<compile_context>
chip_gen: v7x
topology: tpu7x:2x2x1
jax: 0.10.0
libtpu: 0.0.40
codegen_flags: <defaults>
</compile_context>

<pallas_src>
import functools

import jax
import jax.numpy as jnp
import numpy as np
from jax.experimental import pallas as pl
from jax.experimental.pallas import tpu as pltpu

# MXU operand dtype.  Set to jnp.bfloat16 on v6e/v7x to halve VMEM/DMA bytes
# and double the MXU rate (accumulation stays f32 via preferred_element_type).
# Kept f32 here so the correctness check is exact-ish on every generation
# (v5e has no bf16 VPU path anyway and the block is HBM-bound, not MXU-bound).
MXU_DTYPE = jnp.float32


# ----------------------------------------------------------------------------
# Fused RK2Block kernel (one grid step == one image)
# ----------------------------------------------------------------------------
def _rk2_kernel(x_ref, w1_ref, w2_ref, w3_ref, w4_ref, bnp_ref, mask_ref,
                o_ref, *, H, W, Wp, G, L):
    # x_ref   : (1, C, L)   padded, spatially-flattened image (halo ring == 0)
    # w*_ref  : (9, P, Cin) 3x3 taps, resident in VMEM (constant index_map)
    # bnp_ref : (8, C, 1)   folded BN (scale, shift) x4, 2/3 folded into bn3 scale
    # mask_ref: (1, L)      1.0 at interior pixels, 0.0 on the halo ring
    # o_ref   : (1, C, H, W) NCHW output block
    mask = mask_ref[...]                   # (1, L)
    xsl = x_ref[0]                         # (C, L), lane-dense activation slab

    def to_canvas(slab):
        # Add G zero guard columns on both sides so every 3x3 tap shift below
        # is an in-bounds lane slice (guards + zero halo == conv 'same' padding).
        guard = jnp.zeros((slab.shape[0], G), slab.dtype)
        return jnp.concatenate([guard, slab, guard], axis=1)     # (C, L + 2G)

    def conv3x3(canvas, w_ref_):
        # Sum of 9 shifted (Cout,Cin) @ (Cin,L) matmuls, accumulated in f32.
        # The shift for tap (kh,kw) is a fixed lane offset in the flattened
        # padded frame; no patches array is ever materialized.
        acc = None
        for t in range(9):
            kh, kw = divmod(t, 3)
            d = (kh - 1) * Wp + (kw - 1)
            a = canvas[:, G + d: G + d + L].astype(MXU_DTYPE)    # (Cin, L)
            wt = w_ref_[t].astype(MXU_DTYPE)                     # (Cout, Cin)
            c = jnp.dot(wt, a, preferred_element_type=jnp.float32)
            acc = c if acc is None else acc + c
        return acc                                               # (Cout, L) f32

    def bn_relu(v, i):
        # Fused inference-mode BN + ReLU; the mask re-zeroes the halo ring so
        # the next conv sees proper zero padding.
        return mask * jnp.maximum(v * bnp_ref[2 * i] + bnp_ref[2 * i + 1], 0.0)

    # branch 1: conv2(relu(bn2(conv1(relu(bn1(x))))))
    t1 = conv3x3(to_canvas(bn_relu(xsl, 0)), w1_ref)
    k1 = conv3x3(to_canvas(bn_relu(t1, 1)), w2_ref)
    # branch 2: conv4(relu(bn4(conv3(relu(bn3(0.666666*x))))))  (2/3 folded in bn3)
    t3 = conv3x3(to_canvas(bn_relu(xsl, 2)), w3_ref)
    k2 = conv3x3(to_canvas(bn_relu(t3, 3)), w4_ref)

    # RK2 combine + identity shortcut + final ReLU, still on the lane-dense slab.
    out = jnp.maximum(0.25 * k1 + 0.75 * k2 + xsl, 0.0)          # (C, L)

    # Gather the interior pixels back into the NCHW output block.
    for h in range(H):
        off = (h + 1) * Wp + 1
        o_ref[0, :, h, :] = out[:, off: off + W].astype(o_ref.dtype)


# ----------------------------------------------------------------------------
# Wrapper: layout prep (one-time) + gridded pallas_call
# ----------------------------------------------------------------------------
def rk2_forward(x, params):
    N, C, H, W = x.shape
    P = params['w1'].shape[0]
    assert C == P, "identity shortcut only (stride=1, in_planes == planes)"
    Hp, Wp = H + 2, W + 2
    L = Hp * Wp
    G = Wp + 1                      # max |tap shift| in the flattened frame

    # One-time layout prep in XLA (not per-conv): zero-pad spatially and flatten.
    xp = jnp.pad(x, ((0, 0), (0, 0), (1, 1), (1, 1))).reshape(N, C, L)

    # 3x3 taps as (9, Cout, Cin) so each tap is a (Cout,Cin)@(Cin,L) matmul.
    def to9(w):
        return jnp.transpose(w, (2, 3, 0, 1)).reshape(9, w.shape[0], w.shape[1])
    w1m, w2m, w3m, w4m = (to9(params[k]) for k in ('w1', 'w2', 'w3', 'w4'))

    # Folded BN params packed into one tiny resident array; the 0.666666
    # shortcut scaling of branch 2 is folded into bn3's scale.
    bnp = jnp.stack([params['s1'], params['b1'],
                     params['s2'], params['b2'],
                     0.666666 * params['s3'], params['b3'],
                     params['s4'], params['b4']], axis=0)[:, :, None]   # (8, C, 1)

    # Interior mask over the padded-flattened frame (static -> numpy constant).
    idx = np.arange(L)
    ph, pw = idx // Wp, idx % Wp
    mask = jnp.asarray(((ph >= 1) & (ph <= H) & (pw >= 1) & (pw <= W))
                       .astype(np.float32)).reshape(1, L)

    kernel = functools.partial(_rk2_kernel, H=H, W=W, Wp=Wp, G=G, L=L)
    return pl.pallas_call(
        kernel,
        out_shape=jax.ShapeDtypeStruct((N, C, H, W), jnp.float32),
        grid=(N,),
        in_specs=[
            pl.BlockSpec((1, C, L), lambda n: (n, 0, 0)),       # per-image activation
            pl.BlockSpec((9, P, C), lambda n: (0, 0, 0)),       # resident weights
            pl.BlockSpec((9, P, P), lambda n: (0, 0, 0)),
            pl.BlockSpec((9, P, P), lambda n: (0, 0, 0)),
            pl.BlockSpec((9, P, P), lambda n: (0, 0, 0)),
            pl.BlockSpec((8, C, 1), lambda n: (0, 0, 0)),       # resident BN params
            pl.BlockSpec((1, L), lambda n: (0, 0)),             # resident mask
        ],
        out_specs=pl.BlockSpec((1, C, H, W), lambda n: (n, 0, 0, 0)),
        compiler_params=pltpu.CompilerParams(
            dimension_semantics=("parallel",),                  # 2 TCs on v7x
            vmem_limit_bytes=32 * 1024 * 1024),                 # fits v7x's 64 MiB VMEM
    )(xp, w1m, w2m, w3m, w4m, bnp, mask)


# ----------------------------------------------------------------------------
# Deterministic synthetic parameters (inference-mode BN folded to scale/shift)
# ----------------------------------------------------------------------------
def init_params(key, in_planes, planes):
    assert in_planes == planes
    eps = 1e-5
    ks = jax.random.split(key, 20)

    def conv_w(k, cout, cin):
        return jax.random.normal(k, (cout, cin, 3, 3), jnp.float32) / np.sqrt(9.0 * cin)

    def bn(kg, kb, km, kv, c):
        gamma = 1.0 + 0.1 * jax.random.normal(kg, (c,), jnp.float32)
        beta = 0.1 * jax.random.normal(kb, (c,), jnp.float32)
        mean = 0.1 * jax.random.normal(km, (c,), jnp.float32)
        var = jax.random.uniform(kv, (c,), jnp.float32, minval=0.5, maxval=1.5)
        scale = gamma / jnp.sqrt(var + eps)
        shift = beta - mean * scale
        return scale, shift

    p = {'w1': conv_w(ks[0], planes, in_planes),
         'w2': conv_w(ks[1], planes, planes),
         'w3': conv_w(ks[2], planes, planes),
         'w4': conv_w(ks[3], planes, planes)}
    p['s1'], p['b1'] = bn(ks[4], ks[5], ks[6], ks[7], in_planes)
    p['s2'], p['b2'] = bn(ks[8], ks[9], ks[10], ks[11], planes)
    p['s3'], p['b3'] = bn(ks[12], ks[13], ks[14], ks[15], planes)
    p['s4'], p['b4'] = bn(ks[16], ks[17], ks[18], ks[19], planes)
    return p


# ----------------------------------------------------------------------------
# Pure-JAX reference (for correctness check)
# ----------------------------------------------------------------------------
def rk2_reference(x, p):
    def bnrelu(y, s, b):
        return jnp.maximum(y * s[None, :, None, None] + b[None, :, None, None], 0.0)

    def conv(y, w):
        return jax.lax.conv_general_dilated(
            y, w, window_strides=(1, 1), padding='SAME',
            dimension_numbers=('NCHW', 'OIHW', 'NCHW'))

    sc = x
    k1 = conv(bnrelu(conv(bnrelu(x, p['s1'], p['b1']), p['w1']),
                     p['s2'], p['b2']), p['w2'])
    k2 = conv(bnrelu(conv(bnrelu(0.666666 * sc, p['s3'], p['b3']), p['w3']),
                     p['s4'], p['b4']), p['w4'])
    return jnp.maximum(0.25 * k1 + 0.75 * k2 + sc, 0.0)


# ----------------------------------------------------------------------------
# Main
# ----------------------------------------------------------------------------
if __name__ == "__main__":
    key = jax.random.PRNGKey(0)
    kx, kp = jax.random.split(key)
    N, C, H, W = 2, 4, 16, 16            # in_planes = planes = 4, stride = 1
    x = jax.random.normal(kx, (N, C, H, W), jnp.float32)
    params = init_params(kp, C, C)

    out = jax.jit(rk2_forward)(x, params)
    out = jax.block_until_ready(out)

    ref = rk2_reference(x, params)
    assert out.shape == (N, C, H, W)
    np.testing.assert_allclose(np.asarray(out), np.asarray(ref), rtol=1e-2, atol=1e-2)

    print("KERNEL_OK")
</pallas_src>

<mosaic_0001>
module attributes {stable_mosaic.version = 11 : i64} {
  func.func @_rk2_kernel(%arg0: i32, %arg1: memref<1x4x324xf32, #tpu.memory_space<vmem>>, %arg2: memref<9x4x4xf32, #tpu.memory_space<vmem>>, %arg3: memref<9x4x4xf32, #tpu.memory_space<vmem>>, %arg4: memref<9x4x4xf32, #tpu.memory_space<vmem>>, %arg5: memref<9x4x4xf32, #tpu.memory_space<vmem>>, %arg6: memref<8x4x1xf32, #tpu.memory_space<vmem>>, %arg7: memref<1x324xf32, #tpu.memory_space<vmem>>, %arg8: memref<1x4x16x16xf32, #tpu.memory_space<vmem>>) attributes {dimension_semantics = [#tpu.dimension_semantics<parallel>], iteration_bounds = array<i64: 2>, scalar_prefetch = 0 : i64, scratch_operands = 0 : i64, tpu.core_type = #tpu.core_type<tc>, window_params = [{transform_indices = @transform_0, window_bounds = array<i64: 1, 4, 324>}, {pipeline_mode = #tpu.pipeline_mode<synchronous>, transform_indices = @transform_1, window_bounds = array<i64: 9, 4, 4>}, {pipeline_mode = #tpu.pipeline_mode<synchronous>, transform_indices = @transform_2, window_bounds = array<i64: 9, 4, 4>}, {pipeline_mode = #tpu.pipeline_mode<synchronous>, transform_indices = @transform_3, window_bounds = array<i64: 9, 4, 4>}, {pipeline_mode = #tpu.pipeline_mode<synchronous>, transform_indices = @transform_4, window_bounds = array<i64: 9, 4, 4>}, {pipeline_mode = #tpu.pipeline_mode<synchronous>, transform_indices = @transform_5, window_bounds = array<i64: 8, 4, 1>}, {pipeline_mode = #tpu.pipeline_mode<synchronous>, transform_indices = @transform_6, window_bounds = array<i64: 1, 324>}, {transform_indices = @transform_7, window_bounds = array<i64: 1, 4, 16, 16>}]} {
    %c0 = arith.constant 0 : index
    %c0_0 = arith.constant 0 : index
    %0 = vector.load %arg7[%c0, %c0_0] : memref<1x324xf32, #tpu.memory_space<vmem>>, vector<1x324xf32>
    %c0_1 = arith.constant 0 : index
    %c0_2 = arith.constant 0 : index
    %c0_3 = arith.constant 0 : index
    %1 = vector.load %arg1[%c0_1, %c0_2, %c0_3] : memref<1x4x324xf32, #tpu.memory_space<vmem>>, vector<1x4x324xf32>
    %2 = vector.shape_cast %1 : vector<1x4x324xf32> to vector<4x324xf32>
    %c0_4 = arith.constant 0 : index
    %c0_5 = arith.constant 0 : index
    %c0_6 = arith.constant 0 : index
    %3 = vector.load %arg6[%c0_4, %c0_5, %c0_6] : memref<8x4x1xf32, #tpu.memory_space<vmem>>, vector<1x4x1xf32>
    %4 = vector.shape_cast %3 : vector<1x4x1xf32> to vector<4x1xf32>
    %5 = vector.broadcast %4 : vector<4x1xf32> to vector<4x324xf32>
    %6 = arith.mulf %2, %5 : vector<4x324xf32>
    %c1 = arith.constant 1 : index
    %c0_7 = arith.constant 0 : index
    %c0_8 = arith.constant 0 : index
    %7 = vector.load %arg6[%c1, %c0_7, %c0_8] : memref<8x4x1xf32, #tpu.memory_space<vmem>>, vector<1x4x1xf32>
    %8 = vector.shape_cast %7 : vector<1x4x1xf32> to vector<4x1xf32>
    %9 = vector.broadcast %8 : vector<4x1xf32> to vector<4x324xf32>
    %10 = arith.addf %6, %9 : vector<4x324xf32>
    %cst = arith.constant 0.000000e+00 : f32
    %11 = vector.broadcast %cst : f32 to vector<4x324xf32>
    %12 = arith.maximumf %10, %11 : vector<4x324xf32>
    %13 = vector.broadcast %0 : vector<1x324xf32> to vector<4x324xf32>
    %14 = arith.mulf %13, %12 : vector<4x324xf32>
    %cst_9 = arith.constant 0.000000e+00 : f32
    %15 = vector.broadcast %cst_9 : f32 to vector<4x19xf32>
    %16 = tpu.concatenate %15, %14, %15 in 1 : vector<4x19xf32>, vector<4x324xf32>, vector<4x19xf32> -> vector<4x362xf32>
    %17 = vector.extract_strided_slice %16 {offsets = [0, 0], sizes = [4, 324], strides = [1, 1]} : vector<4x362xf32> to vector<4x324xf32>
    %c0_10 = arith.constant 0 : index
    %c0_11 = arith.constant 0 : index
    %c0_12 = arith.constant 0 : index
    %18 = vector.load %arg2[%c0_10, %c0_11, %c0_12] : memref<9x4x4xf32, #tpu.memory_space<vmem>>, vector<1x4x4xf32>
    %19 = vector.shape_cast %18 : vector<1x4x4xf32> to vector<4x4xf32>
    %cst_13 = arith.constant dense<0.000000e+00> : vector<4x324xf32>
    %20 = tpu.matmul %19, %17, %cst_13 {dimension_numbers = #tpu.dot_dimension_numbers<[1], [0], [0], [1], [0, 0, 1, 1], [], []>} : vector<4x4xf32>, vector<4x324xf32>, vector<4x324xf32> -> vector<4x324xf32>
    %21 = vector.extract_strided_slice %16 {offsets = [0, 1], sizes = [4, 324], strides = [1, 1]} : vector<4x362xf32> to vector<4x324xf32>
    %c1_14 = arith.constant 1 : index
    %c0_15 = arith.constant 0 : index
    %c0_16 = arith.constant 0 : index
    %22 = vector.load %arg2[%c1_14, %c0_15, %c0_16] : memref<9x4x4xf32, #tpu.memory_space<vmem>>, vector<1x4x4xf32>
    %23 = vector.shape_cast %22 : vector<1x4x4xf32> to vector<4x4xf32>
    %cst_17 = arith.constant dense<0.000000e+00> : vector<4x324xf32>
    %24 = tpu.matmul %23, %21, %cst_17 {dimension_numbers = #tpu.dot_dimension_numbers<[1], [0], [0], [1], [0, 0, 1, 1], [], []>} : vector<4x4xf32>, vector<4x324xf32>, vector<4x324xf32> -> vector<4x324xf32>
    %25 = arith.addf %20, %24 : vector<4x324xf32>
    %26 = vector.extract_strided_slice %16 {offsets = [0, 2], sizes = [4, 324], strides = [1, 1]} : vector<4x362xf32> to vector<4x324xf32>
    %c2 = arith.constant 2 : index
    %c0_18 = arith.constant 0 : index
    %c0_19 = arith.constant 0 : index
    %27 = vector.load %arg2[%c2, %c0_18, %c0_19] : memref<9x4x4xf32, #tpu.memory_space<vmem>>, vector<1x4x4xf32>
    %28 = vector.shape_cast %27 : vector<1x4x4xf32> to vector<4x4xf32>
    %cst_20 = arith.constant dense<0.000000e+00> : vector<4x324xf32>
    %29 = tpu.matmul %28, %26, %cst_20 {dimension_numbers = #tpu.dot_dimension_numbers<[1], [0], [0], [1], [0, 0, 1, 1], [], []>} : vector<4x4xf32>, vector<4x324xf32>, vector<4x324xf32> -> vector<4x324xf32>
    %30 = arith.addf %25, %29 : vector<4x324xf32>
    %31 = vector.extract_strided_slice %16 {offsets = [0, 18], sizes = [4, 324], strides = [1, 1]} : vector<4x362xf32> to vector<4x324xf32>
    %c3 = arith.constant 3 : index
    %c0_21 = arith.constant 0 : index
    %c0_22 = arith.constant 0 : index
    %32 = vector.load %arg2[%c3, %c0_21, %c0_22] : memref<9x4x4xf32, #tpu.memory_space<vmem>>, vector<1x4x4xf32>
    %33 = vector.shape_cast %32 : vector<1x4x4xf32> to vector<4x4xf32>
    %cst_23 = arith.constant dense<0.000000e+00> : vector<4x324xf32>
    %34 = tpu.matmul %33, %31, %cst_23 {dimension_numbers = #tpu.dot_dimension_numbers<[1], [0], [0], [1], [0, 0, 1, 1], [], []>} : vector<4x4xf32>, vector<4x324xf32>, vector<4x324xf32> -> vector<4x324xf32>
    %35 = arith.addf %30, %34 : vector<4x324xf32>
    %36 = vector.extract_strided_slice %16 {offsets = [0, 19], sizes = [4, 324], strides = [1, 1]} : vector<4x362xf32> to vector<4x324xf32>
    %c4 = arith.constant 4 : index
    %c0_24 = arith.constant 0 : index
    %c0_25 = arith.constant 0 : index
    %37 = vector.load %arg2[%c4, %c0_24, %c0_25] : memref<9x4x4xf32, #tpu.memory_space<vmem>>, vector<1x4x4xf32>
    %38 = vector.shape_cast %37 : vector<1x4x4xf32> to vector<4x4xf32>
    %cst_26 = arith.constant dense<0.000000e+00> : vector<4x324xf32>
    %39 = tpu.matmul %38, %36, %cst_26 {dimension_numbers = #tpu.dot_dimension_numbers<[1], [0], [0], [1], [0, 0, 1, 1], [], []>} : vector<4x4xf32>, vector<4x324xf32>, vector<4x324xf32> -> vector<4x324xf32>
    %40 = arith.addf %35, %39 : vector<4x324xf32>
    %41 = vector.extract_strided_slice %16 {offsets = [0, 20], sizes = [4, 324], strides = [1, 1]} : vector<4x362xf32> to vector<4x324xf32>
    %c5 = arith.constant 5 : index
    %c0_27 = arith.constant 0 : index
    %c0_28 = arith.constant 0 : index
    %42 = vector.load %arg2[%c5, %c0_27, %c0_28] : memref<9x4x4xf32, #tpu.memory_space<vmem>>, vector<1x4x4xf32>
    %43 = vector.shape_cast %42 : vector<1x4x4xf32> to vector<4x4xf32>
    %cst_29 = arith.constant dense<0.000000e+00> : vector<4x324xf32>
    %44 = tpu.matmul %43, %41, %cst_29 {dimension_numbers = #tpu.dot_dimension_numbers<[1], [0], [0], [1], [0, 0, 1, 1], [], []>} : vector<4x4xf32>, vector<4x324xf32>, vector<4x324xf32> -> vector<4x324xf32>
    %45 = arith.addf %40, %44 : vector<4x324xf32>
    %46 = vector.extract_strided_slice %16 {offsets = [0, 36], sizes = [4, 324], strides = [1, 1]} : vector<4x362xf32> to vector<4x324xf32>
    %c6 = arith.constant 6 : index
    %c0_30 = arith.constant 0 : index
    %c0_31 = arith.constant 0 : index
    %47 = vector.load %arg2[%c6, %c0_30, %c0_31] : memref<9x4x4xf32, #tpu.memory_space<vmem>>, vector<1x4x4xf32>
    %48 = vector.shape_cast %47 : vector<1x4x4xf32> to vector<4x4xf32>
    %cst_32 = arith.constant dense<0.000000e+00> : vector<4x324xf32>
    %49 = tpu.matmul %48, %46, %cst_32 {dimension_numbers = #tpu.dot_dimension_numbers<[1], [0], [0], [1], [0, 0, 1, 1], [], []>} : vector<4x4xf32>, vector<4x324xf32>, vector<4x324xf32> -> vector<4x324xf32>
    %50 = arith.addf %45, %49 : vector<4x324xf32>
    %51 = vector.extract_strided_slice %16 {offsets = [0, 37], sizes = [4, 324], strides = [1, 1]} : vector<4x362xf32> to vector<4x324xf32>
    %c7 = arith.constant 7 : index
    %c0_33 = arith.constant 0 : index
    %c0_34 = arith.constant 0 : index
    %52 = vector.load %arg2[%c7, %c0_33, %c0_34] : memref<9x4x4xf32, #tpu.memory_space<vmem>>, vector<1x4x4xf32>
    %53 = vector.shape_cast %52 : vector<1x4x4xf32> to vector<4x4xf32>
    %cst_35 = arith.constant dense<0.000000e+00> : vector<4x324xf32>
    %54 = tpu.matmul %53, %51, %cst_35 {dimension_numbers = #tpu.dot_dimension_numbers<[1], [0], [0], [1], [0, 0, 1, 1], [], []>} : vector<4x4xf32>, vector<4x324xf32>, vector<4x324xf32> -> vector<4x324xf32>
    %55 = arith.addf %50, %54 : vector<4x324xf32>
    %56 = vector.extract_strided_slice %16 {offsets = [0, 38], sizes = [4, 324], strides = [1, 1]} : vector<4x362xf32> to vector<4x324xf32>
    %c8 = arith.constant 8 : index
    %c0_36 = arith.constant 0 : index
    %c0_37 = arith.constant 0 : index
    %57 = vector.load %arg2[%c8, %c0_36, %c0_37] : memref<9x4x4xf32, #tpu.memory_space<vmem>>, vector<1x4x4xf32>
    %58 = vector.shape_cast %57 : vector<1x4x4xf32> to vector<4x4xf32>
    %cst_38 = arith.constant dense<0.000000e+00> : vector<4x324xf32>
    %59 = tpu.matmul %58, %56, %cst_38 {dimension_numbers = #tpu.dot_dimension_numbers<[1], [0], [0], [1], [0, 0, 1, 1], [], []>} : vector<4x4xf32>, vector<4x324xf32>, vector<4x324xf32> -> vector<4x324xf32>
    %60 = arith.addf %55, %59 : vector<4x324xf32>
    %c2_39 = arith.constant 2 : index
    %c0_40 = arith.constant 0 : index
    %c0_41 = arith.constant 0 : index
    %61 = vector.load %arg6[%c2_39, %c0_40, %c0_41] : memref<8x4x1xf32, #tpu.memory_space<vmem>>, vector<1x4x1xf32>
    %62 = vector.shape_cast %61 : vector<1x4x1xf32> to vector<4x1xf32>
    %63 = vector.broadcast %62 : vector<4x1xf32> to vector<4x324xf32>
    %64 = arith.mulf %60, %63 : vector<4x324xf32>
    %c3_42 = arith.constant 3 : index
    %c0_43 = arith.constant 0 : index
    %c0_44 = arith.constant 0 : index
    %65 = vector.load %arg6[%c3_42, %c0_43, %c0_44] : memref<8x4x1xf32, #tpu.memory_space<vmem>>, vector<1x4x1xf32>
    %66 = vector.shape_cast %65 : vector<1x4x1xf32> to vector<4x1xf32>
    %67 = vector.broadcast %66 : vector<4x1xf32> to vector<4x324xf32>
    %68 = arith.addf %64, %67 : vector<4x324xf32>
    %cst_45 = arith.constant 0.000000e+00 : f32
    %69 = vector.broadcast %cst_45 : f32 to vector<4x324xf32>
    %70 = arith.maximumf %68, %69 : vector<4x324xf32>
    %71 = vector.broadcast %0 : vector<1x324xf32> to vector<4x324xf32>
    %72 = arith.mulf %71, %70 : vector<4x324xf32>
    %cst_46 = arith.constant 0.000000e+00 : f32
    %73 = vector.broadcast %cst_46 : f32 to vector<4x19xf32>
    %74 = tpu.concatenate %73, %72, %73 in 1 : vector<4x19xf32>, vector<4x324xf32>, vector<4x19xf32> -> vector<4x362xf32>
    %75 = vector.extract_strided_slice %74 {offsets = [0, 0], sizes = [4, 324], strides = [1, 1]} : vector<4x362xf32> to vector<4x324xf32>
    %c0_47 = arith.constant 0 : index
    %c0_48 = arith.constant 0 : index
    %c0_49 = arith.constant 0 : index
    %76 = vector.load %arg3[%c0_47, %c0_48, %c0_49] : memref<9x4x4xf32, #tpu.memory_space<vmem>>, vector<1x4x4xf32>
    %77 = vector.shape_cast %76 : vector<1x4x4xf32> to vector<4x4xf32>
    %cst_50 = arith.constant dense<0.000000e+00> : vector<4x324xf32>
    %78 = tpu.matmul %77, %75, %cst_50 {dimension_numbers = #tpu.dot_dimension_numbers<[1], [0], [0], [1], [0, 0, 1, 1], [], []>} : vector<4x4xf32>, vector<4x324xf32>, vector<4x324xf32> -> vector<4x324xf32>
    %79 = vector.extract_strided_slice %74 {offsets = [0, 1], sizes = [4, 324], strides = [1, 1]} : vector<4x362xf32> to vector<4x324xf32>
    %c1_51 = arith.constant 1 : index
    %c0_52 = arith.constant 0 : index
    %c0_53 = arith.constant 0 : index
    %80 = vector.load %arg3[%c1_51, %c0_52, %c0_53] : memref<9x4x4xf32, #tpu.memory_space<vmem>>, vector<1x4x4xf32>
    %81 = vector.shape_cast %80 : vector<1x4x4xf32> to vector<4x4xf32>
    %cst_54 = arith.constant dense<0.000000e+00> : vector<4x324xf32>
    %82 = tpu.matmul %81, %79, %cst_54 {dimension_numbers = #tpu.dot_dimension_numbers<[1], [0], [0], [1], [0, 0, 1, 1], [], []>} : vector<4x4xf32>, vector<4x324xf32>, vector<4x324xf32> -> vector<4x324xf32>
    %83 = arith.addf %78, %82 : vector<4x324xf32>
    %84 = vector.extract_strided_slice %74 {offsets = [0, 2], sizes = [4, 324], strides = [1, 1]} : vector<4x362xf32> to vector<4x324xf32>
    %c2_55 = arith.constant 2 : index
    %c0_56 = arith.constant 0 : index
    %c0_57 = arith.constant 0 : index
    %85 = vector.load %arg3[%c2_55, %c0_56, %c0_57] : memref<9x4x4xf32, #tpu.memory_space<vmem>>, vector<1x4x4xf32>
    %86 = vector.shape_cast %85 : vector<1x4x4xf32> to vector<4x4xf32>
    %cst_58 = arith.constant dense<0.000000e+00> : vector<4x324xf32>
    %87 = tpu.matmul %86, %84, %cst_58 {dimension_numbers = #tpu.dot_dimension_numbers<[1], [0], [0], [1], [0, 0, 1, 1], [], []>} : vector<4x4xf32>, vector<4x324xf32>, vector<4x324xf32> -> vector<4x324xf32>
    %88 = arith.addf %83, %87 : vector<4x324xf32>
    %89 = vector.extract_strided_slice %74 {offsets = [0, 18], sizes = [4, 324], strides = [1, 1]} : vector<4x362xf32> to vector<4x324xf32>
    %c3_59 = arith.constant 3 : index
    %c0_60 = arith.constant 0 : index
    %c0_61 = arith.constant 0 : index
    %90 = vector.load %arg3[%c3_59, %c0_60, %c0_61] : memref<9x4x4xf32, #tpu.memory_space<vmem>>, vector<1x4x4xf32>
    %91 = vector.shape_cast %90 : vector<1x4x4xf32> to vector<4x4xf32>
    %cst_62 = arith.constant dense<0.000000e+00> : vector<4x324xf32>
    %92 = tpu.matmul %91, %89, %cst_62 {dimension_numbers = #tpu.dot_dimension_numbers<[1], [0], [0], [1], [0, 0, 1, 1], [], []>} : vector<4x4xf32>, vector<4x324xf32>, vector<4x324xf32> -> vector<4x324xf32>
    %93 = arith.addf %88, %92 : vector<4x324xf32>
    %94 = vector.extract_strided_slice %74 {offsets = [0, 19], sizes = [4, 324], strides = [1, 1]} : vector<4x362xf32> to vector<4x324xf32>
    %c4_63 = arith.constant 4 : index
    %c0_64 = arith.constant 0 : index
    %c0_65 = arith.constant 0 : index
    %95 = vector.load %arg3[%c4_63, %c0_64, %c0_65] : memref<9x4x4xf32, #tpu.memory_space<vmem>>, vector<1x4x4xf32>
    %96 = vector.shape_cast %95 : vector<1x4x4xf32> to vector<4x4xf32>
    %cst_66 = arith.constant dense<0.000000e+00> : vector<4x324xf32>
    %97 = tpu.matmul %96, %94, %cst_66 {dimension_numbers = #tpu.dot_dimension_numbers<[1], [0], [0], [1], [0, 0, 1, 1], [], []>} : vector<4x4xf32>, vector<4x324xf32>, vector<4x324xf32> -> vector<4x324xf32>
    %98 = arith.addf %93, %97 : vector<4x324xf32>
    %99 = vector.extract_strided_slice %74 {offsets = [0, 20], sizes = [4, 324], strides = [1, 1]} : vector<4x362xf32> to vector<4x324xf32>
    %c5_67 = arith.constant 5 : index
    %c0_68 = arith.constant 0 : index
    %c0_69 = arith.constant 0 : index
    %100 = vector.load %arg3[%c5_67, %c0_68, %c0_69] : memref<9x4x4xf32, #tpu.memory_space<vmem>>, vector<1x4x4xf32>
    %101 = vector.shape_cast %100 : vector<1x4x4xf32> to vector<4x4xf32>
    %cst_70 = arith.constant dense<0.000000e+00> : vector<4x324xf32>
    %102 = tpu.matmul %101, %99, %cst_70 {dimension_numbers = #tpu.dot_dimension_numbers<[1], [0], [0], [1], [0, 0, 1, 1], [], []>} : vector<4x4xf32>, vector<4x324xf32>, vector<4x324xf32> -> vector<4x324xf32>
    %103 = arith.addf %98, %102 : vector<4x324xf32>
    %104 = vector.extract_strided_slice %74 {offsets = [0, 36], sizes = [4, 324], strides = [1, 1]} : vector<4x362xf32> to vector<4x324xf32>
    %c6_71 = arith.constant 6 : index
    %c0_72 = arith.constant 0 : index
    %c0_73 = arith.constant 0 : index
    %105 = vector.load %arg3[%c6_71, %c0_72, %c0_73] : memref<9x4x4xf32, #tpu.memory_space<vmem>>, vector<1x4x4xf32>
    %106 = vector.shape_cast %105 : vector<1x4x4xf32> to vector<4x4xf32>
    %cst_74 = arith.constant dense<0.000000e+00> : vector<4x324xf32>
    %107 = tpu.matmul %106, %104, %cst_74 {dimension_numbers = #tpu.dot_dimension_numbers<[1], [0], [0], [1], [0, 0, 1, 1], [], []>} : vector<4x4xf32>, vector<4x324xf32>, vector<4x324xf32> -> vector<4x324xf32>
    %108 = arith.addf %103, %107 : vector<4x324xf32>
    %109 = vector.extract_strided_slice %74 {offsets = [0, 37], sizes = [4, 324], strides = [1, 1]} : vector<4x362xf32> to vector<4x324xf32>
    %c7_75 = arith.constant 7 : index
    %c0_76 = arith.constant 0 : index
    %c0_77 = arith.constant 0 : index
    %110 = vector.load %arg3[%c7_75, %c0_76, %c0_77] : memref<9x4x4xf32, #tpu.memory_space<vmem>>, vector<1x4x4xf32>
    %111 = vector.shape_cast %110 : vector<1x4x4xf32> to vector<4x4xf32>
    %cst_78 = arith.constant dense<0.000000e+00> : vector<4x324xf32>
    %112 = tpu.matmul %111, %109, %cst_78 {dimension_numbers = #tpu.dot_dimension_numbers<[1], [0], [0], [1], [0, 0, 1, 1], [], []>} : vector<4x4xf32>, vector<4x324xf32>, vector<4x324xf32> -> vector<4x324xf32>
    %113 = arith.addf %108, %112 : vector<4x324xf32>
    %114 = vector.extract_strided_slice %74 {offsets = [0, 38], sizes = [4, 324], strides = [1, 1]} : vector<4x362xf32> to vector<4x324xf32>
    %c8_79 = arith.constant 8 : index
    %c0_80 = arith.constant 0 : index
    %c0_81 = arith.constant 0 : index
    %115 = vector.load %arg3[%c8_79, %c0_80, %c0_81] : memref<9x4x4xf32, #tpu.memory_space<vmem>>, vector<1x4x4xf32>
    %116 = vector.shape_cast %115 : vector<1x4x4xf32> to vector<4x4xf32>
    %cst_82 = arith.constant dense<0.000000e+00> : vector<4x324xf32>
    %117 = tpu.matmul %116, %114, %cst_82 {dimension_numbers = #tpu.dot_dimension_numbers<[1], [0], [0], [1], [0, 0, 1, 1], [], []>} : vector<4x4xf32>, vector<4x324xf32>, vector<4x324xf32> -> vector<4x324xf32>
    %118 = arith.addf %113, %117 : vector<4x324xf32>
    %c4_83 = arith.constant 4 : index
    %c0_84 = arith.constant 0 : index
    %c0_85 = arith.constant 0 : index
    %119 = vector.load %arg6[%c4_83, %c0_84, %c0_85] : memref<8x4x1xf32, #tpu.memory_space<vmem>>, vector<1x4x1xf32>
    %120 = vector.shape_cast %119 : vector<1x4x1xf32> to vector<4x1xf32>
    %121 = vector.broadcast %120 : vector<4x1xf32> to vector<4x324xf32>
    %122 = arith.mulf %2, %121 : vector<4x324xf32>
    %c5_86 = arith.constant 5 : index
    %c0_87 = arith.constant 0 : index
    %c0_88 = arith.constant 0 : index
    %123 = vector.load %arg6[%c5_86, %c0_87, %c0_88] : memref<8x4x1xf32, #tpu.memory_space<vmem>>, vector<1x4x1xf32>
    %124 = vector.shape_cast %123 : vector<1x4x1xf32> to vector<4x1xf32>
    %125 = vector.broadcast %124 : vector<4x1xf32> to vector<4x324xf32>
    %126 = arith.addf %122, %125 : vector<4x324xf32>
    %cst_89 = arith.constant 0.000000e+00 : f32
    %127 = vector.broadcast %cst_89 : f32 to vector<4x324xf32>
    %128 = arith.maximumf %126, %127 : vector<4x324xf32>
    %129 = vector.broadcast %0 : vector<1x324xf32> to vector<4x324xf32>
    %130 = arith.mulf %129, %128 : vector<4x324xf32>
    %cst_90 = arith.constant 0.000000e+00 : f32
    %131 = vector.broadcast %cst_90 : f32 to vector<4x19xf32>
    %132 = tpu.concatenate %131, %130, %131 in 1 : vector<4x19xf32>, vector<4x324xf32>, vector<4x19xf32> -> vector<4x362xf32>
    %133 = vector.extract_strided_slice %132 {offsets = [0, 0], sizes = [4, 324], strides = [1, 1]} : vector<4x362xf32> to vector<4x324xf32>
    %c0_91 = arith.constant 0 : index
    %c0_92 = arith.constant 0 : index
    %c0_93 = arith.constant 0 : index
    %134 = vector.load %arg4[%c0_91, %c0_92, %c0_93] : memref<9x4x4xf32, #tpu.memory_space<vmem>>, vector<1x4x4xf32>
    %135 = vector.shape_cast %134 : vector<1x4x4xf32> to vector<4x4xf32>
    %cst_94 = arith.constant dense<0.000000e+00> : vector<4x324xf32>
    %136 = tpu.matmul %135, %133, %cst_94 {dimension_numbers = #tpu.dot_dimension_numbers<[1], [0], [0], [1], [0, 0, 1, 1], [], []>} : vector<4x4xf32>, vector<4x324xf32>, vector<4x324xf32> -> vector<4x324xf32>
    %137 = vector.extract_strided_slice %132 {offsets = [0, 1], sizes = [4, 324], strides = [1, 1]} : vector<4x362xf32> to vector<4x324xf32>
    %c1_95 = arith.constant 1 : index
    %c0_96 = arith.constant 0 : index
    %c0_97 = arith.constant 0 : index
    %138 = vector.load %arg4[%c1_95, %c0_96, %c0_97] : memref<9x4x4xf32, #tpu.memory_space<vmem>>, vector<1x4x4xf32>
    %139 = vector.shape_cast %138 : vector<1x4x4xf32> to vector<4x4xf32>
    %cst_98 = arith.constant dense<0.000000e+00> : vector<4x324xf32>
    %140 = tpu.matmul %139, %137, %cst_98 {dimension_numbers = #tpu.dot_dimension_numbers<[1], [0], [0], [1], [0, 0, 1, 1], [], []>} : vector<4x4xf32>, vector<4x324xf32>, vector<4x324xf32> -> vector<4x324xf32>
    %141 = arith.addf %136, %140 : vector<4x324xf32>
    %142 = vector.extract_strided_slice %132 {offsets = [0, 2], sizes = [4, 324], strides = [1, 1]} : vector<4x362xf32> to vector<4x324xf32>
    %c2_99 = arith.constant 2 : index
    %c0_100 = arith.constant 0 : index
    %c0_101 = arith.constant 0 : index
    %143 = vector.load %arg4[%c2_99, %c0_100, %c0_101] : memref<9x4x4xf32, #tpu.memory_space<vmem>>, vector<1x4x4xf32>
    %144 = vector.shape_cast %143 : vector<1x4x4xf32> to vector<4x4xf32>
    %cst_102 = arith.constant dense<0.000000e+00> : vector<4x324xf32>
    %145 = tpu.matmul %144, %142, %cst_102 {dimension_numbers = #tpu.dot_dimension_numbers<[1], [0], [0], [1], [0, 0, 1, 1], [], []>} : vector<4x4xf32>, vector<4x324xf32>, vector<4x324xf32> -> vector<4x324xf32>
    %146 = arith.addf %141, %145 : vector<4x324xf32>
    %147 = vector.extract_strided_slice %132 {offsets = [0, 18], sizes = [4, 324], strides = [1, 1]} : vector<4x362xf32> to vector<4x324xf32>
    %c3_103 = arith.constant 3 : index
    %c0_104 = arith.constant 0 : index
    %c0_105 = arith.constant 0 : index
    %148 = vector.load %arg4[%c3_103, %c0_104, %c0_105] : memref<9x4x4xf32, #tpu.memory_space<vmem>>, vector<1x4x4xf32>
    %149 = vector.shape_cast %148 : vector<1x4x4xf32> to vector<4x4xf32>
    %cst_106 = arith.constant dense<0.000000e+00> : vector<4x324xf32>
    %150 = tpu.matmul %149, %147, %cst_106 {dimension_numbers = #tpu.dot_dimension_numbers<[1], [0], [0], [1], [0, 0, 1, 1], [], []>} : vector<4x4xf32>, vector<4x324xf32>, vector<4x324xf32> -> vector<4x324xf32>
    %151 = arith.addf %146, %150 : vector<4x324xf32>
    %152 = vector.extract_strided_slice %132 {offsets = [0, 19], sizes = [4, 324], strides = [1, 1]} : vector<4x362xf32> to vector<4x324xf32>
    %c4_107 = arith.constant 4 : index
    %c0_108 = arith.constant 0 : index
    %c0_109 = arith.constant 0 : index
    %153 = vector.load %arg4[%c4_107, %c0_108, %c0_109] : memref<9x4x4xf32, #tpu.memory_space<vmem>>, vector<1x4x4xf32>
    %154 = vector.shape_cast %153 : vector<1x4x4xf32> to vector<4x4xf32>
    %cst_110 = arith.constant dense<0.000000e+00> : vector<4x324xf32>
    %155 = tpu.matmul %154, %152, %cst_110 {dimension_numbers = #tpu.dot_dimension_numbers<[1], [0], [0], [1], [0, 0, 1, 1], [], []>} : vector<4x4xf32>, vector<4x324xf32>, vector<4x324xf32> -> vector<4x324xf32>
    %156 = arith.addf %151, %155 : vector<4x324xf32>
    %157 = vector.extract_strided_slice %132 {offsets = [0, 20], sizes = [4, 324], strides = [1, 1]} : vector<4x362xf32> to vector<4x324xf32>
    %c5_111 = arith.constant 5 : index
    %c0_112 = arith.constant 0 : index
    %c0_113 = arith.constant 0 : index
    %158 = vector.load %arg4[%c5_111, %c0_112, %c0_113] : memref<9x4x4xf32, #tpu.memory_space<vmem>>, vector<1x4x4xf32>
    %159 = vector.shape_cast %158 : vector<1x4x4xf32> to vector<4x4xf32>
    %cst_114 = arith.constant dense<0.000000e+00> : vector<4x324xf32>
    %160 = tpu.matmul %159, %157, %cst_114 {dimension_numbers = #tpu.dot_dimension_numbers<[1], [0], [0], [1], [0, 0, 1, 1], [], []>} : vector<4x4xf32>, vector<4x324xf32>, vector<4x324xf32> -> vector<4x324xf32>
    %161 = arith.addf %156, %160 : vector<4x324xf32>
    %162 = vector.extract_strided_slice %132 {offsets = [0, 36], sizes = [4, 324], strides = [1, 1]} : vector<4x362xf32> to vector<4x324xf32>
    %c6_115 = arith.constant 6 : index
    %c0_116 = arith.constant 0 : index
    %c0_117 = arith.constant 0 : index
    %163 = vector.load %arg4[%c6_115, %c0_116, %c0_117] : memref<9x4x4xf32, #tpu.memory_space<vmem>>, vector<1x4x4xf32>
    %164 = vector.shape_cast %163 : vector<1x4x4xf32> to vector<4x4xf32>
    %cst_118 = arith.constant dense<0.000000e+00> : vector<4x324xf32>
    %165 = tpu.matmul %164, %162, %cst_118 {dimension_numbers = #tpu.dot_dimension_numbers<[1], [0], [0], [1], [0, 0, 1, 1], [], []>} : vector<4x4xf32>, vector<4x324xf32>, vector<4x324xf32> -> vector<4x324xf32>
    %166 = arith.addf %161, %165 : vector<4x324xf32>
    %167 = vector.extract_strided_slice %132 {offsets = [0, 37], sizes = [4, 324], strides = [1, 1]} : vector<4x362xf32> to vector<4x324xf32>
    %c7_119 = arith.constant 7 : index
    %c0_120 = arith.constant 0 : index
    %c0_121 = arith.constant 0 : index
    %168 = vector.load %arg4[%c7_119, %c0_120, %c0_121] : memref<9x4x4xf32, #tpu.memory_space<vmem>>, vector<1x4x4xf32>
    %169 = vector.shape_cast %168 : vector<1x4x4xf32> to vector<4x4xf32>
    %cst_122 = arith.constant dense<0.000000e+00> : vector<4x324xf32>
    %170 = tpu.matmul %169, %167, %cst_122 {dimension_numbers = #tpu.dot_dimension_numbers<[1], [0], [0], [1], [0, 0, 1, 1], [], []>} : vector<4x4xf32>, vector<4x324xf32>, vector<4x324xf32> -> vector<4x324xf32>
    %171 = arith.addf %166, %170 : vector<4x324xf32>
    %172 = vector.extract_strided_slice %132 {offsets = [0, 38], sizes = [4, 324], strides = [1, 1]} : vector<4x362xf32> to vector<4x324xf32>
    %c8_123 = arith.constant 8 : index
    %c0_124 = arith.constant 0 : index
    %c0_125 = arith.constant 0 : index
    %173 = vector.load %arg4[%c8_123, %c0_124, %c0_125] : memref<9x4x4xf32, #tpu.memory_space<vmem>>, vector<1x4x4xf32>
    %174 = vector.shape_cast %173 : vector<1x4x4xf32> to vector<4x4xf32>
    %cst_126 = arith.constant dense<0.000000e+00> : vector<4x324xf32>
    %175 = tpu.matmul %174, %172, %cst_126 {dimension_numbers = #tpu.dot_dimension_numbers<[1], [0], [0], [1], [0, 0, 1, 1], [], []>} : vector<4x4xf32>, vector<4x324xf32>, vector<4x324xf32> -> vector<4x324xf32>
    %176 = arith.addf %171, %175 : vector<4x324xf32>
    %c6_127 = arith.constant 6 : index
    %c0_128 = arith.constant 0 : index
    %c0_129 = arith.constant 0 : index
    %177 = vector.load %arg6[%c6_127, %c0_128, %c0_129] : memref<8x4x1xf32, #tpu.memory_space<vmem>>, vector<1x4x1xf32>
    %178 = vector.shape_cast %177 : vector<1x4x1xf32> to vector<4x1xf32>
    %179 = vector.broadcast %178 : vector<4x1xf32> to vector<4x324xf32>
    %180 = arith.mulf %176, %179 : vector<4x324xf32>
    %c7_130 = arith.constant 7 : index
    %c0_131 = arith.constant 0 : index
    %c0_132 = arith.constant 0 : index
    %181 = vector.load %arg6[%c7_130, %c0_131, %c0_132] : memref<8x4x1xf32, #tpu.memory_space<vmem>>, vector<1x4x1xf32>
    %182 = vector.shape_cast %181 : vector<1x4x1xf32> to vector<4x1xf32>
    %183 = vector.broadcast %182 : vector<4x1xf32> to vector<4x324xf32>
    %184 = arith.addf %180, %183 : vector<4x324xf32>
    %cst_133 = arith.constant 0.000000e+00 : f32
    %185 = vector.broadcast %cst_133 : f32 to vector<4x324xf32>
    %186 = arith.maximumf %184, %185 : vector<4x324xf32>
    %187 = vector.broadcast %0 : vector<1x324xf32> to vector<4x324xf32>
    %188 = arith.mulf %187, %186 : vector<4x324xf32>
    %cst_134 = arith.constant 0.000000e+00 : f32
    %189 = vector.broadcast %cst_134 : f32 to vector<4x19xf32>
    %190 = tpu.concatenate %189, %188, %189 in 1 : vector<4x19xf32>, vector<4x324xf32>, vector<4x19xf32> -> vector<4x362xf32>
    %191 = vector.extract_strided_slice %190 {offsets = [0, 0], sizes = [4, 324], strides = [1, 1]} : vector<4x362xf32> to vector<4x324xf32>
    %c0_135 = arith.constant 0 : index
    %c0_136 = arith.constant 0 : index
    %c0_137 = arith.constant 0 : index
    %192 = vector.load %arg5[%c0_135, %c0_136, %c0_137] : memref<9x4x4xf32, #tpu.memory_space<vmem>>, vector<1x4x4xf32>
    %193 = vector.shape_cast %192 : vector<1x4x4xf32> to vector<4x4xf32>
    %cst_138 = arith.constant dense<0.000000e+00> : vector<4x324xf32>
    %194 = tpu.matmul %193, %191, %cst_138 {dimension_numbers = #tpu.dot_dimension_numbers<[1], [0], [0], [1], [0, 0, 1, 1], [], []>} : vector<4x4xf32>, vector<4x324xf32>, vector<4x324xf32> -> vector<4x324xf32>
    %195 = vector.extract_strided_slice %190 {offsets = [0, 1], sizes = [4, 324], strides = [1, 1]} : vector<4x362xf32> to vector<4x324xf32>
    %c1_139 = arith.constant 1 : index
    %c0_140 = arith.constant 0 : index
    %c0_141 = arith.constant 0 : index
    %196 = vector.load %arg5[%c1_139, %c0_140, %c0_141] : memref<9x4x4xf32, #tpu.memory_space<vmem>>, vector<1x4x4xf32>
    %197 = vector.shape_cast %196 : vector<1x4x4xf32> to vector<4x4xf32>
    %cst_142 = arith.constant dense<0.000000e+00> : vector<4x324xf32>
    %198 = tpu.matmul %197, %195, %cst_142 {dimension_numbers = #tpu.dot_dimension_numbers<[1], [0], [0], [1], [0, 0, 1, 1], [], []>} : vector<4x4xf32>, vector<4x324xf32>, vector<4x324xf32> -> vector<4x324xf32>
    %199 = arith.addf %194, %198 : vector<4x324xf32>
    %200 = vector.extract_strided_slice %190 {offsets = [0, 2], sizes = [4, 324], strides = [1, 1]} : vector<4x362xf32> to vector<4x324xf32>
    %c2_143 = arith.constant 2 : index
    %c0_144 = arith.constant 0 : index
    %c0_145 = arith.constant 0 : index
    %201 = vector.load %arg5[%c2_143, %c0_144, %c0_145] : memref<9x4x4xf32, #tpu.memory_space<vmem>>, vector<1x4x4xf32>
    %202 = vector.shape_cast %201 : vector<1x4x4xf32> to vector<4x4xf32>
    %cst_146 = arith.constant dense<0.000000e+00> : vector<4x324xf32>
    %203 = tpu.matmul %202, %200, %cst_146 {dimension_numbers = #tpu.dot_dimension_numbers<[1], [0], [0], [1], [0, 0, 1, 1], [], []>} : vector<4x4xf32>, vector<4x324xf32>, vector<4x324xf32> -> vector<4x324xf32>
    %204 = arith.addf %199, %203 : vector<4x324xf32>
    %205 = vector.extract_strided_slice %190 {offsets = [0, 18], sizes = [4, 324], strides = [1, 1]} : vector<4x362xf32> to vector<4x324xf32>
    %c3_147 = arith.constant 3 : index
    %c0_148 = arith.constant 0 : index
    %c0_149 = arith.constant 0 : index
    %206 = vector.load %arg5[%c3_147, %c0_148, %c0_149] : memref<9x4x4xf32, #tpu.memory_space<vmem>>, vector<1x4x4xf32>
    %207 = vector.shape_cast %206 : vector<1x4x4xf32> to vector<4x4xf32>
    %cst_150 = arith.constant dense<0.000000e+00> : vector<4x324xf32>
    %208 = tpu.matmul %207, %205, %cst_150 {dimension_numbers = #tpu.dot_dimension_numbers<[1], [0], [0], [1], [0, 0, 1, 1], [], []>} : vector<4x4xf32>, vector<4x324xf32>, vector<4x324xf32> -> vector<4x324xf32>
    %209 = arith.addf %204, %208 : vector<4x324xf32>
    %210 = vector.extract_strided_slice %190 {offsets = [0, 19], sizes = [4, 324], strides = [1, 1]} : vector<4x362xf32> to vector<4x324xf32>
    %c4_151 = arith.constant 4 : index
    %c0_152 = arith.constant 0 : index
    %c0_153 = arith.constant 0 : index
    %211 = vector.load %arg5[%c4_151, %c0_152, %c0_153] : memref<9x4x4xf32, #tpu.memory_space<vmem>>, vector<1x4x4xf32>
    %212 = vector.shape_cast %211 : vector<1x4x4xf32> to vector<4x4xf32>
    %cst_154 = arith.constant dense<0.000000e+00> : vector<4x324xf32>
    %213 = tpu.matmul %212, %210, %cst_154 {dimension_numbers = #tpu.dot_dimension_numbers<[1], [0], [0], [1], [0, 0, 1, 1], [], []>} : vector<4x4xf32>, vector<4x324xf32>, vector<4x324xf32> -> vector<4x324xf32>
    %214 = arith.addf %209, %213 : vector<4x324xf32>
    %215 = vector.extract_strided_slice %190 {offsets = [0, 20], sizes = [4, 324], strides = [1, 1]} : vector<4x362xf32> to vector<4x324xf32>
    %c5_155 = arith.constant 5 : index
    %c0_156 = arith.constant 0 : index
    %c0_157 = arith.constant 0 : index
    %216 = vector.load %arg5[%c5_155, %c0_156, %c0_157] : memref<9x4x4xf32, #tpu.memory_space<vmem>>, vector<1x4x4xf32>
    %217 = vector.shape_cast %216 : vector<1x4x4xf32> to vector<4x4xf32>
    %cst_158 = arith.constant dense<0.000000e+00> : vector<4x324xf32>
    %218 = tpu.matmul %217, %215, %cst_158 {dimension_numbers = #tpu.dot_dimension_numbers<[1], [0], [0], [1], [0, 0, 1, 1], [], []>} : vector<4x4xf32>, vector<4x324xf32>, vector<4x324xf32> -> vector<4x324xf32>
    %219 = arith.addf %214, %218 : vector<4x324xf32>
    %220 = vector.extract_strided_slice %190 {offsets = [0, 36], sizes = [4, 324], strides = [1, 1]} : vector<4x362xf32> to vector<4x324xf32>
    %c6_159 = arith.constant 6 : index
    %c0_160 = arith.constant 0 : index
    %c0_161 = arith.constant 0 : index
    %221 = vector.load %arg5[%c6_159, %c0_160, %c0_161] : memref<9x4x4xf32, #tpu.memory_space<vmem>>, vector<1x4x4xf32>
    %222 = vector.shape_cast %221 : vector<1x4x4xf32> to vector<4x4xf32>
    %cst_162 = arith.constant dense<0.000000e+00> : vector<4x324xf32>
    %223 = tpu.matmul %222, %220, %cst_162 {dimension_numbers = #tpu.dot_dimension_numbers<[1], [0], [0], [1], [0, 0, 1, 1], [], []>} : vector<4x4xf32>, vector<4x324xf32>, vector<4x324xf32> -> vector<4x324xf32>
    %224 = arith.addf %219, %223 : vector<4x324xf32>
    %225 = vector.extract_strided_slice %190 {offsets = [0, 37], sizes = [4, 324], strides = [1, 1]} : vector<4x362xf32> to vector<4x324xf32>
    %c7_163 = arith.constant 7 : index
    %c0_164 = arith.constant 0 : index
    %c0_165 = arith.constant 0 : index
    %226 = vector.load %arg5[%c7_163, %c0_164, %c0_165] : memref<9x4x4xf32, #tpu.memory_space<vmem>>, vector<1x4x4xf32>
    %227 = vector.shape_cast %226 : vector<1x4x4xf32> to vector<4x4xf32>
    %cst_166 = arith.constant dense<0.000000e+00> : vector<4x324xf32>
    %228 = tpu.matmul %227, %225, %cst_166 {dimension_numbers = #tpu.dot_dimension_numbers<[1], [0], [0], [1], [0, 0, 1, 1], [], []>} : vector<4x4xf32>, vector<4x324xf32>, vector<4x324xf32> -> vector<4x324xf32>
    %229 = arith.addf %224, %228 : vector<4x324xf32>
    %230 = vector.extract_strided_slice %190 {offsets = [0, 38], sizes = [4, 324], strides = [1, 1]} : vector<4x362xf32> to vector<4x324xf32>
    %c8_167 = arith.constant 8 : index
    %c0_168 = arith.constant 0 : index
    %c0_169 = arith.constant 0 : index
    %231 = vector.load %arg5[%c8_167, %c0_168, %c0_169] : memref<9x4x4xf32, #tpu.memory_space<vmem>>, vector<1x4x4xf32>
    %232 = vector.shape_cast %231 : vector<1x4x4xf32> to vector<4x4xf32>
    %cst_170 = arith.constant dense<0.000000e+00> : vector<4x324xf32>
    %233 = tpu.matmul %232, %230, %cst_170 {dimension_numbers = #tpu.dot_dimension_numbers<[1], [0], [0], [1], [0, 0, 1, 1], [], []>} : vector<4x4xf32>, vector<4x324xf32>, vector<4x324xf32> -> vector<4x324xf32>
    %234 = arith.addf %229, %233 : vector<4x324xf32>
    %cst_171 = arith.constant 2.500000e-01 : f32
    %235 = vector.broadcast %cst_171 : f32 to vector<4x324xf32>
    %236 = arith.mulf %235, %118 : vector<4x324xf32>
    %cst_172 = arith.constant 7.500000e-01 : f32
    %237 = vector.broadcast %cst_172 : f32 to vector<4x324xf32>
    %238 = arith.mulf %237, %234 : vector<4x324xf32>
    %239 = arith.addf %236, %238 : vector<4x324xf32>
    %240 = arith.addf %239, %2 : vector<4x324xf32>
    %cst_173 = arith.constant 0.000000e+00 : f32
    %241 = vector.broadcast %cst_173 : f32 to vector<4x324xf32>
    %242 = arith.maximumf %240, %241 : vector<4x324xf32>
    %243 = vector.extract_strided_slice %242 {offsets = [0, 19], sizes = [4, 16], strides = [1, 1]} : vector<4x324xf32> to vector<4x16xf32>
    %c0_174 = arith.constant 0 : index
    %c0_175 = arith.constant 0 : index
    %c0_176 = arith.constant 0 : index
    %c0_177 = arith.constant 0 : index
    %244 = vector.load %arg8[%c0_174, %c0_175, %c0_176, %c0_177] : memref<1x4x16x16xf32, #tpu.memory_space<vmem>>, vector<1x4x1x16xf32>
    %245 = vector.shape_cast %244 : vector<1x4x1x16xf32> to vector<4x16xf32>
    %246 = vector.shape_cast %243 : vector<4x16xf32> to vector<1x4x1x16xf32>
    tpu.vector_store %arg8[%c0_174, %c0_175, %c0_176, %c0_177], %246 {strides = array<i32>} : memref<1x4x16x16xf32, #tpu.memory_space<vmem>>, vector<1x4x1x16xf32>,
    %247 = vector.extract_strided_slice %242 {offsets = [0, 37], sizes = [4, 16], strides = [1, 1]} : vector<4x324xf32> to vector<4x16xf32>
    %c0_178 = arith.constant 0 : index
    %c0_179 = arith.constant 0 : index
    %c1_180 = arith.constant 1 : index
    %c0_181 = arith.constant 0 : index
    %248 = vector.load %arg8[%c0_178, %c0_179, %c1_180, %c0_181] : memref<1x4x16x16xf32, #tpu.memory_space<vmem>>, vector<1x4x1x16xf32>
    %249 = vector.shape_cast %248 : vector<1x4x1x16xf32> to vector<4x16xf32>
    %250 = vector.shape_cast %247 : vector<4x16xf32> to vector<1x4x1x16xf32>
    tpu.vector_store %arg8[%c0_178, %c0_179, %c1_180, %c0_181], %250 {strides = array<i32>} : memref<1x4x16x16xf32, #tpu.memory_space<vmem>>, vector<1x4x1x16xf32>,
    %251 = vector.extract_strided_slice %242 {offsets = [0, 55], sizes = [4, 16], strides = [1, 1]} : vector<4x324xf32> to vector<4x16xf32>
    %c0_182 = arith.constant 0 : index
    %c0_183 = arith.constant 0 : index
    %c2_184 = arith.constant 2 : index
    %c0_185 = arith.constant 0 : index
    %252 = vector.load %arg8[%c0_182, %c0_183, %c2_184, %c0_185] : memref<1x4x16x16xf32, #tpu.memory_space<vmem>>, vector<1x4x1x16xf32>
    %253 = vector.shape_cast %252 : vector<1x4x1x16xf32> to vector<4x16xf32>
    %254 = vector.shape_cast %251 : vector<4x16xf32> to vector<1x4x1x16xf32>
    tpu.vector_store %arg8[%c0_182, %c0_183, %c2_184, %c0_185], %254 {strides = array<i32>} : memref<1x4x16x16xf32, #tpu.memory_space<vmem>>, vector<1x4x1x16xf32>,
    %255 = vector.extract_strided_slice %242 {offsets = [0, 73], sizes = [4, 16], strides = [1, 1]} : vector<4x324xf32> to vector<4x16xf32>
    %c0_186 = arith.constant 0 : index
    %c0_187 = arith.constant 0 : index
    %c3_188 = arith.constant 3 : index
    %c0_189 = arith.constant 0 : index
    %256 = vector.load %arg8[%c0_186, %c0_187, %c3_188, %c0_189] : memref<1x4x16x16xf32, #tpu.memory_space<vmem>>, vector<1x4x1x16xf32>
    %257 = vector.shape_cast %256 : vector<1x4x1x16xf32> to vector<4x16xf32>
    %258 = vector.shape_cast %255 : vector<4x16xf32> to vector<1x4x1x16xf32>
    tpu.vector_store %arg8[%c0_186, %c0_187, %c3_188, %c0_189], %258 {strides = array<i32>} : memref<1x4x16x16xf32, #tpu.memory_space<vmem>>, vector<1x4x1x16xf32>,
    %259 = vector.extract_strided_slice %242 {offsets = [0, 91], sizes = [4, 16], strides = [1, 1]} : vector<4x324xf32> to vector<4x16xf32>
    %c0_190 = arith.constant 0 : index
    %c0_191 = arith.constant 0 : index
    %c4_192 = arith.constant 4 : index
    %c0_193 = arith.constant 0 : index
    %260 = vector.load %arg8[%c0_190, %c0_191, %c4_192, %c0_193] : memref<1x4x16x16xf32, #tpu.memory_space<vmem>>, vector<1x4x1x16xf32>
    %261 = vector.shape_cast %260 : vector<1x4x1x16xf32> to vector<4x16xf32>
    %262 = vector.shape_cast %259 : vector<4x16xf32> to vector<1x4x1x16xf32>
    tpu.vector_store %arg8[%c0_190, %c0_191, %c4_192, %c0_193], %262 {strides = array<i32>} : memref<1x4x16x16xf32, #tpu.memory_space<vmem>>, vector<1x4x1x16xf32>,
    %263 = vector.extract_strided_slice %242 {offsets = [0, 109], sizes = [4, 16], strides = [1, 1]} : vector<4x324xf32> to vector<4x16xf32>
    %c0_194 = arith.constant 0 : index
    %c0_195 = arith.constant 0 : index
    %c5_196 = arith.constant 5 : index
    %c0_197 = arith.constant 0 : index
    %264 = vector.load %arg8[%c0_194, %c0_195, %c5_196, %c0_197] : memref<1x4x16x16xf32, #tpu.memory_space<vmem>>, vector<1x4x1x16xf32>
    %265 = vector.shape_cast %264 : vector<1x4x1x16xf32> to vector<4x16xf32>
    %266 = vector.shape_cast %263 : vector<4x16xf32> to vector<1x4x1x16xf32>
    tpu.vector_store %arg8[%c0_194, %c0_195, %c5_196, %c0_197], %266 {strides = array<i32>} : memref<1x4x16x16xf32, #tpu.memory_space<vmem>>, vector<1x4x1x16xf32>,
    %267 = vector.extract_strided_slice %242 {offsets = [0, 127], sizes = [4, 16], strides = [1, 1]} : vector<4x324xf32> to vector<4x16xf32>
    %c0_198 = arith.constant 0 : index
    %c0_199 = arith.constant 0 : index
    %c6_200 = arith.constant 6 : index
    %c0_201 = arith.constant 0 : index
    %268 = vector.load %arg8[%c0_198, %c0_199, %c6_200, %c0_201] : memref<1x4x16x16xf32, #tpu.memory_space<vmem>>, vector<1x4x1x16xf32>
    %269 = vector.shape_cast %268 : vector<1x4x1x16xf32> to vector<4x16xf32>
    %270 = vector.shape_cast %267 : vector<4x16xf32> to vector<1x4x1x16xf32>
    tpu.vector_store %arg8[%c0_198, %c0_199, %c6_200, %c0_201], %270 {strides = array<i32>} : memref<1x4x16x16xf32, #tpu.memory_space<vmem>>, vector<1x4x1x16xf32>,
    %271 = vector.extract_strided_slice %242 {offsets = [0, 145], sizes = [4, 16], strides = [1, 1]} : vector<4x324xf32> to vector<4x16xf32>
    %c0_202 = arith.constant 0 : index
    %c0_203 = arith.constant 0 : index
    %c7_204 = arith.constant 7 : index
    %c0_205 = arith.constant 0 : index
    %272 = vector.load %arg8[%c0_202, %c0_203, %c7_204, %c0_205] : memref<1x4x16x16xf32, #tpu.memory_space<vmem>>, vector<1x4x1x16xf32>
    %273 = vector.shape_cast %272 : vector<1x4x1x16xf32> to vector<4x16xf32>
    %274 = vector.shape_cast %271 : vector<4x16xf32> to vector<1x4x1x16xf32>
    tpu.vector_store %arg8[%c0_202, %c0_203, %c7_204, %c0_205], %274 {strides = array<i32>} : memref<1x4x16x16xf32, #tpu.memory_space<vmem>>, vector<1x4x1x16xf32>,
    %275 = vector.extract_strided_slice %242 {offsets = [0, 163], sizes = [4, 16], strides = [1, 1]} : vector<4x324xf32> to vector<4x16xf32>
    %c0_206 = arith.constant 0 : index
    %c0_207 = arith.constant 0 : index
    %c8_208 = arith.constant 8 : index
    %c0_209 = arith.constant 0 : index
    %276 = vector.load %arg8[%c0_206, %c0_207, %c8_208, %c0_209] : memref<1x4x16x16xf32, #tpu.memory_space<vmem>>, vector<1x4x1x16xf32>
    %277 = vector.shape_cast %276 : vector<1x4x1x16xf32> to vector<4x16xf32>
    %278 = vector.shape_cast %275 : vector<4x16xf32> to vector<1x4x1x16xf32>
    tpu.vector_store %arg8[%c0_206, %c0_207, %c8_208, %c0_209], %278 {strides = array<i32>} : memref<1x4x16x16xf32, #tpu.memory_space<vmem>>, vector<1x4x1x16xf32>,
    %279 = vector.extract_strided_slice %242 {offsets = [0, 181], sizes = [4, 16], strides = [1, 1]} : vector<4x324xf32> to vector<4x16xf32>
    %c0_210 = arith.constant 0 : index
    %c0_211 = arith.constant 0 : index
    %c9 = arith.constant 9 : index
    %c0_212 = arith.constant 0 : index
    %280 = vector.load %arg8[%c0_210, %c0_211, %c9, %c0_212] : memref<1x4x16x16xf32, #tpu.memory_space<vmem>>, vector<1x4x1x16xf32>
    %281 = vector.shape_cast %280 : vector<1x4x1x16xf32> to vector<4x16xf32>
    %282 = vector.shape_cast %279 : vector<4x16xf32> to vector<1x4x1x16xf32>
    tpu.vector_store %arg8[%c0_210, %c0_211, %c9, %c0_212], %282 {strides = array<i32>} : memref<1x4x16x16xf32, #tpu.memory_space<vmem>>, vector<1x4x1x16xf32>,
    %283 = vector.extract_strided_slice %242 {offsets = [0, 199], sizes = [4, 16], strides = [1, 1]} : vector<4x324xf32> to vector<4x16xf32>
    %c0_213 = arith.constant 0 : index
    %c0_214 = arith.constant 0 : index
    %c10 = arith.constant 10 : index
    %c0_215 = arith.constant 0 : index
    %284 = vector.load %arg8[%c0_213, %c0_214, %c10, %c0_215] : memref<1x4x16x16xf32, #tpu.memory_space<vmem>>, vector<1x4x1x16xf32>
    %285 = vector.shape_cast %284 : vector<1x4x1x16xf32> to vector<4x16xf32>
    %286 = vector.shape_cast %283 : vector<4x16xf32> to vector<1x4x1x16xf32>
    tpu.vector_store %arg8[%c0_213, %c0_214, %c10, %c0_215], %286 {strides = array<i32>} : memref<1x4x16x16xf32, #tpu.memory_space<vmem>>, vector<1x4x1x16xf32>,
    %287 = vector.extract_strided_slice %242 {offsets = [0, 217], sizes = [4, 16], strides = [1, 1]} : vector<4x324xf32> to vector<4x16xf32>
    %c0_216 = arith.constant 0 : index
    %c0_217 = arith.constant 0 : index
    %c11 = arith.constant 11 : index
    %c0_218 = arith.constant 0 : index
    %288 = vector.load %arg8[%c0_216, %c0_217, %c11, %c0_218] : memref<1x4x16x16xf32, #tpu.memory_space<vmem>>, vector<1x4x1x16xf32>
    %289 = vector.shape_cast %288 : vector<1x4x1x16xf32> to vector<4x16xf32>
    %290 = vector.shape_cast %287 : vector<4x16xf32> to vector<1x4x1x16xf32>
    tpu.vector_store %arg8[%c0_216, %c0_217, %c11, %c0_218], %290 {strides = array<i32>} : memref<1x4x16x16xf32, #tpu.memory_space<vmem>>, vector<1x4x1x16xf32>,
    %291 = vector.extract_strided_slice %242 {offsets = [0, 235], sizes = [4, 16], strides = [1, 1]} : vector<4x324xf32> to vector<4x16xf32>
    %c0_219 = arith.constant 0 : index
    %c0_220 = arith.constant 0 : index
    %c12 = arith.constant 12 : index
    %c0_221 = arith.constant 0 : index
    %292 = vector.load %arg8[%c0_219, %c0_220, %c12, %c0_221] : memref<1x4x16x16xf32, #tpu.memory_space<vmem>>, vector<1x4x1x16xf32>
    %293 = vector.shape_cast %292 : vector<1x4x1x16xf32> to vector<4x16xf32>
    %294 = vector.shape_cast %291 : vector<4x16xf32> to vector<1x4x1x16xf32>
    tpu.vector_store %arg8[%c0_219, %c0_220, %c12, %c0_221], %294 {strides = array<i32>} : memref<1x4x16x16xf32, #tpu.memory_space<vmem>>, vector<1x4x1x16xf32>,
    %295 = vector.extract_strided_slice %242 {offsets = [0, 253], sizes = [4, 16], strides = [1, 1]} : vector<4x324xf32> to vector<4x16xf32>
    %c0_222 = arith.constant 0 : index
    %c0_223 = arith.constant 0 : index
    %c13 = arith.constant 13 : index
    %c0_224 = arith.constant 0 : index
    %296 = vector.load %arg8[%c0_222, %c0_223, %c13, %c0_224] : memref<1x4x16x16xf32, #tpu.memory_space<vmem>>, vector<1x4x1x16xf32>
    %297 = vector.shape_cast %296 : vector<1x4x1x16xf32> to vector<4x16xf32>
    %298 = vector.shape_cast %295 : vector<4x16xf32> to vector<1x4x1x16xf32>
    tpu.vector_store %arg8[%c0_222, %c0_223, %c13, %c0_224], %298 {strides = array<i32>} : memref<1x4x16x16xf32, #tpu.memory_space<vmem>>, vector<1x4x1x16xf32>,
    %299 = vector.extract_strided_slice %242 {offsets = [0, 271], sizes = [4, 16], strides = [1, 1]} : vector<4x324xf32> to vector<4x16xf32>
    %c0_225 = arith.constant 0 : index
    %c0_226 = arith.constant 0 : index
    %c14 = arith.constant 14 : index
    %c0_227 = arith.constant 0 : index
    %300 = vector.load %arg8[%c0_225, %c0_226, %c14, %c0_227] : memref<1x4x16x16xf32, #tpu.memory_space<vmem>>, vector<1x4x1x16xf32>
    %301 = vector.shape_cast %300 : vector<1x4x1x16xf32> to vector<4x16xf32>
    %302 = vector.shape_cast %299 : vector<4x16xf32> to vector<1x4x1x16xf32>
    tpu.vector_store %arg8[%c0_225, %c0_226, %c14, %c0_227], %302 {strides = array<i32>} : memref<1x4x16x16xf32, #tpu.memory_space<vmem>>, vector<1x4x1x16xf32>,
    %303 = vector.extract_strided_slice %242 {offsets = [0, 289], sizes = [4, 16], strides = [1, 1]} : vector<4x324xf32> to vector<4x16xf32>
    %c0_228 = arith.constant 0 : index
    %c0_229 = arith.constant 0 : index
    %c15 = arith.constant 15 : index
    %c0_230 = arith.constant 0 : index
    %304 = vector.load %arg8[%c0_228, %c0_229, %c15, %c0_230] : memref<1x4x16x16xf32, #tpu.memory_space<vmem>>, vector<1x4x1x16xf32>
    %305 = vector.shape_cast %304 : vector<1x4x1x16xf32> to vector<4x16xf32>
    %306 = vector.shape_cast %303 : vector<4x16xf32> to vector<1x4x1x16xf32>
    tpu.vector_store %arg8[%c0_228, %c0_229, %c15, %c0_230], %306 {strides = array<i32>} : memref<1x4x16x16xf32, #tpu.memory_space<vmem>>, vector<1x4x1x16xf32>,
    return
  }
  func.func @transform_0(%arg0: i32) -> (i32, i32, i32) {
    %c0_i32 = arith.constant 0 : i32
    %c0_i32_0 = arith.constant 0 : i32
    %c0_i32_1 = arith.constant 0 : i32
    return %arg0, %c0_i32, %c0_i32_0 : i32, i32, i32
  }
  func.func @transform_1(%arg0: i32) -> (i32, i32, i32) {
    %c0_i32 = arith.constant 0 : i32
    %c0_i32_0 = arith.constant 0 : i32
    %c0_i32_1 = arith.constant 0 : i32
    %c0_i32_2 = arith.constant 0 : i32
    return %c0_i32, %c0_i32_0, %c0_i32_1 : i32, i32, i32
  }
  func.func @transform_2(%arg0: i32) -> (i32, i32, i32) {
    %c0_i32 = arith.constant 0 : i32
    %c0_i32_0 = arith.constant 0 : i32
    %c0_i32_1 = arith.constant 0 : i32
    %c0_i32_2 = arith.constant 0 : i32
    return %c0_i32, %c0_i32_0, %c0_i32_1 : i32, i32, i32
  }
  func.func @transform_3(%arg0: i32) -> (i32, i32, i32) {
    %c0_i32 = arith.constant 0 : i32
    %c0_i32_0 = arith.constant 0 : i32
    %c0_i32_1 = arith.constant 0 : i32
    %c0_i32_2 = arith.constant 0 : i32
    return %c0_i32, %c0_i32_0, %c0_i32_1 : i32, i32, i32
  }
  func.func @transform_4(%arg0: i32) -> (i32, i32, i32) {
    %c0_i32 = arith.constant 0 : i32
    %c0_i32_0 = arith.constant 0 : i32
    %c0_i32_1 = arith.constant 0 : i32
    %c0_i32_2 = arith.constant 0 : i32
    return %c0_i32, %c0_i32_0, %c0_i32_1 : i32, i32, i32
  }
  func.func @transform_5(%arg0: i32) -> (i32, i32, i32) {
    %c0_i32 = arith.constant 0 : i32
    %c0_i32_0 = arith.constant 0 : i32
    %c0_i32_1 = arith.constant 0 : i32
    %c0_i32_2 = arith.constant 0 : i32
    return %c0_i32, %c0_i32_0, %c0_i32_1 : i32, i32, i32
  }
  func.func @transform_6(%arg0: i32) -> (i32, i32) {
    %c0_i32 = arith.constant 0 : i32
    %c0_i32_0 = arith.constant 0 : i32
    %c0_i32_1 = arith.constant 0 : i32
    return %c0_i32, %c0_i32_0 : i32, i32
  }
  func.func @transform_7(%arg0: i32) -> (i32, i32, i32, i32) {
    %c0_i32 = arith.constant 0 : i32
    %c0_i32_0 = arith.constant 0 : i32
    %c0_i32_1 = arith.constant 0 : i32
    %c0_i32_2 = arith.constant 0 : i32
    return %arg0, %c0_i32, %c0_i32_0, %c0_i32_1 : i32, i32, i32, i32
  }
}

</mosaic_0001>

<llo_original>
// kernel: rk2_forward.1
$region0: #{rk2_forward.1}
  #allocation0 [shape = 'u32[]', space=smem, size = 0x4, offset = 0x4, fixed_abs, tag = 'smem constant byte address 0x4 - core index']
  #allocation1 [shape = 'u32[144,128]{1,0:T(1,128)}', space=vmem, size = 0x12000, scoped, tag = 'internal scratch']
  %s0 = inlined_call_operand.vmem [shape: f32[2,4,324], index: 0, kind: input, shape index: {}]
  %s1 = inlined_call_operand.vmem [shape: f32[9,4,4], index: 1, kind: input, shape index: {}]
  %s2 = inlined_call_operand.vmem [shape: f32[9,4,4], index: 2, kind: input, shape index: {}]
  %s3 = inlined_call_operand.vmem [shape: f32[9,4,4], index: 3, kind: input, shape index: {}]
  %s4 = inlined_call_operand.vmem [shape: f32[9,4,4], index: 4, kind: input, shape index: {}]
  %s5 = inlined_call_operand.vmem [shape: f32[8,4,1], index: 5, kind: input, shape index: {}]
  %s6 = inlined_call_operand.vmem [shape: f32[1,324], index: 6, kind: input, shape index: {}]
  %s7 = inlined_call_operand.hbm [shape: f32[2,4,16,16], index: 7, kind: output, shape index: {}]
  %s8 = sld [smem:[#allocation0]]
  $region61: #{rk2_forward.1} parent=0
    _
  %s10 = ssub.s32 1, %s8
  %s11 = scalar_select 0, %s10, %s8
  $region1: #{rk2_forward.1} parent=0
    #allocation2 [shape = 'u8[65536]{0}', space=vmem, size = 0x10000, scoped, tag = 'output window, operand 0']
    #allocation3 [shape = 's32[2]{0}', space=sflag, size = 0x8, scoped, tag = 'scoped memory for rk2_forward.1']
    %12 = vsyncpa [#allocation3], 0
    %s13 = scalar_lea.sflag [#allocation3], 1
    %14 = vsyncpa %s13, 0
    loop: start=0, step=1, limit=4
    $region2: #{rk2_forward.1} parent=1 // loop_pre_header
      _
    $region3: #{rk2_forward.1} parent=1 // loop_header
      %s16 = sphi 0, %s20
      %p17 = scmp.ge.s32.totalorder %s16, 4
      %s26 = sphi 0, %s28
      %s29 = sphi 0, %s26
      %s30 = sphi 0, %s29
      %s46 = sphi 0, %s30
      %s50 = sphi 0, %s50
      %s52 = sphi 0, %s50
      %s53 = sphi 0, %s52
      %s67 = sphi 0, %s53
      %s71 = sphi 0, %s71
      %s73 = sphi 0, %s71
      %s74 = sphi 0, %s73
      %s88 = sphi 0, %s74
      %s92 = sphi 0, %s92
      %s94 = sphi 0, %s92
      %s95 = sphi 0, %s94
      %s109 = sphi 0, %s95
      %s113 = sphi 0, %s113
      %s115 = sphi 0, %s113
      %s116 = sphi 0, %s115
      %s130 = sphi 0, %s116
      %s134 = sphi 0, %s134
      %s136 = sphi 0, %s134
      %s137 = sphi 0, %s136
      %s151 = sphi 0, %s137
      %s155 = sphi 0, %s155
      %s157 = sphi 0, %s155
      %s158 = sphi 0, %s157
      %s172 = sphi 0, %s158
      %s178 = sphi 0, %s180
      %s181 = sphi 0, %s178
      %s182 = sphi 0, %s181
      %s198 = sphi 0, %s182
    $region4: #{rk2_forward.1} parent=1 // loop_header_branch
      %19 = sbr.rel (%p17) target = $region8
    $region5: #{rk2_forward.1} parent=1 // loop_body
      %s21 = ssub.s32 %s16, 1
      %s22 = ssub.s32 %s16, 2
      %s23 = sadd.s32 %s16, 1
      %s24 = ssub.s32 %s16, %s23
      %p25 = scmp.eq.s32.totalorder %s24, 0
      %s27 = sadd.s32 %s26, 1
      %s28 = scalar_select %p25, %s26, %s27
      %p31 = pneg %p25
      %p32 = scmp.eq.s32.totalorder %s16, 1
      %p33 = por %p31, %p32
      %p34 = scmp.ne.s32.totalorder %s26, %s29
      %p35 = scmp.eq.s32.totalorder %s16, 0
      %p36 = por %p34, %p35
      %p37 = scmp.ne.s32.totalorder %s26, %s29
      %p38 = scmp.eq.s32.totalorder %s21, 1
      %p39 = por %p37, %p38
      %p40 = scmp.ne.s32.totalorder %s29, %s30
      %p41 = scmp.eq.s32.totalorder %s21, 0
      %p42 = por %p40, %p41
      %p43 = scmp.ne.s32.totalorder %s29, %s30
      %p44 = scmp.eq.s32.totalorder %s22, 1
      %p45 = por %p43, %p44
      %p47 = scmp.ne.s32.totalorder %s30, %s46
      %p48 = scmp.eq.s32.totalorder %s22, 0
      %p49 = por %p47, %p48
      %s51 = sadd.s32 %s50, 1
      %p54 = scmp.eq.s32.totalorder %s16, 1
      %p55 = scmp.ne.s32.totalorder %s50, %s52
      %p56 = scmp.eq.s32.totalorder %s16, 0
      %p57 = por %p55, %p56
      %p58 = scmp.ne.s32.totalorder %s50, %s52
      %p59 = scmp.eq.s32.totalorder %s21, 1
      %p60 = por %p58, %p59
      %p61 = scmp.ne.s32.totalorder %s52, %s53
      %p62 = scmp.eq.s32.totalorder %s21, 0
      %p63 = por %p61, %p62
      %p64 = scmp.ne.s32.totalorder %s52, %s53
      %p65 = scmp.eq.s32.totalorder %s22, 1
      %p66 = por %p64, %p65
      %p68 = scmp.ne.s32.totalorder %s53, %s67
      %p69 = scmp.eq.s32.totalorder %s22, 0
      %p70 = por %p68, %p69
      %s72 = sadd.s32 %s71, 1
      %p75 = scmp.eq.s32.totalorder %s16, 1
      %p76 = scmp.ne.s32.totalorder %s71, %s73
      %p77 = scmp.eq.s32.totalorder %s16, 0
      %p78 = por %p76, %p77
      %p79 = scmp.ne.s32.totalorder %s71, %s73
      %p80 = scmp.eq.s32.totalorder %s21, 1
      %p81 = por %p79, %p80
      %p82 = scmp.ne.s32.totalorder %s73, %s74
      %p83 = scmp.eq.s32.totalorder %s21, 0
      %p84 = por %p82, %p83
      %p85 = scmp.ne.s32.totalorder %s73, %s74
      %p86 = scmp.eq.s32.totalorder %s22, 1
      %p87 = por %p85, %p86
      %p89 = scmp.ne.s32.totalorder %s74, %s88
      %p90 = scmp.eq.s32.totalorder %s22, 0
      %p91 = por %p89, %p90
      %s93 = sadd.s32 %s92, 1
      %p96 = scmp.eq.s32.totalorder %s16, 1
      %p97 = scmp.ne.s32.totalorder %s92, %s94
      %p98 = scmp.eq.s32.totalorder %s16, 0
      %p99 = por %p97, %p98
      %p100 = scmp.ne.s32.totalorder %s92, %s94
      %p101 = scmp.eq.s32.totalorder %s21, 1
      %p102 = por %p100, %p101
      %p103 = scmp.ne.s32.totalorder %s94, %s95
      %p104 = scmp.eq.s32.totalorder %s21, 0
      %p105 = por %p103, %p104
      %p106 = scmp.ne.s32.totalorder %s94, %s95
      %p107 = scmp.eq.s32.totalorder %s22, 1
      %p108 = por %p106, %p107
      %p110 = scmp.ne.s32.totalorder %s95, %s109
      %p111 = scmp.eq.s32.totalorder %s22, 0
      %p112 = por %p110, %p111
      %s114 = sadd.s32 %s113, 1
      %p117 = scmp.eq.s32.totalorder %s16, 1
      %p118 = scmp.ne.s32.totalorder %s113, %s115
      %p119 = scmp.eq.s32.totalorder %s16, 0
      %p120 = por %p118, %p119
      %p121 = scmp.ne.s32.totalorder %s113, %s115
      %p122 = scmp.eq.s32.totalorder %s21, 1
      %p123 = por %p121, %p122
      %p124 = scmp.ne.s32.totalorder %s115, %s116
      %p125 = scmp.eq.s32.totalorder %s21, 0
      %p126 = por %p124, %p125
      %p127 = scmp.ne.s32.totalorder %s115, %s116
      %p128 = scmp.eq.s32.totalorder %s22, 1
      %p129 = por %p127, %p128
      %p131 = scmp.ne.s32.totalorder %s116, %s130
      %p132 = scmp.eq.s32.totalorder %s22, 0
      %p133 = por %p131, %p132
      %s135 = sadd.s32 %s134, 1
      %p138 = scmp.eq.s32.totalorder %s16, 1
      %p139 = scmp.ne.s32.totalorder %s134, %s136
      %p140 = scmp.eq.s32.totalorder %s16, 0
      %p141 = por %p139, %p140
      %p142 = scmp.ne.s32.totalorder %s134, %s136
      %p143 = scmp.eq.s32.totalorder %s21, 1
      %p144 = por %p142, %p143
      %p145 = scmp.ne.s32.totalorder %s136, %s137
      %p146 = scmp.eq.s32.totalorder %s21, 0
      %p147 = por %p145, %p146
      %p148 = scmp.ne.s32.totalorder %s136, %s137
      %p149 = scmp.eq.s32.totalorder %s22, 1
      %p150 = por %p148, %p149
      %p152 = scmp.ne.s32.totalorder %s137, %s151
      %p153 = scmp.eq.s32.totalorder %s22, 0
      %p154 = por %p152, %p153
      %s156 = sadd.s32 %s155, 1
      %p159 = scmp.eq.s32.totalorder %s16, 1
      %p160 = scmp.ne.s32.totalorder %s155, %s157
      %p161 = scmp.eq.s32.totalorder %s16, 0
      %p162 = por %p160, %p161
      %p163 = scmp.ne.s32.totalorder %s155, %s157
      %p164 = scmp.eq.s32.totalorder %s21, 1
      %p165 = por %p163, %p164
      %p166 = scmp.ne.s32.totalorder %s157, %s158
      %p167 = scmp.eq.s32.totalorder %s21, 0
      %p168 = por %p166, %p167
      %p169 = scmp.ne.s32.totalorder %s157, %s158
      %p170 = scmp.eq.s32.totalorder %s22, 1
      %p171 = por %p169, %p170
      %p173 = scmp.ne.s32.totalorder %s158, %s172
      %p174 = scmp.eq.s32.totalorder %s22, 0
      %p175 = por %p173, %p174
      %s176 = ssub.s32 %s16, %s23
      %p177 = scmp.eq.s32.totalorder %s176, 0
      %s179 = sadd.s32 %s178, 1
      %s180 = scalar_select %p177, %s178, %s179
      %p183 = pneg %p177
      %p184 = scmp.eq.s32.totalorder %s16, 1
      %p185 = por %p183, %p184
      %p186 = scmp.ne.s32.totalorder %s178, %s181
      %p187 = scmp.eq.s32.totalorder %s16, 0
      %p188 = por %p186, %p187
      %p189 = scmp.ne.s32.totalorder %s178, %s181
      %p190 = scmp.eq.s32.totalorder %s21, 1
      %p191 = por %p189, %p190
      %p192 = scmp.ne.s32.totalorder %s181, %s182
      %p193 = scmp.eq.s32.totalorder %s21, 0
      %p194 = por %p192, %p193
      %p195 = scmp.ne.s32.totalorder %s181, %s182
      %p196 = scmp.eq.s32.totalorder %s22, 1
      %p197 = por %p195, %p196
      %p199 = scmp.ne.s32.totalorder %s182, %s198
      %p200 = scmp.eq.s32.totalorder %s22, 0
      %p201 = por %p199, %p200
      %p202 = scmp.le.s32.totalorder 1, %s16
      %p203 = scmp.lt.s32.totalorder %s16, 3
      %p204 = pnand %p202, %p203
      %p205 = pneg %p204
      // Predicated region
      $region9: #{rk2_forward.1} parent=5 // pred_check
        _
      $region10: #{rk2_forward.1} parent=5 // pred_check_branch
        %207 = sbr.rel (%p204) target = $region12
      $region11: #{rk2_forward.1} parent=5 // pred_region
        %s208 = ssub.s32 %s16, 1
        // Predicated region
        $region13: #{rk2_forward.1} parent=11 // pred_check
          %p209 = pneg %p63
        $region14: #{rk2_forward.1} parent=11 // pred_check_branch
          %211 = sbr.rel (%p209) target = $region16
        $region15: #{rk2_forward.1} parent=11 // pred_region
          _
        $region16: #{rk2_forward.1} parent=11 // pred_fallthru
          _
        // Predicated region
        $region17: #{rk2_forward.1} parent=11 // pred_check
          %p212 = pneg %p84
        $region18: #{rk2_forward.1} parent=11 // pred_check_branch
          %214 = sbr.rel (%p212) target = $region20
        $region19: #{rk2_forward.1} parent=11 // pred_region
          _
        $region20: #{rk2_forward.1} parent=11 // pred_fallthru
          _
        // Predicated region
        $region21: #{rk2_forward.1} parent=11 // pred_check
          %p215 = pneg %p105
        $region22: #{rk2_forward.1} parent=11 // pred_check_branch
          %217 = sbr.rel (%p215) target = $region24
        $region23: #{rk2_forward.1} parent=11 // pred_region
          _
        $region24: #{rk2_forward.1} parent=11 // pred_fallthru
          _
        // Predicated region
        $region25: #{rk2_forward.1} parent=11 // pred_check
          %p218 = pneg %p126
        $region26: #{rk2_forward.1} parent=11 // pred_check_branch
          %220 = sbr.rel (%p218) target = $region28
        $region27: #{rk2_forward.1} parent=11 // pred_region
          _
        $region28: #{rk2_forward.1} parent=11 // pred_fallthru
          _
        // Predicated region
        $region29: #{rk2_forward.1} parent=11 // pred_check
          %p221 = pneg %p147
        $region30: #{rk2_forward.1} parent=11 // pred_check_branch
          %223 = sbr.rel (%p221) target = $region32
        $region31: #{rk2_forward.1} parent=11 // pred_region
          _
        $region32: #{rk2_forward.1} parent=11 // pred_fallthru
          _
        // Predicated region
        $region33: #{rk2_forward.1} parent=11 // pred_check
          %p224 = pneg %p168
        $region34: #{rk2_forward.1} parent=11 // pred_check_branch
          %226 = sbr.rel (%p224) target = $region36
        $region35: #{rk2_forward.1} parent=11 // pred_region
          _
        $region36: #{rk2_forward.1} parent=11 // pred_fallthru
          _
      $region12: #{rk2_forward.1} parent=5 // pred_fallthru
        _
      %p227 = scmp.lt.s32.totalorder %s16, 2
      // Predicated region
      $region37: #{rk2_forward.1} parent=5 // pred_check
        %p228 = pneg %p227
      $region38: #{rk2_forward.1} parent=5 // pred_check_branch
        %230 = sbr.rel (%p228) target = $region40
      $region39: #{rk2_forward.1} parent=5 // pred_region
        // Predicated region
        $region41: #{rk2_forward.1} parent=39 // pred_check
          %p231 = pneg %p36
        $region42: #{rk2_forward.1} parent=39 // pred_check_branch
          %233 = sbr.rel (%p231) target = $region44
        $region43: #{rk2_forward.1} parent=39 // pred_region
          %p234 = scmp.lt.s32.totalorder %s16, 1
          %s235 = scalar_select %p234, %s16, 1
          %s236 = smul.addr %s235, 3
          %s237 = smul.addr %s236, 4
          %s238 = scalar_lea.vmem %s0, %s237
        $region44: #{rk2_forward.1} parent=39 // pred_fallthru
          _
      $region40: #{rk2_forward.1} parent=5 // pred_fallthru
        _
      %p239 = scmp.le.s32.totalorder 1, %s16
      %p240 = scmp.lt.s32.totalorder %s16, 3
      %p241 = pnand %p239, %p240
      %p242 = pneg %p241
      // Predicated region
      $region45: #{rk2_forward.1} parent=5 // pred_check
        _
      $region46: #{rk2_forward.1} parent=5 // pred_check_branch
        %244 = sbr.rel (%p241) target = $region48
      $region47: #{rk2_forward.1} parent=5 // pred_region
        %s245 = ssub.s32 %s16, 1
        %p246 = scmp.lt.s32.totalorder %s21, 1
        %s247 = scalar_select %p246, %s21, 1
        %s248 = smul.addr %s247, 3
        %s249 = smul.addr %s248, 4
        %s250 = scalar_lea.vmem %s0, %s249
        %p251 = pneg %p42
        %p252 = pneg %p39
        %p253 = pneg %p63
        %p254 = pneg %p60
        %p255 = pneg %p84
        %p256 = pneg %p81
        %p257 = pneg %p105
        %p258 = pneg %p102
        %p259 = pneg %p126
        %p260 = pneg %p123
        %p261 = pneg %p147
        %p262 = pneg %p144
        %p263 = pneg %p168
        %p264 = pneg %p165
        %p265 = pneg %p194
        %p266 = pneg %p191
        %s267 = sand.u32 %s181, 1
        %s268 = scalar_lea.sflag [#allocation3], %s267
        %s269 = sand.u32 %s181, 1
        %s270 = smul.addr %s269, 64
        %s271 = scalar_lea.vmem [#allocation2], %s270
        %p272 = scmp.lt.s32.totalorder %s21, 1
        %s273 = scalar_select %p272, %s21, 1
        %s274 = smul.addr %s273, 3
        %s275 = smul.addr %s274, 4
        %s276 = scalar_lea.vmem %s0, %s275
        %v277 = vld [vmem:[%s6] sm:$0x7]
        %v278 = vld [vmem:[%s276] sm:$0xff]
        %v279 = vld [vmem:[%s276 + $0x8] sm:$0xf]
        %v280 = vld [vmem:[%s5] sm:$0xf]
        %282 = vset.pattern.permute.xlu0 0
        %283 = vperm.xlu0 %282, %v280
        %v284 = vpop.permute.xlu0 %283
        %v286 = vunpack.c.l.s4 839922192
        %v287 = vunpack.c.0.s8 %v286
        %v288 = vlaneseq
        %v289 = vshrl.u32 %v288, 7
        %v290 = vsub.s32 %v287, %v289
        %v291 = vrot.slane %v284, %v290
        %v293 = vmul.f32 %v278, %v291
        %v294 = vmul.f32 %v279, %v291
        %s295 = scalar_lea.vmem %s5, 4
        %v296 = vld [vmem:[%s295] sm:$0xf]
        %298 = vset.pattern.permute.xlu0 0
        %299 = vperm.xlu0 %298, %v296
        %v300 = vpop.permute.xlu0 %299
        %v302 = vunpack.c.l.s4 839922192
        %v303 = vunpack.c.0.s8 %v302
        %v304 = vlaneseq
        %v305 = vshrl.u32 %v304, 7
        %v306 = vsub.s32 %v303, %v305
        %v307 = vrot.slane %v300, %v306
        %v309 = vadd.f32 %v293, %v307
        %v310 = vadd.f32 %v294, %v307
        %v311 = vmax.f32 %v309, 0.0
        %v312 = vmax.f32 %v310, 0.0
        %v314 = vlaneseq
        %v315 = vshrl.u32 %v314, 7
        %v316 = vsub.s32 0, %v315
        %v317 = vrot.slane %v277, %v316
        %v318 = vlaneseq
        %v319 = vshrl.u32 %v318, 7
        %v320 = vsub.s32 1, %v319
        %v321 = vrot.slane %v277, %v320
        %v322 = vlaneseq
        %v323 = vshrl.u32 %v322, 7
        %v324 = vsub.s32 2, %v323
        %v325 = vrot.slane %v277, %v324
        %v330 = vcombine.high %v311, %v311
        %v332 = vmul.f32 %v317, %v311
        %v333 = vmul.f32 %v321, %v330
        %v334 = vmul.f32 %v325, %v312
        %338 = vrot.lane.b32.xlu0 %v332, 19
        %v339 = vpop.permute.xlu0 %338
        %340 = vrot.lane.b32.xlu0 %v333, 19
        %v341 = vpop.permute.xlu0 %340
        %342 = vrot.lane.b32.xlu0 %v334, 19
        %v343 = vpop.permute.xlu0 %342
        %vm344 = vcmask 154624
        %v345 = vsel %vm344, %v339, %v341
        %v346 = vsel %vm344, %v341, %v343
        %v349 = vsel %vm344, 0.0, %v339
        %vm350 = vcmask 711680
        %v351 = vsel %vm350, %v346, 0.0
        %v352 = vld [vmem:[%s1] sm:$0xf]
        %s353 = scalar_lea.vmem %s1, 4
        %v354 = vld [vmem:[%s353] sm:$0xf]
        %357 = vrot.lane.b32.xlu0 %v349, 127
        %v358 = vpop.permute.xlu0 %357
        %359 = vrot.lane.b32.xlu0 %v345, 127
        %v360 = vpop.permute.xlu0 %359
        %361 = vrot.lane.b32.xlu0 %v351, 127
        %v362 = vpop.permute.xlu0 %361
        %vm363 = vcmask 1039360
        %v364 = vsel %vm363, %v358, %v360
        %v365 = vsel %vm363, %v360, %v362
        %vm366 = vcmask 31744
        %v368 = vsel %vm366, %v354, 0
        %vm370 = vcmask 1043456
        %v371 = vsel %vm370, %v364, 0
        %v373 = vsel %vm370, %v365, 0
        %v375 = vsel %vm370, %v362, 0
        %377 = vmatprep.subr.mxu0 %v373
        %378 = vmatpush1.msra.mxu0 %v371
        %379 = vmatprep.subr.mxu0 0.0
        %380 = vmatpush1.msra.mxu0 0.0
        %381 = vmatprep.subr.mxu0 0.0
        %382 = vmatpush1.msra.mxu0 0.0
        %383 = vmatprep.subr.mxu0 0.0
        %384 = vmatpush1.msra.mxu0 0.0
        %385 = vmatprep.subr.mxu0 0.0
        %386 = vmatpush1.msra.mxu0 0.0
        %387 = vmatprep.subr.mxu0 0.0
        %388 = vmatpush1.msra.mxu0 0.0
        %389 = vmatprep.subr.mxu0 0.0
        %390 = vmatpush1.msra.mxu0 0.0
        %391 = vmatprep.subr.mxu0 0.0
        %392 = vmatpush1.msra.mxu0 0.0
        %393 = vmatprep.subr.mxu0 0.0
        %394 = vmatpush1.msra.mxu0 0.0
        %395 = vmatprep.subr.mxu0 0.0
        %396 = vmatpush1.msra.mxu0 0.0
        %397 = vmatprep.subr.mxu0 0.0
        %398 = vmatpush1.msra.mxu0 0.0
        %399 = vmatprep.subr.mxu0 0.0
        %400 = vmatpush1.msra.mxu0 0.0
        %401 = vmatprep.subr.mxu0 0.0
        %402 = vmatpush1.msra.mxu0 0.0
        %403 = vmatprep.subr.mxu0 0.0
        %404 = vmatpush1.msra.mxu0 0.0
        %405 = vmatprep.subr.mxu0 0.0
        %406 = vmatpush1.msra.mxu0 0.0
        %407 = vmatprep.subr.mxu0 0.0
        %408 = vmatpush1.msra.mxu0 0.0
        %409 = vmatprep.subr.mxu0 0.0
        %410 = vmatpush1.msra.mxu0 0.0
        %411 = vmatprep.subr.mxu0 0.0
        %412 = vmatpush1.msra.mxu0 0.0
        %413 = vmatprep.subr.mxu0 0.0
        %414 = vmatpush1.msra.mxu0 0.0
        %415 = vmatprep.subr.mxu0 0.0
        %416 = vmatpush1.msra.mxu0 0.0
        %417 = vmatprep.subr.mxu0 0.0
        %418 = vmatpush1.msra.mxu0 0.0
        %419 = vmatprep.subr.mxu0 0.0
        %420 = vmatpush1.msra.mxu0 0.0
        %421 = vmatprep.subr.mxu0 0.0
        %422 = vmatpush1.msra.mxu0 0.0
        %423 = vmatprep.subr.mxu0 0.0
        %424 = vmatpush1.msra.mxu0 0.0
        %425 = vmatprep.subr.mxu0 0.0
        %426 = vmatpush1.msra.mxu0 0.0
        %427 = vmatprep.subr.mxu0 0.0
        %428 = vmatpush1.msra.mxu0 0.0
        %429 = vmatprep.subr.mxu0 0.0
        %430 = vmatpush1.msra.mxu0 0.0
        %431 = vmatprep.subr.mxu0 0.0
        %432 = vmatpush1.msra.mxu0 0.0
        %433 = vmatprep.subr.mxu0 0.0
        %434 = vmatpush1.msra.mxu0 0.0
        %435 = vmatprep.subr.mxu0 0.0
        %436 = vmatpush1.msra.mxu0 0.0
        %437 = vmatprep.subr.mxu0 0.0
        %438 = vmatpush1.msra.mxu0 0.0
        %439 = vmatprep.subr.mxu0 0.0
        %440 = vmatpush1.msra.mxu0 0.0
        %441 = vmatprep.mubr.f32.mxu0 0.0
        %442 = vmatmul.mubr.f32.gmra.mrb[0].mxu0 %v368
        %v443 = vpop.f32.mrb[0].mxu0
        %v444 = vadd.f32 0.0, %v443
        %v445 = vpop.f32.mrb[0].mxu0
        %v446 = vadd.f32 0.0, %v445
        %447 = vdwg.mxu0
        %448 = vmatprep.subr.mxu0 0.0
        %449 = vmatpush1.msra.mxu0 %v375
        %450 = vmatprep.subr.mxu0 0.0
        %451 = vmatpush1.msra.mxu0 0.0
        %452 = vmatprep.subr.mxu0 0.0
        %453 = vmatpush1.msra.mxu0 0.0
        %454 = vmatprep.subr.mxu0 0.0
        %455 = vmatpush1.msra.mxu0 0.0
        %456 = vmatprep.subr.mxu0 0.0
        %457 = vmatpush1.msra.mxu0 0.0
        %458 = vmatprep.subr.mxu0 0.0
        %459 = vmatpush1.msra.mxu0 0.0
        %460 = vmatprep.subr.mxu0 0.0
        %461 = vmatpush1.msra.mxu0 0.0
        %462 = vmatprep.subr.mxu0 0.0
        %463 = vmatpush1.msra.mxu0 0.0
        %464 = vmatprep.subr.mxu0 0.0
        %465 = vmatpush1.msra.mxu0 0.0
        %466 = vmatprep.subr.mxu0 0.0
        %467 = vmatpush1.msra.mxu0 0.0
        %468 = vmatprep.subr.mxu0 0.0
        %469 = vmatpush1.msra.mxu0 0.0
        %470 = vmatprep.subr.mxu0 0.0
        %471 = vmatpush1.msra.mxu0 0.0
        %472 = vmatprep.subr.mxu0 0.0
        %473 = vmatpush1.msra.mxu0 0.0
        %474 = vmatprep.subr.mxu0 0.0
        %475 = vmatpush1.msra.mxu0 0.0
        %476 = vmatprep.subr.mxu0 0.0
        %477 = vmatpush1.msra.mxu0 0.0
        %478 = vmatprep.subr.mxu0 0.0
        %479 = vmatpush1.msra.mxu0 0.0
        %480 = vmatprep.subr.mxu0 0.0
        %481 = vmatpush1.msra.mxu0 0.0
        %482 = vmatprep.subr.mxu0 0.0
        %483 = vmatpush1.msra.mxu0 0.0
        %484 = vmatprep.subr.mxu0 0.0
        %485 = vmatpush1.msra.mxu0 0.0
        %486 = vmatprep.subr.mxu0 0.0
        %487 = vmatpush1.msra.mxu0 0.0
        %488 = vmatprep.subr.mxu0 0.0
        %489 = vmatpush1.msra.mxu0 0.0
        %490 = vmatprep.subr.mxu0 0.0
        %491 = vmatpush1.msra.mxu0 0.0
        %492 = vmatprep.subr.mxu0 0.0
        %493 = vmatpush1.msra.mxu0 0.0
        %494 = vmatprep.subr.mxu0 0.0
        %495 = vmatpush1.msra.mxu0 0.0
        %496 = vmatprep.subr.mxu0 0.0
        %497 = vmatpush1.msra.mxu0 0.0
        %498 = vmatprep.subr.mxu0 0.0
        %499 = vmatpush1.msra.mxu0 0.0
        %500 = vmatprep.subr.mxu0 0.0
        %501 = vmatpush1.msra.mxu0 0.0
        %502 = vmatprep.subr.mxu0 0.0
        %503 = vmatpush1.msra.mxu0 0.0
        %504 = vmatprep.subr.mxu0 0.0
        %505 = vmatpush1.msra.mxu0 0.0
        %506 = vmatprep.subr.mxu0 0.0
        %507 = vmatpush1.msra.mxu0 0.0
        %508 = vmatprep.subr.mxu0 0.0
        %509 = vmatpush1.msra.mxu0 0.0
        %510 = vmatprep.subr.mxu0 0.0
        %511 = vmatpush1.msra.mxu0 0.0
        %512 = vmatprep.mubr.f32.mxu0 0.0
        %513 = vmatmul.mubr.f32.gmra.mrb[0].mxu0 %v368
        %v514 = vpop.f32.mrb[0].mxu0
        %v515 = vadd.f32 0.0, %v514
        %v516 = vpop.f32.mrb[0].mxu0
        %517 = vdwg.mxu0
        %v519 = vsel %vm366, %v352, 0
        %v521 = vsel %vm370, %v349, 0
        %v523 = vsel %vm370, %v345, 0
        %v525 = vsel %vm370, %v351, 0
        %527 = vmatprep.subr.mxu0 %v523
        %528 = vmatpush1.msra.mxu0 %v521
        %529 = vmatprep.subr.mxu0 0.0
        %530 = vmatpush1.msra.mxu0 0.0
        %531 = vmatprep.subr.mxu0 0.0
        %532 = vmatpush1.msra.mxu0 0.0
        %533 = vmatprep.subr.mxu0 0.0
        %534 = vmatpush1.msra.mxu0 0.0
        %535 = vmatprep.subr.mxu0 0.0
        %536 = vmatpush1.msra.mxu0 0.0
        %537 = vmatprep.subr.mxu0 0.0
        %538 = vmatpush1.msra.mxu0 0.0
        %539 = vmatprep.subr.mxu0 0.0
        %540 = vmatpush1.msra.mxu0 0.0
        %541 = vmatprep.subr.mxu0 0.0
        %542 = vmatpush1.msra.mxu0 0.0
        %543 = vmatprep.subr.mxu0 0.0
        %544 = vmatpush1.msra.mxu0 0.0
        %545 = vmatprep.subr.mxu0 0.0
        %546 = vmatpush1.msra.mxu0 0.0
        %547 = vmatprep.subr.mxu0 0.0
        %548 = vmatpush1.msra.mxu0 0.0
        %549 = vmatprep.subr.mxu0 0.0
        %550 = vmatpush1.msra.mxu0 0.0
        %551 = vmatprep.subr.mxu0 0.0
        %552 = vmatpush1.msra.mxu0 0.0
        %553 = vmatprep.subr.mxu0 0.0
        %554 = vmatpush1.msra.mxu0 0.0
        %555 = vmatprep.subr.mxu0 0.0
        %556 = vmatpush1.msra.mxu0 0.0
        %557 = vmatprep.subr.mxu0 0.0
        %558 = vmatpush1.msra.mxu0 0.0
        %559 = vmatprep.subr.mxu0 0.0
        %560 = vmatpush1.msra.mxu0 0.0
        %561 = vmatprep.subr.mxu0 0.0
        %562 = vmatpush1.msra.mxu0 0.0
        %563 = vmatprep.subr.mxu0 0.0
        %564 = vmatpush1.msra.mxu0 0.0
        %565 = vmatprep.subr.mxu0 0.0
        %566 = vmatpush1.msra.mxu0 0.0
        %567 = vmatprep.subr.mxu0 0.0
        %568 = vmatpush1.msra.mxu0 0.0
        %569 = vmatprep.subr.mxu0 0.0
        %570 = vmatpush1.msra.mxu0 0.0
        %571 = vmatprep.subr.mxu0 0.0
        %572 = vmatpush1.msra.mxu0 0.0
        %573 = vmatprep.subr.mxu0 0.0
        %574 = vmatpush1.msra.mxu0 0.0
        %575 = vmatprep.subr.mxu0 0.0
        %576 = vmatpush1.msra.mxu0 0.0
        %577 = vmatprep.subr.mxu0 0.0
        %578 = vmatpush1.msra.mxu0 0.0
        %579 = vmatprep.subr.mxu0 0.0
        %580 = vmatpush1.msra.mxu0 0.0
        %581 = vmatprep.subr.mxu0 0.0
        %582 = vmatpush1.msra.mxu0 0.0
        %583 = vmatprep.subr.mxu0 0.0
        %584 = vmatpush1.msra.mxu0 0.0
        %585 = vmatprep.subr.mxu0 0.0
        %586 = vmatpush1.msra.mxu0 0.0
        %587 = vmatprep.subr.mxu0 0.0
        %588 = vmatpush1.msra.mxu0 0.0
        %589 = vmatprep.subr.mxu0 0.0
        %590 = vmatpush1.msra.mxu0 0.0
        %591 = vmatprep.mubr.f32.mxu0 0.0
        %592 = vmatmul.mubr.f32.gmra.mrb[0].mxu0 %v519
        %v593 = vpop.f32.mrb[0].mxu0
        %v594 = vadd.f32 %v444, %v593
        %v595 = vpop.f32.mrb[0].mxu0
        %v596 = vadd.f32 %v446, %v595
        %597 = vdwg.mxu0
        %598 = vmatprep.subr.mxu0 0.0
        %599 = vmatpush1.msra.mxu0 %v525
        %600 = vmatprep.subr.mxu0 0.0
        %601 = vmatpush1.msra.mxu0 0.0
        %602 = vmatprep.subr.mxu0 0.0
        %603 = vmatpush1.msra.mxu0 0.0
        %604 = vmatprep.subr.mxu0 0.0
        %605 = vmatpush1.msra.mxu0 0.0
        %606 = vmatprep.subr.mxu0 0.0
        %607 = vmatpush1.msra.mxu0 0.0
        %608 = vmatprep.subr.mxu0 0.0
        %609 = vmatpush1.msra.mxu0 0.0
        %610 = vmatprep.subr.mxu0 0.0
        %611 = vmatpush1.msra.mxu0 0.0
        %612 = vmatprep.subr.mxu0 0.0
        %613 = vmatpush1.msra.mxu0 0.0
        %614 = vmatprep.subr.mxu0 0.0
        %615 = vmatpush1.msra.mxu0 0.0
        %616 = vmatprep.subr.mxu0 0.0
        %617 = vmatpush1.msra.mxu0 0.0
        %618 = vmatprep.subr.mxu0 0.0
        %619 = vmatpush1.msra.mxu0 0.0
        %620 = vmatprep.subr.mxu0 0.0
        %621 = vmatpush1.msra.mxu0 0.0
        %622 = vmatprep.subr.mxu0 0.0
        %623 = vmatpush1.msra.mxu0 0.0
        %624 = vmatprep.subr.mxu0 0.0
        %625 = vmatpush1.msra.mxu0 0.0
        %626 = vmatprep.subr.mxu0 0.0
        %627 = vmatpush1.msra.mxu0 0.0
        %628 = vmatprep.subr.mxu0 0.0
        %629 = vmatpush1.msra.mxu0 0.0
        %630 = vmatprep.subr.mxu0 0.0
        %631 = vmatpush1.msra.mxu0 0.0
        %632 = vmatprep.subr.mxu0 0.0
        %633 = vmatpush1.msra.mxu0 0.0
        %634 = vmatprep.subr.mxu0 0.0
        %635 = vmatpush1.msra.mxu0 0.0
        %636 = vmatprep.subr.mxu0 0.0
        %637 = vmatpush1.msra.mxu0 0.0
        %638 = vmatprep.subr.mxu0 0.0
        %639 = vmatpush1.msra.mxu0 0.0
        %640 = vmatprep.subr.mxu0 0.0
        %641 = vmatpush1.msra.mxu0 0.0
        %642 = vmatprep.subr.mxu0 0.0
        %643 = vmatpush1.msra.mxu0 0.0
        %644 = vmatprep.subr.mxu0 0.0
        %645 = vmatpush1.msra.mxu0 0.0
        %646 = vmatprep.subr.mxu0 0.0
        %647 = vmatpush1.msra.mxu0 0.0
        %648 = vmatprep.subr.mxu0 0.0
        %649 = vmatpush1.msra.mxu0 0.0
        %650 = vmatprep.subr.mxu0 0.0
        %651 = vmatpush1.msra.mxu0 0.0
        %652 = vmatprep.subr.mxu0 0.0
        %653 = vmatpush1.msra.mxu0 0.0
        %654 = vmatprep.subr.mxu0 0.0
        %655 = vmatpush1.msra.mxu0 0.0
        %656 = vmatprep.subr.mxu0 0.0
        %657 = vmatpush1.msra.mxu0 0.0
        %658 = vmatprep.subr.mxu0 0.0
        %659 = vmatpush1.msra.mxu0 0.0
        %660 = vmatprep.subr.mxu0 0.0
        %661 = vmatpush1.msra.mxu0 0.0
        %662 = vmatprep.mubr.f32.mxu0 0.0
        %663 = vmatmul.mubr.f32.gmra.mrb[0].mxu0 %v519
        %v664 = vpop.f32.mrb[0].mxu0
        %v665 = vadd.f32 %v515, %v664
        %v666 = vpop.f32.mrb[0].mxu0
        %667 = vdwg.mxu0
        %s668 = scalar_lea.vmem %s1, 8
        %v669 = vld [vmem:[%s668] sm:$0xf]
        %670 = vrot.lane.b32.xlu0 %v349, 126
        %v671 = vpop.permute.xlu0 %670
        %672 = vrot.lane.b32.xlu0 %v345, 126
        %v673 = vpop.permute.xlu0 %672
        %674 = vrot.lane.b32.xlu0 %v351, 126
        %v675 = vpop.permute.xlu0 %674
        %vm676 = vcmask 1031168
        %v677 = vsel %vm676, %v671, %v673
        %v678 = vsel %vm676, %v673, %v675
        %v680 = vsel %vm366, %v669, 0
        %v682 = vsel %vm370, %v677, 0
        %v684 = vsel %vm370, %v678, 0
        %v686 = vsel %vm370, %v675, 0
        %688 = vmatprep.subr.mxu0 %v684
        %689 = vmatpush1.msra.mxu0 %v682
        %690 = vmatprep.subr.mxu0 0.0
        %691 = vmatpush1.msra.mxu0 0.0
        %692 = vmatprep.subr.mxu0 0.0
        %693 = vmatpush1.msra.mxu0 0.0
        %694 = vmatprep.subr.mxu0 0.0
        %695 = vmatpush1.msra.mxu0 0.0
        %696 = vmatprep.subr.mxu0 0.0
        %697 = vmatpush1.msra.mxu0 0.0
        %698 = vmatprep.subr.mxu0 0.0
        %699 = vmatpush1.msra.mxu0 0.0
        %700 = vmatprep.subr.mxu0 0.0
        %701 = vmatpush1.msra.mxu0 0.0
        %702 = vmatprep.subr.mxu0 0.0
        %703 = vmatpush1.msra.mxu0 0.0
        %704 = vmatprep.subr.mxu0 0.0
        %705 = vmatpush1.msra.mxu0 0.0
        %706 = vmatprep.subr.mxu0 0.0
        %707 = vmatpush1.msra.mxu0 0.0
        %708 = vmatprep.subr.mxu0 0.0
        %709 = vmatpush1.msra.mxu0 0.0
        %710 = vmatprep.subr.mxu0 0.0
        %711 = vmatpush1.msra.mxu0 0.0
        %712 = vmatprep.subr.mxu0 0.0
        %713 = vmatpush1.msra.mxu0 0.0
        %714 = vmatprep.subr.mxu0 0.0
        %715 = vmatpush1.msra.mxu0 0.0
        %716 = vmatprep.subr.mxu0 0.0
        %717 = vmatpush1.msra.mxu0 0.0
        %718 = vmatprep.subr.mxu0 0.0
        %719 = vmatpush1.msra.mxu0 0.0
        %720 = vmatprep.subr.mxu0 0.0
        %721 = vmatpush1.msra.mxu0 0.0
        %722 = vmatprep.subr.mxu0 0.0
        %723 = vmatpush1.msra.mxu0 0.0
        %724 = vmatprep.subr.mxu0 0.0
        %725 = vmatpush1.msra.mxu0 0.0
        %726 = vmatprep.subr.mxu0 0.0
        %727 = vmatpush1.msra.mxu0 0.0
        %728 = vmatprep.subr.mxu0 0.0
        %729 = vmatpush1.msra.mxu0 0.0
        %730 = vmatprep.subr.mxu0 0.0
        %731 = vmatpush1.msra.mxu0 0.0
        %732 = vmatprep.subr.mxu0 0.0
        %733 = vmatpush1.msra.mxu0 0.0
        %734 = vmatprep.subr.mxu0 0.0
        %735 = vmatpush1.msra.mxu0 0.0
        %736 = vmatprep.subr.mxu0 0.0
        %737 = vmatpush1.msra.mxu0 0.0
        %738 = vmatprep.subr.mxu0 0.0
        %739 = vmatpush1.msra.mxu0 0.0
        %740 = vmatprep.subr.mxu0 0.0
        %741 = vmatpush1.msra.mxu0 0.0
        %742 = vmatprep.subr.mxu0 0.0
        %743 = vmatpush1.msra.mxu0 0.0
        %744 = vmatprep.subr.mxu0 0.0
        %745 = vmatpush1.msra.mxu0 0.0
        %746 = vmatprep.subr.mxu0 0.0
        %747 = vmatpush1.msra.mxu0 0.0
        %748 = vmatprep.subr.mxu0 0.0
        %749 = vmatpush1.msra.mxu0 0.0
        %750 = vmatprep.subr.mxu0 0.0
        %751 = vmatpush1.msra.mxu0 0.0
        %752 = vmatprep.mubr.f32.mxu0 0.0
        %753 = vmatmul.mubr.f32.gmra.mrb[0].mxu0 %v680
        %v754 = vpop.f32.mrb[0].mxu0
        %v755 = vadd.f32 0.0, %v754
        %v756 = vpop.f32.mrb[0].mxu0
        %v757 = vadd.f32 0.0, %v756
        %758 = vdwg.mxu0
        %759 = vmatprep.subr.mxu0 0.0
        %760 = vmatpush1.msra.mxu0 %v686
        %761 = vmatprep.subr.mxu0 0.0
        %762 = vmatpush1.msra.mxu0 0.0
        %763 = vmatprep.subr.mxu0 0.0
        %764 = vmatpush1.msra.mxu0 0.0
        %765 = vmatprep.subr.mxu0 0.0
        %766 = vmatpush1.msra.mxu0 0.0
        %767 = vmatprep.subr.mxu0 0.0
        %768 = vmatpush1.msra.mxu0 0.0
        %769 = vmatprep.subr.mxu0 0.0
        %770 = vmatpush1.msra.mxu0 0.0
        %771 = vmatprep.subr.mxu0 0.0
        %772 = vmatpush1.msra.mxu0 0.0
        %773 = vmatprep.subr.mxu0 0.0
        %774 = vmatpush1.msra.mxu0 0.0
        %775 = vmatprep.subr.mxu0 0.0
        %776 = vmatpush1.msra.mxu0 0.0
        %777 = vmatprep.subr.mxu0 0.0
        %778 = vmatpush1.msra.mxu0 0.0
        %779 = vmatprep.subr.mxu0 0.0
        %780 = vmatpush1.msra.mxu0 0.0
        %781 = vmatprep.subr.mxu0 0.0
        %782 = vmatpush1.msra.mxu0 0.0
        %783 = vmatprep.subr.mxu0 0.0
        %784 = vmatpush1.msra.mxu0 0.0
        %785 = vmatprep.subr.mxu0 0.0
        %786 = vmatpush1.msra.mxu0 0.0
        %787 = vmatprep.subr.mxu0 0.0
        %788 = vmatpush1.msra.mxu0 0.0
        %789 = vmatprep.subr.mxu0 0.0
        %790 = vmatpush1.msra.mxu0 0.0
        %791 = vmatprep.subr.mxu0 0.0
        %792 = vmatpush1.msra.mxu0 0.0
        %793 = vmatprep.subr.mxu0 0.0
        %794 = vmatpush1.msra.mxu0 0.0
        %795 = vmatprep.subr.mxu0 0.0
        %796 = vmatpush1.msra.mxu0 0.0
        %797 = vmatprep.subr.mxu0 0.0
        %798 = vmatpush1.msra.mxu0 0.0
        %799 = vmatprep.subr.mxu0 0.0
        %800 = vmatpush1.msra.mxu0 0.0
        %801 = vmatprep.subr.mxu0 0.0
        %802 = vmatpush1.msra.mxu0 0.0
        %803 = vmatprep.subr.mxu0 0.0
        %804 = vmatpush1.msra.mxu0 0.0
        %805 = vmatprep.subr.mxu0 0.0
        %806 = vmatpush1.msra.mxu0 0.0
        %807 = vmatprep.subr.mxu0 0.0
        %808 = vmatpush1.msra.mxu0 0.0
        %809 = vmatprep.subr.mxu0 0.0
        %810 = vmatpush1.msra.mxu0 0.0
        %811 = vmatprep.subr.mxu0 0.0
        %812 = vmatpush1.msra.mxu0 0.0
        %813 = vmatprep.subr.mxu0 0.0
        %814 = vmatpush1.msra.mxu0 0.0
        %815 = vmatprep.subr.mxu0 0.0
        %816 = vmatpush1.msra.mxu0 0.0
        %817 = vmatprep.subr.mxu0 0.0
        %818 = vmatpush1.msra.mxu0 0.0
        %819 = vmatprep.subr.mxu0 0.0
        %820 = vmatpush1.msra.mxu0 0.0
        %821 = vmatprep.subr.mxu0 0.0
        %822 = vmatpush1.msra.mxu0 0.0
        %823 = vmatprep.mubr.f32.mxu0 0.0
        %824 = vmatmul.mubr.f32.gmra.mrb[0].mxu0 %v680
        %v825 = vpop.f32.mrb[0].mxu0
        %v826 = vadd.f32 0.0, %v825
        %v827 = vpop.f32.mrb[0].mxu0
        %828 = vdwg.mxu0
        %v829 = vadd.f32 %v594, %v755
        %v830 = vadd.f32 %v596, %v757
        %v831 = vadd.f32 %v665, %v826
        %s832 = scalar_lea.vmem %s1, 12
        %v833 = vld [vmem:[%s832] sm:$0xf]
        %834 = vrot.lane.b32.xlu0 %v349, 110
        %v835 = vpop.permute.xlu0 %834
        %836 = vrot.lane.b32.xlu0 %v345, 110
        %v837 = vpop.permute.xlu0 %836
        %838 = vrot.lane.b32.xlu0 %v351, 110
        %v839 = vpop.permute.xlu0 %838
        %vm840 = vcmask 900096
        %v841 = vsel %vm840, %v835, %v837
        %v842 = vsel %vm840, %v837, %v839
        %v844 = vsel %vm366, %v833, 0
        %v846 = vsel %vm370, %v841, 0
        %v848 = vsel %vm370, %v842, 0
        %v850 = vsel %vm370, %v839, 0
        %852 = vmatprep.subr.mxu0 %v848
        %853 = vmatpush1.msra.mxu0 %v846
        %854 = vmatprep.subr.mxu0 0.0
        %855 = vmatpush1.msra.mxu0 0.0
        %856 = vmatprep.subr.mxu0 0.0
        %857 = vmatpush1.msra.mxu0 0.0
        %858 = vmatprep.subr.mxu0 0.0
        %859 = vmatpush1.msra.mxu0 0.0
        %860 = vmatprep.subr.mxu0 0.0
        %861 = vmatpush1.msra.mxu0 0.0
        %862 = vmatprep.subr.mxu0 0.0
        %863 = vmatpush1.msra.mxu0 0.0
        %864 = vmatprep.subr.mxu0 0.0
        %865 = vmatpush1.msra.mxu0 0.0
        %866 = vmatprep.subr.mxu0 0.0
        %867 = vmatpush1.msra.mxu0 0.0
        %868 = vmatprep.subr.mxu0 0.0
        %869 = vmatpush1.msra.mxu0 0.0
        %870 = vmatprep.subr.mxu0 0.0
        %871 = vmatpush1.msra.mxu0 0.0
        %872 = vmatprep.subr.mxu0 0.0
        %873 = vmatpush1.msra.mxu0 0.0
        %874 = vmatprep.subr.mxu0 0.0
        %875 = vmatpush1.msra.mxu0 0.0
        %876 = vmatprep.subr.mxu0 0.0
        %877 = vmatpush1.msra.mxu0 0.0
        %878 = vmatprep.subr.mxu0 0.0
        %879 = vmatpush1.msra.mxu0 0.0
        %880 = vmatprep.subr.mxu0 0.0
        %881 = vmatpush1.msra.mxu0 0.0
        %882 = vmatprep.subr.mxu0 0.0
        %883 = vmatpush1.msra.mxu0 0.0
        %884 = vmatprep.subr.mxu0 0.0
        %885 = vmatpush1.msra.mxu0 0.0
        %886 = vmatprep.subr.mxu0 0.0
        %887 = vmatpush1.msra.mxu0 0.0
        %888 = vmatprep.subr.mxu0 0.0
        %889 = vmatpush1.msra.mxu0 0.0
        %890 = vmatprep.subr.mxu0 0.0
        %891 = vmatpush1.msra.mxu0 0.0
        %892 = vmatprep.subr.mxu0 0.0
        %893 = vmatpush1.msra.mxu0 0.0
        %894 = vmatprep.subr.mxu0 0.0
        %895 = vmatpush1.msra.mxu0 0.0
        %896 = vmatprep.subr.mxu0 0.0
        %897 = vmatpush1.msra.mxu0 0.0
        %898 = vmatprep.subr.mxu0 0.0
        %899 = vmatpush1.msra.mxu0 0.0
        %900 = vmatprep.subr.mxu0 0.0
        %901 = vmatpush1.msra.mxu0 0.0
        %902 = vmatprep.subr.mxu0 0.0
        %903 = vmatpush1.msra.mxu0 0.0
        %904 = vmatprep.subr.mxu0 0.0
        %905 = vmatpush1.msra.mxu0 0.0
        %906 = vmatprep.subr.mxu0 0.0
        %907 = vmatpush1.msra.mxu0 0.0
        %908 = vmatprep.subr.mxu0 0.0
        %909 = vmatpush1.msra.mxu0 0.0
        %910 = vmatprep.subr.mxu0 0.0
        %911 = vmatpush1.msra.mxu0 0.0
        %912 = vmatprep.subr.mxu0 0.0
        %913 = vmatpush1.msra.mxu0 0.0
        %914 = vmatprep.subr.mxu0 0.0
        %915 = vmatpush1.msra.mxu0 0.0
        %916 = vmatprep.mubr.f32.mxu0 0.0
        %917 = vmatmul.mubr.f32.gmra.mrb[0].mxu0 %v844
        %v918 = vpop.f32.mrb[0].mxu0
        %v919 = vadd.f32 0.0, %v918
        %v920 = vpop.f32.mrb[0].mxu0
        %v921 = vadd.f32 0.0, %v920
        %922 = vdwg.mxu0
        %923 = vmatprep.subr.mxu0 0.0
        %924 = vmatpush1.msra.mxu0 %v850
        %925 = vmatprep.subr.mxu0 0.0
        %926 = vmatpush1.msra.mxu0 0.0
        %927 = vmatprep.subr.mxu0 0.0
        %928 = vmatpush1.msra.mxu0 0.0
        %929 = vmatprep.subr.mxu0 0.0
        %930 = vmatpush1.msra.mxu0 0.0
        %931 = vmatprep.subr.mxu0 0.0
        %932 = vmatpush1.msra.mxu0 0.0
        %933 = vmatprep.subr.mxu0 0.0
        %934 = vmatpush1.msra.mxu0 0.0
        %935 = vmatprep.subr.mxu0 0.0
        %936 = vmatpush1.msra.mxu0 0.0
        %937 = vmatprep.subr.mxu0 0.0
        %938 = vmatpush1.msra.mxu0 0.0
        %939 = vmatprep.subr.mxu0 0.0
        %940 = vmatpush1.msra.mxu0 0.0
        %941 = vmatprep.subr.mxu0 0.0
        %942 = vmatpush1.msra.mxu0 0.0
        %943 = vmatprep.subr.mxu0 0.0
        %944 = vmatpush1.msra.mxu0 0.0
        %945 = vmatprep.subr.mxu0 0.0
        %946 = vmatpush1.msra.mxu0 0.0
        %947 = vmatprep.subr.mxu0 0.0
        %948 = vmatpush1.msra.mxu0 0.0
        %949 = vmatprep.subr.mxu0 0.0
        %950 = vmatpush1.msra.mxu0 0.0
        %951 = vmatprep.subr.mxu0 0.0
        %952 = vmatpush1.msra.mxu0 0.0
        %953 = vmatprep.subr.mxu0 0.0
        %954 = vmatpush1.msra.mxu0 0.0
        %955 = vmatprep.subr.mxu0 0.0
        %956 = vmatpush1.msra.mxu0 0.0
        %957 = vmatprep.subr.mxu0 0.0
        %958 = vmatpush1.msra.mxu0 0.0
        %959 = vmatprep.subr.mxu0 0.0
        %960 = vmatpush1.msra.mxu0 0.0
        %961 = vmatprep.subr.mxu0 0.0
        %962 = vmatpush1.msra.mxu0 0.0
        %963 = vmatprep.subr.mxu0 0.0
        %964 = vmatpush1.msra.mxu0 0.0
        %965 = vmatprep.subr.mxu0 0.0
        %966 = vmatpush1.msra.mxu0 0.0
        %967 = vmatprep.subr.mxu0 0.0
        %968 = vmatpush1.msra.mxu0 0.0
        %969 = vmatprep.subr.mxu0 0.0
        %970 = vmatpush1.msra.mxu0 0.0
        %971 = vmatprep.subr.mxu0 0.0
        %972 = vmatpush1.msra.mxu0 0.0
        %973 = vmatprep.subr.mxu0 0.0
        %974 = vmatpush1.msra.mxu0 0.0
        %975 = vmatprep.subr.mxu0 0.0
        %976 = vmatpush1.msra.mxu0 0.0
        %977 = vmatprep.subr.mxu0 0.0
        %978 = vmatpush1.msra.mxu0 0.0
        %979 = vmatprep.subr.mxu0 0.0
        %980 = vmatpush1.msra.mxu0 0.0
        %981 = vmatprep.subr.mxu0 0.0
        %982 = vmatpush1.msra.mxu0 0.0
        %983 = vmatprep.subr.mxu0 0.0
        %984 = vmatpush1.msra.mxu0 0.0
        %985 = vmatprep.subr.mxu0 0.0
        %986 = vmatpush1.msra.mxu0 0.0
        %987 = vmatprep.mubr.f32.mxu0 0.0
        %988 = vmatmul.mubr.f32.gmra.mrb[0].mxu0 %v844
        %v989 = vpop.f32.mrb[0].mxu0
        %v990 = vadd.f32 0.0, %v989
        %v991 = vpop.f32.mrb[0].mxu0
        %992 = vdwg.mxu0
        %v993 = vadd.f32 %v829, %v919
        %v994 = vadd.f32 %v830, %v921
        %v995 = vadd.f32 %v831, %v990
        %s996 = scalar_lea.vmem %s1, 16
        %v997 = vld [vmem:[%s996] sm:$0xf]
        %998 = vrot.lane.b32.xlu0 %v349, 109
        %v999 = vpop.permute.xlu0 %998
        %1000 = vrot.lane.b32.xlu0 %v345, 109
        %v1001 = vpop.permute.xlu0 %1000
        %1002 = vrot.lane.b32.xlu0 %v351, 109
        %v1003 = vpop.permute.xlu0 %1002
        %vm1004 = vcmask 891904
        %v1005 = vsel %vm1004, %v999, %v1001
        %v1006 = vsel %vm1004, %v1001, %v1003
        %v1008 = vsel %vm366, %v997, 0
        %v1010 = vsel %vm370, %v1005, 0
        %v1012 = vsel %vm370, %v1006, 0
        %v1014 = vsel %vm370, %v1003, 0
        %1016 = vmatprep.subr.mxu0 %v1012
        %1017 = vmatpush1.msra.mxu0 %v1010
        %1018 = vmatprep.subr.mxu0 0.0
        %1019 = vmatpush1.msra.mxu0 0.0
        %1020 = vmatprep.subr.mxu0 0.0
        %1021 = vmatpush1.msra.mxu0 0.0
        %1022 = vmatprep.subr.mxu0 0.0
        %1023 = vmatpush1.msra.mxu0 0.0
        %1024 = vmatprep.subr.mxu0 0.0
        %1025 = vmatpush1.msra.mxu0 0.0
        %1026 = vmatprep.subr.mxu0 0.0
        %1027 = vmatpush1.msra.mxu0 0.0
        %1028 = vmatprep.subr.mxu0 0.0
        %1029 = vmatpush1.msra.mxu0 0.0
        %1030 = vmatprep.subr.mxu0 0.0
        %1031 = vmatpush1.msra.mxu0 0.0
        %1032 = vmatprep.subr.mxu0 0.0
        %1033 = vmatpush1.msra.mxu0 0.0
        %1034 = vmatprep.subr.mxu0 0.0
        %1035 = vmatpush1.msra.mxu0 0.0
        %1036 = vmatprep.subr.mxu0 0.0
        %1037 = vmatpush1.msra.mxu0 0.0
        %1038 = vmatprep.subr.mxu0 0.0
        %1039 = vmatpush1.msra.mxu0 0.0
        %1040 = vmatprep.subr.mxu0 0.0
        %1041 = vmatpush1.msra.mxu0 0.0
        %1042 = vmatprep.subr.mxu0 0.0
        %1043 = vmatpush1.msra.mxu0 0.0
        %1044 = vmatprep.subr.mxu0 0.0
        %1045 = vmatpush1.msra.mxu0 0.0
        %1046 = vmatprep.subr.mxu0 0.0
        %1047 = vmatpush1.msra.mxu0 0.0
        %1048 = vmatprep.subr.mxu0 0.0
        %1049 = vmatpush1.msra.mxu0 0.0
        %1050 = vmatprep.subr.mxu0 0.0
        %1051 = vmatpush1.msra.mxu0 0.0
        %1052 = vmatprep.subr.mxu0 0.0
        %1053 = vmatpush1.msra.mxu0 0.0
        %1054 = vmatprep.subr.mxu0 0.0
        %1055 = vmatpush1.msra.mxu0 0.0
        %1056 = vmatprep.subr.mxu0 0.0
        %1057 = vmatpush1.msra.mxu0 0.0
        %1058 = vmatprep.subr.mxu0 0.0
        %1059 = vmatpush1.msra.mxu0 0.0
        %1060 = vmatprep.subr.mxu0 0.0
        %1061 = vmatpush1.msra.mxu0 0.0
        %1062 = vmatprep.subr.mxu0 0.0
        %1063 = vmatpush1.msra.mxu0 0.0
        %1064 = vmatprep.subr.mxu0 0.0
        %1065 = vmatpush1.msra.mxu0 0.0
        %1066 = vmatprep.subr.mxu0 0.0
        %1067 = vmatpush1.msra.mxu0 0.0
        %1068 = vmatprep.subr.mxu0 0.0
        %1069 = vmatpush1.msra.mxu0 0.0
        %1070 = vmatprep.subr.mxu0 0.0
        %1071 = vmatpush1.msra.mxu0 0.0
        %1072 = vmatprep.subr.mxu0 0.0
        %1073 = vmatpush1.msra.mxu0 0.0
        %1074 = vmatprep.subr.mxu0 0.0
        %1075 = vmatpush1.msra.mxu0 0.0
        %1076 = vmatprep.subr.mxu0 0.0
        %1077 = vmatpush1.msra.mxu0 0.0
        %1078 = vmatprep.subr.mxu0 0.0
        %1079 = vmatpush1.msra.mxu0 0.0
        %1080 = vmatprep.mubr.f32.mxu0 0.0
        %1081 = vmatmul.mubr.f32.gmra.mrb[0].mxu0 %v1008
        %v1082 = vpop.f32.mrb[0].mxu0
        %v1083 = vadd.f32 0.0, %v1082
        %v1084 = vpop.f32.mrb[0].mxu0
        %v1085 = vadd.f32 0.0, %v1084
        %1086 = vdwg.mxu0
        %1087 = vmatprep.subr.mxu0 0.0
        %1088 = vmatpush1.msra.mxu0 %v1014
        %1089 = vmatprep.subr.mxu0 0.0
        %1090 = vmatpush1.msra.mxu0 0.0
        %1091 = vmatprep.subr.mxu0 0.0
        %1092 = vmatpush1.msra.mxu0 0.0
        %1093 = vmatprep.subr.mxu0 0.0
        %1094 = vmatpush1.msra.mxu0 0.0
        %1095 = vmatprep.subr.mxu0 0.0
        %1096 = vmatpush1.msra.mxu0 0.0
        %1097 = vmatprep.subr.mxu0 0.0
        %1098 = vmatpush1.msra.mxu0 0.0
        %1099 = vmatprep.subr.mxu0 0.0
        %1100 = vmatpush1.msra.mxu0 0.0
        %1101 = vmatprep.subr.mxu0 0.0
        %1102 = vmatpush1.msra.mxu0 0.0
        %1103 = vmatprep.subr.mxu0 0.0
        %1104 = vmatpush1.msra.mxu0 0.0
        %1105 = vmatprep.subr.mxu0 0.0
        %1106 = vmatpush1.msra.mxu0 0.0
        %1107 = vmatprep.subr.mxu0 0.0
        %1108 = vmatpush1.msra.mxu0 0.0
        %1109 = vmatprep.subr.mxu0 0.0
        %1110 = vmatpush1.msra.mxu0 0.0
        %1111 = vmatprep.subr.mxu0 0.0
        %1112 = vmatpush1.msra.mxu0 0.0
        %1113 = vmatprep.subr.mxu0 0.0
        %1114 = vmatpush1.msra.mxu0 0.0
        %1115 = vmatprep.subr.mxu0 0.0
        %1116 = vmatpush1.msra.mxu0 0.0
        %1117 = vmatprep.subr.mxu0 0.0
        %1118 = vmatpush1.msra.mxu0 0.0
        %1119 = vmatprep.subr.mxu0 0.0
        %1120 = vmatpush1.msra.mxu0 0.0
        %1121 = vmatprep.subr.mxu0 0.0
        %1122 = vmatpush1.msra.mxu0 0.0
        %1123 = vmatprep.subr.mxu0 0.0
        %1124 = vmatpush1.msra.mxu0 0.0
        %1125 = vmatprep.subr.mxu0 0.0
        %1126 = vmatpush1.msra.mxu0 0.0
        %1127 = vmatprep.subr.mxu0 0.0
        %1128 = vmatpush1.msra.mxu0 0.0
        %1129 = vmatprep.subr.mxu0 0.0
        %1130 = vmatpush1.msra.mxu0 0.0
        %1131 = vmatprep.subr.mxu0 0.0
        %1132 = vmatpush1.msra.mxu0 0.0
        %1133 = vmatprep.subr.mxu0 0.0
        %1134 = vmatpush1.msra.mxu0 0.0
        %1135 = vmatprep.subr.mxu0 0.0
        %1136 = vmatpush1.msra.mxu0 0.0
        %1137 = vmatprep.subr.mxu0 0.0
        %1138 = vmatpush1.msra.mxu0 0.0
        %1139 = vmatprep.subr.mxu0 0.0
        %1140 = vmatpush1.msra.mxu0 0.0
        %1141 = vmatprep.subr.mxu0 0.0
        %1142 = vmatpush1.msra.mxu0 0.0
        %1143 = vmatprep.subr.mxu0 0.0
        %1144 = vmatpush1.msra.mxu0 0.0
        %1145 = vmatprep.subr.mxu0 0.0
        %1146 = vmatpush1.msra.mxu0 0.0
        %1147 = vmatprep.subr.mxu0 0.0
        %1148 = vmatpush1.msra.mxu0 0.0
        %1149 = vmatprep.subr.mxu0 0.0
        %1150 = vmatpush1.msra.mxu0 0.0
        %1151 = vmatprep.mubr.f32.mxu0 0.0
        %1152 = vmatmul.mubr.f32.gmra.mrb[0].mxu0 %v1008
        %v1153 = vpop.f32.mrb[0].mxu0
        %v1154 = vadd.f32 0.0, %v1153
        %v1155 = vpop.f32.mrb[0].mxu0
        %1156 = vdwg.mxu0
        %v1157 = vadd.f32 %v993, %v1083
        %v1158 = vadd.f32 %v994, %v1085
        %v1159 = vadd.f32 %v995, %v1154
        %s1160 = scalar_lea.vmem %s1, 20
        %v1161 = vld [vmem:[%s1160] sm:$0xf]
        %1162 = vrot.lane.b32.xlu0 %v349, 108
        %v1163 = vpop.permute.xlu0 %1162
        %1164 = vrot.lane.b32.xlu0 %v345, 108
        %v1165 = vpop.permute.xlu0 %1164
        %1166 = vrot.lane.b32.xlu0 %v351, 108
        %v1167 = vpop.permute.xlu0 %1166
        %vm1168 = vcmask 883712
        %v1169 = vsel %vm1168, %v1163, %v1165
        %v1170 = vsel %vm1168, %v1165, %v1167
        %v1172 = vsel %vm366, %v1161, 0
        %v1174 = vsel %vm370, %v1169, 0
        %v1176 = vsel %vm370, %v1170, 0
        %v1178 = vsel %vm370, %v1167, 0
        %1180 = vmatprep.subr.mxu0 %v1176
        %1181 = vmatpush1.msra.mxu0 %v1174
        %1182 = vmatprep.subr.mxu0 0.0
        %1183 = vmatpush1.msra.mxu0 0.0
        %1184 = vmatprep.subr.mxu0 0.0
        %1185 = vmatpush1.msra.mxu0 0.0
        %1186 = vmatprep.subr.mxu0 0.0
        %1187 = vmatpush1.msra.mxu0 0.0
        %1188 = vmatprep.subr.mxu0 0.0
        %1189 = vmatpush1.msra.mxu0 0.0
        %1190 = vmatprep.subr.mxu0 0.0
        %1191 = vmatpush1.msra.mxu0 0.0
        %1192 = vmatprep.subr.mxu0 0.0
        %1193 = vmatpush1.msra.mxu0 0.0
        %1194 = vmatprep.subr.mxu0 0.0
        %1195 = vmatpush1.msra.mxu0 0.0
        %1196 = vmatprep.subr.mxu0 0.0
        %1197 = vmatpush1.msra.mxu0 0.0
        %1198 = vmatprep.subr.mxu0 0.0
        %1199 = vmatpush1.msra.mxu0 0.0
        %1200 = vmatprep.subr.mxu0 0.0
        %1201 = vmatpush1.msra.mxu0 0.0
        %1202 = vmatprep.subr.mxu0 0.0
        %1203 = vmatpush1.msra.mxu0 0.0
        %1204 = vmatprep.subr.mxu0 0.0
        %1205 = vmatpush1.msra.mxu0 0.0
        %1206 = vmatprep.subr.mxu0 0.0
        %1207 = vmatpush1.msra.mxu0 0.0
        %1208 = vmatprep.subr.mxu0 0.0
        %1209 = vmatpush1.msra.mxu0 0.0
        %1210 = vmatprep.subr.mxu0 0.0
        %1211 = vmatpush1.msra.mxu0 0.0
        %1212 = vmatprep.subr.mxu0 0.0
        %1213 = vmatpush1.msra.mxu0 0.0
        %1214 = vmatprep.subr.mxu0 0.0
        %1215 = vmatpush1.msra.mxu0 0.0
        %1216 = vmatprep.subr.mxu0 0.0
        %1217 = vmatpush1.msra.mxu0 0.0
        %1218 = vmatprep.subr.mxu0 0.0
        %1219 = vmatpush1.msra.mxu0 0.0
        %1220 = vmatprep.subr.mxu0 0.0
        %1221 = vmatpush1.msra.mxu0 0.0
        %1222 = vmatprep.subr.mxu0 0.0
        %1223 = vmatpush1.msra.mxu0 0.0
        %1224 = vmatprep.subr.mxu0 0.0
        %1225 = vmatpush1.msra.mxu0 0.0
        %1226 = vmatprep.subr.mxu0 0.0
        %1227 = vmatpush1.msra.mxu0 0.0
        %1228 = vmatprep.subr.mxu0 0.0
        %1229 = vmatpush1.msra.mxu0 0.0
        %1230 = vmatprep.subr.mxu0 0.0
        %1231 = vmatpush1.msra.mxu0 0.0
        %1232 = vmatprep.subr.mxu0 0.0
        %1233 = vmatpush1.msra.mxu0 0.0
        %1234 = vmatprep.subr.mxu0 0.0
        %1235 = vmatpush1.msra.mxu0 0.0
        %1236 = vmatprep.subr.mxu0 0.0
        %1237 = vmatpush1.msra.mxu0 0.0
        %1238 = vmatprep.subr.mxu0 0.0
        %1239 = vmatpush1.msra.mxu0 0.0
        %1240 = vmatprep.subr.mxu0 0.0
        %1241 = vmatpush1.msra.mxu0 0.0
        %1242 = vmatprep.subr.mxu0 0.0
        %1243 = vmatpush1.msra.mxu0 0.0
        %1244 = vmatprep.mubr.f32.mxu0 0.0
        %1245 = vmatmul.mubr.f32.gmra.mrb[0].mxu0 %v1172
        %v1246 = vpop.f32.mrb[0].mxu0
        %v1247 = vadd.f32 0.0, %v1246
        %v1248 = vpop.f32.mrb[0].mxu0
        %v1249 = vadd.f32 0.0, %v1248
        %1250 = vdwg.mxu0
        %1251 = vmatprep.subr.mxu0 0.0
        %1252 = vmatpush1.msra.mxu0 %v1178
        %1253 = vmatprep.subr.mxu0 0.0
        %1254 = vmatpush1.msra.mxu0 0.0
        %1255 = vmatprep.subr.mxu0 0.0
        %1256 = vmatpush1.msra.mxu0 0.0
        %1257 = vmatprep.subr.mxu0 0.0
        %1258 = vmatpush1.msra.mxu0 0.0
        %1259 = vmatprep.subr.mxu0 0.0
        %1260 = vmatpush1.msra.mxu0 0.0
        %1261 = vmatprep.subr.mxu0 0.0
        %1262 = vmatpush1.msra.mxu0 0.0
        %1263 = vmatprep.subr.mxu0 0.0
        %1264 = vmatpush1.msra.mxu0 0.0
        %1265 = vmatprep.subr.mxu0 0.0
        %1266 = vmatpush1.msra.mxu0 0.0
        %1267 = vmatprep.subr.mxu0 0.0
        %1268 = vmatpush1.msra.mxu0 0.0
        %1269 = vmatprep.subr.mxu0 0.0
        %1270 = vmatpush1.msra.mxu0 0.0
        %1271 = vmatprep.subr.mxu0 0.0
        %1272 = vmatpush1.msra.mxu0 0.0
        %1273 = vmatprep.subr.mxu0 0.0
        %1274 = vmatpush1.msra.mxu0 0.0
        %1275 = vmatprep.subr.mxu0 0.0
        %1276 = vmatpush1.msra.mxu0 0.0
        %1277 = vmatprep.subr.mxu0 0.0
        %1278 = vmatpush1.msra.mxu0 0.0
        %1279 = vmatprep.subr.mxu0 0.0
        %1280 = vmatpush1.msra.mxu0 0.0
        %1281 = vmatprep.subr.mxu0 0.0
        %1282 = vmatpush1.msra.mxu0 0.0
        %1283 = vmatprep.subr.mxu0 0.0
        %1284 = vmatpush1.msra.mxu0 0.0
        %1285 = vmatprep.subr.mxu0 0.0
        %1286 = vmatpush1.msra.mxu0 0.0
        %1287 = vmatprep.subr.mxu0 0.0
        %1288 = vmatpush1.msra.mxu0 0.0
        %1289 = vmatprep.subr.mxu0 0.0
        %1290 = vmatpush1.msra.mxu0 0.0
        %1291 = vmatprep.subr.mxu0 0.0
        %1292 = vmatpush1.msra.mxu0 0.0
        %1293 = vmatprep.subr.mxu0 0.0
        %1294 = vmatpush1.msra.mxu0 0.0
        %1295 = vmatprep.subr.mxu0 0.0
        %1296 = vmatpush1.msra.mxu0 0.0
        %1297 = vmatprep.subr.mxu0 0.0
        %1298 = vmatpush1.msra.mxu0 0.0
        %1299 = vmatprep.subr.mxu0 0.0
        %1300 = vmatpush1.msra.mxu0 0.0
        %1301 = vmatprep.subr.mxu0 0.0
        %1302 = vmatpush1.msra.mxu0 0.0
        %1303 = vmatprep.subr.mxu0 0.0
        %1304 = vmatpush1.msra.mxu0 0.0
        %1305 = vmatprep.subr.mxu0 0.0
        %1306 = vmatpush1.msra.mxu0 0.0
        %1307 = vmatprep.subr.mxu0 0.0
        %1308 = vmatpush1.msra.mxu0 0.0
        %1309 = vmatprep.subr.mxu0 0.0
        %1310 = vmatpush1.msra.mxu0 0.0
        %1311 = vmatprep.subr.mxu0 0.0
        %1312 = vmatpush1.msra.mxu0 0.0
        %1313 = vmatprep.subr.mxu0 0.0
        %1314 = vmatpush1.msra.mxu0 0.0
        %1315 = vmatprep.mubr.f32.mxu0 0.0
        %1316 = vmatmul.mubr.f32.gmra.mrb[0].mxu0 %v1172
        %v1317 = vpop.f32.mrb[0].mxu0
        %v1318 = vadd.f32 0.0, %v1317
        %v1319 = vpop.f32.mrb[0].mxu0
        %1320 = vdwg.mxu0
        %v1321 = vadd.f32 %v1157, %v1247
        %v1322 = vadd.f32 %v1158, %v1249
        %v1323 = vadd.f32 %v1159, %v1318
        %s1324 = scalar_lea.vmem %s1, 24
        %v1325 = vld [vmem:[%s1324] sm:$0xf]
        %1326 = vrot.lane.b32.xlu0 %v349, 92
        %v1327 = vpop.permute.xlu0 %1326
        %1328 = vrot.lane.b32.xlu0 %v345, 92
        %v1329 = vpop.permute.xlu0 %1328
        %1330 = vrot.lane.b32.xlu0 %v351, 92
        %v1331 = vpop.permute.xlu0 %1330
        %vm1332 = vcmask 752640
        %v1333 = vsel %vm1332, %v1327, %v1329
        %v1334 = vsel %vm1332, %v1329, %v1331
        %v1336 = vsel %vm366, %v1325, 0
        %v1338 = vsel %vm370, %v1333, 0
        %v1340 = vsel %vm370, %v1334, 0
        %v1342 = vsel %vm370, %v1331, 0
        %1344 = vmatprep.subr.mxu0 %v1340
        %1345 = vmatpush1.msra.mxu0 %v1338
        %1346 = vmatprep.subr.mxu0 0.0
        %1347 = vmatpush1.msra.mxu0 0.0
        %1348 = vmatprep.subr.mxu0 0.0
        %1349 = vmatpush1.msra.mxu0 0.0
        %1350 = vmatprep.subr.mxu0 0.0
        %1351 = vmatpush1.msra.mxu0 0.0
        %1352 = vmatprep.subr.mxu0 0.0
        %1353 = vmatpush1.msra.mxu0 0.0
        %1354 = vmatprep.subr.mxu0 0.0
        %1355 = vmatpush1.msra.mxu0 0.0
        %1356 = vmatprep.subr.mxu0 0.0
        %1357 = vmatpush1.msra.mxu0 0.0
        %1358 = vmatprep.subr.mxu0 0.0
        %1359 = vmatpush1.msra.mxu0 0.0
        %1360 = vmatprep.subr.mxu0 0.0
        %1361 = vmatpush1.msra.mxu0 0.0
        %1362 = vmatprep.subr.mxu0 0.0
        %1363 = vmatpush1.msra.mxu0 0.0
        %1364 = vmatprep.subr.mxu0 0.0
        %1365 = vmatpush1.msra.mxu0 0.0
        %1366 = vmatprep.subr.mxu0 0.0
        %1367 = vmatpush1.msra.mxu0 0.0
        %1368 = vmatprep.subr.mxu0 0.0
        %1369 = vmatpush1.msra.mxu0 0.0
        %1370 = vmatprep.subr.mxu0 0.0
        %1371 = vmatpush1.msra.mxu0 0.0
        %1372 = vmatprep.subr.mxu0 0.0
        %1373 = vmatpush1.msra.mxu0 0.0
        %1374 = vmatprep.subr.mxu0 0.0
        %1375 = vmatpush1.msra.mxu0 0.0
        %1376 = vmatprep.subr.mxu0 0.0
        %1377 = vmatpush1.msra.mxu0 0.0
        %1378 = vmatprep.subr.mxu0 0.0
        %1379 = vmatpush1.msra.mxu0 0.0
        %1380 = vmatprep.subr.mxu0 0.0
        %1381 = vmatpush1.msra.mxu0 0.0
        %1382 = vmatprep.subr.mxu0 0.0
        %1383 = vmatpush1.msra.mxu0 0.0
        %1384 = vmatprep.subr.mxu0 0.0
        %1385 = vmatpush1.msra.mxu0 0.0
        %1386 = vmatprep.subr.mxu0 0.0
        %1387 = vmatpush1.msra.mxu0 0.0
        %1388 = vmatprep.subr.mxu0 0.0
        %1389 = vmatpush1.msra.mxu0 0.0
        %1390 = vmatprep.subr.mxu0 0.0
        %1391 = vmatpush1.msra.mxu0 0.0
        %1392 = vmatprep.subr.mxu0 0.0
        %1393 = vmatpush1.msra.mxu0 0.0
        %1394 = vmatprep.subr.mxu0 0.0
        %1395 = vmatpush1.msra.mxu0 0.0
        %1396 = vmatprep.subr.mxu0 0.0
        %1397 = vmatpush1.msra.mxu0 0.0
        %1398 = vmatprep.subr.mxu0 0.0
        %1399 = vmatpush1.msra.mxu0 0.0
        %1400 = vmatprep.subr.mxu0 0.0
        %1401 = vmatpush1.msra.mxu0 0.0
        %1402 = vmatprep.subr.mxu0 0.0
        %1403 = vmatpush1.msra.mxu0 0.0
        %1404 = vmatprep.subr.mxu0 0.0
        %1405 = vmatpush1.msra.mxu0 0.0
        %1406 = vmatprep.subr.mxu0 0.0
        %1407 = vmatpush1.msra.mxu0 0.0
        %1408 = vmatprep.mubr.f32.mxu0 0.0
        %1409 = vmatmul.mubr.f32.gmra.mrb[0].mxu0 %v1336
        %v1410 = vpop.f32.mrb[0].mxu0
        %v1411 = vadd.f32 0.0, %v1410
        %v1412 = vpop.f32.mrb[0].mxu0
        %v1413 = vadd.f32 0.0, %v1412
        %1414 = vdwg.mxu0
        %1415 = vmatprep.subr.mxu0 0.0
        %1416 = vmatpush1.msra.mxu0 %v1342
        %1417 = vmatprep.subr.mxu0 0.0
        %1418 = vmatpush1.msra.mxu0 0.0
        %1419 = vmatprep.subr.mxu0 0.0
        %1420 = vmatpush1.msra.mxu0 0.0
        %1421 = vmatprep.subr.mxu0 0.0
        %1422 = vmatpush1.msra.mxu0 0.0
        %1423 = vmatprep.subr.mxu0 0.0
        %1424 = vmatpush1.msra.mxu0 0.0
        %1425 = vmatprep.subr.mxu0 0.0
        %1426 = vmatpush1.msra.mxu0 0.0
        %1427 = vmatprep.subr.mxu0 0.0
        %1428 = vmatpush1.msra.mxu0 0.0
        %1429 = vmatprep.subr.mxu0 0.0
        %1430 = vmatpush1.msra.mxu0 0.0
        %1431 = vmatprep.subr.mxu0 0.0
        %1432 = vmatpush1.msra.mxu0 0.0
        %1433 = vmatprep.subr.mxu0 0.0
        %1434 = vmatpush1.msra.mxu0 0.0
        %1435 = vmatprep.subr.mxu0 0.0
        %1436 = vmatpush1.msra.mxu0 0.0
        %1437 = vmatprep.subr.mxu0 0.0
        %1438 = vmatpush1.msra.mxu0 0.0
        %1439 = vmatprep.subr.mxu0 0.0
        %1440 = vmatpush1.msra.mxu0 0.0
        %1441 = vmatprep.subr.mxu0 0.0
        %1442 = vmatpush1.msra.mxu0 0.0
        %1443 = vmatprep.subr.mxu0 0.0
        %1444 = vmatpush1.msra.mxu0 0.0
        %1445 = vmatprep.subr.mxu0 0.0
        %1446 = vmatpush1.msra.mxu0 0.0
        %1447 = vmatprep.subr.mxu0 0.0
        %1448 = vmatpush1.msra.mxu0 0.0
        %1449 = vmatprep.subr.mxu0 0.0
        %1450 = vmatpush1.msra.mxu0 0.0
        %1451 = vmatprep.subr.mxu0 0.0
        %1452 = vmatpush1.msra.mxu0 0.0
        %1453 = vmatprep.subr.mxu0 0.0
        %1454 = vmatpush1.msra.mxu0 0.0
        %1455 = vmatprep.subr.mxu0 0.0
        %1456 = vmatpush1.msra.mxu0 0.0
        %1457 = vmatprep.subr.mxu0 0.0
        %1458 = vmatpush1.msra.mxu0 0.0
        %1459 = vmatprep.subr.mxu0 0.0
        %1460 = vmatpush1.msra.mxu0 0.0
        %1461 = vmatprep.subr.mxu0 0.0
        %1462 = vmatpush1.msra.mxu0 0.0
        %1463 = vmatprep.subr.mxu0 0.0
        %1464 = vmatpush1.msra.mxu0 0.0
        %1465 = vmatprep.subr.mxu0 0.0
        %1466 = vmatpush1.msra.mxu0 0.0
        %1467 = vmatprep.subr.mxu0 0.0
        %1468 = vmatpush1.msra.mxu0 0.0
        %1469 = vmatprep.subr.mxu0 0.0
        %1470 = vmatpush1.msra.mxu0 0.0
        %1471 = vmatprep.subr.mxu0 0.0
        %1472 = vmatpush1.msra.mxu0 0.0
        %1473 = vmatprep.subr.mxu0 0.0
        %1474 = vmatpush1.msra.mxu0 0.0
        %1475 = vmatprep.subr.mxu0 0.0
        %1476 = vmatpush1.msra.mxu0 0.0
        %1477 = vmatprep.subr.mxu0 0.0
        %1478 = vmatpush1.msra.mxu0 0.0
        %1479 = vmatprep.mubr.f32.mxu0 0.0
        %1480 = vmatmul.mubr.f32.gmra.mrb[0].mxu0 %v1336
        %v1481 = vpop.f32.mrb[0].mxu0
        %v1482 = vadd.f32 0.0, %v1481
        %v1483 = vpop.f32.mrb[0].mxu0
        %1484 = vdwg.mxu0
        %v1485 = vadd.f32 %v1321, %v1411
        %v1486 = vadd.f32 %v1322, %v1413
        %v1487 = vadd.f32 %v1323, %v1482
        %s1488 = scalar_lea.vmem %s1, 28
        %v1489 = vld [vmem:[%s1488] sm:$0xf]
        %1490 = vrot.lane.b32.xlu0 %v349, 91
        %v1491 = vpop.permute.xlu0 %1490
        %1492 = vrot.lane.b32.xlu0 %v345, 91
        %v1493 = vpop.permute.xlu0 %1492
        %1494 = vrot.lane.b32.xlu0 %v351, 91
        %v1495 = vpop.permute.xlu0 %1494
        %vm1496 = vcmask 744448
        %v1497 = vsel %vm1496, %v1491, %v1493
        %v1498 = vsel %vm1496, %v1493, %v1495
        %v1500 = vsel %vm366, %v1489, 0
        %v1502 = vsel %vm370, %v1497, 0
        %v1504 = vsel %vm370, %v1498, 0
        %v1506 = vsel %vm370, %v1495, 0
        %1508 = vmatprep.subr.mxu0 %v1504
        %1509 = vmatpush1.msra.mxu0 %v1502
        %1510 = vmatprep.subr.mxu0 0.0
        %1511 = vmatpush1.msra.mxu0 0.0
        %1512 = vmatprep.subr.mxu0 0.0
        %1513 = vmatpush1.msra.mxu0 0.0
        %1514 = vmatprep.subr.mxu0 0.0
        %1515 = vmatpush1.msra.mxu0 0.0
        %1516 = vmatprep.subr.mxu0 0.0
        %1517 = vmatpush1.msra.mxu0 0.0
        %1518 = vmatprep.subr.mxu0 0.0
        %1519 = vmatpush1.msra.mxu0 0.0
        %1520 = vmatprep.subr.mxu0 0.0
        %1521 = vmatpush1.msra.mxu0 0.0
        %1522 = vmatprep.subr.mxu0 0.0
        %1523 = vmatpush1.msra.mxu0 0.0
        %1524 = vmatprep.subr.mxu0 0.0
        %1525 = vmatpush1.msra.mxu0 0.0
        %1526 = vmatprep.subr.mxu0 0.0
        %1527 = vmatpush1.msra.mxu0 0.0
        %1528 = vmatprep.subr.mxu0 0.0
        %1529 = vmatpush1.msra.mxu0 0.0
        %1530 = vmatprep.subr.mxu0 0.0
        %1531 = vmatpush1.msra.mxu0 0.0
        %1532 = vmatprep.subr.mxu0 0.0
        %1533 = vmatpush1.msra.mxu0 0.0
        %1534 = vmatprep.subr.mxu0 0.0
        %1535 = vmatpush1.msra.mxu0 0.0
        %1536 = vmatprep.subr.mxu0 0.0
        %1537 = vmatpush1.msra.mxu0 0.0
        %1538 = vmatprep.subr.mxu0 0.0
        %1539 = vmatpush1.msra.mxu0 0.0
        %1540 = vmatprep.subr.mxu0 0.0
        %1541 = vmatpush1.msra.mxu0 0.0
        %1542 = vmatprep.subr.mxu0 0.0
        %1543 = vmatpush1.msra.mxu0 0.0
        %1544 = vmatprep.subr.mxu0 0.0
        %1545 = vmatpush1.msra.mxu0 0.0
        %1546 = vmatprep.subr.mxu0 0.0
        %1547 = vmatpush1.msra.mxu0 0.0
        %1548 = vmatprep.subr.mxu0 0.0
        %1549 = vmatpush1.msra.mxu0 0.0
        %1550 = vmatprep.subr.mxu0 0.0
        %1551 = vmatpush1.msra.mxu0 0.0
        %1552 = vmatprep.subr.mxu0 0.0
        %1553 = vmatpush1.msra.mxu0 0.0
        %1554 = vmatprep.subr.mxu0 0.0
        %1555 = vmatpush1.msra.mxu0 0.0
        %1556 = vmatprep.subr.mxu0 0.0
        %1557 = vmatpush1.msra.mxu0 0.0
        %1558 = vmatprep.subr.mxu0 0.0
        %1559 = vmatpush1.msra.mxu0 0.0
        %1560 = vmatprep.subr.mxu0 0.0
        %1561 = vmatpush1.msra.mxu0 0.0
        %1562 = vmatprep.subr.mxu0 0.0
        %1563 = vmatpush1.msra.mxu0 0.0
        %1564 = vmatprep.subr.mxu0 0.0
        %1565 = vmatpush1.msra.mxu0 0.0
        %1566 = vmatprep.subr.mxu0 0.0
        %1567 = vmatpush1.msra.mxu0 0.0
        %1568 = vmatprep.subr.mxu0 0.0
        %1569 = vmatpush1.msra.mxu0 0.0
        %1570 = vmatprep.subr.mxu0 0.0
        %1571 = vmatpush1.msra.mxu0 0.0
        %1572 = vmatprep.mubr.f32.mxu0 0.0
        %1573 = vmatmul.mubr.f32.gmra.mrb[0].mxu0 %v1500
        %v1574 = vpop.f32.mrb[0].mxu0
        %v1575 = vadd.f32 0.0, %v1574
        %v1576 = vpop.f32.mrb[0].mxu0
        %v1577 = vadd.f32 0.0, %v1576
        %1578 = vdwg.mxu0
        %1579 = vmatprep.subr.mxu0 0.0
        %1580 = vmatpush1.msra.mxu0 %v1506
        %1581 = vmatprep.subr.mxu0 0.0
        %1582 = vmatpush1.msra.mxu0 0.0
        %1583 = vmatprep.subr.mxu0 0.0
        %1584 = vmatpush1.msra.mxu0 0.0
        %1585 = vmatprep.subr.mxu0 0.0
        %1586 = vmatpush1.msra.mxu0 0.0
        %1587 = vmatprep.subr.mxu0 0.0
        %1588 = vmatpush1.msra.mxu0 0.0
        %1589 = vmatprep.subr.mxu0 0.0
        %1590 = vmatpush1.msra.mxu0 0.0
        %1591 = vmatprep.subr.mxu0 0.0
        %1592 = vmatpush1.msra.mxu0 0.0
        %1593 = vmatprep.subr.mxu0 0.0
        %1594 = vmatpush1.msra.mxu0 0.0
        %1595 = vmatprep.subr.mxu0 0.0
        %1596 = vmatpush1.msra.mxu0 0.0
        %1597 = vmatprep.subr.mxu0 0.0
        %1598 = vmatpush1.msra.mxu0 0.0
        %1599 = vmatprep.subr.mxu0 0.0
        %1600 = vmatpush1.msra.mxu0 0.0
        %1601 = vmatprep.subr.mxu0 0.0
        %1602 = vmatpush1.msra.mxu0 0.0
        %1603 = vmatprep.subr.mxu0 0.0
        %1604 = vmatpush1.msra.mxu0 0.0
        %1605 = vmatprep.subr.mxu0 0.0
        %1606 = vmatpush1.msra.mxu0 0.0
        %1607 = vmatprep.subr.mxu0 0.0
        %1608 = vmatpush1.msra.mxu0 0.0
        %1609 = vmatprep.subr.mxu0 0.0
        %1610 = vmatpush1.msra.mxu0 0.0
        %1611 = vmatprep.subr.mxu0 0.0
        %1612 = vmatpush1.msra.mxu0 0.0
        %1613 = vmatprep.subr.mxu0 0.0
        %1614 = vmatpush1.msra.mxu0 0.0
        %1615 = vmatprep.subr.mxu0 0.0
        %1616 = vmatpush1.msra.mxu0 0.0
        %1617 = vmatprep.subr.mxu0 0.0
        %1618 = vmatpush1.msra.mxu0 0.0
        %1619 = vmatprep.subr.mxu0 0.0
        %1620 = vmatpush1.msra.mxu0 0.0
        %1621 = vmatprep.subr.mxu0 0.0
        %1622 = vmatpush1.msra.mxu0 0.0
        %1623 = vmatprep.subr.mxu0 0.0
        %1624 = vmatpush1.msra.mxu0 0.0
        %1625 = vmatprep.subr.mxu0 0.0
        %1626 = vmatpush1.msra.mxu0 0.0
        %1627 = vmatprep.subr.mxu0 0.0
        %1628 = vmatpush1.msra.mxu0 0.0
        %1629 = vmatprep.subr.mxu0 0.0
        %1630 = vmatpush1.msra.mxu0 0.0
        %1631 = vmatprep.subr.mxu0 0.0
        %1632 = vmatpush1.msra.mxu0 0.0
        %1633 = vmatprep.subr.mxu0 0.0
        %1634 = vmatpush1.msra.mxu0 0.0
        %1635 = vmatprep.subr.mxu0 0.0
        %1636 = vmatpush1.msra.mxu0 0.0
        %1637 = vmatprep.subr.mxu0 0.0
        %1638 = vmatpush1.msra.mxu0 0.0
        %1639 = vmatprep.subr.mxu0 0.0
        %1640 = vmatpush1.msra.mxu0 0.0
        %1641 = vmatprep.subr.mxu0 0.0
        %1642 = vmatpush1.msra.mxu0 0.0
        %1643 = vmatprep.mubr.f32.mxu0 0.0
        %1644 = vmatmul.mubr.f32.gmra.mrb[0].mxu0 %v1500
        %v1645 = vpop.f32.mrb[0].mxu0
        %v1646 = vadd.f32 0.0, %v1645
        %v1647 = vpop.f32.mrb[0].mxu0
        %1648 = vdwg.mxu0
        %v1649 = vadd.f32 %v1485, %v1575
        %v1650 = vadd.f32 %v1486, %v1577
        %v1651 = vadd.f32 %v1487, %v1646
        %s1652 = scalar_lea.vmem %s1, 32
        %v1653 = vld [vmem:[%s1652] sm:$0xf]
        %1654 = vrot.lane.b32.xlu0 %v349, 90
        %v1655 = vpop.permute.xlu0 %1654
        %1656 = vrot.lane.b32.xlu0 %v345, 90
        %v1657 = vpop.permute.xlu0 %1656
        %1658 = vrot.lane.b32.xlu0 %v351, 90
        %v1659 = vpop.permute.xlu0 %1658
        %vm1660 = vcmask 736256
        %v1661 = vsel %vm1660, %v1655, %v1657
        %v1662 = vsel %vm1660, %v1657, %v1659
        %v1664 = vsel %vm366, %v1653, 0
        %v1666 = vsel %vm370, %v1661, 0
        %v1668 = vsel %vm370, %v1662, 0
        %v1670 = vsel %vm370, %v1659, 0
        %1672 = vmatprep.subr.mxu0 %v1668
        %1673 = vmatpush1.msra.mxu0 %v1666
        %1674 = vmatprep.subr.mxu0 0.0
        %1675 = vmatpush1.msra.mxu0 0.0
        %1676 = vmatprep.subr.mxu0 0.0
        %1677 = vmatpush1.msra.mxu0 0.0
        %1678 = vmatprep.subr.mxu0 0.0
        %1679 = vmatpush1.msra.mxu0 0.0
        %1680 = vmatprep.subr.mxu0 0.0
        %1681 = vmatpush1.msra.mxu0 0.0
        %1682 = vmatprep.subr.mxu0 0.0
        %1683 = vmatpush1.msra.mxu0 0.0
        %1684 = vmatprep.subr.mxu0 0.0
        %1685 = vmatpush1.msra.mxu0 0.0
        %1686 = vmatprep.subr.mxu0 0.0
        %1687 = vmatpush1.msra.mxu0 0.0
        %1688 = vmatprep.subr.mxu0 0.0
        %1689 = vmatpush1.msra.mxu0 0.0
        %1690 = vmatprep.subr.mxu0 0.0
        %1691 = vmatpush1.msra.mxu0 0.0
        %1692 = vmatprep.subr.mxu0 0.0
        %1693 = vmatpush1.msra.mxu0 0.0
        %1694 = vmatprep.subr.mxu0 0.0
        %1695 = vmatpush1.msra.mxu0 0.0
        %1696 = vmatprep.subr.mxu0 0.0
        %1697 = vmatpush1.msra.mxu0 0.0
        %1698 = vmatprep.subr.mxu0 0.0
        %1699 = vmatpush1.msra.mxu0 0.0
        %1700 = vmatprep.subr.mxu0 0.0
        %1701 = vmatpush1.msra.mxu0 0.0
        %1702 = vmatprep.subr.mxu0 0.0
        %1703 = vmatpush1.msra.mxu0 0.0
        %1704 = vmatprep.subr.mxu0 0.0
        %1705 = vmatpush1.msra.mxu0 0.0
        %1706 = vmatprep.subr.mxu0 0.0
        %1707 = vmatpush1.msra.mxu0 0.0
        %1708 = vmatprep.subr.mxu0 0.0
        %1709 = vmatpush1.msra.mxu0 0.0
        %1710 = vmatprep.subr.mxu0 0.0
        %1711 = vmatpush1.msra.mxu0 0.0
        %1712 = vmatprep.subr.mxu0 0.0
        %1713 = vmatpush1.msra.mxu0 0.0
        %1714 = vmatprep.subr.mxu0 0.0
        %1715 = vmatpush1.msra.mxu0 0.0
        %1716 = vmatprep.subr.mxu0 0.0
        %1717 = vmatpush1.msra.mxu0 0.0
        %1718 = vmatprep.subr.mxu0 0.0
        %1719 = vmatpush1.msra.mxu0 0.0
        %1720 = vmatprep.subr.mxu0 0.0
        %1721 = vmatpush1.msra.mxu0 0.0
        %1722 = vmatprep.subr.mxu0 0.0
        %1723 = vmatpush1.msra.mxu0 0.0
        %1724 = vmatprep.subr.mxu0 0.0
        %1725 = vmatpush1.msra.mxu0 0.0
        %1726 = vmatprep.subr.mxu0 0.0
        %1727 = vmatpush1.msra.mxu0 0.0
        %1728 = vmatprep.subr.mxu0 0.0
        %1729 = vmatpush1.msra.mxu0 0.0
        %1730 = vmatprep.subr.mxu0 0.0
        %1731 = vmatpush1.msra.mxu0 0.0
        %1732 = vmatprep.subr.mxu0 0.0
        %1733 = vmatpush1.msra.mxu0 0.0
        %1734 = vmatprep.subr.mxu0 0.0
        %1735 = vmatpush1.msra.mxu0 0.0
        %1736 = vmatprep.mubr.f32.mxu0 0.0
        %1737 = vmatmul.mubr.f32.gmra.mrb[0].mxu0 %v1664
        %v1738 = vpop.f32.mrb[0].mxu0
        %v1739 = vadd.f32 0.0, %v1738
        %v1740 = vpop.f32.mrb[0].mxu0
        %v1741 = vadd.f32 0.0, %v1740
        %1742 = vdwg.mxu0
        %1743 = vmatprep.subr.mxu0 0.0
        %1744 = vmatpush1.msra.mxu0 %v1670
        %1745 = vmatprep.subr.mxu0 0.0
        %1746 = vmatpush1.msra.mxu0 0.0
        %1747 = vmatprep.subr.mxu0 0.0
        %1748 = vmatpush1.msra.mxu0 0.0
        %1749 = vmatprep.subr.mxu0 0.0
        %1750 = vmatpush1.msra.mxu0 0.0
        %1751 = vmatprep.subr.mxu0 0.0
        %1752 = vmatpush1.msra.mxu0 0.0
        %1753 = vmatprep.subr.mxu0 0.0
        %1754 = vmatpush1.msra.mxu0 0.0
        %1755 = vmatprep.subr.mxu0 0.0
        %1756 = vmatpush1.msra.mxu0 0.0
        %1757 = vmatprep.subr.mxu0 0.0
        %1758 = vmatpush1.msra.mxu0 0.0
        %1759 = vmatprep.subr.mxu0 0.0
        %1760 = vmatpush1.msra.mxu0 0.0
        %1761 = vmatprep.subr.mxu0 0.0
        %1762 = vmatpush1.msra.mxu0 0.0
        %1763 = vmatprep.subr.mxu0 0.0
        %1764 = vmatpush1.msra.mxu0 0.0
        %1765 = vmatprep.subr.mxu0 0.0
        %1766 = vmatpush1.msra.mxu0 0.0
        %1767 = vmatprep.subr.mxu0 0.0
        %1768 = vmatpush1.msra.mxu0 0.0
        %1769 = vmatprep.subr.mxu0 0.0
        %1770 = vmatpush1.msra.mxu0 0.0
        %1771 = vmatprep.subr.mxu0 0.0
        %1772 = vmatpush1.msra.mxu0 0.0
        %1773 = vmatprep.subr.mxu0 0.0
        %1774 = vmatpush1.msra.mxu0 0.0
        %1775 = vmatprep.subr.mxu0 0.0
        %1776 = vmatpush1.msra.mxu0 0.0
        %1777 = vmatprep.subr.mxu0 0.0
        %1778 = vmatpush1.msra.mxu0 0.0
        %1779 = vmatprep.subr.mxu0 0.0
        %1780 = vmatpush1.msra.mxu0 0.0
        %1781 = vmatprep.subr.mxu0 0.0
        %1782 = vmatpush1.msra.mxu0 0.0
        %1783 = vmatprep.subr.mxu0 0.0
        %1784 = vmatpush1.msra.mxu0 0.0
        %1785 = vmatprep.subr.mxu0 0.0
        %1786 = vmatpush1.msra.mxu0 0.0
        %1787 = vmatprep.subr.mxu0 0.0
        %1788 = vmatpush1.msra.mxu0 0.0
        %1789 = vmatprep.subr.mxu0 0.0
        %1790 = vmatpush1.msra.mxu0 0.0
        %1791 = vmatprep.subr.mxu0 0.0
        %1792 = vmatpush1.msra.mxu0 0.0
        %1793 = vmatprep.subr.mxu0 0.0
        %1794 = vmatpush1.msra.mxu0 0.0
        %1795 = vmatprep.subr.mxu0 0.0
        %1796 = vmatpush1.msra.mxu0 0.0
        %1797 = vmatprep.subr.mxu0 0.0
        %1798 = vmatpush1.msra.mxu0 0.0
        %1799 = vmatprep.subr.mxu0 0.0
        %1800 = vmatpush1.msra.mxu0 0.0
        %1801 = vmatprep.subr.mxu0 0.0
        %1802 = vmatpush1.msra.mxu0 0.0
        %1803 = vmatprep.subr.mxu0 0.0
        %1804 = vmatpush1.msra.mxu0 0.0
        %1805 = vmatprep.subr.mxu0 0.0
        %1806 = vmatpush1.msra.mxu0 0.0
        %1807 = vmatprep.mubr.f32.mxu0 0.0
        %1808 = vmatmul.mubr.f32.gmra.mrb[0].mxu0 %v1664
        %v1809 = vpop.f32.mrb[0].mxu0
        %v1810 = vadd.f32 0.0, %v1809
        %v1811 = vpop.f32.mrb[0].mxu0
        %1812 = vdwg.mxu0
        %v1813 = vadd.f32 %v1649, %v1739
        %v1814 = vadd.f32 %v1650, %v1741
        %v1815 = vadd.f32 %v1651, %v1810
        %s1816 = scalar_lea.vmem %s5, 8
        %v1817 = vld [vmem:[%s1816] sm:$0xf]
        %1819 = vset.pattern.permute.xlu0 0
        %1820 = vperm.xlu0 %1819, %v1817
        %v1821 = vpop.permute.xlu0 %1820
        %v1823 = vmul.f32 %v1813, %v1821
        %v1824 = vmul.f32 %v1814, %v1821
        %v1825 = vmul.f32 %v1815, %v1821
        %s1826 = scalar_lea.vmem %s5, 12
        %v1827 = vld [vmem:[%s1826] sm:$0xf]
        %1829 = vset.pattern.permute.xlu0 0
        %1830 = vperm.xlu0 %1829, %v1827
        %v1831 = vpop.permute.xlu0 %1830
        %v1833 = vadd.f32 %v1823, %v1831
        %v1834 = vadd.f32 %v1824, %v1831
        %v1835 = vadd.f32 %v1825, %v1831
        %v1836 = vmax.f32 %v1833, 0.0
        %v1837 = vmax.f32 %v1834, 0.0
        %v1838 = vmax.f32 %v1835, 0.0
        %v1839 = vmul.f32 %v317, %v1836
        %v1840 = vmul.f32 %v321, %v1837
        %v1841 = vmul.f32 %v325, %v1838
        %1845 = vrot.lane.b32.xlu0 %v1839, 19
        %v1846 = vpop.permute.xlu0 %1845
        %1847 = vrot.lane.b32.xlu0 %v1840, 19
        %v1848 = vpop.permute.xlu0 %1847
        %1849 = vrot.lane.b32.xlu0 %v1841, 19
        %v1850 = vpop.permute.xlu0 %1849
        %v1851 = vsel %vm344, %v1846, %v1848
        %v1852 = vsel %vm344, %v1848, %v1850
        %v1855 = vsel %vm344, 0.0, %v1846
        %v1856 = vsel %vm350, %v1852, 0.0
        %v1857 = vld [vmem:[%s2] sm:$0xf]
        %s1858 = scalar_lea.vmem %s2, 4
        %v1859 = vld [vmem:[%s1858] sm:$0xf]
        %1862 = vrot.lane.b32.xlu0 %v1855, 127
        %v1863 = vpop.permute.xlu0 %1862
        %1864 = vrot.lane.b32.xlu0 %v1851, 127
        %v1865 = vpop.permute.xlu0 %1864
        %1866 = vrot.lane.b32.xlu0 %v1856, 127
        %v1867 = vpop.permute.xlu0 %1866
        %v1868 = vsel %vm363, %v1863, %v1865
        %v1869 = vsel %vm363, %v1865, %v1867
        %v1871 = vsel %vm366, %v1859, 0
        %v1873 = vsel %vm370, %v1868, 0
        %v1875 = vsel %vm370, %v1869, 0
        %v1877 = vsel %vm370, %v1867, 0
        %1879 = vmatprep.subr.mxu0 %v1875
        %1880 = vmatpush1.msra.mxu0 %v1873
        %1881 = vmatprep.subr.mxu0 0.0
        %1882 = vmatpush1.msra.mxu0 0.0
        %1883 = vmatprep.subr.mxu0 0.0
        %1884 = vmatpush1.msra.mxu0 0.0
        %1885 = vmatprep.subr.mxu0 0.0
        %1886 = vmatpush1.msra.mxu0 0.0
        %1887 = vmatprep.subr.mxu0 0.0
        %1888 = vmatpush1.msra.mxu0 0.0
        %1889 = vmatprep.subr.mxu0 0.0
        %1890 = vmatpush1.msra.mxu0 0.0
        %1891 = vmatprep.subr.mxu0 0.0
        %1892 = vmatpush1.msra.mxu0 0.0
        %1893 = vmatprep.subr.mxu0 0.0
        %1894 = vmatpush1.msra.mxu0 0.0
        %1895 = vmatprep.subr.mxu0 0.0
        %1896 = vmatpush1.msra.mxu0 0.0
        %1897 = vmatprep.subr.mxu0 0.0
        %1898 = vmatpush1.msra.mxu0 0.0
        %1899 = vmatprep.subr.mxu0 0.0
        %1900 = vmatpush1.msra.mxu0 0.0
        %1901 = vmatprep.subr.mxu0 0.0
        %1902 = vmatpush1.msra.mxu0 0.0
        %1903 = vmatprep.subr.mxu0 0.0
        %1904 = vmatpush1.msra.mxu0 0.0
        %1905 = vmatprep.subr.mxu0 0.0
        %1906 = vmatpush1.msra.mxu0 0.0
        %1907 = vmatprep.subr.mxu0 0.0
        %1908 = vmatpush1.msra.mxu0 0.0
        %1909 = vmatprep.subr.mxu0 0.0
        %1910 = vmatpush1.msra.mxu0 0.0
        %1911 = vmatprep.subr.mxu0 0.0
        %1912 = vmatpush1.msra.mxu0 0.0
        %1913 = vmatprep.subr.mxu0 0.0
        %1914 = vmatpush1.msra.mxu0 0.0
        %1915 = vmatprep.subr.mxu0 0.0
        %1916 = vmatpush1.msra.mxu0 0.0
        %1917 = vmatprep.subr.mxu0 0.0
        %1918 = vmatpush1.msra.mxu0 0.0
        %1919 = vmatprep.subr.mxu0 0.0
        %1920 = vmatpush1.msra.mxu0 0.0
        %1921 = vmatprep.subr.mxu0 0.0
        %1922 = vmatpush1.msra.mxu0 0.0
        %1923 = vmatprep.subr.mxu0 0.0
        %1924 = vmatpush1.msra.mxu0 0.0
        %1925 = vmatprep.subr.mxu0 0.0
        %1926 = vmatpush1.msra.mxu0 0.0
        %1927 = vmatprep.subr.mxu0 0.0
        %1928 = vmatpush1.msra.mxu0 0.0
        %1929 = vmatprep.subr.mxu0 0.0
        %1930 = vmatpush1.msra.mxu0 0.0
        %1931 = vmatprep.subr.mxu0 0.0
        %1932 = vmatpush1.msra.mxu0 0.0
        %1933 = vmatprep.subr.mxu0 0.0
        %1934 = vmatpush1.msra.mxu0 0.0
        %1935 = vmatprep.subr.mxu0 0.0
        %1936 = vmatpush1.msra.mxu0 0.0
        %1937 = vmatprep.subr.mxu0 0.0
        %1938 = vmatpush1.msra.mxu0 0.0
        %1939 = vmatprep.subr.mxu0 0.0
        %1940 = vmatpush1.msra.mxu0 0.0
        %1941 = vmatprep.subr.mxu0 0.0
        %1942 = vmatpush1.msra.mxu0 0.0
        %1943 = vmatprep.mubr.f32.mxu0 0.0
        %1944 = vmatmul.mubr.f32.gmra.mrb[0].mxu0 %v1871
        %v1945 = vpop.f32.mrb[0].mxu0
        %v1946 = vadd.f32 0.0, %v1945
        %v1947 = vpop.f32.mrb[0].mxu0
        %v1948 = vadd.f32 0.0, %v1947
        %1949 = vdwg.mxu0
        %1950 = vmatprep.subr.mxu0 0.0
        %1951 = vmatpush1.msra.mxu0 %v1877
        %1952 = vmatprep.subr.mxu0 0.0
        %1953 = vmatpush1.msra.mxu0 0.0
        %1954 = vmatprep.subr.mxu0 0.0
        %1955 = vmatpush1.msra.mxu0 0.0
        %1956 = vmatprep.subr.mxu0 0.0
        %1957 = vmatpush1.msra.mxu0 0.0
        %1958 = vmatprep.subr.mxu0 0.0
        %1959 = vmatpush1.msra.mxu0 0.0
        %1960 = vmatprep.subr.mxu0 0.0
        %1961 = vmatpush1.msra.mxu0 0.0
        %1962 = vmatprep.subr.mxu0 0.0
        %1963 = vmatpush1.msra.mxu0 0.0
        %1964 = vmatprep.subr.mxu0 0.0
        %1965 = vmatpush1.msra.mxu0 0.0
        %1966 = vmatprep.subr.mxu0 0.0
        %1967 = vmatpush1.msra.mxu0 0.0
        %1968 = vmatprep.subr.mxu0 0.0
        %1969 = vmatpush1.msra.mxu0 0.0
        %1970 = vmatprep.subr.mxu0 0.0
        %1971 = vmatpush1.msra.mxu0 0.0
        %1972 = vmatprep.subr.mxu0 0.0
        %1973 = vmatpush1.msra.mxu0 0.0
        %1974 = vmatprep.subr.mxu0 0.0
        %1975 = vmatpush1.msra.mxu0 0.0
        %1976 = vmatprep.subr.mxu0 0.0
        %1977 = vmatpush1.msra.mxu0 0.0
        %1978 = vmatprep.subr.mxu0 0.0
        %1979 = vmatpush1.msra.mxu0 0.0
        %1980 = vmatprep.subr.mxu0 0.0
        %1981 = vmatpush1.msra.mxu0 0.0
        %1982 = vmatprep.subr.mxu0 0.0
        %1983 = vmatpush1.msra.mxu0 0.0
        %1984 = vmatprep.subr.mxu0 0.0
        %1985 = vmatpush1.msra.mxu0 0.0
        %1986 = vmatprep.subr.mxu0 0.0
        %1987 = vmatpush1.msra.mxu0 0.0
        %1988 = vmatprep.subr.mxu0 0.0
        %1989 = vmatpush1.msra.mxu0 0.0
        %1990 = vmatprep.subr.mxu0 0.0
        %1991 = vmatpush1.msra.mxu0 0.0
        %1992 = vmatprep.subr.mxu0 0.0
        %1993 = vmatpush1.msra.mxu0 0.0
        %1994 = vmatprep.subr.mxu0 0.0
        %1995 = vmatpush1.msra.mxu0 0.0
        %1996 = vmatprep.subr.mxu0 0.0
        %1997 = vmatpush1.msra.mxu0 0.0
        %1998 = vmatprep.subr.mxu0 0.0
        %1999 = vmatpush1.msra.mxu0 0.0
        %2000 = vmatprep.subr.mxu0 0.0
        %2001 = vmatpush1.msra.mxu0 0.0
        %2002 = vmatprep.subr.mxu0 0.0
        %2003 = vmatpush1.msra.mxu0 0.0
        %2004 = vmatprep.subr.mxu0 0.0
        %2005 = vmatpush1.msra.mxu0 0.0
        %2006 = vmatprep.subr.mxu0 0.0
        %2007 = vmatpush1.msra.mxu0 0.0
        %2008 = vmatprep.subr.mxu0 0.0
        %2009 = vmatpush1.msra.mxu0 0.0
        %2010 = vmatprep.subr.mxu0 0.0
        %2011 = vmatpush1.msra.mxu0 0.0
        %2012 = vmatprep.subr.mxu0 0.0
        %2013 = vmatpush1.msra.mxu0 0.0
        %2014 = vmatprep.mubr.f32.mxu0 0.0
        %2015 = vmatmul.mubr.f32.gmra.mrb[0].mxu0 %v1871
        %v2016 = vpop.f32.mrb[0].mxu0
        %v2017 = vadd.f32 0.0, %v2016
        %v2018 = vpop.f32.mrb[0].mxu0
        %2019 = vdwg.mxu0
        %v2021 = vsel %vm366, %v1857, 0
        %v2023 = vsel %vm370, %v1855, 0
        %v2025 = vsel %vm370, %v1851, 0
        %v2027 = vsel %vm370, %v1856, 0
        %2029 = vmatprep.subr.mxu0 %v2025
        %2030 = vmatpush1.msra.mxu0 %v2023
        %2031 = vmatprep.subr.mxu0 0.0
        %2032 = vmatpush1.msra.mxu0 0.0
        %2033 = vmatprep.subr.mxu0 0.0
        %2034 = vmatpush1.msra.mxu0 0.0
        %2035 = vmatprep.subr.mxu0 0.0
        %2036 = vmatpush1.msra.mxu0 0.0
        %2037 = vmatprep.subr.mxu0 0.0
        %2038 = vmatpush1.msra.mxu0 0.0
        %2039 = vmatprep.subr.mxu0 0.0
        %2040 = vmatpush1.msra.mxu0 0.0
        %2041 = vmatprep.subr.mxu0 0.0
        %2042 = vmatpush1.msra.mxu0 0.0
        %2043 = vmatprep.subr.mxu0 0.0
        %2044 = vmatpush1.msra.mxu0 0.0
        %2045 = vmatprep.subr.mxu0 0.0
        %2046 = vmatpush1.msra.mxu0 0.0
        %2047 = vmatprep.subr.mxu0 0.0
        %2048 = vmatpush1.msra.mxu0 0.0
        %2049 = vmatprep.subr.mxu0 0.0
        %2050 = vmatpush1.msra.mxu0 0.0
        %2051 = vmatprep.subr.mxu0 0.0
        %2052 = vmatpush1.msra.mxu0 0.0
        %2053 = vmatprep.subr.mxu0 0.0
        %2054 = vmatpush1.msra.mxu0 0.0
        %2055 = vmatprep.subr.mxu0 0.0
        %2056 = vmatpush1.msra.mxu0 0.0
        %2057 = vmatprep.subr.mxu0 0.0
        %2058 = vmatpush1.msra.mxu0 0.0
        %2059 = vmatprep.subr.mxu0 0.0
        %2060 = vmatpush1.msra.mxu0 0.0
        %2061 = vmatprep.subr.mxu0 0.0
        %2062 = vmatpush1.msra.mxu0 0.0
        %2063 = vmatprep.subr.mxu0 0.0
        %2064 = vmatpush1.msra.mxu0 0.0
        %2065 = vmatprep.subr.mxu0 0.0
        %2066 = vmatpush1.msra.mxu0 0.0
        %2067 = vmatprep.subr.mxu0 0.0
        %2068 = vmatpush1.msra.mxu0 0.0
        %2069 = vmatprep.subr.mxu0 0.0
        %2070 = vmatpush1.msra.mxu0 0.0
        %2071 = vmatprep.subr.mxu0 0.0
        %2072 = vmatpush1.msra.mxu0 0.0
        %2073 = vmatprep.subr.mxu0 0.0
        %2074 = vmatpush1.msra.mxu0 0.0
        %2075 = vmatprep.subr.mxu0 0.0
        %2076 = vmatpush1.msra.mxu0 0.0
        %2077 = vmatprep.subr.mxu0 0.0
        %2078 = vmatpush1.msra.mxu0 0.0
        %2079 = vmatprep.subr.mxu0 0.0
        %2080 = vmatpush1.msra.mxu0 0.0
        %2081 = vmatprep.subr.mxu0 0.0
        %2082 = vmatpush1.msra.mxu0 0.0
        %2083 = vmatprep.subr.mxu0 0.0
        %2084 = vmatpush1.msra.mxu0 0.0
        %2085 = vmatprep.subr.mxu0 0.0
        %2086 = vmatpush1.msra.mxu0 0.0
        %2087 = vmatprep.subr.mxu0 0.0
        %2088 = vmatpush1.msra.mxu0 0.0
        %2089 = vmatprep.subr.mxu0 0.0
        %2090 = vmatpush1.msra.mxu0 0.0
        %2091 = vmatprep.subr.mxu0 0.0
        %2092 = vmatpush1.msra.mxu0 0.0
        %2093 = vmatprep.mubr.f32.mxu0 0.0
        %2094 = vmatmul.mubr.f32.gmra.mrb[0].mxu0 %v2021
        %v2095 = vpop.f32.mrb[0].mxu0
        %v2096 = vadd.f32 %v1946, %v2095
        %v2097 = vpop.f32.mrb[0].mxu0
        %v2098 = vadd.f32 %v1948, %v2097
        %2099 = vdwg.mxu0
        %2100 = vmatprep.subr.mxu0 0.0
        %2101 = vmatpush1.msra.mxu0 %v2027
        %2102 = vmatprep.subr.mxu0 0.0
        %2103 = vmatpush1.msra.mxu0 0.0
        %2104 = vmatprep.subr.mxu0 0.0
        %2105 = vmatpush1.msra.mxu0 0.0
        %2106 = vmatprep.subr.mxu0 0.0
        %2107 = vmatpush1.msra.mxu0 0.0
        %2108 = vmatprep.subr.mxu0 0.0
        %2109 = vmatpush1.msra.mxu0 0.0
        %2110 = vmatprep.subr.mxu0 0.0
        %2111 = vmatpush1.msra.mxu0 0.0
        %2112 = vmatprep.subr.mxu0 0.0
        %2113 = vmatpush1.msra.mxu0 0.0
        %2114 = vmatprep.subr.mxu0 0.0
        %2115 = vmatpush1.msra.mxu0 0.0
        %2116 = vmatprep.subr.mxu0 0.0
        %2117 = vmatpush1.msra.mxu0 0.0
        %2118 = vmatprep.subr.mxu0 0.0
        %2119 = vmatpush1.msra.mxu0 0.0
        %2120 = vmatprep.subr.mxu0 0.0
        %2121 = vmatpush1.msra.mxu0 0.0
        %2122 = vmatprep.subr.mxu0 0.0
        %2123 = vmatpush1.msra.mxu0 0.0
        %2124 = vmatprep.subr.mxu0 0.0
        %2125 = vmatpush1.msra.mxu0 0.0
        %2126 = vmatprep.subr.mxu0 0.0
        %2127 = vmatpush1.msra.mxu0 0.0
        %2128 = vmatprep.subr.mxu0 0.0
        %2129 = vmatpush1.msra.mxu0 0.0
        %2130 = vmatprep.subr.mxu0 0.0
        %2131 = vmatpush1.msra.mxu0 0.0
        %2132 = vmatprep.subr.mxu0 0.0
        %2133 = vmatpush1.msra.mxu0 0.0
        %2134 = vmatprep.subr.mxu0 0.0
        %2135 = vmatpush1.msra.mxu0 0.0
        %2136 = vmatprep.subr.mxu0 0.0
        %2137 = vmatpush1.msra.mxu0 0.0
        %2138 = vmatprep.subr.mxu0 0.0
        %2139 = vmatpush1.msra.mxu0 0.0
        %2140 = vmatprep.subr.mxu0 0.0
        %2141 = vmatpush1.msra.mxu0 0.0
        %2142 = vmatprep.subr.mxu0 0.0
        %2143 = vmatpush1.msra.mxu0 0.0
        %2144 = vmatprep.subr.mxu0 0.0
        %2145 = vmatpush1.msra.mxu0 0.0
        %2146 = vmatprep.subr.mxu0 0.0
        %2147 = vmatpush1.msra.mxu0 0.0
        %2148 = vmatprep.subr.mxu0 0.0
        %2149 = vmatpush1.msra.mxu0 0.0
        %2150 = vmatprep.subr.mxu0 0.0
        %2151 = vmatpush1.msra.mxu0 0.0
        %2152 = vmatprep.subr.mxu0 0.0
        %2153 = vmatpush1.msra.mxu0 0.0
        %2154 = vmatprep.subr.mxu0 0.0
        %2155 = vmatpush1.msra.mxu0 0.0
        %2156 = vmatprep.subr.mxu0 0.0
        %2157 = vmatpush1.msra.mxu0 0.0
        %2158 = vmatprep.subr.mxu0 0.0
        %2159 = vmatpush1.msra.mxu0 0.0
        %2160 = vmatprep.subr.mxu0 0.0
        %2161 = vmatpush1.msra.mxu0 0.0
        %2162 = vmatprep.subr.mxu0 0.0
        %2163 = vmatpush1.msra.mxu0 0.0
        %2164 = vmatprep.mubr.f32.mxu0 0.0
        %2165 = vmatmul.mubr.f32.gmra.mrb[0].mxu0 %v2021
        %v2166 = vpop.f32.mrb[0].mxu0
        %v2167 = vadd.f32 %v2017, %v2166
        %v2168 = vpop.f32.mrb[0].mxu0
        %2169 = vdwg.mxu0
        %s2170 = scalar_lea.vmem %s2, 8
        %v2171 = vld [vmem:[%s2170] sm:$0xf]
        %2172 = vrot.lane.b32.xlu0 %v1855, 126
        %v2173 = vpop.permute.xlu0 %2172
        %2174 = vrot.lane.b32.xlu0 %v1851, 126
        %v2175 = vpop.permute.xlu0 %2174
        %2176 = vrot.lane.b32.xlu0 %v1856, 126
        %v2177 = vpop.permute.xlu0 %2176
        %v2178 = vsel %vm676, %v2173, %v2175
        %v2179 = vsel %vm676, %v2175, %v2177
        %v2181 = vsel %vm366, %v2171, 0
        %v2183 = vsel %vm370, %v2178, 0
        %v2185 = vsel %vm370, %v2179, 0
        %v2187 = vsel %vm370, %v2177, 0
        %2189 = vmatprep.subr.mxu0 %v2185
        %2190 = vmatpush1.msra.mxu0 %v2183
        %2191 = vmatprep.subr.mxu0 0.0
        %2192 = vmatpush1.msra.mxu0 0.0
        %2193 = vmatprep.subr.mxu0 0.0
        %2194 = vmatpush1.msra.mxu0 0.0
        %2195 = vmatprep.subr.mxu0 0.0
        %2196 = vmatpush1.msra.mxu0 0.0
        %2197 = vmatprep.subr.mxu0 0.0
        %2198 = vmatpush1.msra.mxu0 0.0
        %2199 = vmatprep.subr.mxu0 0.0
        %2200 = vmatpush1.msra.mxu0 0.0
        %2201 = vmatprep.subr.mxu0 0.0
        %2202 = vmatpush1.msra.mxu0 0.0
        %2203 = vmatprep.subr.mxu0 0.0
        %2204 = vmatpush1.msra.mxu0 0.0
        %2205 = vmatprep.subr.mxu0 0.0
        %2206 = vmatpush1.msra.mxu0 0.0
        %2207 = vmatprep.subr.mxu0 0.0
        %2208 = vmatpush1.msra.mxu0 0.0
        %2209 = vmatprep.subr.mxu0 0.0
        %2210 = vmatpush1.msra.mxu0 0.0
        %2211 = vmatprep.subr.mxu0 0.0
        %2212 = vmatpush1.msra.mxu0 0.0
        %2213 = vmatprep.subr.mxu0 0.0
        %2214 = vmatpush1.msra.mxu0 0.0
        %2215 = vmatprep.subr.mxu0 0.0
        %2216 = vmatpush1.msra.mxu0 0.0
        %2217 = vmatprep.subr.mxu0 0.0
        %2218 = vmatpush1.msra.mxu0 0.0
        %2219 = vmatprep.subr.mxu0 0.0
        %2220 = vmatpush1.msra.mxu0 0.0
        %2221 = vmatprep.subr.mxu0 0.0
        %2222 = vmatpush1.msra.mxu0 0.0
        %2223 = vmatprep.subr.mxu0 0.0
        %2224 = vmatpush1.msra.mxu0 0.0
        %2225 = vmatprep.subr.mxu0 0.0
        %2226 = vmatpush1.msra.mxu0 0.0
        %2227 = vmatprep.subr.mxu0 0.0
        %2228 = vmatpush1.msra.mxu0 0.0
        %2229 = vmatprep.subr.mxu0 0.0
        %2230 = vmatpush1.msra.mxu0 0.0
        %2231 = vmatprep.subr.mxu0 0.0
        %2232 = vmatpush1.msra.mxu0 0.0
        %2233 = vmatprep.subr.mxu0 0.0
        %2234 = vmatpush1.msra.mxu0 0.0
        %2235 = vmatprep.subr.mxu0 0.0
        %2236 = vmatpush1.msra.mxu0 0.0
        %2237 = vmatprep.subr.mxu0 0.0
        %2238 = vmatpush1.msra.mxu0 0.0
        %2239 = vmatprep.subr.mxu0 0.0
        %2240 = vmatpush1.msra.mxu0 0.0
        %2241 = vmatprep.subr.mxu0 0.0
        %2242 = vmatpush1.msra.mxu0 0.0
        %2243 = vmatprep.subr.mxu0 0.0
        %2244 = vmatpush1.msra.mxu0 0.0
        %2245 = vmatprep.subr.mxu0 0.0
        %2246 = vmatpush1.msra.mxu0 0.0
        %2247 = vmatprep.subr.mxu0 0.0
        %2248 = vmatpush1.msra.mxu0 0.0
        %2249 = vmatprep.subr.mxu0 0.0
        %2250 = vmatpush1.msra.mxu0 0.0
        %2251 = vmatprep.subr.mxu0 0.0
        %2252 = vmatpush1.msra.mxu0 0.0
        %2253 = vmatprep.mubr.f32.mxu0 0.0
        %2254 = vmatmul.mubr.f32.gmra.mrb[0].mxu0 %v2181
        %v2255 = vpop.f32.mrb[0].mxu0
        %v2256 = vadd.f32 0.0, %v2255
        %v2257 = vpop.f32.mrb[0].mxu0
        %v2258 = vadd.f32 0.0, %v2257
        %2259 = vdwg.mxu0
        %2260 = vmatprep.subr.mxu0 0.0
        %2261 = vmatpush1.msra.mxu0 %v2187
        %2262 = vmatprep.subr.mxu0 0.0
        %2263 = vmatpush1.msra.mxu0 0.0
        %2264 = vmatprep.subr.mxu0 0.0
        %2265 = vmatpush1.msra.mxu0 0.0
        %2266 = vmatprep.subr.mxu0 0.0
        %2267 = vmatpush1.msra.mxu0 0.0
        %2268 = vmatprep.subr.mxu0 0.0
        %2269 = vmatpush1.msra.mxu0 0.0
        %2270 = vmatprep.subr.mxu0 0.0
        %2271 = vmatpush1.msra.mxu0 0.0
        %2272 = vmatprep.subr.mxu0 0.0
        %2273 = vmatpush1.msra.mxu0 0.0
        %2274 = vmatprep.subr.mxu0 0.0
        %2275 = vmatpush1.msra.mxu0 0.0
        %2276 = vmatprep.subr.mxu0 0.0
        %2277 = vmatpush1.msra.mxu0 0.0
        %2278 = vmatprep.subr.mxu0 0.0
        %2279 = vmatpush1.msra.mxu0 0.0
        %2280 = vmatprep.subr.mxu0 0.0
        %2281 = vmatpush1.msra.mxu0 0.0
        %2282 = vmatprep.subr.mxu0 0.0
        %2283 = vmatpush1.msra.mxu0 0.0
        %2284 = vmatprep.subr.mxu0 0.0
        %2285 = vmatpush1.msra.mxu0 0.0
        %2286 = vmatprep.subr.mxu0 0.0
        %2287 = vmatpush1.msra.mxu0 0.0
        %2288 = vmatprep.subr.mxu0 0.0
        %2289 = vmatpush1.msra.mxu0 0.0
        %2290 = vmatprep.subr.mxu0 0.0
        %2291 = vmatpush1.msra.mxu0 0.0
        %2292 = vmatprep.subr.mxu0 0.0
        %2293 = vmatpush1.msra.mxu0 0.0
        %2294 = vmatprep.subr.mxu0 0.0
        %2295 = vmatpush1.msra.mxu0 0.0
        %2296 = vmatprep.subr.mxu0 0.0
        %2297 = vmatpush1.msra.mxu0 0.0
        %2298 = vmatprep.subr.mxu0 0.0
        %2299 = vmatpush1.msra.mxu0 0.0
        %2300 = vmatprep.subr.mxu0 0.0
        %2301 = vmatpush1.msra.mxu0 0.0
        %2302 = vmatprep.subr.mxu0 0.0
        %2303 = vmatpush1.msra.mxu0 0.0
        %2304 = vmatprep.subr.mxu0 0.0
        %2305 = vmatpush1.msra.mxu0 0.0
        %2306 = vmatprep.subr.mxu0 0.0
        %2307 = vmatpush1.msra.mxu0 0.0
        %2308 = vmatprep.subr.mxu0 0.0
        %2309 = vmatpush1.msra.mxu0 0.0
        %2310 = vmatprep.subr.mxu0 0.0
        %2311 = vmatpush1.msra.mxu0 0.0
        %2312 = vmatprep.subr.mxu0 0.0
        %2313 = vmatpush1.msra.mxu0 0.0
        %2314 = vmatprep.subr.mxu0 0.0
        %2315 = vmatpush1.msra.mxu0 0.0
        %2316 = vmatprep.subr.mxu0 0.0
        %2317 = vmatpush1.msra.mxu0 0.0
        %2318 = vmatprep.subr.mxu0 0.0
        %2319 = vmatpush1.msra.mxu0 0.0
        %2320 = vmatprep.subr.mxu0 0.0
        %2321 = vmatpush1.msra.mxu0 0.0
        %2322 = vmatprep.subr.mxu0 0.0
        %2323 = vmatpush1.msra.mxu0 0.0
        %2324 = vmatprep.mubr.f32.mxu0 0.0
        %2325 = vmatmul.mubr.f32.gmra.mrb[0].mxu0 %v2181
        %v2326 = vpop.f32.mrb[0].mxu0
        %v2327 = vadd.f32 0.0, %v2326
        %v2328 = vpop.f32.mrb[0].mxu0
        %2329 = vdwg.mxu0
        %v2330 = vadd.f32 %v2096, %v2256
        %v2331 = vadd.f32 %v2098, %v2258
        %v2332 = vadd.f32 %v2167, %v2327
        %s2333 = scalar_lea.vmem %s2, 12
        %v2334 = vld [vmem:[%s2333] sm:$0xf]
        %2335 = vrot.lane.b32.xlu0 %v1855, 110
        %v2336 = vpop.permute.xlu0 %2335
        %2337 = vrot.lane.b32.xlu0 %v1851, 110
        %v2338 = vpop.permute.xlu0 %2337
        %2339 = vrot.lane.b32.xlu0 %v1856, 110
        %v2340 = vpop.permute.xlu0 %2339
        %v2341 = vsel %vm840, %v2336, %v2338
        %v2342 = vsel %vm840, %v2338, %v2340
        %v2344 = vsel %vm366, %v2334, 0
        %v2346 = vsel %vm370, %v2341, 0
        %v2348 = vsel %vm370, %v2342, 0
        %v2350 = vsel %vm370, %v2340, 0
        %2352 = vmatprep.subr.mxu0 %v2348
        %2353 = vmatpush1.msra.mxu0 %v2346
        %2354 = vmatprep.subr.mxu0 0.0
        %2355 = vmatpush1.msra.mxu0 0.0
        %2356 = vmatprep.subr.mxu0 0.0
        %2357 = vmatpush1.msra.mxu0 0.0
        %2358 = vmatprep.subr.mxu0 0.0
        %2359 = vmatpush1.msra.mxu0 0.0
        %2360 = vmatprep.subr.mxu0 0.0
        %2361 = vmatpush1.msra.mxu0 0.0
        %2362 = vmatprep.subr.mxu0 0.0
        %2363 = vmatpush1.msra.mxu0 0.0
        %2364 = vmatprep.subr.mxu0 0.0
        %2365 = vmatpush1.msra.mxu0 0.0
        %2366 = vmatprep.subr.mxu0 0.0
        %2367 = vmatpush1.msra.mxu0 0.0
        %2368 = vmatprep.subr.mxu0 0.0
        %2369 = vmatpush1.msra.mxu0 0.0
        %2370 = vmatprep.subr.mxu0 0.0
        %2371 = vmatpush1.msra.mxu0 0.0
        %2372 = vmatprep.subr.mxu0 0.0
        %2373 = vmatpush1.msra.mxu0 0.0
        %2374 = vmatprep.subr.mxu0 0.0
        %2375 = vmatpush1.msra.mxu0 0.0
        %2376 = vmatprep.subr.mxu0 0.0
        %2377 = vmatpush1.msra.mxu0 0.0
        %2378 = vmatprep.subr.mxu0 0.0
        %2379 = vmatpush1.msra.mxu0 0.0
        %2380 = vmatprep.subr.mxu0 0.0
        %2381 = vmatpush1.msra.mxu0 0.0
        %2382 = vmatprep.subr.mxu0 0.0
        %2383 = vmatpush1.msra.mxu0 0.0
        %2384 = vmatprep.subr.mxu0 0.0
        %2385 = vmatpush1.msra.mxu0 0.0
        %2386 = vmatprep.subr.mxu0 0.0
        %2387 = vmatpush1.msra.mxu0 0.0
        %2388 = vmatprep.subr.mxu0 0.0
        %2389 = vmatpush1.msra.mxu0 0.0
        %2390 = vmatprep.subr.mxu0 0.0
        %2391 = vmatpush1.msra.mxu0 0.0
        %2392 = vmatprep.subr.mxu0 0.0
        %2393 = vmatpush1.msra.mxu0 0.0
        %2394 = vmatprep.subr.mxu0 0.0
        %2395 = vmatpush1.msra.mxu0 0.0
        %2396 = vmatprep.subr.mxu0 0.0
        %2397 = vmatpush1.msra.mxu0 0.0
        %2398 = vmatprep.subr.mxu0 0.0
        %2399 = vmatpush1.msra.mxu0 0.0
        %2400 = vmatprep.subr.mxu0 0.0
        %2401 = vmatpush1.msra.mxu0 0.0
        %2402 = vmatprep.subr.mxu0 0.0
        %2403 = vmatpush1.msra.mxu0 0.0
        %2404 = vmatprep.subr.mxu0 0.0
        %2405 = vmatpush1.msra.mxu0 0.0
        %2406 = vmatprep.subr.mxu0 0.0
        %2407 = vmatpush1.msra.mxu0 0.0
        %2408 = vmatprep.subr.mxu0 0.0
        %2409 = vmatpush1.msra.mxu0 0.0
        %2410 = vmatprep.subr.mxu0 0.0
        %2411 = vmatpush1.msra.mxu0 0.0
        %2412 = vmatprep.subr.mxu0 0.0
        %2413 = vmatpush1.msra.mxu0 0.0
        %2414 = vmatprep.subr.mxu0 0.0
        %2415 = vmatpush1.msra.mxu0 0.0
        %2416 = vmatprep.mubr.f32.mxu0 0.0
        %2417 = vmatmul.mubr.f32.gmra.mrb[0].mxu0 %v2344
        %v2418 = vpop.f32.mrb[0].mxu0
        %v2419 = vadd.f32 0.0, %v2418
        %v2420 = vpop.f32.mrb[0].mxu0
        %v2421 = vadd.f32 0.0, %v2420
        %2422 = vdwg.mxu0
        %2423 = vmatprep.subr.mxu0 0.0
        %2424 = vmatpush1.msra.mxu0 %v2350
        %2425 = vmatprep.subr.mxu0 0.0
        %2426 = vmatpush1.msra.mxu0 0.0
        %2427 = vmatprep.subr.mxu0 0.0
        %2428 = vmatpush1.msra.mxu0 0.0
        %2429 = vmatprep.subr.mxu0 0.0
        %2430 = vmatpush1.msra.mxu0 0.0
        %2431 = vmatprep.subr.mxu0 0.0
        %2432 = vmatpush1.msra.mxu0 0.0
        %2433 = vmatprep.subr.mxu0 0.0
        %2434 = vmatpush1.msra.mxu0 0.0
        %2435 = vmatprep.subr.mxu0 0.0
        %2436 = vmatpush1.msra.mxu0 0.0
        %2437 = vmatprep.subr.mxu0 0.0
        %2438 = vmatpush1.msra.mxu0 0.0
        %2439 = vmatprep.subr.mxu0 0.0
        %2440 = vmatpush1.msra.mxu0 0.0
        %2441 = vmatprep.subr.mxu0 0.0
        %2442 = vmatpush1.msra.mxu0 0.0
        %2443 = vmatprep.subr.mxu0 0.0
        %2444 = vmatpush1.msra.mxu0 0.0
        %2445 = vmatprep.subr.mxu0 0.0
        %2446 = vmatpush1.msra.mxu0 0.0
        %2447 = vmatprep.subr.mxu0 0.0
        %2448 = vmatpush1.msra.mxu0 0.0
        %2449 = vmatprep.subr.mxu0 0.0
        %2450 = vmatpush1.msra.mxu0 0.0
        %2451 = vmatprep.subr.mxu0 0.0
        %2452 = vmatpush1.msra.mxu0 0.0
        %2453 = vmatprep.subr.mxu0 0.0
        %2454 = vmatpush1.msra.mxu0 0.0
        %2455 = vmatprep.subr.mxu0 0.0
        %2456 = vmatpush1.msra.mxu0 0.0
        %2457 = vmatprep.subr.mxu0 0.0
        %2458 = vmatpush1.msra.mxu0 0.0
        %2459 = vmatprep.subr.mxu0 0.0
        %2460 = vmatpush1.msra.mxu0 0.0
        %2461 = vmatprep.subr.mxu0 0.0
        %2462 = vmatpush1.msra.mxu0 0.0
        %2463 = vmatprep.subr.mxu0 0.0
        %2464 = vmatpush1.msra.mxu0 0.0
        %2465 = vmatprep.subr.mxu0 0.0
        %2466 = vmatpush1.msra.mxu0 0.0
        %2467 = vmatprep.subr.mxu0 0.0
        %2468 = vmatpush1.msra.mxu0 0.0
        %2469 = vmatprep.subr.mxu0 0.0
        %2470 = vmatpush1.msra.mxu0 0.0
        %2471 = vmatprep.subr.mxu0 0.0
        %2472 = vmatpush1.msra.mxu0 0.0
        %2473 = vmatprep.subr.mxu0 0.0
        %2474 = vmatpush1.msra.mxu0 0.0
        %2475 = vmatprep.subr.mxu0 0.0
        %2476 = vmatpush1.msra.mxu0 0.0
        %2477 = vmatprep.subr.mxu0 0.0
        %2478 = vmatpush1.msra.mxu0 0.0
        %2479 = vmatprep.subr.mxu0 0.0
        %2480 = vmatpush1.msra.mxu0 0.0
        %2481 = vmatprep.subr.mxu0 0.0
        %2482 = vmatpush1.msra.mxu0 0.0
        %2483 = vmatprep.subr.mxu0 0.0
        %2484 = vmatpush1.msra.mxu0 0.0
        %2485 = vmatprep.subr.mxu0 0.0
        %2486 = vmatpush1.msra.mxu0 0.0
        %2487 = vmatprep.mubr.f32.mxu0 0.0
        %2488 = vmatmul.mubr.f32.gmra.mrb[0].mxu0 %v2344
        %v2489 = vpop.f32.mrb[0].mxu0
        %v2490 = vadd.f32 0.0, %v2489
        %v2491 = vpop.f32.mrb[0].mxu0
        %2492 = vdwg.mxu0
        %v2493 = vadd.f32 %v2330, %v2419
        %v2494 = vadd.f32 %v2331, %v2421
        %v2495 = vadd.f32 %v2332, %v2490
        %s2496 = scalar_lea.vmem %s2, 16
        %v2497 = vld [vmem:[%s2496] sm:$0xf]
        %2498 = vrot.lane.b32.xlu0 %v1855, 109
        %v2499 = vpop.permute.xlu0 %2498
        %2500 = vrot.lane.b32.xlu0 %v1851, 109
        %v2501 = vpop.permute.xlu0 %2500
        %2502 = vrot.lane.b32.xlu0 %v1856, 109
        %v2503 = vpop.permute.xlu0 %2502
        %v2504 = vsel %vm1004, %v2499, %v2501
        %v2505 = vsel %vm1004, %v2501, %v2503
        %v2507 = vsel %vm366, %v2497, 0
        %v2509 = vsel %vm370, %v2504, 0
        %v2511 = vsel %vm370, %v2505, 0
        %v2513 = vsel %vm370, %v2503, 0
        %2515 = vmatprep.subr.mxu0 %v2511
        %2516 = vmatpush1.msra.mxu0 %v2509
        %2517 = vmatprep.subr.mxu0 0.0
        %2518 = vmatpush1.msra.mxu0 0.0
        %2519 = vmatprep.subr.mxu0 0.0
        %2520 = vmatpush1.msra.mxu0 0.0
        %2521 = vmatprep.subr.mxu0 0.0
        %2522 = vmatpush1.msra.mxu0 0.0
        %2523 = vmatprep.subr.mxu0 0.0
        %2524 = vmatpush1.msra.mxu0 0.0
        %2525 = vmatprep.subr.mxu0 0.0
        %2526 = vmatpush1.msra.mxu0 0.0
        %2527 = vmatprep.subr.mxu0 0.0
        %2528 = vmatpush1.msra.mxu0 0.0
        %2529 = vmatprep.subr.mxu0 0.0
        %2530 = vmatpush1.msra.mxu0 0.0
        %2531 = vmatprep.subr.mxu0 0.0
        %2532 = vmatpush1.msra.mxu0 0.0
        %2533 = vmatprep.subr.mxu0 0.0
        %2534 = vmatpush1.msra.mxu0 0.0
        %2535 = vmatprep.subr.mxu0 0.0
        %2536 = vmatpush1.msra.mxu0 0.0
        %2537 = vmatprep.subr.mxu0 0.0
        %2538 = vmatpush1.msra.mxu0 0.0
        %2539 = vmatprep.subr.mxu0 0.0
        %2540 = vmatpush1.msra.mxu0 0.0
        %2541 = vmatprep.subr.mxu0 0.0
        %2542 = vmatpush1.msra.mxu0 0.0
        %2543 = vmatprep.subr.mxu0 0.0
        %2544 = vmatpush1.msra.mxu0 0.0
        %2545 = vmatprep.subr.mxu0 0.0
        %2546 = vmatpush1.msra.mxu0 0.0
        %2547 = vmatprep.subr.mxu0 0.0
        %2548 = vmatpush1.msra.mxu0 0.0
        %2549 = vmatprep.subr.mxu0 0.0
        %2550 = vmatpush1.msra.mxu0 0.0
        %2551 = vmatprep.subr.mxu0 0.0
        %2552 = vmatpush1.msra.mxu0 0.0
        %2553 = vmatprep.subr.mxu0 0.0
        %2554 = vmatpush1.msra.mxu0 0.0
        %2555 = vmatprep.subr.mxu0 0.0
        %2556 = vmatpush1.msra.mxu0 0.0
        %2557 = vmatprep.subr.mxu0 0.0
        %2558 = vmatpush1.msra.mxu0 0.0
        %2559 = vmatprep.subr.mxu0 0.0
        %2560 = vmatpush1.msra.mxu0 0.0
        %2561 = vmatprep.subr.mxu0 0.0
        %2562 = vmatpush1.msra.mxu0 0.0
        %2563 = vmatprep.subr.mxu0 0.0
        %2564 = vmatpush1.msra.mxu0 0.0
        %2565 = vmatprep.subr.mxu0 0.0
        %2566 = vmatpush1.msra.mxu0 0.0
        %2567 = vmatprep.subr.mxu0 0.0
        %2568 = vmatpush1.msra.mxu0 0.0
        %2569 = vmatprep.subr.mxu0 0.0
        %2570 = vmatpush1.msra.mxu0 0.0
        %2571 = vmatprep.subr.mxu0 0.0
        %2572 = vmatpush1.msra.mxu0 0.0
        %2573 = vmatprep.subr.mxu0 0.0
        %2574 = vmatpush1.msra.mxu0 0.0
        %2575 = vmatprep.subr.mxu0 0.0
        %2576 = vmatpush1.msra.mxu0 0.0
        %2577 = vmatprep.subr.mxu0 0.0
        %2578 = vmatpush1.msra.mxu0 0.0
        %2579 = vmatprep.mubr.f32.mxu0 0.0
        %2580 = vmatmul.mubr.f32.gmra.mrb[0].mxu0 %v2507
        %v2581 = vpop.f32.mrb[0].mxu0
        %v2582 = vadd.f32 0.0, %v2581
        %v2583 = vpop.f32.mrb[0].mxu0
        %v2584 = vadd.f32 0.0, %v2583
        %2585 = vdwg.mxu0
        %2586 = vmatprep.subr.mxu0 0.0
        %2587 = vmatpush1.msra.mxu0 %v2513
        %2588 = vmatprep.subr.mxu0 0.0
        %2589 = vmatpush1.msra.mxu0 0.0
        %2590 = vmatprep.subr.mxu0 0.0
        %2591 = vmatpush1.msra.mxu0 0.0
        %2592 = vmatprep.subr.mxu0 0.0
        %2593 = vmatpush1.msra.mxu0 0.0
        %2594 = vmatprep.subr.mxu0 0.0
        %2595 = vmatpush1.msra.mxu0 0.0
        %2596 = vmatprep.subr.mxu0 0.0
        %2597 = vmatpush1.msra.mxu0 0.0
        %2598 = vmatprep.subr.mxu0 0.0
        %2599 = vmatpush1.msra.mxu0 0.0
        %2600 = vmatprep.subr.mxu0 0.0
        %2601 = vmatpush1.msra.mxu0 0.0
        %2602 = vmatprep.subr.mxu0 0.0
        %2603 = vmatpush1.msra.mxu0 0.0
        %2604 = vmatprep.subr.mxu0 0.0
        %2605 = vmatpush1.msra.mxu0 0.0
        %2606 = vmatprep.subr.mxu0 0.0
        %2607 = vmatpush1.msra.mxu0 0.0
        %2608 = vmatprep.subr.mxu0 0.0
        %2609 = vmatpush1.msra.mxu0 0.0
        %2610 = vmatprep.subr.mxu0 0.0
        %2611 = vmatpush1.msra.mxu0 0.0
        %2612 = vmatprep.subr.mxu0 0.0
        %2613 = vmatpush1.msra.mxu0 0.0
        %2614 = vmatprep.subr.mxu0 0.0
        %2615 = vmatpush1.msra.mxu0 0.0
        %2616 = vmatprep.subr.mxu0 0.0
        %2617 = vmatpush1.msra.mxu0 0.0
        %2618 = vmatprep.subr.mxu0 0.0
        %2619 = vmatpush1.msra.mxu0 0.0
        %2620 = vmatprep.subr.mxu0 0.0
        %2621 = vmatpush1.msra.mxu0 0.0
        %2622 = vmatprep.subr.mxu0 0.0
        %2623 = vmatpush1.msra.mxu0 0.0
        %2624 = vmatprep.subr.mxu0 0.0
        %2625 = vmatpush1.msra.mxu0 0.0
        %2626 = vmatprep.subr.mxu0 0.0
        %2627 = vmatpush1.msra.mxu0 0.0
        %2628 = vmatprep.subr.mxu0 0.0
        %2629 = vmatpush1.msra.mxu0 0.0
        %2630 = vmatprep.subr.mxu0 0.0
        %2631 = vmatpush1.msra.mxu0 0.0
        %2632 = vmatprep.subr.mxu0 0.0
        %2633 = vmatpush1.msra.mxu0 0.0
        %2634 = vmatprep.subr.mxu0 0.0
        %2635 = vmatpush1.msra.mxu0 0.0
        %2636 = vmatprep.subr.mxu0 0.0
        %2637 = vmatpush1.msra.mxu0 0.0
        %2638 = vmatprep.subr.mxu0 0.0
        %2639 = vmatpush1.msra.mxu0 0.0
        %2640 = vmatprep.subr.mxu0 0.0
        %2641 = vmatpush1.msra.mxu0 0.0
        %2642 = vmatprep.subr.mxu0 0.0
        %2643 = vmatpush1.msra.mxu0 0.0
        %2644 = vmatprep.subr.mxu0 0.0
        %2645 = vmatpush1.msra.mxu0 0.0
        %2646 = vmatprep.subr.mxu0 0.0
        %2647 = vmatpush1.msra.mxu0 0.0
        %2648 = vmatprep.subr.mxu0 0.0
        %2649 = vmatpush1.msra.mxu0 0.0
        %2650 = vmatprep.mubr.f32.mxu0 0.0
        %2651 = vmatmul.mubr.f32.gmra.mrb[0].mxu0 %v2507
        %v2652 = vpop.f32.mrb[0].mxu0
        %v2653 = vadd.f32 0.0, %v2652
        %v2654 = vpop.f32.mrb[0].mxu0
        %2655 = vdwg.mxu0
        %v2656 = vadd.f32 %v2493, %v2582
        %v2657 = vadd.f32 %v2494, %v2584
        %v2658 = vadd.f32 %v2495, %v2653
        %s2659 = scalar_lea.vmem %s2, 20
        %v2660 = vld [vmem:[%s2659] sm:$0xf]
        %2661 = vrot.lane.b32.xlu0 %v1855, 108
        %v2662 = vpop.permute.xlu0 %2661
        %2663 = vrot.lane.b32.xlu0 %v1851, 108
        %v2664 = vpop.permute.xlu0 %2663
        %2665 = vrot.lane.b32.xlu0 %v1856, 108
        %v2666 = vpop.permute.xlu0 %2665
        %v2667 = vsel %vm1168, %v2662, %v2664
        %v2668 = vsel %vm1168, %v2664, %v2666
        %v2670 = vsel %vm366, %v2660, 0
        %v2672 = vsel %vm370, %v2667, 0
        %v2674 = vsel %vm370, %v2668, 0
        %v2676 = vsel %vm370, %v2666, 0
        %2678 = vmatprep.subr.mxu0 %v2674
        %2679 = vmatpush1.msra.mxu0 %v2672
        %2680 = vmatprep.subr.mxu0 0.0
        %2681 = vmatpush1.msra.mxu0 0.0
        %2682 = vmatprep.subr.mxu0 0.0
        %2683 = vmatpush1.msra.mxu0 0.0
        %2684 = vmatprep.subr.mxu0 0.0
        %2685 = vmatpush1.msra.mxu0 0.0
        %2686 = vmatprep.subr.mxu0 0.0
        %2687 = vmatpush1.msra.mxu0 0.0
        %2688 = vmatprep.subr.mxu0 0.0
        %2689 = vmatpush1.msra.mxu0 0.0
        %2690 = vmatprep.subr.mxu0 0.0
        %2691 = vmatpush1.msra.mxu0 0.0
        %2692 = vmatprep.subr.mxu0 0.0
        %2693 = vmatpush1.msra.mxu0 0.0
        %2694 = vmatprep.subr.mxu0 0.0
        %2695 = vmatpush1.msra.mxu0 0.0
        %2696 = vmatprep.subr.mxu0 0.0
        %2697 = vmatpush1.msra.mxu0 0.0
        %2698 = vmatprep.subr.mxu0 0.0
        %2699 = vmatpush1.msra.mxu0 0.0
        %2700 = vmatprep.subr.mxu0 0.0
        %2701 = vmatpush1.msra.mxu0 0.0
        %2702 = vmatprep.subr.mxu0 0.0
        %2703 = vmatpush1.msra.mxu0 0.0
        %2704 = vmatprep.subr.mxu0 0.0
        %2705 = vmatpush1.msra.mxu0 0.0
        %2706 = vmatprep.subr.mxu0 0.0
        %2707 = vmatpush1.msra.mxu0 0.0
        %2708 = vmatprep.subr.mxu0 0.0
        %2709 = vmatpush1.msra.mxu0 0.0
        %2710 = vmatprep.subr.mxu0 0.0
        %2711 = vmatpush1.msra.mxu0 0.0
        %2712 = vmatprep.subr.mxu0 0.0
        %2713 = vmatpush1.msra.mxu0 0.0
        %2714 = vmatprep.subr.mxu0 0.0
        %2715 = vmatpush1.msra.mxu0 0.0
        %2716 = vmatprep.subr.mxu0 0.0
        %2717 = vmatpush1.msra.mxu0 0.0
        %2718 = vmatprep.subr.mxu0 0.0
        %2719 = vmatpush1.msra.mxu0 0.0
        %2720 = vmatprep.subr.mxu0 0.0
        %2721 = vmatpush1.msra.mxu0 0.0
        %2722 = vmatprep.subr.mxu0 0.0
        %2723 = vmatpush1.msra.mxu0 0.0
        %2724 = vmatprep.subr.mxu0 0.0
        %2725 = vmatpush1.msra.mxu0 0.0
        %2726 = vmatprep.subr.mxu0 0.0
        %2727 = vmatpush1.msra.mxu0 0.0
        %2728 = vmatprep.subr.mxu0 0.0
        %2729 = vmatpush1.msra.mxu0 0.0
        %2730 = vmatprep.subr.mxu0 0.0
        %2731 = vmatpush1.msra.mxu0 0.0
        %2732 = vmatprep.subr.mxu0 0.0
        %2733 = vmatpush1.msra.mxu0 0.0
        %2734 = vmatprep.subr.mxu0 0.0
        %2735 = vmatpush1.msra.mxu0 0.0
        %2736 = vmatprep.subr.mxu0 0.0
        %2737 = vmatpush1.msra.mxu0 0.0
        %2738 = vmatprep.subr.mxu0 0.0
        %2739 = vmatpush1.msra.mxu0 0.0
        %2740 = vmatprep.subr.mxu0 0.0
        %2741 = vmatpush1.msra.mxu0 0.0
        %2742 = vmatprep.mubr.f32.mxu0 0.0
        %2743 = vmatmul.mubr.f32.gmra.mrb[0].mxu0 %v2670
        %v2744 = vpop.f32.mrb[0].mxu0
        %v2745 = vadd.f32 0.0, %v2744
        %v2746 = vpop.f32.mrb[0].mxu0
        %v2747 = vadd.f32 0.0, %v2746
        %2748 = vdwg.mxu0
        %2749 = vmatprep.subr.mxu0 0.0
        %2750 = vmatpush1.msra.mxu0 %v2676
        %2751 = vmatprep.subr.mxu0 0.0
        %2752 = vmatpush1.msra.mxu0 0.0
        %2753 = vmatprep.subr.mxu0 0.0
        %2754 = vmatpush1.msra.mxu0 0.0
        %2755 = vmatprep.subr.mxu0 0.0
        %2756 = vmatpush1.msra.mxu0 0.0
        %2757 = vmatprep.subr.mxu0 0.0
        %2758 = vmatpush1.msra.mxu0 0.0
        %2759 = vmatprep.subr.mxu0 0.0
        %2760 = vmatpush1.msra.mxu0 0.0
        %2761 = vmatprep.subr.mxu0 0.0
        %2762 = vmatpush1.msra.mxu0 0.0
        %2763 = vmatprep.subr.mxu0 0.0
        %2764 = vmatpush1.msra.mxu0 0.0
        %2765 = vmatprep.subr.mxu0 0.0
        %2766 = vmatpush1.msra.mxu0 0.0
        %2767 = vmatprep.subr.mxu0 0.0
        %2768 = vmatpush1.msra.mxu0 0.0
        %2769 = vmatprep.subr.mxu0 0.0
        %2770 = vmatpush1.msra.mxu0 0.0
        %2771 = vmatprep.subr.mxu0 0.0
        %2772 = vmatpush1.msra.mxu0 0.0
        %2773 = vmatprep.subr.mxu0 0.0
        %2774 = vmatpush1.msra.mxu0 0.0
        %2775 = vmatprep.subr.mxu0 0.0
        %2776 = vmatpush1.msra.mxu0 0.0
        %2777 = vmatprep.subr.mxu0 0.0
        %2778 = vmatpush1.msra.mxu0 0.0
        %2779 = vmatprep.subr.mxu0 0.0
        %2780 = vmatpush1.msra.mxu0 0.0
        %2781 = vmatprep.subr.mxu0 0.0
        %2782 = vmatpush1.msra.mxu0 0.0
        %2783 = vmatprep.subr.mxu0 0.0
        %2784 = vmatpush1.msra.mxu0 0.0
        %2785 = vmatprep.subr.mxu0 0.0
        %2786 = vmatpush1.msra.mxu0 0.0
        %2787 = vmatprep.subr.mxu0 0.0
        %2788 = vmatpush1.msra.mxu0 0.0
        %2789 = vmatprep.subr.mxu0 0.0
        %2790 = vmatpush1.msra.mxu0 0.0
        %2791 = vmatprep.subr.mxu0 0.0
        %2792 = vmatpush1.msra.mxu0 0.0
        %2793 = vmatprep.subr.mxu0 0.0
        %2794 = vmatpush1.msra.mxu0 0.0
        %2795 = vmatprep.subr.mxu0 0.0
        %2796 = vmatpush1.msra.mxu0 0.0
        %2797 = vmatprep.subr.mxu0 0.0
        %2798 = vmatpush1.msra.mxu0 0.0
        %2799 = vmatprep.subr.mxu0 0.0
        %2800 = vmatpush1.msra.mxu0 0.0
        %2801 = vmatprep.subr.mxu0 0.0
        %2802 = vmatpush1.msra.mxu0 0.0
        %2803 = vmatprep.subr.mxu0 0.0
        %2804 = vmatpush1.msra.mxu0 0.0
        %2805 = vmatprep.subr.mxu0 0.0
        %2806 = vmatpush1.msra.mxu0 0.0
        %2807 = vmatprep.subr.mxu0 0.0
        %2808 = vmatpush1.msra.mxu0 0.0
        %2809 = vmatprep.subr.mxu0 0.0
        %2810 = vmatpush1.msra.mxu0 0.0
        %2811 = vmatprep.subr.mxu0 0.0
        %2812 = vmatpush1.msra.mxu0 0.0
        %2813 = vmatprep.mubr.f32.mxu0 0.0
        %2814 = vmatmul.mubr.f32.gmra.mrb[0].mxu0 %v2670
        %v2815 = vpop.f32.mrb[0].mxu0
        %v2816 = vadd.f32 0.0, %v2815
        %v2817 = vpop.f32.mrb[0].mxu0
        %2818 = vdwg.mxu0
        %v2819 = vadd.f32 %v2656, %v2745
        %v2820 = vadd.f32 %v2657, %v2747
        %v2821 = vadd.f32 %v2658, %v2816
        %s2822 = scalar_lea.vmem %s2, 24
        %v2823 = vld [vmem:[%s2822] sm:$0xf]
        %2824 = vrot.lane.b32.xlu0 %v1855, 92
        %v2825 = vpop.permute.xlu0 %2824
        %2826 = vrot.lane.b32.xlu0 %v1851, 92
        %v2827 = vpop.permute.xlu0 %2826
        %2828 = vrot.lane.b32.xlu0 %v1856, 92
        %v2829 = vpop.permute.xlu0 %2828
        %v2830 = vsel %vm1332, %v2825, %v2827
        %v2831 = vsel %vm1332, %v2827, %v2829
        %v2833 = vsel %vm366, %v2823, 0
        %v2835 = vsel %vm370, %v2830, 0
        %v2837 = vsel %vm370, %v2831, 0
        %v2839 = vsel %vm370, %v2829, 0
        %2841 = vmatprep.subr.mxu0 %v2837
        %2842 = vmatpush1.msra.mxu0 %v2835
        %2843 = vmatprep.subr.mxu0 0.0
        %2844 = vmatpush1.msra.mxu0 0.0
        %2845 = vmatprep.subr.mxu0 0.0
        %2846 = vmatpush1.msra.mxu0 0.0
        %2847 = vmatprep.subr.mxu0 0.0
        %2848 = vmatpush1.msra.mxu0 0.0
        %2849 = vmatprep.subr.mxu0 0.0
        %2850 = vmatpush1.msra.mxu0 0.0
        %2851 = vmatprep.subr.mxu0 0.0
        %2852 = vmatpush1.msra.mxu0 0.0
        %2853 = vmatprep.subr.mxu0 0.0
        %2854 = vmatpush1.msra.mxu0 0.0
        %2855 = vmatprep.subr.mxu0 0.0
        %2856 = vmatpush1.msra.mxu0 0.0
        %2857 = vmatprep.subr.mxu0 0.0
        %2858 = vmatpush1.msra.mxu0 0.0
        %2859 = vmatprep.subr.mxu0 0.0
        %2860 = vmatpush1.msra.mxu0 0.0
        %2861 = vmatprep.subr.mxu0 0.0
        %2862 = vmatpush1.msra.mxu0 0.0
        %2863 = vmatprep.subr.mxu0 0.0
        %2864 = vmatpush1.msra.mxu0 0.0
        %2865 = vmatprep.subr.mxu0 0.0
        %2866 = vmatpush1.msra.mxu0 0.0
        %2867 = vmatprep.subr.mxu0 0.0
        %2868 = vmatpush1.msra.mxu0 0.0
        %2869 = vmatprep.subr.mxu0 0.0
        %2870 = vmatpush1.msra.mxu0 0.0
        %2871 = vmatprep.subr.mxu0 0.0
        %2872 = vmatpush1.msra.mxu0 0.0
        %2873 = vmatprep.subr.mxu0 0.0
        %2874 = vmatpush1.msra.mxu0 0.0
        %2875 = vmatprep.subr.mxu0 0.0
        %2876 = vmatpush1.msra.mxu0 0.0
        %2877 = vmatprep.subr.mxu0 0.0
        %2878 = vmatpush1.msra.mxu0 0.0
        %2879 = vmatprep.subr.mxu0 0.0
        %2880 = vmatpush1.msra.mxu0 0.0
        %2881 = vmatprep.subr.mxu0 0.0
        %2882 = vmatpush1.msra.mxu0 0.0
        %2883 = vmatprep.subr.mxu0 0.0
        %2884 = vmatpush1.msra.mxu0 0.0
        %2885 = vmatprep.subr.mxu0 0.0
        %2886 = vmatpush1.msra.mxu0 0.0
        %2887 = vmatprep.subr.mxu0 0.0
        %2888 = vmatpush1.msra.mxu0 0.0
        %2889 = vmatprep.subr.mxu0 0.0
        %2890 = vmatpush1.msra.mxu0 0.0
        %2891 = vmatprep.subr.mxu0 0.0
        %2892 = vmatpush1.msra.mxu0 0.0
        %2893 = vmatprep.subr.mxu0 0.0
        %2894 = vmatpush1.msra.mxu0 0.0
        %2895 = vmatprep.subr.mxu0 0.0
        %2896 = vmatpush1.msra.mxu0 0.0
        %2897 = vmatprep.subr.mxu0 0.0
        %2898 = vmatpush1.msra.mxu0 0.0
        %2899 = vmatprep.subr.mxu0 0.0
        %2900 = vmatpush1.msra.mxu0 0.0
        %2901 = vmatprep.subr.mxu0 0.0
        %2902 = vmatpush1.msra.mxu0 0.0
        %2903 = vmatprep.subr.mxu0 0.0
        %2904 = vmatpush1.msra.mxu0 0.0
        %2905 = vmatprep.mubr.f32.mxu0 0.0
        %2906 = vmatmul.mubr.f32.gmra.mrb[0].mxu0 %v2833
        %v2907 = vpop.f32.mrb[0].mxu0
        %v2908 = vadd.f32 0.0, %v2907
        %v2909 = vpop.f32.mrb[0].mxu0
        %v2910 = vadd.f32 0.0, %v2909
        %2911 = vdwg.mxu0
        %2912 = vmatprep.subr.mxu0 0.0
        %2913 = vmatpush1.msra.mxu0 %v2839
        %2914 = vmatprep.subr.mxu0 0.0
        %2915 = vmatpush1.msra.mxu0 0.0
        %2916 = vmatprep.subr.mxu0 0.0
        %2917 = vmatpush1.msra.mxu0 0.0
        %2918 = vmatprep.subr.mxu0 0.0
        %2919 = vmatpush1.msra.mxu0 0.0
        %2920 = vmatprep.subr.mxu0 0.0
        %2921 = vmatpush1.msra.mxu0 0.0
        %2922 = vmatprep.subr.mxu0 0.0
        %2923 = vmatpush1.msra.mxu0 0.0
        %2924 = vmatprep.subr.mxu0 0.0
        %2925 = vmatpush1.msra.mxu0 0.0
        %2926 = vmatprep.subr.mxu0 0.0
        %2927 = vmatpush1.msra.mxu0 0.0
        %2928 = vmatprep.subr.mxu0 0.0
        %2929 = vmatpush1.msra.mxu0 0.0
        %2930 = vmatprep.subr.mxu0 0.0
        %2931 = vmatpush1.msra.mxu0 0.0
        %2932 = vmatprep.subr.mxu0 0.0
        %2933 = vmatpush1.msra.mxu0 0.0
        %2934 = vmatprep.subr.mxu0 0.0
        %2935 = vmatpush1.msra.mxu0 0.0
        %2936 = vmatprep.subr.mxu0 0.0
        %2937 = vmatpush1.msra.mxu0 0.0
        %2938 = vmatprep.subr.mxu0 0.0
        %2939 = vmatpush1.msra.mxu0 0.0
        %2940 = vmatprep.subr.mxu0 0.0
        %2941 = vmatpush1.msra.mxu0 0.0
        %2942 = vmatprep.subr.mxu0 0.0
        %2943 = vmatpush1.msra.mxu0 0.0
        %2944 = vmatprep.subr.mxu0 0.0
        %2945 = vmatpush1.msra.mxu0 0.0
        %2946 = vmatprep.subr.mxu0 0.0
        %2947 = vmatpush1.msra.mxu0 0.0
        %2948 = vmatprep.subr.mxu0 0.0
        %2949 = vmatpush1.msra.mxu0 0.0
        %2950 = vmatprep.subr.mxu0 0.0
        %2951 = vmatpush1.msra.mxu0 0.0
        %2952 = vmatprep.subr.mxu0 0.0
        %2953 = vmatpush1.msra.mxu0 0.0
        %2954 = vmatprep.subr.mxu0 0.0
        %2955 = vmatpush1.msra.mxu0 0.0
        %2956 = vmatprep.subr.mxu0 0.0
        %2957 = vmatpush1.msra.mxu0 0.0
        %2958 = vmatprep.subr.mxu0 0.0
        %2959 = vmatpush1.msra.mxu0 0.0
        %2960 = vmatprep.subr.mxu0 0.0
        %2961 = vmatpush1.msra.mxu0 0.0
        %2962 = vmatprep.subr.mxu0 0.0
        %2963 = vmatpush1.msra.mxu0 0.0
        %2964 = vmatprep.subr.mxu0 0.0
        %2965 = vmatpush1.msra.mxu0 0.0
        %2966 = vmatprep.subr.mxu0 0.0
        %2967 = vmatpush1.msra.mxu0 0.0
        %2968 = vmatprep.subr.mxu0 0.0
        %2969 = vmatpush1.msra.mxu0 0.0
        %2970 = vmatprep.subr.mxu0 0.0
        %2971 = vmatpush1.msra.mxu0 0.0
        %2972 = vmatprep.subr.mxu0 0.0
        %2973 = vmatpush1.msra.mxu0 0.0
        %2974 = vmatprep.subr.mxu0 0.0
        %2975 = vmatpush1.msra.mxu0 0.0
        %2976 = vmatprep.mubr.f32.mxu0 0.0
        %2977 = vmatmul.mubr.f32.gmra.mrb[0].mxu0 %v2833
        %v2978 = vpop.f32.mrb[0].mxu0
        %v2979 = vadd.f32 0.0, %v2978
        %v2980 = vpop.f32.mrb[0].mxu0
        %2981 = vdwg.mxu0
        %v2982 = vadd.f32 %v2819, %v2908
        %v2983 = vadd.f32 %v2820, %v2910
        %v2984 = vadd.f32 %v2821, %v2979
        %s2985 = scalar_lea.vmem %s2, 28
        %v2986 = vld [vmem:[%s2985] sm:$0xf]
        %2987 = vrot.lane.b32.xlu0 %v1855, 91
        %v2988 = vpop.permute.xlu0 %2987
        %2989 = vrot.lane.b32.xlu0 %v1851, 91
        %v2990 = vpop.permute.xlu0 %2989
        %2991 = vrot.lane.b32.xlu0 %v1856, 91
        %v2992 = vpop.permute.xlu0 %2991
        %v2993 = vsel %vm1496, %v2988, %v2990
        %v2994 = vsel %vm1496, %v2990, %v2992
        %v2996 = vsel %vm366, %v2986, 0
        %v2998 = vsel %vm370, %v2993, 0
        %v3000 = vsel %vm370, %v2994, 0
        %v3002 = vsel %vm370, %v2992, 0
        %3004 = vmatprep.subr.mxu0 %v3000
        %3005 = vmatpush1.msra.mxu0 %v2998
        %3006 = vmatprep.subr.mxu0 0.0
        %3007 = vmatpush1.msra.mxu0 0.0
        %3008 = vmatprep.subr.mxu0 0.0
        %3009 = vmatpush1.msra.mxu0 0.0
        %3010 = vmatprep.subr.mxu0 0.0
        %3011 = vmatpush1.msra.mxu0 0.0
        %3012 = vmatprep.subr.mxu0 0.0
        %3013 = vmatpush1.msra.mxu0 0.0
        %3014 = vmatprep.subr.mxu0 0.0
        %3015 = vmatpush1.msra.mxu0 0.0
        %3016 = vmatprep.subr.mxu0 0.0
        %3017 = vmatpush1.msra.mxu0 0.0
        %3018 = vmatprep.subr.mxu0 0.0
        %3019 = vmatpush1.msra.mxu0 0.0
        %3020 = vmatprep.subr.mxu0 0.0
        %3021 = vmatpush1.msra.mxu0 0.0
        %3022 = vmatprep.subr.mxu0 0.0
        %3023 = vmatpush1.msra.mxu0 0.0
        %3024 = vmatprep.subr.mxu0 0.0
        %3025 = vmatpush1.msra.mxu0 0.0
        %3026 = vmatprep.subr.mxu0 0.0
        %3027 = vmatpush1.msra.mxu0 0.0
        %3028 = vmatprep.subr.mxu0 0.0
        %3029 = vmatpush1.msra.mxu0 0.0
        %3030 = vmatprep.subr.mxu0 0.0
        %3031 = vmatpush1.msra.mxu0 0.0
        %3032 = vmatprep.subr.mxu0 0.0
        %3033 = vmatpush1.msra.mxu0 0.0
        %3034 = vmatprep.subr.mxu0 0.0
        %3035 = vmatpush1.msra.mxu0 0.0
        %3036 = vmatprep.subr.mxu0 0.0
        %3037 = vmatpush1.msra.mxu0 0.0
        %3038 = vmatprep.subr.mxu0 0.0
        %3039 = vmatpush1.msra.mxu0 0.0
        %3040 = vmatprep.subr.mxu0 0.0
        %3041 = vmatpush1.msra.mxu0 0.0
        %3042 = vmatprep.subr.mxu0 0.0
        %3043 = vmatpush1.msra.mxu0 0.0
        %3044 = vmatprep.subr.mxu0 0.0
        %3045 = vmatpush1.msra.mxu0 0.0
        %3046 = vmatprep.subr.mxu0 0.0
        %3047 = vmatpush1.msra.mxu0 0.0
        %3048 = vmatprep.subr.mxu0 0.0
        %3049 = vmatpush1.msra.mxu0 0.0
        %3050 = vmatprep.subr.mxu0 0.0
        %3051 = vmatpush1.msra.mxu0 0.0
        %3052 = vmatprep.subr.mxu0 0.0
        %3053 = vmatpush1.msra.mxu0 0.0
        %3054 = vmatprep.subr.mxu0 0.0
        %3055 = vmatpush1.msra.mxu0 0.0
        %3056 = vmatprep.subr.mxu0 0.0
        %3057 = vmatpush1.msra.mxu0 0.0
        %3058 = vmatprep.subr.mxu0 0.0
        %3059 = vmatpush1.msra.mxu0 0.0
        %3060 = vmatprep.subr.mxu0 0.0
        %3061 = vmatpush1.msra.mxu0 0.0
        %3062 = vmatprep.subr.mxu0 0.0
        %3063 = vmatpush1.msra.mxu0 0.0
        %3064 = vmatprep.subr.mxu0 0.0
        %3065 = vmatpush1.msra.mxu0 0.0
        %3066 = vmatprep.subr.mxu0 0.0
        %3067 = vmatpush1.msra.mxu0 0.0
        %3068 = vmatprep.mubr.f32.mxu0 0.0
        %3069 = vmatmul.mubr.f32.gmra.mrb[0].mxu0 %v2996
        %v3070 = vpop.f32.mrb[0].mxu0
        %v3071 = vadd.f32 0.0, %v3070
        %v3072 = vpop.f32.mrb[0].mxu0
        %v3073 = vadd.f32 0.0, %v3072
        %3074 = vdwg.mxu0
        %3075 = vmatprep.subr.mxu0 0.0
        %3076 = vmatpush1.msra.mxu0 %v3002
        %3077 = vmatprep.subr.mxu0 0.0
        %3078 = vmatpush1.msra.mxu0 0.0
        %3079 = vmatprep.subr.mxu0 0.0
        %3080 = vmatpush1.msra.mxu0 0.0
        %3081 = vmatprep.subr.mxu0 0.0
        %3082 = vmatpush1.msra.mxu0 0.0
        %3083 = vmatprep.subr.mxu0 0.0
        %3084 = vmatpush1.msra.mxu0 0.0
        %3085 = vmatprep.subr.mxu0 0.0
        %3086 = vmatpush1.msra.mxu0 0.0
        %3087 = vmatprep.subr.mxu0 0.0
        %3088 = vmatpush1.msra.mxu0 0.0
        %3089 = vmatprep.subr.mxu0 0.0
        %3090 = vmatpush1.msra.mxu0 0.0
        %3091 = vmatprep.subr.mxu0 0.0
        %3092 = vmatpush1.msra.mxu0 0.0
        %3093 = vmatprep.subr.mxu0 0.0
        %3094 = vmatpush1.msra.mxu0 0.0
        %3095 = vmatprep.subr.mxu0 0.0
        %3096 = vmatpush1.msra.mxu0 0.0
        %3097 = vmatprep.subr.mxu0 0.0
        %3098 = vmatpush1.msra.mxu0 0.0
        %3099 = vmatprep.subr.mxu0 0.0
        %3100 = vmatpush1.msra.mxu0 0.0
        %3101 = vmatprep.subr.mxu0 0.0
        %3102 = vmatpush1.msra.mxu0 0.0
        %3103 = vmatprep.subr.mxu0 0.0
        %3104 = vmatpush1.msra.mxu0 0.0
        %3105 = vmatprep.subr.mxu0 0.0
        %3106 = vmatpush1.msra.mxu0 0.0
        %3107 = vmatprep.subr.mxu0 0.0
        %3108 = vmatpush1.msra.mxu0 0.0
        %3109 = vmatprep.subr.mxu0 0.0
        %3110 = vmatpush1.msra.mxu0 0.0
        %3111 = vmatprep.subr.mxu0 0.0
        %3112 = vmatpush1.msra.mxu0 0.0
        %3113 = vmatprep.subr.mxu0 0.0
        %3114 = vmatpush1.msra.mxu0 0.0
        %3115 = vmatprep.subr.mxu0 0.0
        %3116 = vmatpush1.msra.mxu0 0.0
        %3117 = vmatprep.subr.mxu0 0.0
        %3118 = vmatpush1.msra.mxu0 0.0
        %3119 = vmatprep.subr.mxu0 0.0
        %3120 = vmatpush1.msra.mxu0 0.0
        %3121 = vmatprep.subr.mxu0 0.0
        %3122 = vmatpush1.msra.mxu0 0.0
        %3123 = vmatprep.subr.mxu0 0.0
        %3124 = vmatpush1.msra.mxu0 0.0
        %3125 = vmatprep.subr.mxu0 0.0
        %3126 = vmatpush1.msra.mxu0 0.0
        %3127 = vmatprep.subr.mxu0 0.0
        %3128 = vmatpush1.msra.mxu0 0.0
        %3129 = vmatprep.subr.mxu0 0.0
        %3130 = vmatpush1.msra.mxu0 0.0
        %3131 = vmatprep.subr.mxu0 0.0
        %3132 = vmatpush1.msra.mxu0 0.0
        %3133 = vmatprep.subr.mxu0 0.0
        %3134 = vmatpush1.msra.mxu0 0.0
        %3135 = vmatprep.subr.mxu0 0.0
        %3136 = vmatpush1.msra.mxu0 0.0
        %3137 = vmatprep.subr.mxu0 0.0
        %3138 = vmatpush1.msra.mxu0 0.0
        %3139 = vmatprep.mubr.f32.mxu0 0.0
        %3140 = vmatmul.mubr.f32.gmra.mrb[0].mxu0 %v2996
        %v3141 = vpop.f32.mrb[0].mxu0
        %v3142 = vadd.f32 0.0, %v3141
        %v3143 = vpop.f32.mrb[0].mxu0
        %3144 = vdwg.mxu0
        %v3145 = vadd.f32 %v2982, %v3071
        %v3146 = vadd.f32 %v2983, %v3073
        %v3147 = vadd.f32 %v2984, %v3142
        %s3148 = scalar_lea.vmem %s2, 32
        %v3149 = vld [vmem:[%s3148] sm:$0xf]
        %3150 = vrot.lane.b32.xlu0 %v1855, 90
        %v3151 = vpop.permute.xlu0 %3150
        %3152 = vrot.lane.b32.xlu0 %v1851, 90
        %v3153 = vpop.permute.xlu0 %3152
        %3154 = vrot.lane.b32.xlu0 %v1856, 90
        %v3155 = vpop.permute.xlu0 %3154
        %v3156 = vsel %vm1660, %v3151, %v3153
        %v3157 = vsel %vm1660, %v3153, %v3155
        %v3159 = vsel %vm366, %v3149, 0
        %v3161 = vsel %vm370, %v3156, 0
        %v3163 = vsel %vm370, %v3157, 0
        %v3165 = vsel %vm370, %v3155, 0
        %3167 = vmatprep.subr.mxu0 %v3163
        %3168 = vmatpush1.msra.mxu0 %v3161
        %3169 = vmatprep.subr.mxu0 0.0
        %3170 = vmatpush1.msra.mxu0 0.0
        %3171 = vmatprep.subr.mxu0 0.0
        %3172 = vmatpush1.msra.mxu0 0.0
        %3173 = vmatprep.subr.mxu0 0.0
        %3174 = vmatpush1.msra.mxu0 0.0
        %3175 = vmatprep.subr.mxu0 0.0
        %3176 = vmatpush1.msra.mxu0 0.0
        %3177 = vmatprep.subr.mxu0 0.0
        %3178 = vmatpush1.msra.mxu0 0.0
        %3179 = vmatprep.subr.mxu0 0.0
        %3180 = vmatpush1.msra.mxu0 0.0
        %3181 = vmatprep.subr.mxu0 0.0
        %3182 = vmatpush1.msra.mxu0 0.0
        %3183 = vmatprep.subr.mxu0 0.0
        %3184 = vmatpush1.msra.mxu0 0.0
        %3185 = vmatprep.subr.mxu0 0.0
        %3186 = vmatpush1.msra.mxu0 0.0
        %3187 = vmatprep.subr.mxu0 0.0
        %3188 = vmatpush1.msra.mxu0 0.0
        %3189 = vmatprep.subr.mxu0 0.0
        %3190 = vmatpush1.msra.mxu0 0.0
        %3191 = vmatprep.subr.mxu0 0.0
        %3192 = vmatpush1.msra.mxu0 0.0
        %3193 = vmatprep.subr.mxu0 0.0
        %3194 = vmatpush1.msra.mxu0 0.0
        %3195 = vmatprep.subr.mxu0 0.0
        %3196 = vmatpush1.msra.mxu0 0.0
        %3197 = vmatprep.subr.mxu0 0.0
        %3198 = vmatpush1.msra.mxu0 0.0
        %3199 = vmatprep.subr.mxu0 0.0
        %3200 = vmatpush1.msra.mxu0 0.0
        %3201 = vmatprep.subr.mxu0 0.0
        %3202 = vmatpush1.msra.mxu0 0.0
        %3203 = vmatprep.subr.mxu0 0.0
        %3204 = vmatpush1.msra.mxu0 0.0
        %3205 = vmatprep.subr.mxu0 0.0
        %3206 = vmatpush1.msra.mxu0 0.0
        %3207 = vmatprep.subr.mxu0 0.0
        %3208 = vmatpush1.msra.mxu0 0.0
        %3209 = vmatprep.subr.mxu0 0.0
        %3210 = vmatpush1.msra.mxu0 0.0
        %3211 = vmatprep.subr.mxu0 0.0
        %3212 = vmatpush1.msra.mxu0 0.0
        %3213 = vmatprep.subr.mxu0 0.0
        %3214 = vmatpush1.msra.mxu0 0.0
        %3215 = vmatprep.subr.mxu0 0.0
        %3216 = vmatpush1.msra.mxu0 0.0
        %3217 = vmatprep.subr.mxu0 0.0
        %3218 = vmatpush1.msra.mxu0 0.0
        %3219 = vmatprep.subr.mxu0 0.0
        %3220 = vmatpush1.msra.mxu0 0.0
        %3221 = vmatprep.subr.mxu0 0.0
        %3222 = vmatpush1.msra.mxu0 0.0
        %3223 = vmatprep.subr.mxu0 0.0
        %3224 = vmatpush1.msra.mxu0 0.0
        %3225 = vmatprep.subr.mxu0 0.0
        %3226 = vmatpush1.msra.mxu0 0.0
        %3227 = vmatprep.subr.mxu0 0.0
        %3228 = vmatpush1.msra.mxu0 0.0
        %3229 = vmatprep.subr.mxu0 0.0
        %3230 = vmatpush1.msra.mxu0 0.0
        %3231 = vmatprep.mubr.f32.mxu0 0.0
        %3232 = vmatmul.mubr.f32.gmra.mrb[0].mxu0 %v3159
        %v3233 = vpop.f32.mrb[0].mxu0
        %v3234 = vadd.f32 0.0, %v3233
        %v3235 = vpop.f32.mrb[0].mxu0
        %v3236 = vadd.f32 0.0, %v3235
        %3237 = vdwg.mxu0
        %3238 = vmatprep.subr.mxu0 0.0
        %3239 = vmatpush1.msra.mxu0 %v3165
        %3240 = vmatprep.subr.mxu0 0.0
        %3241 = vmatpush1.msra.mxu0 0.0
        %3242 = vmatprep.subr.mxu0 0.0
        %3243 = vmatpush1.msra.mxu0 0.0
        %3244 = vmatprep.subr.mxu0 0.0
        %3245 = vmatpush1.msra.mxu0 0.0
        %3246 = vmatprep.subr.mxu0 0.0
        %3247 = vmatpush1.msra.mxu0 0.0
        %3248 = vmatprep.subr.mxu0 0.0
        %3249 = vmatpush1.msra.mxu0 0.0
        %3250 = vmatprep.subr.mxu0 0.0
        %3251 = vmatpush1.msra.mxu0 0.0
        %3252 = vmatprep.subr.mxu0 0.0
        %3253 = vmatpush1.msra.mxu0 0.0
        %3254 = vmatprep.subr.mxu0 0.0
        %3255 = vmatpush1.msra.mxu0 0.0
        %3256 = vmatprep.subr.mxu0 0.0
        %3257 = vmatpush1.msra.mxu0 0.0
        %3258 = vmatprep.subr.mxu0 0.0
        %3259 = vmatpush1.msra.mxu0 0.0
        %3260 = vmatprep.subr.mxu0 0.0
        %3261 = vmatpush1.msra.mxu0 0.0
        %3262 = vmatprep.subr.mxu0 0.0
        %3263 = vmatpush1.msra.mxu0 0.0
        %3264 = vmatprep.subr.mxu0 0.0
        %3265 = vmatpush1.msra.mxu0 0.0
        %3266 = vmatprep.subr.mxu0 0.0
        %3267 = vmatpush1.msra.mxu0 0.0
        %3268 = vmatprep.subr.mxu0 0.0
        %3269 = vmatpush1.msra.mxu0 0.0
        %3270 = vmatprep.subr.mxu0 0.0
        %3271 = vmatpush1.msra.mxu0 0.0
        %3272 = vmatprep.subr.mxu0 0.0
        %3273 = vmatpush1.msra.mxu0 0.0
        %3274 = vmatprep.subr.mxu0 0.0
        %3275 = vmatpush1.msra.mxu0 0.0
        %3276 = vmatprep.subr.mxu0 0.0
        %3277 = vmatpush1.msra.mxu0 0.0
        %3278 = vmatprep.subr.mxu0 0.0
        %3279 = vmatpush1.msra.mxu0 0.0
        %3280 = vmatprep.subr.mxu0 0.0
        %3281 = vmatpush1.msra.mxu0 0.0
        %3282 = vmatprep.subr.mxu0 0.0
        %3283 = vmatpush1.msra.mxu0 0.0
        %3284 = vmatprep.subr.mxu0 0.0
        %3285 = vmatpush1.msra.mxu0 0.0
        %3286 = vmatprep.subr.mxu0 0.0
        %3287 = vmatpush1.msra.mxu0 0.0
        %3288 = vmatprep.subr.mxu0 0.0
        %3289 = vmatpush1.msra.mxu0 0.0
        %3290 = vmatprep.subr.mxu0 0.0
        %3291 = vmatpush1.msra.mxu0 0.0
        %3292 = vmatprep.subr.mxu0 0.0
        %3293 = vmatpush1.msra.mxu0 0.0
        %3294 = vmatprep.subr.mxu0 0.0
        %3295 = vmatpush1.msra.mxu0 0.0
        %3296 = vmatprep.subr.mxu0 0.0
        %3297 = vmatpush1.msra.mxu0 0.0
        %3298 = vmatprep.subr.mxu0 0.0
        %3299 = vmatpush1.msra.mxu0 0.0
        %3300 = vmatprep.subr.mxu0 0.0
        %3301 = vmatpush1.msra.mxu0 0.0
        %3302 = vmatprep.mubr.f32.mxu0 0.0
        %3303 = vmatmul.mubr.f32.gmra.mrb[0].mxu0 %v3159
        %v3304 = vpop.f32.mrb[0].mxu0
        %v3305 = vadd.f32 0.0, %v3304
        %v3306 = vpop.f32.mrb[0].mxu0
        %3307 = vdwg.mxu0
        %v3308 = vadd.f32 %v3145, %v3234
        %v3309 = vadd.f32 %v3146, %v3236
        %v3310 = vadd.f32 %v3147, %v3305
        %s3311 = scalar_lea.vmem %s5, 16
        %v3312 = vld [vmem:[%s3311] sm:$0xf]
        %3314 = vset.pattern.permute.xlu0 0
        %3315 = vperm.xlu0 %3314, %v3312
        %v3316 = vpop.permute.xlu0 %3315
        %v3318 = vunpack.c.l.s4 839922192
        %v3319 = vunpack.c.0.s8 %v3318
        %v3320 = vlaneseq
        %v3321 = vshrl.u32 %v3320, 7
        %v3322 = vsub.s32 %v3319, %v3321
        %v3323 = vrot.slane %v3316, %v3322
        %v3325 = vmul.f32 %v278, %v3323
        %v3326 = vmul.f32 %v279, %v3323
        %s3327 = scalar_lea.vmem %s5, 20
        %v3328 = vld [vmem:[%s3327] sm:$0xf]
        %3330 = vset.pattern.permute.xlu0 0
        %3331 = vperm.xlu0 %3330, %v3328
        %v3332 = vpop.permute.xlu0 %3331
        %v3334 = vunpack.c.l.s4 839922192
        %v3335 = vunpack.c.0.s8 %v3334
        %v3336 = vlaneseq
        %v3337 = vshrl.u32 %v3336, 7
        %v3338 = vsub.s32 %v3335, %v3337
        %v3339 = vrot.slane %v3332, %v3338
        %v3341 = vadd.f32 %v3325, %v3339
        %v3342 = vadd.f32 %v3326, %v3339
        %v3343 = vmax.f32 %v3341, 0.0
        %v3344 = vmax.f32 %v3342, 0.0
        %v3346 = vcombine.high %v3343, %v3343
        %v3348 = vmul.f32 %v317, %v3343
        %v3349 = vmul.f32 %v321, %v3346
        %v3350 = vmul.f32 %v325, %v3344
        %3354 = vrot.lane.b32.xlu0 %v3348, 19
        %v3355 = vpop.permute.xlu0 %3354
        %3356 = vrot.lane.b32.xlu0 %v3349, 19
        %v3357 = vpop.permute.xlu0 %3356
        %3358 = vrot.lane.b32.xlu0 %v3350, 19
        %v3359 = vpop.permute.xlu0 %3358
        %v3360 = vsel %vm344, %v3355, %v3357
        %v3361 = vsel %vm344, %v3357, %v3359
        %v3364 = vsel %vm344, 0.0, %v3355
        %v3365 = vsel %vm350, %v3361, 0.0
        %v3366 = vld [vmem:[%s3] sm:$0xf]
        %s3367 = scalar_lea.vmem %s3, 4
        %v3368 = vld [vmem:[%s3367] sm:$0xf]
        %3371 = vrot.lane.b32.xlu0 %v3364, 127
        %v3372 = vpop.permute.xlu0 %3371
        %3373 = vrot.lane.b32.xlu0 %v3360, 127
        %v3374 = vpop.permute.xlu0 %3373
        %3375 = vrot.lane.b32.xlu0 %v3365, 127
        %v3376 = vpop.permute.xlu0 %3375
        %v3377 = vsel %vm363, %v3372, %v3374
        %v3378 = vsel %vm363, %v3374, %v3376
        %v3380 = vsel %vm366, %v3368, 0
        %v3382 = vsel %vm370, %v3377, 0
        %v3384 = vsel %vm370, %v3378, 0
        %v3386 = vsel %vm370, %v3376, 0
        %3388 = vmatprep.subr.mxu0 %v3384
        %3389 = vmatpush1.msra.mxu0 %v3382
        %3390 = vmatprep.subr.mxu0 0.0
        %3391 = vmatpush1.msra.mxu0 0.0
        %3392 = vmatprep.subr.mxu0 0.0
        %3393 = vmatpush1.msra.mxu0 0.0
        %3394 = vmatprep.subr.mxu0 0.0
        %3395 = vmatpush1.msra.mxu0 0.0
        %3396 = vmatprep.subr.mxu0 0.0
        %3397 = vmatpush1.msra.mxu0 0.0
        %3398 = vmatprep.subr.mxu0 0.0
        %3399 = vmatpush1.msra.mxu0 0.0
        %3400 = vmatprep.subr.mxu0 0.0
        %3401 = vmatpush1.msra.mxu0 0.0
        %3402 = vmatprep.subr.mxu0 0.0
        %3403 = vmatpush1.msra.mxu0 0.0
        %3404 = vmatprep.subr.mxu0 0.0
        %3405 = vmatpush1.msra.mxu0 0.0
        %3406 = vmatprep.subr.mxu0 0.0
        %3407 = vmatpush1.msra.mxu0 0.0
        %3408 = vmatprep.subr.mxu0 0.0
        %3409 = vmatpush1.msra.mxu0 0.0
        %3410 = vmatprep.subr.mxu0 0.0
        %3411 = vmatpush1.msra.mxu0 0.0
        %3412 = vmatprep.subr.mxu0 0.0
        %3413 = vmatpush1.msra.mxu0 0.0
        %3414 = vmatprep.subr.mxu0 0.0
        %3415 = vmatpush1.msra.mxu0 0.0
        %3416 = vmatprep.subr.mxu0 0.0
        %3417 = vmatpush1.msra.mxu0 0.0
        %3418 = vmatprep.subr.mxu0 0.0
        %3419 = vmatpush1.msra.mxu0 0.0
        %3420 = vmatprep.subr.mxu0 0.0
        %3421 = vmatpush1.msra.mxu0 0.0
        %3422 = vmatprep.subr.mxu0 0.0
        %3423 = vmatpush1.msra.mxu0 0.0
        %3424 = vmatprep.subr.mxu0 0.0
        %3425 = vmatpush1.msra.mxu0 0.0
        %3426 = vmatprep.subr.mxu0 0.0
        %3427 = vmatpush1.msra.mxu0 0.0
        %3428 = vmatprep.subr.mxu0 0.0
        %3429 = vmatpush1.msra.mxu0 0.0
        %3430 = vmatprep.subr.mxu0 0.0
        %3431 = vmatpush1.msra.mxu0 0.0
        %3432 = vmatprep.subr.mxu0 0.0
        %3433 = vmatpush1.msra.mxu0 0.0
        %3434 = vmatprep.subr.mxu0 0.0
        %3435 = vmatpush1.msra.mxu0 0.0
        %3436 = vmatprep.subr.mxu0 0.0
        %3437 = vmatpush1.msra.mxu0 0.0
        %3438 = vmatprep.subr.mxu0 0.0
        %3439 = vmatpush1.msra.mxu0 0.0
        %3440 = vmatprep.subr.mxu0 0.0
        %3441 = vmatpush1.msra.mxu0 0.0
        %3442 = vmatprep.subr.mxu0 0.0
        %3443 = vmatpush1.msra.mxu0 0.0
        %3444 = vmatprep.subr.mxu0 0.0
        %3445 = vmatpush1.msra.mxu0 0.0
        %3446 = vmatprep.subr.mxu0 0.0
        %3447 = vmatpush1.msra.mxu0 0.0
        %3448 = vmatprep.subr.mxu0 0.0
        %3449 = vmatpush1.msra.mxu0 0.0
        %3450 = vmatprep.subr.mxu0 0.0
        %3451 = vmatpush1.msra.mxu0 0.0
        %3452 = vmatprep.mubr.f32.mxu0 0.0
        %3453 = vmatmul.mubr.f32.gmra.mrb[0].mxu0 %v3380
        %v3454 = vpop.f32.mrb[0].mxu0
        %v3455 = vadd.f32 0.0, %v3454
        %v3456 = vpop.f32.mrb[0].mxu0
        %v3457 = vadd.f32 0.0, %v3456
        %3458 = vdwg.mxu0
        %3459 = vmatprep.subr.mxu0 0.0
        %3460 = vmatpush1.msra.mxu0 %v3386
        %3461 = vmatprep.subr.mxu0 0.0
        %3462 = vmatpush1.msra.mxu0 0.0
        %3463 = vmatprep.subr.mxu0 0.0
        %3464 = vmatpush1.msra.mxu0 0.0
        %3465 = vmatprep.subr.mxu0 0.0
        %3466 = vmatpush1.msra.mxu0 0.0
        %3467 = vmatprep.subr.mxu0 0.0
        %3468 = vmatpush1.msra.mxu0 0.0
        %3469 = vmatprep.subr.mxu0 0.0
        %3470 = vmatpush1.msra.mxu0 0.0
        %3471 = vmatprep.subr.mxu0 0.0
        %3472 = vmatpush1.msra.mxu0 0.0
        %3473 = vmatprep.subr.mxu0 0.0
        %3474 = vmatpush1.msra.mxu0 0.0
        %3475 = vmatprep.subr.mxu0 0.0
        %3476 = vmatpush1.msra.mxu0 0.0
        %3477 = vmatprep.subr.mxu0 0.0
        %3478 = vmatpush1.msra.mxu0 0.0
        %3479 = vmatprep.subr.mxu0 0.0
        %3480 = vmatpush1.msra.mxu0 0.0
        %3481 = vmatprep.subr.mxu0 0.0
        %3482 = vmatpush1.msra.mxu0 0.0
        %3483 = vmatprep.subr.mxu0 0.0
        %3484 = vmatpush1.msra.mxu0 0.0
        %3485 = vmatprep.subr.mxu0 0.0
        %3486 = vmatpush1.msra.mxu0 0.0
        %3487 = vmatprep.subr.mxu0 0.0
        %3488 = vmatpush1.msra.mxu0 0.0
        %3489 = vmatprep.subr.mxu0 0.0
        %3490 = vmatpush1.msra.mxu0 0.0
        %3491 = vmatprep.subr.mxu0 0.0
        %3492 = vmatpush1.msra.mxu0 0.0
        %3493 = vmatprep.subr.mxu0 0.0
        %3494 = vmatpush1.msra.mxu0 0.0
        %3495 = vmatprep.subr.mxu0 0.0
        %3496 = vmatpush1.msra.mxu0 0.0
        %3497 = vmatprep.subr.mxu0 0.0
        %3498 = vmatpush1.msra.mxu0 0.0
        %3499 = vmatprep.subr.mxu0 0.0
        %3500 = vmatpush1.msra.mxu0 0.0
        %3501 = vmatprep.subr.mxu0 0.0
        %3502 = vmatpush1.msra.mxu0 0.0
        %3503 = vmatprep.subr.mxu0 0.0
        %3504 = vmatpush1.msra.mxu0 0.0
        %3505 = vmatprep.subr.mxu0 0.0
        %3506 = vmatpush1.msra.mxu0 0.0
        %3507 = vmatprep.subr.mxu0 0.0
        %3508 = vmatpush1.msra.mxu0 0.0
        %3509 = vmatprep.subr.mxu0 0.0
        %3510 = vmatpush1.msra.mxu0 0.0
        %3511 = vmatprep.subr.mxu0 0.0
        %3512 = vmatpush1.msra.mxu0 0.0
        %3513 = vmatprep.subr.mxu0 0.0
        %3514 = vmatpush1.msra.mxu0 0.0
        %3515 = vmatprep.subr.mxu0 0.0
        %3516 = vmatpush1.msra.mxu0 0.0
        %3517 = vmatprep.subr.mxu0 0.0
        %3518 = vmatpush1.msra.mxu0 0.0
        %3519 = vmatprep.subr.mxu0 0.0
        %3520 = vmatpush1.msra.mxu0 0.0
        %3521 = vmatprep.subr.mxu0 0.0
        %3522 = vmatpush1.msra.mxu0 0.0
        %3523 = vmatprep.mubr.f32.mxu0 0.0
        %3524 = vmatmul.mubr.f32.gmra.mrb[0].mxu0 %v3380
        %v3525 = vpop.f32.mrb[0].mxu0
        %v3526 = vadd.f32 0.0, %v3525
        %v3527 = vpop.f32.mrb[0].mxu0
        %3528 = vdwg.mxu0
        %v3530 = vsel %vm366, %v3366, 0
        %v3532 = vsel %vm370, %v3364, 0
        %v3534 = vsel %vm370, %v3360, 0
        %v3536 = vsel %vm370, %v3365, 0
        %3538 = vmatprep.subr.mxu0 %v3534
        %3539 = vmatpush1.msra.mxu0 %v3532
        %3540 = vmatprep.subr.mxu0 0.0
        %3541 = vmatpush1.msra.mxu0 0.0
        %3542 = vmatprep.subr.mxu0 0.0
        %3543 = vmatpush1.msra.mxu0 0.0
        %3544 = vmatprep.subr.mxu0 0.0
        %3545 = vmatpush1.msra.mxu0 0.0
        %3546 = vmatprep.subr.mxu0 0.0
        %3547 = vmatpush1.msra.mxu0 0.0
        %3548 = vmatprep.subr.mxu0 0.0
        %3549 = vmatpush1.msra.mxu0 0.0
        %3550 = vmatprep.subr.mxu0 0.0
        %3551 = vmatpush1.msra.mxu0 0.0
        %3552 = vmatprep.subr.mxu0 0.0
        %3553 = vmatpush1.msra.mxu0 0.0
        %3554 = vmatprep.subr.mxu0 0.0
        %3555 = vmatpush1.msra.mxu0 0.0
        %3556 = vmatprep.subr.mxu0 0.0
        %3557 = vmatpush1.msra.mxu0 0.0
        %3558 = vmatprep.subr.mxu0 0.0
        %3559 = vmatpush1.msra.mxu0 0.0
        %3560 = vmatprep.subr.mxu0 0.0
        %3561 = vmatpush1.msra.mxu0 0.0
        %3562 = vmatprep.subr.mxu0 0.0
        %3563 = vmatpush1.msra.mxu0 0.0
        %3564 = vmatprep.subr.mxu0 0.0
        %3565 = vmatpush1.msra.mxu0 0.0
        %3566 = vmatprep.subr.mxu0 0.0
        %3567 = vmatpush1.msra.mxu0 0.0
        %3568 = vmatprep.subr.mxu0 0.0
        %3569 = vmatpush1.msra.mxu0 0.0
        %3570 = vmatprep.subr.mxu0 0.0
        %3571 = vmatpush1.msra.mxu0 0.0
        %3572 = vmatprep.subr.mxu0 0.0
        %3573 = vmatpush1.msra.mxu0 0.0
        %3574 = vmatprep.subr.mxu0 0.0
        %3575 = vmatpush1.msra.mxu0 0.0
        %3576 = vmatprep.subr.mxu0 0.0
        %3577 = vmatpush1.msra.mxu0 0.0
        %3578 = vmatprep.subr.mxu0 0.0
        %3579 = vmatpush1.msra.mxu0 0.0
        %3580 = vmatprep.subr.mxu0 0.0
        %3581 = vmatpush1.msra.mxu0 0.0
        %3582 = vmatprep.subr.mxu0 0.0
        %3583 = vmatpush1.msra.mxu0 0.0
        %3584 = vmatprep.subr.mxu0 0.0
        %3585 = vmatpush1.msra.mxu0 0.0
        %3586 = vmatprep.subr.mxu0 0.0
        %3587 = vmatpush1.msra.mxu0 0.0
        %3588 = vmatprep.subr.mxu0 0.0
        %3589 = vmatpush1.msra.mxu0 0.0
        %3590 = vmatprep.subr.mxu0 0.0
        %3591 = vmatpush1.msra.mxu0 0.0
        %3592 = vmatprep.subr.mxu0 0.0
        %3593 = vmatpush1.msra.mxu0 0.0
        %3594 = vmatprep.subr.mxu0 0.0
        %3595 = vmatpush1.msra.mxu0 0.0
        %3596 = vmatprep.subr.mxu0 0.0
        %3597 = vmatpush1.msra.mxu0 0.0
        %3598 = vmatprep.subr.mxu0 0.0
        %3599 = vmatpush1.msra.mxu0 0.0
        %3600 = vmatprep.subr.mxu0 0.0
        %3601 = vmatpush1.msra.mxu0 0.0
        %3602 = vmatprep.mubr.f32.mxu0 0.0
        %3603 = vmatmul.mubr.f32.gmra.mrb[0].mxu0 %v3530
        %v3604 = vpop.f32.mrb[0].mxu0
        %v3605 = vadd.f32 %v3455, %v3604
        %v3606 = vpop.f32.mrb[0].mxu0
        %v3607 = vadd.f32 %v3457, %v3606
        %3608 = vdwg.mxu0
        %3609 = vmatprep.subr.mxu0 0.0
        %3610 = vmatpush1.msra.mxu0 %v3536
        %3611 = vmatprep.subr.mxu0 0.0
        %3612 = vmatpush1.msra.mxu0 0.0
        %3613 = vmatprep.subr.mxu0 0.0
        %3614 = vmatpush1.msra.mxu0 0.0
        %3615 = vmatprep.subr.mxu0 0.0
        %3616 = vmatpush1.msra.mxu0 0.0
        %3617 = vmatprep.subr.mxu0 0.0
        %3618 = vmatpush1.msra.mxu0 0.0
        %3619 = vmatprep.subr.mxu0 0.0
        %3620 = vmatpush1.msra.mxu0 0.0
        %3621 = vmatprep.subr.mxu0 0.0
        %3622 = vmatpush1.msra.mxu0 0.0
        %3623 = vmatprep.subr.mxu0 0.0
        %3624 = vmatpush1.msra.mxu0 0.0
        %3625 = vmatprep.subr.mxu0 0.0
        %3626 = vmatpush1.msra.mxu0 0.0
        %3627 = vmatprep.subr.mxu0 0.0
        %3628 = vmatpush1.msra.mxu0 0.0
        %3629 = vmatprep.subr.mxu0 0.0
        %3630 = vmatpush1.msra.mxu0 0.0
        %3631 = vmatprep.subr.mxu0 0.0
        %3632 = vmatpush1.msra.mxu0 0.0
        %3633 = vmatprep.subr.mxu0 0.0
        %3634 = vmatpush1.msra.mxu0 0.0
        %3635 = vmatprep.subr.mxu0 0.0
        %3636 = vmatpush1.msra.mxu0 0.0
        %3637 = vmatprep.subr.mxu0 0.0
        %3638 = vmatpush1.msra.mxu0 0.0
        %3639 = vmatprep.subr.mxu0 0.0
        %3640 = vmatpush1.msra.mxu0 0.0
        %3641 = vmatprep.subr.mxu0 0.0
        %3642 = vmatpush1.msra.mxu0 0.0
        %3643 = vmatprep.subr.mxu0 0.0
        %3644 = vmatpush1.msra.mxu0 0.0
        %3645 = vmatprep.subr.mxu0 0.0
        %3646 = vmatpush1.msra.mxu0 0.0
        %3647 = vmatprep.subr.mxu0 0.0
        %3648 = vmatpush1.msra.mxu0 0.0
        %3649 = vmatprep.subr.mxu0 0.0
        %3650 = vmatpush1.msra.mxu0 0.0
        %3651 = vmatprep.subr.mxu0 0.0
        %3652 = vmatpush1.msra.mxu0 0.0
        %3653 = vmatprep.subr.mxu0 0.0
        %3654 = vmatpush1.msra.mxu0 0.0
        %3655 = vmatprep.subr.mxu0 0.0
        %3656 = vmatpush1.msra.mxu0 0.0
        %3657 = vmatprep.subr.mxu0 0.0
        %3658 = vmatpush1.msra.mxu0 0.0
        %3659 = vmatprep.subr.mxu0 0.0
        %3660 = vmatpush1.msra.mxu0 0.0
        %3661 = vmatprep.subr.mxu0 0.0
        %3662 = vmatpush1.msra.mxu0 0.0
        %3663 = vmatprep.subr.mxu0 0.0
        %3664 = vmatpush1.msra.mxu0 0.0
        %3665 = vmatprep.subr.mxu0 0.0
        %3666 = vmatpush1.msra.mxu0 0.0
        %3667 = vmatprep.subr.mxu0 0.0
        %3668 = vmatpush1.msra.mxu0 0.0
        %3669 = vmatprep.subr.mxu0 0.0
        %3670 = vmatpush1.msra.mxu0 0.0
        %3671 = vmatprep.subr.mxu0 0.0
        %3672 = vmatpush1.msra.mxu0 0.0
        %3673 = vmatprep.mubr.f32.mxu0 0.0
        %3674 = vmatmul.mubr.f32.gmra.mrb[0].mxu0 %v3530
        %v3675 = vpop.f32.mrb[0].mxu0
        %v3676 = vadd.f32 %v3526, %v3675
        %v3677 = vpop.f32.mrb[0].mxu0
        %3678 = vdwg.mxu0
        %s3679 = scalar_lea.vmem %s3, 8
        %v3680 = vld [vmem:[%s3679] sm:$0xf]
        %3681 = vrot.lane.b32.xlu0 %v3364, 126
        %v3682 = vpop.permute.xlu0 %3681
        %3683 = vrot.lane.b32.xlu0 %v3360, 126
        %v3684 = vpop.permute.xlu0 %3683
        %3685 = vrot.lane.b32.xlu0 %v3365, 126
        %v3686 = vpop.permute.xlu0 %3685
        %v3687 = vsel %vm676, %v3682, %v3684
        %v3688 = vsel %vm676, %v3684, %v3686
        %v3690 = vsel %vm366, %v3680, 0
        %v3692 = vsel %vm370, %v3687, 0
        %v3694 = vsel %vm370, %v3688, 0
        %v3696 = vsel %vm370, %v3686, 0
        %3698 = vmatprep.subr.mxu0 %v3694
        %3699 = vmatpush1.msra.mxu0 %v3692
        %3700 = vmatprep.subr.mxu0 0.0
        %3701 = vmatpush1.msra.mxu0 0.0
        %3702 = vmatprep.subr.mxu0 0.0
        %3703 = vmatpush1.msra.mxu0 0.0
        %3704 = vmatprep.subr.mxu0 0.0
        %3705 = vmatpush1.msra.mxu0 0.0
        %3706 = vmatprep.subr.mxu0 0.0
        %3707 = vmatpush1.msra.mxu0 0.0
        %3708 = vmatprep.subr.mxu0 0.0
        %3709 = vmatpush1.msra.mxu0 0.0
        %3710 = vmatprep.subr.mxu0 0.0
        %3711 = vmatpush1.msra.mxu0 0.0
        %3712 = vmatprep.subr.mxu0 0.0
        %3713 = vmatpush1.msra.mxu0 0.0
        %3714 = vmatprep.subr.mxu0 0.0
        %3715 = vmatpush1.msra.mxu0 0.0
        %3716 = vmatprep.subr.mxu0 0.0
        %3717 = vmatpush1.msra.mxu0 0.0
        %3718 = vmatprep.subr.mxu0 0.0
        %3719 = vmatpush1.msra.mxu0 0.0
        %3720 = vmatprep.subr.mxu0 0.0
        %3721 = vmatpush1.msra.mxu0 0.0
        %3722 = vmatprep.subr.mxu0 0.0
        %3723 = vmatpush1.msra.mxu0 0.0
        %3724 = vmatprep.subr.mxu0 0.0
        %3725 = vmatpush1.msra.mxu0 0.0
        %3726 = vmatprep.subr.mxu0 0.0
        %3727 = vmatpush1.msra.mxu0 0.0
        %3728 = vmatprep.subr.mxu0 0.0
        %3729 = vmatpush1.msra.mxu0 0.0
        %3730 = vmatprep.subr.mxu0 0.0
        %3731 = vmatpush1.msra.mxu0 0.0
        %3732 = vmatprep.subr.mxu0 0.0
        %3733 = vmatpush1.msra.mxu0 0.0
        %3734 = vmatprep.subr.mxu0 0.0
        %3735 = vmatpush1.msra.mxu0 0.0
        %3736 = vmatprep.subr.mxu0 0.0
        %3737 = vmatpush1.msra.mxu0 0.0
        %3738 = vmatprep.subr.mxu0 0.0
        %3739 = vmatpush1.msra.mxu0 0.0
        %3740 = vmatprep.subr.mxu0 0.0
        %3741 = vmatpush1.msra.mxu0 0.0
        %3742 = vmatprep.subr.mxu0 0.0
        %3743 = vmatpush1.msra.mxu0 0.0
        %3744 = vmatprep.subr.mxu0 0.0
        %3745 = vmatpush1.msra.mxu0 0.0
        %3746 = vmatprep.subr.mxu0 0.0
        %3747 = vmatpush1.msra.mxu0 0.0
        %3748 = vmatprep.subr.mxu0 0.0
        %3749 = vmatpush1.msra.mxu0 0.0
        %3750 = vmatprep.subr.mxu0 0.0
        %3751 = vmatpush1.msra.mxu0 0.0
        %3752 = vmatprep.subr.mxu0 0.0
        %3753 = vmatpush1.msra.mxu0 0.0
        %3754 = vmatprep.subr.mxu0 0.0
        %3755 = vmatpush1.msra.mxu0 0.0
        %3756 = vmatprep.subr.mxu0 0.0
        %3757 = vmatpush1.msra.mxu0 0.0
        %3758 = vmatprep.subr.mxu0 0.0
        %3759 = vmatpush1.msra.mxu0 0.0
        %3760 = vmatprep.subr.mxu0 0.0
        %3761 = vmatpush1.msra.mxu0 0.0
        %3762 = vmatprep.mubr.f32.mxu0 0.0
        %3763 = vmatmul.mubr.f32.gmra.mrb[0].mxu0 %v3690
        %v3764 = vpop.f32.mrb[0].mxu0
        %v3765 = vadd.f32 0.0, %v3764
        %v3766 = vpop.f32.mrb[0].mxu0
        %v3767 = vadd.f32 0.0, %v3766
        %3768 = vdwg.mxu0
        %3769 = vmatprep.subr.mxu0 0.0
        %3770 = vmatpush1.msra.mxu0 %v3696
        %3771 = vmatprep.subr.mxu0 0.0
        %3772 = vmatpush1.msra.mxu0 0.0
        %3773 = vmatprep.subr.mxu0 0.0
        %3774 = vmatpush1.msra.mxu0 0.0
        %3775 = vmatprep.subr.mxu0 0.0
        %3776 = vmatpush1.msra.mxu0 0.0
        %3777 = vmatprep.subr.mxu0 0.0
        %3778 = vmatpush1.msra.mxu0 0.0
        %3779 = vmatprep.subr.mxu0 0.0
        %3780 = vmatpush1.msra.mxu0 0.0
        %3781 = vmatprep.subr.mxu0 0.0
        %3782 = vmatpush1.msra.mxu0 0.0
        %3783 = vmatprep.subr.mxu0 0.0
        %3784 = vmatpush1.msra.mxu0 0.0
        %3785 = vmatprep.subr.mxu0 0.0
        %3786 = vmatpush1.msra.mxu0 0.0
        %3787 = vmatprep.subr.mxu0 0.0
        %3788 = vmatpush1.msra.mxu0 0.0
        %3789 = vmatprep.subr.mxu0 0.0
        %3790 = vmatpush1.msra.mxu0 0.0
        %3791 = vmatprep.subr.mxu0 0.0
        %3792 = vmatpush1.msra.mxu0 0.0
        %3793 = vmatprep.subr.mxu0 0.0
        %3794 = vmatpush1.msra.mxu0 0.0
        %3795 = vmatprep.subr.mxu0 0.0
        %3796 = vmatpush1.msra.mxu0 0.0
        %3797 = vmatprep.subr.mxu0 0.0
        %3798 = vmatpush1.msra.mxu0 0.0
        %3799 = vmatprep.subr.mxu0 0.0
        %3800 = vmatpush1.msra.mxu0 0.0
        %3801 = vmatprep.subr.mxu0 0.0
        %3802 = vmatpush1.msra.mxu0 0.0
        %3803 = vmatprep.subr.mxu0 0.0
        %3804 = vmatpush1.msra.mxu0 0.0
        %3805 = vmatprep.subr.mxu0 0.0
        %3806 = vmatpush1.msra.mxu0 0.0
        %3807 = vmatprep.subr.mxu0 0.0
        %3808 = vmatpush1.msra.mxu0 0.0
        %3809 = vmatprep.subr.mxu0 0.0
        %3810 = vmatpush1.msra.mxu0 0.0
        %3811 = vmatprep.subr.mxu0 0.0
        %3812 = vmatpush1.msra.mxu0 0.0
        %3813 = vmatprep.subr.mxu0 0.0
        %3814 = vmatpush1.msra.mxu0 0.0
        %3815 = vmatprep.subr.mxu0 0.0
        %3816 = vmatpush1.msra.mxu0 0.0
        %3817 = vmatprep.subr.mxu0 0.0
        %3818 = vmatpush1.msra.mxu0 0.0
        %3819 = vmatprep.subr.mxu0 0.0
        %3820 = vmatpush1.msra.mxu0 0.0
        %3821 = vmatprep.subr.mxu0 0.0
        %3822 = vmatpush1.msra.mxu0 0.0
        %3823 = vmatprep.subr.mxu0 0.0
        %3824 = vmatpush1.msra.mxu0 0.0
        %3825 = vmatprep.subr.mxu0 0.0
        %3826 = vmatpush1.msra.mxu0 0.0
        %3827 = vmatprep.subr.mxu0 0.0
        %3828 = vmatpush1.msra.mxu0 0.0
        %3829 = vmatprep.subr.mxu0 0.0
        %3830 = vmatpush1.msra.mxu0 0.0
        %3831 = vmatprep.subr.mxu0 0.0
        %3832 = vmatpush1.msra.mxu0 0.0
        %3833 = vmatprep.mubr.f32.mxu0 0.0
        %3834 = vmatmul.mubr.f32.gmra.mrb[0].mxu0 %v3690
        %v3835 = vpop.f32.mrb[0].mxu0
        %v3836 = vadd.f32 0.0, %v3835
        %v3837 = vpop.f32.mrb[0].mxu0
        %3838 = vdwg.mxu0
        %v3839 = vadd.f32 %v3605, %v3765
        %v3840 = vadd.f32 %v3607, %v3767
        %v3841 = vadd.f32 %v3676, %v3836
        %s3842 = scalar_lea.vmem %s3, 12
        %v3843 = vld [vmem:[%s3842] sm:$0xf]
        %3844 = vrot.lane.b32.xlu0 %v3364, 110
        %v3845 = vpop.permute.xlu0 %3844
        %3846 = vrot.lane.b32.xlu0 %v3360, 110
        %v3847 = vpop.permute.xlu0 %3846
        %3848 = vrot.lane.b32.xlu0 %v3365, 110
        %v3849 = vpop.permute.xlu0 %3848
        %v3850 = vsel %vm840, %v3845, %v3847
        %v3851 = vsel %vm840, %v3847, %v3849
        %v3853 = vsel %vm366, %v3843, 0
        %v3855 = vsel %vm370, %v3850, 0
        %v3857 = vsel %vm370, %v3851, 0
        %v3859 = vsel %vm370, %v3849, 0
        %3861 = vmatprep.subr.mxu0 %v3857
        %3862 = vmatpush1.msra.mxu0 %v3855
        %3863 = vmatprep.subr.mxu0 0.0
        %3864 = vmatpush1.msra.mxu0 0.0
        %3865 = vmatprep.subr.mxu0 0.0
        %3866 = vmatpush1.msra.mxu0 0.0
        %3867 = vmatprep.subr.mxu0 0.0
        %3868 = vmatpush1.msra.mxu0 0.0
        %3869 = vmatprep.subr.mxu0 0.0
        %3870 = vmatpush1.msra.mxu0 0.0
        %3871 = vmatprep.subr.mxu0 0.0
        %3872 = vmatpush1.msra.mxu0 0.0
        %3873 = vmatprep.subr.mxu0 0.0
        %3874 = vmatpush1.msra.mxu0 0.0
        %3875 = vmatprep.subr.mxu0 0.0
        %3876 = vmatpush1.msra.mxu0 0.0
        %3877 = vmatprep.subr.mxu0 0.0
        %3878 = vmatpush1.msra.mxu0 0.0
        %3879 = vmatprep.subr.mxu0 0.0
        %3880 = vmatpush1.msra.mxu0 0.0
        %3881 = vmatprep.subr.mxu0 0.0
        %3882 = vmatpush1.msra.mxu0 0.0
        %3883 = vmatprep.subr.mxu0 0.0
        %3884 = vmatpush1.msra.mxu0 0.0
        %3885 = vmatprep.subr.mxu0 0.0
        %3886 = vmatpush1.msra.mxu0 0.0
        %3887 = vmatprep.subr.mxu0 0.0
        %3888 = vmatpush1.msra.mxu0 0.0
        %3889 = vmatprep.subr.mxu0 0.0
        %3890 = vmatpush1.msra.mxu0 0.0
        %3891 = vmatprep.subr.mxu0 0.0
        %3892 = vmatpush1.msra.mxu0 0.0
        %3893 = vmatprep.subr.mxu0 0.0
        %3894 = vmatpush1.msra.mxu0 0.0
        %3895 = vmatprep.subr.mxu0 0.0
        %3896 = vmatpush1.msra.mxu0 0.0
        %3897 = vmatprep.subr.mxu0 0.0
        %3898 = vmatpush1.msra.mxu0 0.0
        %3899 = vmatprep.subr.mxu0 0.0
        %3900 = vmatpush1.msra.mxu0 0.0
        %3901 = vmatprep.subr.mxu0 0.0
        %3902 = vmatpush1.msra.mxu0 0.0
        %3903 = vmatprep.subr.mxu0 0.0
        %3904 = vmatpush1.msra.mxu0 0.0
        %3905 = vmatprep.subr.mxu0 0.0
        %3906 = vmatpush1.msra.mxu0 0.0
        %3907 = vmatprep.subr.mxu0 0.0
        %3908 = vmatpush1.msra.mxu0 0.0
        %3909 = vmatprep.subr.mxu0 0.0
        %3910 = vmatpush1.msra.mxu0 0.0
        %3911 = vmatprep.subr.mxu0 0.0
        %3912 = vmatpush1.msra.mxu0 0.0
        %3913 = vmatprep.subr.mxu0 0.0
        %3914 = vmatpush1.msra.mxu0 0.0
        %3915 = vmatprep.subr.mxu0 0.0
        %3916 = vmatpush1.msra.mxu0 0.0
        %3917 = vmatprep.subr.mxu0 0.0
        %3918 = vmatpush1.msra.mxu0 0.0
        %3919 = vmatprep.subr.mxu0 0.0
        %3920 = vmatpush1.msra.mxu0 0.0
        %3921 = vmatprep.subr.mxu0 0.0
        %3922 = vmatpush1.msra.mxu0 0.0
        %3923 = vmatprep.subr.mxu0 0.0
        %3924 = vmatpush1.msra.mxu0 0.0
        %3925 = vmatprep.mubr.f32.mxu0 0.0
        %3926 = vmatmul.mubr.f32.gmra.mrb[0].mxu0 %v3853
        %v3927 = vpop.f32.mrb[0].mxu0
        %v3928 = vadd.f32 0.0, %v3927
        %v3929 = vpop.f32.mrb[0].mxu0
        %v3930 = vadd.f32 0.0, %v3929
        %3931 = vdwg.mxu0
        %3932 = vmatprep.subr.mxu0 0.0
        %3933 = vmatpush1.msra.mxu0 %v3859
        %3934 = vmatprep.subr.mxu0 0.0
        %3935 = vmatpush1.msra.mxu0 0.0
        %3936 = vmatprep.subr.mxu0 0.0
        %3937 = vmatpush1.msra.mxu0 0.0
        %3938 = vmatprep.subr.mxu0 0.0
        %3939 = vmatpush1.msra.mxu0 0.0
        %3940 = vmatprep.subr.mxu0 0.0
        %3941 = vmatpush1.msra.mxu0 0.0
        %3942 = vmatprep.subr.mxu0 0.0
        %3943 = vmatpush1.msra.mxu0 0.0
        %3944 = vmatprep.subr.mxu0 0.0
        %3945 = vmatpush1.msra.mxu0 0.0
        %3946 = vmatprep.subr.mxu0 0.0
        %3947 = vmatpush1.msra.mxu0 0.0
        %3948 = vmatprep.subr.mxu0 0.0
        %3949 = vmatpush1.msra.mxu0 0.0
        %3950 = vmatprep.subr.mxu0 0.0
        %3951 = vmatpush1.msra.mxu0 0.0
        %3952 = vmatprep.subr.mxu0 0.0
        %3953 = vmatpush1.msra.mxu0 0.0
        %3954 = vmatprep.subr.mxu0 0.0
        %3955 = vmatpush1.msra.mxu0 0.0
        %3956 = vmatprep.subr.mxu0 0.0
        %3957 = vmatpush1.msra.mxu0 0.0
        %3958 = vmatprep.subr.mxu0 0.0
        %3959 = vmatpush1.msra.mxu0 0.0
        %3960 = vmatprep.subr.mxu0 0.0
        %3961 = vmatpush1.msra.mxu0 0.0
        %3962 = vmatprep.subr.mxu0 0.0
        %3963 = vmatpush1.msra.mxu0 0.0
        %3964 = vmatprep.subr.mxu0 0.0
        %3965 = vmatpush1.msra.mxu0 0.0
        %3966 = vmatprep.subr.mxu0 0.0
        %3967 = vmatpush1.msra.mxu0 0.0
        %3968 = vmatprep.subr.mxu0 0.0
        %3969 = vmatpush1.msra.mxu0 0.0
        %3970 = vmatprep.subr.mxu0 0.0
        %3971 = vmatpush1.msra.mxu0 0.0
        %3972 = vmatprep.subr.mxu0 0.0
        %3973 = vmatpush1.msra.mxu0 0.0
        %3974 = vmatprep.subr.mxu0 0.0
        %3975 = vmatpush1.msra.mxu0 0.0
        %3976 = vmatprep.subr.mxu0 0.0
        %3977 = vmatpush1.msra.mxu0 0.0
        %3978 = vmatprep.subr.mxu0 0.0
        %3979 = vmatpush1.msra.mxu0 0.0
        %3980 = vmatprep.subr.mxu0 0.0
        %3981 = vmatpush1.msra.mxu0 0.0
        %3982 = vmatprep.subr.mxu0 0.0
        %3983 = vmatpush1.msra.mxu0 0.0
        %3984 = vmatprep.subr.mxu0 0.0
        %3985 = vmatpush1.msra.mxu0 0.0
        %3986 = vmatprep.subr.mxu0 0.0
        %3987 = vmatpush1.msra.mxu0 0.0
        %3988 = vmatprep.subr.mxu0 0.0
        %3989 = vmatpush1.msra.mxu0 0.0
        %3990 = vmatprep.subr.mxu0 0.0
        %3991 = vmatpush1.msra.mxu0 0.0
        %3992 = vmatprep.subr.mxu0 0.0
        %3993 = vmatpush1.msra.mxu0 0.0
        %3994 = vmatprep.subr.mxu0 0.0
        %3995 = vmatpush1.msra.mxu0 0.0
        %3996 = vmatprep.mubr.f32.mxu0 0.0
        %3997 = vmatmul.mubr.f32.gmra.mrb[0].mxu0 %v3853
        %v3998 = vpop.f32.mrb[0].mxu0
        %v3999 = vadd.f32 0.0, %v3998
        %v4000 = vpop.f32.mrb[0].mxu0
        %4001 = vdwg.mxu0
        %v4002 = vadd.f32 %v3839, %v3928
        %v4003 = vadd.f32 %v3840, %v3930
        %v4004 = vadd.f32 %v3841, %v3999
        %s4005 = scalar_lea.vmem %s3, 16
        %v4006 = vld [vmem:[%s4005] sm:$0xf]
        %4007 = vrot.lane.b32.xlu0 %v3364, 109
        %v4008 = vpop.permute.xlu0 %4007
        %4009 = vrot.lane.b32.xlu0 %v3360, 109
        %v4010 = vpop.permute.xlu0 %4009
        %4011 = vrot.lane.b32.xlu0 %v3365, 109
        %v4012 = vpop.permute.xlu0 %4011
        %v4013 = vsel %vm1004, %v4008, %v4010
        %v4014 = vsel %vm1004, %v4010, %v4012
        %v4016 = vsel %vm366, %v4006, 0
        %v4018 = vsel %vm370, %v4013, 0
        %v4020 = vsel %vm370, %v4014, 0
        %v4022 = vsel %vm370, %v4012, 0
        %4024 = vmatprep.subr.mxu0 %v4020
        %4025 = vmatpush1.msra.mxu0 %v4018
        %4026 = vmatprep.subr.mxu0 0.0
        %4027 = vmatpush1.msra.mxu0 0.0
        %4028 = vmatprep.subr.mxu0 0.0
        %4029 = vmatpush1.msra.mxu0 0.0
        %4030 = vmatprep.subr.mxu0 0.0
        %4031 = vmatpush1.msra.mxu0 0.0
        %4032 = vmatprep.subr.mxu0 0.0
        %4033 = vmatpush1.msra.mxu0 0.0
        %4034 = vmatprep.subr.mxu0 0.0
        %4035 = vmatpush1.msra.mxu0 0.0
        %4036 = vmatprep.subr.mxu0 0.0
        %4037 = vmatpush1.msra.mxu0 0.0
        %4038 = vmatprep.subr.mxu0 0.0
        %4039 = vmatpush1.msra.mxu0 0.0
        %4040 = vmatprep.subr.mxu0 0.0
        %4041 = vmatpush1.msra.mxu0 0.0
        %4042 = vmatprep.subr.mxu0 0.0
        %4043 = vmatpush1.msra.mxu0 0.0
        %4044 = vmatprep.subr.mxu0 0.0
        %4045 = vmatpush1.msra.mxu0 0.0
        %4046 = vmatprep.subr.mxu0 0.0
        %4047 = vmatpush1.msra.mxu0 0.0
        %4048 = vmatprep.subr.mxu0 0.0
        %4049 = vmatpush1.msra.mxu0 0.0
        %4050 = vmatprep.subr.mxu0 0.0
        %4051 = vmatpush1.msra.mxu0 0.0
        %4052 = vmatprep.subr.mxu0 0.0
        %4053 = vmatpush1.msra.mxu0 0.0
        %4054 = vmatprep.subr.mxu0 0.0
        %4055 = vmatpush1.msra.mxu0 0.0
        %4056 = vmatprep.subr.mxu0 0.0
        %4057 = vmatpush1.msra.mxu0 0.0
        %4058 = vmatprep.subr.mxu0 0.0
        %4059 = vmatpush1.msra.mxu0 0.0
        %4060 = vmatprep.subr.mxu0 0.0
        %4061 = vmatpush1.msra.mxu0 0.0
        %4062 = vmatprep.subr.mxu0 0.0
        %4063 = vmatpush1.msra.mxu0 0.0
        %4064 = vmatprep.subr.mxu0 0.0
        %4065 = vmatpush1.msra.mxu0 0.0
        %4066 = vmatprep.subr.mxu0 0.0
        %4067 = vmatpush1.msra.mxu0 0.0
        %4068 = vmatprep.subr.mxu0 0.0
        %4069 = vmatpush1.msra.mxu0 0.0
        %4070 = vmatprep.subr.mxu0 0.0
        %4071 = vmatpush1.msra.mxu0 0.0
        %4072 = vmatprep.subr.mxu0 0.0
        %4073 = vmatpush1.msra.mxu0 0.0
        %4074 = vmatprep.subr.mxu0 0.0
        %4075 = vmatpush1.msra.mxu0 0.0
        %4076 = vmatprep.subr.mxu0 0.0
        %4077 = vmatpush1.msra.mxu0 0.0
        %4078 = vmatprep.subr.mxu0 0.0
        %4079 = vmatpush1.msra.mxu0 0.0
        %4080 = vmatprep.subr.mxu0 0.0
        %4081 = vmatpush1.msra.mxu0 0.0
        %4082 = vmatprep.subr.mxu0 0.0
        %4083 = vmatpush1.msra.mxu0 0.0
        %4084 = vmatprep.subr.mxu0 0.0
        %4085 = vmatpush1.msra.mxu0 0.0
        %4086 = vmatprep.subr.mxu0 0.0
        %4087 = vmatpush1.msra.mxu0 0.0
        %4088 = vmatprep.mubr.f32.mxu0 0.0
        %4089 = vmatmul.mubr.f32.gmra.mrb[0].mxu0 %v4016
        %v4090 = vpop.f32.mrb[0].mxu0
        %v4091 = vadd.f32 0.0, %v4090
        %v4092 = vpop.f32.mrb[0].mxu0
        %v4093 = vadd.f32 0.0, %v4092
        %4094 = vdwg.mxu0
        %4095 = vmatprep.subr.mxu0 0.0
        %4096 = vmatpush1.msra.mxu0 %v4022
        %4097 = vmatprep.subr.mxu0 0.0
        %4098 = vmatpush1.msra.mxu0 0.0
        %4099 = vmatprep.subr.mxu0 0.0
        %4100 = vmatpush1.msra.mxu0 0.0
        %4101 = vmatprep.subr.mxu0 0.0
        %4102 = vmatpush1.msra.mxu0 0.0
        %4103 = vmatprep.subr.mxu0 0.0
        %4104 = vmatpush1.msra.mxu0 0.0
        %4105 = vmatprep.subr.mxu0 0.0
        %4106 = vmatpush1.msra.mxu0 0.0
        %4107 = vmatprep.subr.mxu0 0.0
        %4108 = vmatpush1.msra.mxu0 0.0
        %4109 = vmatprep.subr.mxu0 0.0
        %4110 = vmatpush1.msra.mxu0 0.0
        %4111 = vmatprep.subr.mxu0 0.0
        %4112 = vmatpush1.msra.mxu0 0.0
        %4113 = vmatprep.subr.mxu0 0.0
        %4114 = vmatpush1.msra.mxu0 0.0
        %4115 = vmatprep.subr.mxu0 0.0
        %4116 = vmatpush1.msra.mxu0 0.0
        %4117 = vmatprep.subr.mxu0 0.0
        %4118 = vmatpush1.msra.mxu0 0.0
        %4119 = vmatprep.subr.mxu0 0.0
        %4120 = vmatpush1.msra.mxu0 0.0
        %4121 = vmatprep.subr.mxu0 0.0
        %4122 = vmatpush1.msra.mxu0 0.0
        %4123 = vmatprep.subr.mxu0 0.0
        %4124 = vmatpush1.msra.mxu0 0.0
        %4125 = vmatprep.subr.mxu0 0.0
        %4126 = vmatpush1.msra.mxu0 0.0
        %4127 = vmatprep.subr.mxu0 0.0
        %4128 = vmatpush1.msra.mxu0 0.0
        %4129 = vmatprep.subr.mxu0 0.0
        %4130 = vmatpush1.msra.mxu0 0.0
        %4131 = vmatprep.subr.mxu0 0.0
        %4132 = vmatpush1.msra.mxu0 0.0
        %4133 = vmatprep.subr.mxu0 0.0
        %4134 = vmatpush1.msra.mxu0 0.0
        %4135 = vmatprep.subr.mxu0 0.0
        %4136 = vmatpush1.msra.mxu0 0.0
        %4137 = vmatprep.subr.mxu0 0.0
        %4138 = vmatpush1.msra.mxu0 0.0
        %4139 = vmatprep.subr.mxu0 0.0
        %4140 = vmatpush1.msra.mxu0 0.0
        %4141 = vmatprep.subr.mxu0 0.0
        %4142 = vmatpush1.msra.mxu0 0.0
        %4143 = vmatprep.subr.mxu0 0.0
        %4144 = vmatpush1.msra.mxu0 0.0
        %4145 = vmatprep.subr.mxu0 0.0
        %4146 = vmatpush1.msra.mxu0 0.0
        %4147 = vmatprep.subr.mxu0 0.0
        %4148 = vmatpush1.msra.mxu0 0.0
        %4149 = vmatprep.subr.mxu0 0.0
        %4150 = vmatpush1.msra.mxu0 0.0
        %4151 = vmatprep.subr.mxu0 0.0
        %4152 = vmatpush1.msra.mxu0 0.0
        %4153 = vmatprep.subr.mxu0 0.0
        %4154 = vmatpush1.msra.mxu0 0.0
        %4155 = vmatprep.subr.mxu0 0.0
        %4156 = vmatpush1.msra.mxu0 0.0
        %4157 = vmatprep.subr.mxu0 0.0
        %4158 = vmatpush1.msra.mxu0 0.0
        %4159 = vmatprep.mubr.f32.mxu0 0.0
        %4160 = vmatmul.mubr.f32.gmra.mrb[0].mxu0 %v4016
        %v4161 = vpop.f32.mrb[0].mxu0
        %v4162 = vadd.f32 0.0, %v4161
        %v4163 = vpop.f32.mrb[0].mxu0
        %4164 = vdwg.mxu0
        %v4165 = vadd.f32 %v4002, %v4091
        %v4166 = vadd.f32 %v4003, %v4093
        %v4167 = vadd.f32 %v4004, %v4162
        %s4168 = scalar_lea.vmem %s3, 20
        %v4169 = vld [vmem:[%s4168] sm:$0xf]
        %4170 = vrot.lane.b32.xlu0 %v3364, 108
        %v4171 = vpop.permute.xlu0 %4170
        %4172 = vrot.lane.b32.xlu0 %v3360, 108
        %v4173 = vpop.permute.xlu0 %4172
        %4174 = vrot.lane.b32.xlu0 %v3365, 108
        %v4175 = vpop.permute.xlu0 %4174
        %v4176 = vsel %vm1168, %v4171, %v4173
        %v4177 = vsel %vm1168, %v4173, %v4175
        %v4179 = vsel %vm366, %v4169, 0
        %v4181 = vsel %vm370, %v4176, 0
        %v4183 = vsel %vm370, %v4177, 0
        %v4185 = vsel %vm370, %v4175, 0
        %4187 = vmatprep.subr.mxu0 %v4183
        %4188 = vmatpush1.msra.mxu0 %v4181
        %4189 = vmatprep.subr.mxu0 0.0
        %4190 = vmatpush1.msra.mxu0 0.0
        %4191 = vmatprep.subr.mxu0 0.0
        %4192 = vmatpush1.msra.mxu0 0.0
        %4193 = vmatprep.subr.mxu0 0.0
        %4194 = vmatpush1.msra.mxu0 0.0
        %4195 = vmatprep.subr.mxu0 0.0
        %4196 = vmatpush1.msra.mxu0 0.0
        %4197 = vmatprep.subr.mxu0 0.0
        %4198 = vmatpush1.msra.mxu0 0.0
        %4199 = vmatprep.subr.mxu0 0.0
        %4200 = vmatpush1.msra.mxu0 0.0
        %4201 = vmatprep.subr.mxu0 0.0
        %4202 = vmatpush1.msra.mxu0 0.0
        %4203 = vmatprep.subr.mxu0 0.0
        %4204 = vmatpush1.msra.mxu0 0.0
        %4205 = vmatprep.subr.mxu0 0.0
        %4206 = vmatpush1.msra.mxu0 0.0
        %4207 = vmatprep.subr.mxu0 0.0
        %4208 = vmatpush1.msra.mxu0 0.0
        %4209 = vmatprep.subr.mxu0 0.0
        %4210 = vmatpush1.msra.mxu0 0.0
        %4211 = vmatprep.subr.mxu0 0.0
        %4212 = vmatpush1.msra.mxu0 0.0
        %4213 = vmatprep.subr.mxu0 0.0
        %4214 = vmatpush1.msra.mxu0 0.0
        %4215 = vmatprep.subr.mxu0 0.0
        %4216 = vmatpush1.msra.mxu0 0.0
        %4217 = vmatprep.subr.mxu0 0.0
        %4218 = vmatpush1.msra.mxu0 0.0
        %4219 = vmatprep.subr.mxu0 0.0
        %4220 = vmatpush1.msra.mxu0 0.0
        %4221 = vmatprep.subr.mxu0 0.0
        %4222 = vmatpush1.msra.mxu0 0.0
        %4223 = vmatprep.subr.mxu0 0.0
        %4224 = vmatpush1.msra.mxu0 0.0
        %4225 = vmatprep.subr.mxu0 0.0
        %4226 = vmatpush1.msra.mxu0 0.0
        %4227 = vmatprep.subr.mxu0 0.0
        %4228 = vmatpush1.msra.mxu0 0.0
        %4229 = vmatprep.subr.mxu0 0.0
        %4230 = vmatpush1.msra.mxu0 0.0
        %4231 = vmatprep.subr.mxu0 0.0
        %4232 = vmatpush1.msra.mxu0 0.0
        %4233 = vmatprep.subr.mxu0 0.0
        %4234 = vmatpush1.msra.mxu0 0.0
        %4235 = vmatprep.subr.mxu0 0.0
        %4236 = vmatpush1.msra.mxu0 0.0
        %4237 = vmatprep.subr.mxu0 0.0
        %4238 = vmatpush1.msra.mxu0 0.0
        %4239 = vmatprep.subr.mxu0 0.0
        %4240 = vmatpush1.msra.mxu0 0.0
        %4241 = vmatprep.subr.mxu0 0.0
        %4242 = vmatpush1.msra.mxu0 0.0
        %4243 = vmatprep.subr.mxu0 0.0
        %4244 = vmatpush1.msra.mxu0 0.0
        %4245 = vmatprep.subr.mxu0 0.0
        %4246 = vmatpush1.msra.mxu0 0.0
        %4247 = vmatprep.subr.mxu0 0.0
        %4248 = vmatpush1.msra.mxu0 0.0
        %4249 = vmatprep.subr.mxu0 0.0
        %4250 = vmatpush1.msra.mxu0 0.0
        %4251 = vmatprep.mubr.f32.mxu0 0.0
        %4252 = vmatmul.mubr.f32.gmra.mrb[0].mxu0 %v4179
        %v4253 = vpop.f32.mrb[0].mxu0
        %v4254 = vadd.f32 0.0, %v4253
        %v4255 = vpop.f32.mrb[0].mxu0
        %v4256 = vadd.f32 0.0, %v4255
        %4257 = vdwg.mxu0
        %4258 = vmatprep.subr.mxu0 0.0
        %4259 = vmatpush1.msra.mxu0 %v4185
        %4260 = vmatprep.subr.mxu0 0.0
        %4261 = vmatpush1.msra.mxu0 0.0
        %4262 = vmatprep.subr.mxu0 0.0
        %4263 = vmatpush1.msra.mxu0 0.0
        %4264 = vmatprep.subr.mxu0 0.0
        %4265 = vmatpush1.msra.mxu0 0.0
        %4266 = vmatprep.subr.mxu0 0.0
        %4267 = vmatpush1.msra.mxu0 0.0
        %4268 = vmatprep.subr.mxu0 0.0
        %4269 = vmatpush1.msra.mxu0 0.0
        %4270 = vmatprep.subr.mxu0 0.0
        %4271 = vmatpush1.msra.mxu0 0.0
        %4272 = vmatprep.subr.mxu0 0.0
        %4273 = vmatpush1.msra.mxu0 0.0
        %4274 = vmatprep.subr.mxu0 0.0
        %4275 = vmatpush1.msra.mxu0 0.0
        %4276 = vmatprep.subr.mxu0 0.0
        %4277 = vmatpush1.msra.mxu0 0.0
        %4278 = vmatprep.subr.mxu0 0.0
        %4279 = vmatpush1.msra.mxu0 0.0
        %4280 = vmatprep.subr.mxu0 0.0
        %4281 = vmatpush1.msra.mxu0 0.0
        %4282 = vmatprep.subr.mxu0 0.0
        %4283 = vmatpush1.msra.mxu0 0.0
        %4284 = vmatprep.subr.mxu0 0.0
        %4285 = vmatpush1.msra.mxu0 0.0
        %4286 = vmatprep.subr.mxu0 0.0
        %4287 = vmatpush1.msra.mxu0 0.0
        %4288 = vmatprep.subr.mxu0 0.0
        %4289 = vmatpush1.msra.mxu0 0.0
        %4290 = vmatprep.subr.mxu0 0.0
        %4291 = vmatpush1.msra.mxu0 0.0
        %4292 = vmatprep.subr.mxu0 0.0
        %4293 = vmatpush1.msra.mxu0 0.0
        %4294 = vmatprep.subr.mxu0 0.0
        %4295 = vmatpush1.msra.mxu0 0.0
        %4296 = vmatprep.subr.mxu0 0.0
        %4297 = vmatpush1.msra.mxu0 0.0
        %4298 = vmatprep.subr.mxu0 0.0
        %4299 = vmatpush1.msra.mxu0 0.0
        %4300 = vmatprep.subr.mxu0 0.0
        %4301 = vmatpush1.msra.mxu0 0.0
        %4302 = vmatprep.subr.mxu0 0.0
        %4303 = vmatpush1.msra.mxu0 0.0
        %4304 = vmatprep.subr.mxu0 0.0
        %4305 = vmatpush1.msra.mxu0 0.0
        %4306 = vmatprep.subr.mxu0 0.0
        %4307 = vmatpush1.msra.mxu0 0.0
        %4308 = vmatprep.subr.mxu0 0.0
        %4309 = vmatpush1.msra.mxu0 0.0
        %4310 = vmatprep.subr.mxu0 0.0
        %4311 = vmatpush1.msra.mxu0 0.0
        %4312 = vmatprep.subr.mxu0 0.0
        %4313 = vmatpush1.msra.mxu0 0.0
        %4314 = vmatprep.subr.mxu0 0.0
        %4315 = vmatpush1.msra.mxu0 0.0
        %4316 = vmatprep.subr.mxu0 0.0
        %4317 = vmatpush1.msra.mxu0 0.0
        %4318 = vmatprep.subr.mxu0 0.0
        %4319 = vmatpush1.msra.mxu0 0.0
        %4320 = vmatprep.subr.mxu0 0.0
        %4321 = vmatpush1.msra.mxu0 0.0
        %4322 = vmatprep.mubr.f32.mxu0 0.0
        %4323 = vmatmul.mubr.f32.gmra.mrb[0].mxu0 %v4179
        %v4324 = vpop.f32.mrb[0].mxu0
        %v4325 = vadd.f32 0.0, %v4324
        %v4326 = vpop.f32.mrb[0].mxu0
        %4327 = vdwg.mxu0
        %v4328 = vadd.f32 %v4165, %v4254
        %v4329 = vadd.f32 %v4166, %v4256
        %v4330 = vadd.f32 %v4167, %v4325
        %s4331 = scalar_lea.vmem %s3, 24
        %v4332 = vld [vmem:[%s4331] sm:$0xf]
        %4333 = vrot.lane.b32.xlu0 %v3364, 92
        %v4334 = vpop.permute.xlu0 %4333
        %4335 = vrot.lane.b32.xlu0 %v3360, 92
        %v4336 = vpop.permute.xlu0 %4335
        %4337 = vrot.lane.b32.xlu0 %v3365, 92
        %v4338 = vpop.permute.xlu0 %4337
        %v4339 = vsel %vm1332, %v4334, %v4336
        %v4340 = vsel %vm1332, %v4336, %v4338
        %v4342 = vsel %vm366, %v4332, 0
        %v4344 = vsel %vm370, %v4339, 0
        %v4346 = vsel %vm370, %v4340, 0
        %v4348 = vsel %vm370, %v4338, 0
        %4350 = vmatprep.subr.mxu0 %v4346
        %4351 = vmatpush1.msra.mxu0 %v4344
        %4352 = vmatprep.subr.mxu0 0.0
        %4353 = vmatpush1.msra.mxu0 0.0
        %4354 = vmatprep.subr.mxu0 0.0
        %4355 = vmatpush1.msra.mxu0 0.0
        %4356 = vmatprep.subr.mxu0 0.0
        %4357 = vmatpush1.msra.mxu0 0.0
        %4358 = vmatprep.subr.mxu0 0.0
        %4359 = vmatpush1.msra.mxu0 0.0
        %4360 = vmatprep.subr.mxu0 0.0
        %4361 = vmatpush1.msra.mxu0 0.0
        %4362 = vmatprep.subr.mxu0 0.0
        %4363 = vmatpush1.msra.mxu0 0.0
        %4364 = vmatprep.subr.mxu0 0.0
        %4365 = vmatpush1.msra.mxu0 0.0
        %4366 = vmatprep.subr.mxu0 0.0
        %4367 = vmatpush1.msra.mxu0 0.0
        %4368 = vmatprep.subr.mxu0 0.0
        %4369 = vmatpush1.msra.mxu0 0.0
        %4370 = vmatprep.subr.mxu0 0.0
        %4371 = vmatpush1.msra.mxu0 0.0
        %4372 = vmatprep.subr.mxu0 0.0
        %4373 = vmatpush1.msra.mxu0 0.0
        %4374 = vmatprep.subr.mxu0 0.0
        %4375 = vmatpush1.msra.mxu0 0.0
        %4376 = vmatprep.subr.mxu0 0.0
        %4377 = vmatpush1.msra.mxu0 0.0
        %4378 = vmatprep.subr.mxu0 0.0
        %4379 = vmatpush1.msra.mxu0 0.0
        %4380 = vmatprep.subr.mxu0 0.0
        %4381 = vmatpush1.msra.mxu0 0.0
        %4382 = vmatprep.subr.mxu0 0.0
        %4383 = vmatpush1.msra.mxu0 0.0
        %4384 = vmatprep.subr.mxu0 0.0
        %4385 = vmatpush1.msra.mxu0 0.0
        %4386 = vmatprep.subr.mxu0 0.0
        %4387 = vmatpush1.msra.mxu0 0.0
        %4388 = vmatprep.subr.mxu0 0.0
        %4389 = vmatpush1.msra.mxu0 0.0
        %4390 = vmatprep.subr.mxu0 0.0
        %4391 = vmatpush1.msra.mxu0 0.0
        %4392 = vmatprep.subr.mxu0 0.0
        %4393 = vmatpush1.msra.mxu0 0.0
        %4394 = vmatprep.subr.mxu0 0.0
        %4395 = vmatpush1.msra.mxu0 0.0
        %4396 = vmatprep.subr.mxu0 0.0
        %4397 = vmatpush1.msra.mxu0 0.0
        %4398 = vmatprep.subr.mxu0 0.0
        %4399 = vmatpush1.msra.mxu0 0.0
        %4400 = vmatprep.subr.mxu0 0.0
        %4401 = vmatpush1.msra.mxu0 0.0
        %4402 = vmatprep.subr.mxu0 0.0
        %4403 = vmatpush1.msra.mxu0 0.0
        %4404 = vmatprep.subr.mxu0 0.0
        %4405 = vmatpush1.msra.mxu0 0.0
        %4406 = vmatprep.subr.mxu0 0.0
        %4407 = vmatpush1.msra.mxu0 0.0
        %4408 = vmatprep.subr.mxu0 0.0
        %4409 = vmatpush1.msra.mxu0 0.0
        %4410 = vmatprep.subr.mxu0 0.0
        %4411 = vmatpush1.msra.mxu0 0.0
        %4412 = vmatprep.subr.mxu0 0.0
        %4413 = vmatpush1.msra.mxu0 0.0
        %4414 = vmatprep.mubr.f32.mxu0 0.0
        %4415 = vmatmul.mubr.f32.gmra.mrb[0].mxu0 %v4342
        %v4416 = vpop.f32.mrb[0].mxu0
        %v4417 = vadd.f32 0.0, %v4416
        %v4418 = vpop.f32.mrb[0].mxu0
        %v4419 = vadd.f32 0.0, %v4418
        %4420 = vdwg.mxu0
        %4421 = vmatprep.subr.mxu0 0.0
        %4422 = vmatpush1.msra.mxu0 %v4348
        %4423 = vmatprep.subr.mxu0 0.0
        %4424 = vmatpush1.msra.mxu0 0.0
        %4425 = vmatprep.subr.mxu0 0.0
        %4426 = vmatpush1.msra.mxu0 0.0
        %4427 = vmatprep.subr.mxu0 0.0
        %4428 = vmatpush1.msra.mxu0 0.0
        %4429 = vmatprep.subr.mxu0 0.0
        %4430 = vmatpush1.msra.mxu0 0.0
        %4431 = vmatprep.subr.mxu0 0.0
        %4432 = vmatpush1.msra.mxu0 0.0
        %4433 = vmatprep.subr.mxu0 0.0
        %4434 = vmatpush1.msra.mxu0 0.0
        %4435 = vmatprep.subr.mxu0 0.0
        %4436 = vmatpush1.msra.mxu0 0.0
        %4437 = vmatprep.subr.mxu0 0.0
        %4438 = vmatpush1.msra.mxu0 0.0
        %4439 = vmatprep.subr.mxu0 0.0
        %4440 = vmatpush1.msra.mxu0 0.0
        %4441 = vmatprep.subr.mxu0 0.0
        %4442 = vmatpush1.msra.mxu0 0.0
        %4443 = vmatprep.subr.mxu0 0.0
        %4444 = vmatpush1.msra.mxu0 0.0
        %4445 = vmatprep.subr.mxu0 0.0
        %4446 = vmatpush1.msra.mxu0 0.0
        %4447 = vmatprep.subr.mxu0 0.0
        %4448 = vmatpush1.msra.mxu0 0.0
        %4449 = vmatprep.subr.mxu0 0.0
        %4450 = vmatpush1.msra.mxu0 0.0
        %4451 = vmatprep.subr.mxu0 0.0
        %4452 = vmatpush1.msra.mxu0 0.0
        %4453 = vmatprep.subr.mxu0 0.0
        %4454 = vmatpush1.msra.mxu0 0.0
        %4455 = vmatprep.subr.mxu0 0.0
        %4456 = vmatpush1.msra.mxu0 0.0
        %4457 = vmatprep.subr.mxu0 0.0
        %4458 = vmatpush1.msra.mxu0 0.0
        %4459 = vmatprep.subr.mxu0 0.0
        %4460 = vmatpush1.msra.mxu0 0.0
        %4461 = vmatprep.subr.mxu0 0.0
        %4462 = vmatpush1.msra.mxu0 0.0
        %4463 = vmatprep.subr.mxu0 0.0
        %4464 = vmatpush1.msra.mxu0 0.0
        %4465 = vmatprep.subr.mxu0 0.0
        %4466 = vmatpush1.msra.mxu0 0.0
        %4467 = vmatprep.subr.mxu0 0.0
        %4468 = vmatpush1.msra.mxu0 0.0
        %4469 = vmatprep.subr.mxu0 0.0
        %4470 = vmatpush1.msra.mxu0 0.0
        %4471 = vmatprep.subr.mxu0 0.0
        %4472 = vmatpush1.msra.mxu0 0.0
        %4473 = vmatprep.subr.mxu0 0.0
        %4474 = vmatpush1.msra.mxu0 0.0
        %4475 = vmatprep.subr.mxu0 0.0
        %4476 = vmatpush1.msra.mxu0 0.0
        %4477 = vmatprep.subr.mxu0 0.0
        %4478 = vmatpush1.msra.mxu0 0.0
        %4479 = vmatprep.subr.mxu0 0.0
        %4480 = vmatpush1.msra.mxu0 0.0
        %4481 = vmatprep.subr.mxu0 0.0
        %4482 = vmatpush1.msra.mxu0 0.0
        %4483 = vmatprep.subr.mxu0 0.0
        %4484 = vmatpush1.msra.mxu0 0.0
        %4485 = vmatprep.mubr.f32.mxu0 0.0
        %4486 = vmatmul.mubr.f32.gmra.mrb[0].mxu0 %v4342
        %v4487 = vpop.f32.mrb[0].mxu0
        %v4488 = vadd.f32 0.0, %v4487
        %v4489 = vpop.f32.mrb[0].mxu0
        %4490 = vdwg.mxu0
        %v4491 = vadd.f32 %v4328, %v4417
        %v4492 = vadd.f32 %v4329, %v4419
        %v4493 = vadd.f32 %v4330, %v4488
        %s4494 = scalar_lea.vmem %s3, 28
        %v4495 = vld [vmem:[%s4494] sm:$0xf]
        %4496 = vrot.lane.b32.xlu0 %v3364, 91
        %v4497 = vpop.permute.xlu0 %4496
        %4498 = vrot.lane.b32.xlu0 %v3360, 91
        %v4499 = vpop.permute.xlu0 %4498
        %4500 = vrot.lane.b32.xlu0 %v3365, 91
        %v4501 = vpop.permute.xlu0 %4500
        %v4502 = vsel %vm1496, %v4497, %v4499
        %v4503 = vsel %vm1496, %v4499, %v4501
        %v4505 = vsel %vm366, %v4495, 0
        %v4507 = vsel %vm370, %v4502, 0
        %v4509 = vsel %vm370, %v4503, 0
        %v4511 = vsel %vm370, %v4501, 0
        %4513 = vmatprep.subr.mxu0 %v4509
        %4514 = vmatpush1.msra.mxu0 %v4507
        %4515 = vmatprep.subr.mxu0 0.0
        %4516 = vmatpush1.msra.mxu0 0.0
        %4517 = vmatprep.subr.mxu0 0.0
        %4518 = vmatpush1.msra.mxu0 0.0
        %4519 = vmatprep.subr.mxu0 0.0
        %4520 = vmatpush1.msra.mxu0 0.0
        %4521 = vmatprep.subr.mxu0 0.0
        %4522 = vmatpush1.msra.mxu0 0.0
        %4523 = vmatprep.subr.mxu0 0.0
        %4524 = vmatpush1.msra.mxu0 0.0
        %4525 = vmatprep.subr.mxu0 0.0
        %4526 = vmatpush1.msra.mxu0 0.0
        %4527 = vmatprep.subr.mxu0 0.0
        %4528 = vmatpush1.msra.mxu0 0.0
        %4529 = vmatprep.subr.mxu0 0.0
        %4530 = vmatpush1.msra.mxu0 0.0
        %4531 = vmatprep.subr.mxu0 0.0
        %4532 = vmatpush1.msra.mxu0 0.0
        %4533 = vmatprep.subr.mxu0 0.0
        %4534 = vmatpush1.msra.mxu0 0.0
        %4535 = vmatprep.subr.mxu0 0.0
        %4536 = vmatpush1.msra.mxu0 0.0
        %4537 = vmatprep.subr.mxu0 0.0
        %4538 = vmatpush1.msra.mxu0 0.0
        %4539 = vmatprep.subr.mxu0 0.0
        %4540 = vmatpush1.msra.mxu0 0.0
        %4541 = vmatprep.subr.mxu0 0.0
        %4542 = vmatpush1.msra.mxu0 0.0
        %4543 = vmatprep.subr.mxu0 0.0
        %4544 = vmatpush1.msra.mxu0 0.0
        %4545 = vmatprep.subr.mxu0 0.0
        %4546 = vmatpush1.msra.mxu0 0.0
        %4547 = vmatprep.subr.mxu0 0.0
        %4548 = vmatpush1.msra.mxu0 0.0
        %4549 = vmatprep.subr.mxu0 0.0
        %4550 = vmatpush1.msra.mxu0 0.0
        %4551 = vmatprep.subr.mxu0 0.0
        %4552 = vmatpush1.msra.mxu0 0.0
        %4553 = vmatprep.subr.mxu0 0.0
        %4554 = vmatpush1.msra.mxu0 0.0
        %4555 = vmatprep.subr.mxu0 0.0
        %4556 = vmatpush1.msra.mxu0 0.0
        %4557 = vmatprep.subr.mxu0 0.0
        %4558 = vmatpush1.msra.mxu0 0.0
        %4559 = vmatprep.subr.mxu0 0.0
        %4560 = vmatpush1.msra.mxu0 0.0
        %4561 = vmatprep.subr.mxu0 0.0
        %4562 = vmatpush1.msra.mxu0 0.0
        %4563 = vmatprep.subr.mxu0 0.0
        %4564 = vmatpush1.msra.mxu0 0.0
        %4565 = vmatprep.subr.mxu0 0.0
        %4566 = vmatpush1.msra.mxu0 0.0
        %4567 = vmatprep.subr.mxu0 0.0
        %4568 = vmatpush1.msra.mxu0 0.0
        %4569 = vmatprep.subr.mxu0 0.0
        %4570 = vmatpush1.msra.mxu0 0.0
        %4571 = vmatprep.subr.mxu0 0.0
        %4572 = vmatpush1.msra.mxu0 0.0
        %4573 = vmatprep.subr.mxu0 0.0
        %4574 = vmatpush1.msra.mxu0 0.0
        %4575 = vmatprep.subr.mxu0 0.0
        %4576 = vmatpush1.msra.mxu0 0.0
        %4577 = vmatprep.mubr.f32.mxu0 0.0
        %4578 = vmatmul.mubr.f32.gmra.mrb[0].mxu0 %v4505
        %v4579 = vpop.f32.mrb[0].mxu0
        %v4580 = vadd.f32 0.0, %v4579
        %v4581 = vpop.f32.mrb[0].mxu0
        %v4582 = vadd.f32 0.0, %v4581
        %4583 = vdwg.mxu0
        %4584 = vmatprep.subr.mxu0 0.0
        %4585 = vmatpush1.msra.mxu0 %v4511
        %4586 = vmatprep.subr.mxu0 0.0
        %4587 = vmatpush1.msra.mxu0 0.0
        %4588 = vmatprep.subr.mxu0 0.0
        %4589 = vmatpush1.msra.mxu0 0.0
        %4590 = vmatprep.subr.mxu0 0.0
        %4591 = vmatpush1.msra.mxu0 0.0
        %4592 = vmatprep.subr.mxu0 0.0
        %4593 = vmatpush1.msra.mxu0 0.0
        %4594 = vmatprep.subr.mxu0 0.0
        %4595 = vmatpush1.msra.mxu0 0.0
        %4596 = vmatprep.subr.mxu0 0.0
        %4597 = vmatpush1.msra.mxu0 0.0
        %4598 = vmatprep.subr.mxu0 0.0
        %4599 = vmatpush1.msra.mxu0 0.0
        %4600 = vmatprep.subr.mxu0 0.0
        %4601 = vmatpush1.msra.mxu0 0.0
        %4602 = vmatprep.subr.mxu0 0.0
        %4603 = vmatpush1.msra.mxu0 0.0
        %4604 = vmatprep.subr.mxu0 0.0
        %4605 = vmatpush1.msra.mxu0 0.0
        %4606 = vmatprep.subr.mxu0 0.0
        %4607 = vmatpush1.msra.mxu0 0.0
        %4608 = vmatprep.subr.mxu0 0.0
        %4609 = vmatpush1.msra.mxu0 0.0
        %4610 = vmatprep.subr.mxu0 0.0
        %4611 = vmatpush1.msra.mxu0 0.0
        %4612 = vmatprep.subr.mxu0 0.0
        %4613 = vmatpush1.msra.mxu0 0.0
        %4614 = vmatprep.subr.mxu0 0.0
        %4615 = vmatpush1.msra.mxu0 0.0
        %4616 = vmatprep.subr.mxu0 0.0
        %4617 = vmatpush1.msra.mxu0 0.0
        %4618 = vmatprep.subr.mxu0 0.0
        %4619 = vmatpush1.msra.mxu0 0.0
        %4620 = vmatprep.subr.mxu0 0.0
        %4621 = vmatpush1.msra.mxu0 0.0
        %4622 = vmatprep.subr.mxu0 0.0
        %4623 = vmatpush1.msra.mxu0 0.0
        %4624 = vmatprep.subr.mxu0 0.0
        %4625 = vmatpush1.msra.mxu0 0.0
        %4626 = vmatprep.subr.mxu0 0.0
        %4627 = vmatpush1.msra.mxu0 0.0
        %4628 = vmatprep.subr.mxu0 0.0
        %4629 = vmatpush1.msra.mxu0 0.0
        %4630 = vmatprep.subr.mxu0 0.0
        %4631 = vmatpush1.msra.mxu0 0.0
        %4632 = vmatprep.subr.mxu0 0.0
        %4633 = vmatpush1.msra.mxu0 0.0
        %4634 = vmatprep.subr.mxu0 0.0
        %4635 = vmatpush1.msra.mxu0 0.0
        %4636 = vmatprep.subr.mxu0 0.0
        %4637 = vmatpush1.msra.mxu0 0.0
        %4638 = vmatprep.subr.mxu0 0.0
        %4639 = vmatpush1.msra.mxu0 0.0
        %4640 = vmatprep.subr.mxu0 0.0
        %4641 = vmatpush1.msra.mxu0 0.0
        %4642 = vmatprep.subr.mxu0 0.0
        %4643 = vmatpush1.msra.mxu0 0.0
        %4644 = vmatprep.subr.mxu0 0.0
        %4645 = vmatpush1.msra.mxu0 0.0
        %4646 = vmatprep.subr.mxu0 0.0
        %4647 = vmatpush1.msra.mxu0 0.0
        %4648 = vmatprep.mubr.f32.mxu0 0.0
        %4649 = vmatmul.mubr.f32.gmra.mrb[0].mxu0 %v4505
        %v4650 = vpop.f32.mrb[0].mxu0
        %v4651 = vadd.f32 0.0, %v4650
        %v4652 = vpop.f32.mrb[0].mxu0
        %4653 = vdwg.mxu0
        %v4654 = vadd.f32 %v4491, %v4580
        %v4655 = vadd.f32 %v4492, %v4582
        %v4656 = vadd.f32 %v4493, %v4651
        %s4657 = scalar_lea.vmem %s3, 32
        %v4658 = vld [vmem:[%s4657] sm:$0xf]
        %4659 = vrot.lane.b32.xlu0 %v3364, 90
        %v4660 = vpop.permute.xlu0 %4659
        %4661 = vrot.lane.b32.xlu0 %v3360, 90
        %v4662 = vpop.permute.xlu0 %4661
        %4663 = vrot.lane.b32.xlu0 %v3365, 90
        %v4664 = vpop.permute.xlu0 %4663
        %v4665 = vsel %vm1660, %v4660, %v4662
        %v4666 = vsel %vm1660, %v4662, %v4664
        %v4668 = vsel %vm366, %v4658, 0
        %v4670 = vsel %vm370, %v4665, 0
        %v4672 = vsel %vm370, %v4666, 0
        %v4674 = vsel %vm370, %v4664, 0
        %4676 = vmatprep.subr.mxu0 %v4672
        %4677 = vmatpush1.msra.mxu0 %v4670
        %4678 = vmatprep.subr.mxu0 0.0
        %4679 = vmatpush1.msra.mxu0 0.0
        %4680 = vmatprep.subr.mxu0 0.0
        %4681 = vmatpush1.msra.mxu0 0.0
        %4682 = vmatprep.subr.mxu0 0.0
        %4683 = vmatpush1.msra.mxu0 0.0
        %4684 = vmatprep.subr.mxu0 0.0
        %4685 = vmatpush1.msra.mxu0 0.0
        %4686 = vmatprep.subr.mxu0 0.0
        %4687 = vmatpush1.msra.mxu0 0.0
        %4688 = vmatprep.subr.mxu0 0.0
        %4689 = vmatpush1.msra.mxu0 0.0
        %4690 = vmatprep.subr.mxu0 0.0
        %4691 = vmatpush1.msra.mxu0 0.0
        %4692 = vmatprep.subr.mxu0 0.0
        %4693 = vmatpush1.msra.mxu0 0.0
        %4694 = vmatprep.subr.mxu0 0.0
        %4695 = vmatpush1.msra.mxu0 0.0
        %4696 = vmatprep.subr.mxu0 0.0
        %4697 = vmatpush1.msra.mxu0 0.0
        %4698 = vmatprep.subr.mxu0 0.0
        %4699 = vmatpush1.msra.mxu0 0.0
        %4700 = vmatprep.subr.mxu0 0.0
        %4701 = vmatpush1.msra.mxu0 0.0
        %4702 = vmatprep.subr.mxu0 0.0
        %4703 = vmatpush1.msra.mxu0 0.0
        %4704 = vmatprep.subr.mxu0 0.0
        %4705 = vmatpush1.msra.mxu0 0.0
        %4706 = vmatprep.subr.mxu0 0.0
        %4707 = vmatpush1.msra.mxu0 0.0
        %4708 = vmatprep.subr.mxu0 0.0
        %4709 = vmatpush1.msra.mxu0 0.0
        %4710 = vmatprep.subr.mxu0 0.0
        %4711 = vmatpush1.msra.mxu0 0.0
        %4712 = vmatprep.subr.mxu0 0.0
        %4713 = vmatpush1.msra.mxu0 0.0
        %4714 = vmatprep.subr.mxu0 0.0
        %4715 = vmatpush1.msra.mxu0 0.0
        %4716 = vmatprep.subr.mxu0 0.0
        %4717 = vmatpush1.msra.mxu0 0.0
        %4718 = vmatprep.subr.mxu0 0.0
        %4719 = vmatpush1.msra.mxu0 0.0
        %4720 = vmatprep.subr.mxu0 0.0
        %4721 = vmatpush1.msra.mxu0 0.0
        %4722 = vmatprep.subr.mxu0 0.0
        %4723 = vmatpush1.msra.mxu0 0.0
        %4724 = vmatprep.subr.mxu0 0.0
        %4725 = vmatpush1.msra.mxu0 0.0
        %4726 = vmatprep.subr.mxu0 0.0
        %4727 = vmatpush1.msra.mxu0 0.0
        %4728 = vmatprep.subr.mxu0 0.0
        %4729 = vmatpush1.msra.mxu0 0.0
        %4730 = vmatprep.subr.mxu0 0.0
        %4731 = vmatpush1.msra.mxu0 0.0
        %4732 = vmatprep.subr.mxu0 0.0
        %4733 = vmatpush1.msra.mxu0 0.0
        %4734 = vmatprep.subr.mxu0 0.0
        %4735 = vmatpush1.msra.mxu0 0.0
        %4736 = vmatprep.subr.mxu0 0.0
        %4737 = vmatpush1.msra.mxu0 0.0
        %4738 = vmatprep.subr.mxu0 0.0
        %4739 = vmatpush1.msra.mxu0 0.0
        %4740 = vmatprep.mubr.f32.mxu0 0.0
        %4741 = vmatmul.mubr.f32.gmra.mrb[0].mxu0 %v4668
        %v4742 = vpop.f32.mrb[0].mxu0
        %v4743 = vadd.f32 0.0, %v4742
        %v4744 = vpop.f32.mrb[0].mxu0
        %v4745 = vadd.f32 0.0, %v4744
        %4746 = vdwg.mxu0
        %4747 = vmatprep.subr.mxu0 0.0
        %4748 = vmatpush1.msra.mxu0 %v4674
        %4749 = vmatprep.subr.mxu0 0.0
        %4750 = vmatpush1.msra.mxu0 0.0
        %4751 = vmatprep.subr.mxu0 0.0
        %4752 = vmatpush1.msra.mxu0 0.0
        %4753 = vmatprep.subr.mxu0 0.0
        %4754 = vmatpush1.msra.mxu0 0.0
        %4755 = vmatprep.subr.mxu0 0.0
        %4756 = vmatpush1.msra.mxu0 0.0
        %4757 = vmatprep.subr.mxu0 0.0
        %4758 = vmatpush1.msra.mxu0 0.0
        %4759 = vmatprep.subr.mxu0 0.0
        %4760 = vmatpush1.msra.mxu0 0.0
        %4761 = vmatprep.subr.mxu0 0.0
        %4762 = vmatpush1.msra.mxu0 0.0
        %4763 = vmatprep.subr.mxu0 0.0
        %4764 = vmatpush1.msra.mxu0 0.0
        %4765 = vmatprep.subr.mxu0 0.0
        %4766 = vmatpush1.msra.mxu0 0.0
        %4767 = vmatprep.subr.mxu0 0.0
        %4768 = vmatpush1.msra.mxu0 0.0
        %4769 = vmatprep.subr.mxu0 0.0
        %4770 = vmatpush1.msra.mxu0 0.0
        %4771 = vmatprep.subr.mxu0 0.0
        %4772 = vmatpush1.msra.mxu0 0.0
        %4773 = vmatprep.subr.mxu0 0.0
        %4774 = vmatpush1.msra.mxu0 0.0
        %4775 = vmatprep.subr.mxu0 0.0
        %4776 = vmatpush1.msra.mxu0 0.0
        %4777 = vmatprep.subr.mxu0 0.0
        %4778 = vmatpush1.msra.mxu0 0.0
        %4779 = vmatprep.subr.mxu0 0.0
        %4780 = vmatpush1.msra.mxu0 0.0
        %4781 = vmatprep.subr.mxu0 0.0
        %4782 = vmatpush1.msra.mxu0 0.0
        %4783 = vmatprep.subr.mxu0 0.0
        %4784 = vmatpush1.msra.mxu0 0.0
        %4785 = vmatprep.subr.mxu0 0.0
        %4786 = vmatpush1.msra.mxu0 0.0
        %4787 = vmatprep.subr.mxu0 0.0
        %4788 = vmatpush1.msra.mxu0 0.0
        %4789 = vmatprep.subr.mxu0 0.0
        %4790 = vmatpush1.msra.mxu0 0.0
        %4791 = vmatprep.subr.mxu0 0.0
        %4792 = vmatpush1.msra.mxu0 0.0
        %4793 = vmatprep.subr.mxu0 0.0
        %4794 = vmatpush1.msra.mxu0 0.0
        %4795 = vmatprep.subr.mxu0 0.0
        %4796 = vmatpush1.msra.mxu0 0.0
        %4797 = vmatprep.subr.mxu0 0.0
        %4798 = vmatpush1.msra.mxu0 0.0
        %4799 = vmatprep.subr.mxu0 0.0
        %4800 = vmatpush1.msra.mxu0 0.0
        %4801 = vmatprep.subr.mxu0 0.0
        %4802 = vmatpush1.msra.mxu0 0.0
        %4803 = vmatprep.subr.mxu0 0.0
        %4804 = vmatpush1.msra.mxu0 0.0
        %4805 = vmatprep.subr.mxu0 0.0
        %4806 = vmatpush1.msra.mxu0 0.0
        %4807 = vmatprep.subr.mxu0 0.0
        %4808 = vmatpush1.msra.mxu0 0.0
        %4809 = vmatprep.subr.mxu0 0.0
        %4810 = vmatpush1.msra.mxu0 0.0
        %4811 = vmatprep.mubr.f32.mxu0 0.0
        %4812 = vmatmul.mubr.f32.gmra.mrb[0].mxu0 %v4668
        %v4813 = vpop.f32.mrb[0].mxu0
        %v4814 = vadd.f32 0.0, %v4813
        %v4815 = vpop.f32.mrb[0].mxu0
        %4816 = vdwg.mxu0
        %v4817 = vadd.f32 %v4654, %v4743
        %v4818 = vadd.f32 %v4655, %v4745
        %v4819 = vadd.f32 %v4656, %v4814
        %s4820 = scalar_lea.vmem %s5, 24
        %v4821 = vld [vmem:[%s4820] sm:$0xf]
        %4823 = vset.pattern.permute.xlu0 0
        %4824 = vperm.xlu0 %4823, %v4821
        %v4825 = vpop.permute.xlu0 %4824
        %v4827 = vmul.f32 %v4817, %v4825
        %v4828 = vmul.f32 %v4818, %v4825
        %v4829 = vmul.f32 %v4819, %v4825
        %s4830 = scalar_lea.vmem %s5, 28
        %v4831 = vld [vmem:[%s4830] sm:$0xf]
        %4833 = vset.pattern.permute.xlu0 0
        %4834 = vperm.xlu0 %4833, %v4831
        %v4835 = vpop.permute.xlu0 %4834
        %v4837 = vadd.f32 %v4827, %v4835
        %v4838 = vadd.f32 %v4828, %v4835
        %v4839 = vadd.f32 %v4829, %v4835
        %v4840 = vmax.f32 %v4837, 0.0
        %v4841 = vmax.f32 %v4838, 0.0
        %v4842 = vmax.f32 %v4839, 0.0
        %v4843 = vmul.f32 %v317, %v4840
        %v4844 = vmul.f32 %v321, %v4841
        %v4845 = vmul.f32 %v325, %v4842
        %4849 = vrot.lane.b32.xlu0 %v4843, 19
        %v4850 = vpop.permute.xlu0 %4849
        %4851 = vrot.lane.b32.xlu0 %v4844, 19
        %v4852 = vpop.permute.xlu0 %4851
        %4853 = vrot.lane.b32.xlu0 %v4845, 19
        %v4854 = vpop.permute.xlu0 %4853
        %v4855 = vsel %vm344, %v4850, %v4852
        %v4856 = vsel %vm344, %v4852, %v4854
        %v4859 = vsel %vm344, 0.0, %v4850
        %v4860 = vsel %vm350, %v4856, 0.0
        %v4861 = vld [vmem:[%s4] sm:$0xf]
        %s4862 = scalar_lea.vmem %s4, 4
        %v4863 = vld [vmem:[%s4862] sm:$0xf]
        %4866 = vrot.lane.b32.xlu0 %v4859, 127
        %v4867 = vpop.permute.xlu0 %4866
        %4868 = vrot.lane.b32.xlu0 %v4855, 127
        %v4869 = vpop.permute.xlu0 %4868
        %4870 = vrot.lane.b32.xlu0 %v4860, 127
        %v4871 = vpop.permute.xlu0 %4870
        %v4872 = vsel %vm363, %v4867, %v4869
        %v4873 = vsel %vm363, %v4869, %v4871
        %v4875 = vsel %vm366, %v4863, 0
        %v4877 = vsel %vm370, %v4872, 0
        %v4879 = vsel %vm370, %v4873, 0
        %v4881 = vsel %vm370, %v4871, 0
        %4883 = vmatprep.subr.mxu0 %v4879
        %4884 = vmatpush1.msra.mxu0 %v4877
        %4885 = vmatprep.subr.mxu0 0.0
        %4886 = vmatpush1.msra.mxu0 0.0
        %4887 = vmatprep.subr.mxu0 0.0
        %4888 = vmatpush1.msra.mxu0 0.0
        %4889 = vmatprep.subr.mxu0 0.0
        %4890 = vmatpush1.msra.mxu0 0.0
        %4891 = vmatprep.subr.mxu0 0.0
        %4892 = vmatpush1.msra.mxu0 0.0
        %4893 = vmatprep.subr.mxu0 0.0
        %4894 = vmatpush1.msra.mxu0 0.0
        %4895 = vmatprep.subr.mxu0 0.0
        %4896 = vmatpush1.msra.mxu0 0.0
        %4897 = vmatprep.subr.mxu0 0.0
        %4898 = vmatpush1.msra.mxu0 0.0
        %4899 = vmatprep.subr.mxu0 0.0
        %4900 = vmatpush1.msra.mxu0 0.0
        %4901 = vmatprep.subr.mxu0 0.0
        %4902 = vmatpush1.msra.mxu0 0.0
        %4903 = vmatprep.subr.mxu0 0.0
        %4904 = vmatpush1.msra.mxu0 0.0
        %4905 = vmatprep.subr.mxu0 0.0
        %4906 = vmatpush1.msra.mxu0 0.0
        %4907 = vmatprep.subr.mxu0 0.0
        %4908 = vmatpush1.msra.mxu0 0.0
        %4909 = vmatprep.subr.mxu0 0.0
        %4910 = vmatpush1.msra.mxu0 0.0
        %4911 = vmatprep.subr.mxu0 0.0
        %4912 = vmatpush1.msra.mxu0 0.0
        %4913 = vmatprep.subr.mxu0 0.0
        %4914 = vmatpush1.msra.mxu0 0.0
        %4915 = vmatprep.subr.mxu0 0.0
        %4916 = vmatpush1.msra.mxu0 0.0
        %4917 = vmatprep.subr.mxu0 0.0
        %4918 = vmatpush1.msra.mxu0 0.0
        %4919 = vmatprep.subr.mxu0 0.0
        %4920 = vmatpush1.msra.mxu0 0.0
        %4921 = vmatprep.subr.mxu0 0.0
        %4922 = vmatpush1.msra.mxu0 0.0
        %4923 = vmatprep.subr.mxu0 0.0
        %4924 = vmatpush1.msra.mxu0 0.0
        %4925 = vmatprep.subr.mxu0 0.0
        %4926 = vmatpush1.msra.mxu0 0.0
        %4927 = vmatprep.subr.mxu0 0.0
        %4928 = vmatpush1.msra.mxu0 0.0
        %4929 = vmatprep.subr.mxu0 0.0
        %4930 = vmatpush1.msra.mxu0 0.0
        %4931 = vmatprep.subr.mxu0 0.0
        %4932 = vmatpush1.msra.mxu0 0.0
        %4933 = vmatprep.subr.mxu0 0.0
        %4934 = vmatpush1.msra.mxu0 0.0
        %4935 = vmatprep.subr.mxu0 0.0
        %4936 = vmatpush1.msra.mxu0 0.0
        %4937 = vmatprep.subr.mxu0 0.0
        %4938 = vmatpush1.msra.mxu0 0.0
        %4939 = vmatprep.subr.mxu0 0.0
        %4940 = vmatpush1.msra.mxu0 0.0
        %4941 = vmatprep.subr.mxu0 0.0
        %4942 = vmatpush1.msra.mxu0 0.0
        %4943 = vmatprep.subr.mxu0 0.0
        %4944 = vmatpush1.msra.mxu0 0.0
        %4945 = vmatprep.subr.mxu0 0.0
        %4946 = vmatpush1.msra.mxu0 0.0
        %4947 = vmatprep.mubr.f32.mxu0 0.0
        %4948 = vmatmul.mubr.f32.gmra.mrb[0].mxu0 %v4875
        %v4949 = vpop.f32.mrb[0].mxu0
        %v4950 = vadd.f32 0.0, %v4949
        %v4951 = vpop.f32.mrb[0].mxu0
        %v4952 = vadd.f32 0.0, %v4951
        %4953 = vdwg.mxu0
        %4954 = vmatprep.subr.mxu0 0.0
        %4955 = vmatpush1.msra.mxu0 %v4881
        %4956 = vmatprep.subr.mxu0 0.0
        %4957 = vmatpush1.msra.mxu0 0.0
        %4958 = vmatprep.subr.mxu0 0.0
        %4959 = vmatpush1.msra.mxu0 0.0
        %4960 = vmatprep.subr.mxu0 0.0
        %4961 = vmatpush1.msra.mxu0 0.0
        %4962 = vmatprep.subr.mxu0 0.0
        %4963 = vmatpush1.msra.mxu0 0.0
        %4964 = vmatprep.subr.mxu0 0.0
        %4965 = vmatpush1.msra.mxu0 0.0
        %4966 = vmatprep.subr.mxu0 0.0
        %4967 = vmatpush1.msra.mxu0 0.0
        %4968 = vmatprep.subr.mxu0 0.0
        %4969 = vmatpush1.msra.mxu0 0.0
        %4970 = vmatprep.subr.mxu0 0.0
        %4971 = vmatpush1.msra.mxu0 0.0
        %4972 = vmatprep.subr.mxu0 0.0
        %4973 = vmatpush1.msra.mxu0 0.0
        %4974 = vmatprep.subr.mxu0 0.0
        %4975 = vmatpush1.msra.mxu0 0.0
        %4976 = vmatprep.subr.mxu0 0.0
        %4977 = vmatpush1.msra.mxu0 0.0
        %4978 = vmatprep.subr.mxu0 0.0
        %4979 = vmatpush1.msra.mxu0 0.0
        %4980 = vmatprep.subr.mxu0 0.0
        %4981 = vmatpush1.msra.mxu0 0.0
        %4982 = vmatprep.subr.mxu0 0.0
        %4983 = vmatpush1.msra.mxu0 0.0
        %4984 = vmatprep.subr.mxu0 0.0
        %4985 = vmatpush1.msra.mxu0 0.0
        %4986 = vmatprep.subr.mxu0 0.0
        %4987 = vmatpush1.msra.mxu0 0.0
        %4988 = vmatprep.subr.mxu0 0.0
        %4989 = vmatpush1.msra.mxu0 0.0
        %4990 = vmatprep.subr.mxu0 0.0
        %4991 = vmatpush1.msra.mxu0 0.0
        %4992 = vmatprep.subr.mxu0 0.0
        %4993 = vmatpush1.msra.mxu0 0.0
        %4994 = vmatprep.subr.mxu0 0.0
        %4995 = vmatpush1.msra.mxu0 0.0
        %4996 = vmatprep.subr.mxu0 0.0
        %4997 = vmatpush1.msra.mxu0 0.0
        %4998 = vmatprep.subr.mxu0 0.0
        %4999 = vmatpush1.msra.mxu0 0.0
        %5000 = vmatprep.subr.mxu0 0.0
        %5001 = vmatpush1.msra.mxu0 0.0
        %5002 = vmatprep.subr.mxu0 0.0
        %5003 = vmatpush1.msra.mxu0 0.0
        %5004 = vmatprep.subr.mxu0 0.0
        %5005 = vmatpush1.msra.mxu0 0.0
        %5006 = vmatprep.subr.mxu0 0.0
        %5007 = vmatpush1.msra.mxu0 0.0
        %5008 = vmatprep.subr.mxu0 0.0
        %5009 = vmatpush1.msra.mxu0 0.0
        %5010 = vmatprep.subr.mxu0 0.0
        %5011 = vmatpush1.msra.mxu0 0.0
        %5012 = vmatprep.subr.mxu0 0.0
        %5013 = vmatpush1.msra.mxu0 0.0
        %5014 = vmatprep.subr.mxu0 0.0
        %5015 = vmatpush1.msra.mxu0 0.0
        %5016 = vmatprep.subr.mxu0 0.0
        %5017 = vmatpush1.msra.mxu0 0.0
        %5018 = vmatprep.mubr.f32.mxu0 0.0
        %5019 = vmatmul.mubr.f32.gmra.mrb[0].mxu0 %v4875
        %v5020 = vpop.f32.mrb[0].mxu0
        %v5021 = vadd.f32 0.0, %v5020
        %v5022 = vpop.f32.mrb[0].mxu0
        %5023 = vdwg.mxu0
        %v5025 = vsel %vm366, %v4861, 0
        %v5027 = vsel %vm370, %v4859, 0
        %v5029 = vsel %vm370, %v4855, 0
        %v5031 = vsel %vm370, %v4860, 0
        %5033 = vmatprep.subr.mxu0 %v5029
        %5034 = vmatpush1.msra.mxu0 %v5027
        %5035 = vmatprep.subr.mxu0 0.0
        %5036 = vmatpush1.msra.mxu0 0.0
        %5037 = vmatprep.subr.mxu0 0.0
        %5038 = vmatpush1.msra.mxu0 0.0
        %5039 = vmatprep.subr.mxu0 0.0
        %5040 = vmatpush1.msra.mxu0 0.0
        %5041 = vmatprep.subr.mxu0 0.0
        %5042 = vmatpush1.msra.mxu0 0.0
        %5043 = vmatprep.subr.mxu0 0.0
        %5044 = vmatpush1.msra.mxu0 0.0
        %5045 = vmatprep.subr.mxu0 0.0
        %5046 = vmatpush1.msra.mxu0 0.0
        %5047 = vmatprep.subr.mxu0 0.0
        %5048 = vmatpush1.msra.mxu0 0.0
        %5049 = vmatprep.subr.mxu0 0.0
        %5050 = vmatpush1.msra.mxu0 0.0
        %5051 = vmatprep.subr.mxu0 0.0
        %5052 = vmatpush1.msra.mxu0 0.0
        %5053 = vmatprep.subr.mxu0 0.0
        %5054 = vmatpush1.msra.mxu0 0.0
        %5055 = vmatprep.subr.mxu0 0.0
        %5056 = vmatpush1.msra.mxu0 0.0
        %5057 = vmatprep.subr.mxu0 0.0
        %5058 = vmatpush1.msra.mxu0 0.0
        %5059 = vmatprep.subr.mxu0 0.0
        %5060 = vmatpush1.msra.mxu0 0.0
        %5061 = vmatprep.subr.mxu0 0.0
        %5062 = vmatpush1.msra.mxu0 0.0
        %5063 = vmatprep.subr.mxu0 0.0
        %5064 = vmatpush1.msra.mxu0 0.0
        %5065 = vmatprep.subr.mxu0 0.0
        %5066 = vmatpush1.msra.mxu0 0.0
        %5067 = vmatprep.subr.mxu0 0.0
        %5068 = vmatpush1.msra.mxu0 0.0
        %5069 = vmatprep.subr.mxu0 0.0
        %5070 = vmatpush1.msra.mxu0 0.0
        %5071 = vmatprep.subr.mxu0 0.0
        %5072 = vmatpush1.msra.mxu0 0.0
        %5073 = vmatprep.subr.mxu0 0.0
        %5074 = vmatpush1.msra.mxu0 0.0
        %5075 = vmatprep.subr.mxu0 0.0
        %5076 = vmatpush1.msra.mxu0 0.0
        %5077 = vmatprep.subr.mxu0 0.0
        %5078 = vmatpush1.msra.mxu0 0.0
        %5079 = vmatprep.subr.mxu0 0.0
        %5080 = vmatpush1.msra.mxu0 0.0
        %5081 = vmatprep.subr.mxu0 0.0
        %5082 = vmatpush1.msra.mxu0 0.0
        %5083 = vmatprep.subr.mxu0 0.0
        %5084 = vmatpush1.msra.mxu0 0.0
        %5085 = vmatprep.subr.mxu0 0.0
        %5086 = vmatpush1.msra.mxu0 0.0
        %5087 = vmatprep.subr.mxu0 0.0
        %5088 = vmatpush1.msra.mxu0 0.0
        %5089 = vmatprep.subr.mxu0 0.0
        %5090 = vmatpush1.msra.mxu0 0.0
        %5091 = vmatprep.subr.mxu0 0.0
        %5092 = vmatpush1.msra.mxu0 0.0
        %5093 = vmatprep.subr.mxu0 0.0
        %5094 = vmatpush1.msra.mxu0 0.0
        %5095 = vmatprep.subr.mxu0 0.0
        %5096 = vmatpush1.msra.mxu0 0.0
        %5097 = vmatprep.mubr.f32.mxu0 0.0
        %5098 = vmatmul.mubr.f32.gmra.mrb[0].mxu0 %v5025
        %v5099 = vpop.f32.mrb[0].mxu0
        %v5100 = vadd.f32 %v4950, %v5099
        %v5101 = vpop.f32.mrb[0].mxu0
        %v5102 = vadd.f32 %v4952, %v5101
        %5103 = vdwg.mxu0
        %5104 = vmatprep.subr.mxu0 0.0
        %5105 = vmatpush1.msra.mxu0 %v5031
        %5106 = vmatprep.subr.mxu0 0.0
        %5107 = vmatpush1.msra.mxu0 0.0
        %5108 = vmatprep.subr.mxu0 0.0
        %5109 = vmatpush1.msra.mxu0 0.0
        %5110 = vmatprep.subr.mxu0 0.0
        %5111 = vmatpush1.msra.mxu0 0.0
        %5112 = vmatprep.subr.mxu0 0.0
        %5113 = vmatpush1.msra.mxu0 0.0
        %5114 = vmatprep.subr.mxu0 0.0
        %5115 = vmatpush1.msra.mxu0 0.0
        %5116 = vmatprep.subr.mxu0 0.0
        %5117 = vmatpush1.msra.mxu0 0.0
        %5118 = vmatprep.subr.mxu0 0.0
        %5119 = vmatpush1.msra.mxu0 0.0
        %5120 = vmatprep.subr.mxu0 0.0
        %5121 = vmatpush1.msra.mxu0 0.0
        %5122 = vmatprep.subr.mxu0 0.0
        %5123 = vmatpush1.msra.mxu0 0.0
        %5124 = vmatprep.subr.mxu0 0.0
        %5125 = vmatpush1.msra.mxu0 0.0
        %5126 = vmatprep.subr.mxu0 0.0
        %5127 = vmatpush1.msra.mxu0 0.0
        %5128 = vmatprep.subr.mxu0 0.0
        %5129 = vmatpush1.msra.mxu0 0.0
        %5130 = vmatprep.subr.mxu0 0.0
        %5131 = vmatpush1.msra.mxu0 0.0
        %5132 = vmatprep.subr.mxu0 0.0
        %5133 = vmatpush1.msra.mxu0 0.0
        %5134 = vmatprep.subr.mxu0 0.0
        %5135 = vmatpush1.msra.mxu0 0.0
        %5136 = vmatprep.subr.mxu0 0.0
        %5137 = vmatpush1.msra.mxu0 0.0
        %5138 = vmatprep.subr.mxu0 0.0
        %5139 = vmatpush1.msra.mxu0 0.0
        %5140 = vmatprep.subr.mxu0 0.0
        %5141 = vmatpush1.msra.mxu0 0.0
        %5142 = vmatprep.subr.mxu0 0.0
        %5143 = vmatpush1.msra.mxu0 0.0
        %5144 = vmatprep.subr.mxu0 0.0
        %5145 = vmatpush1.msra.mxu0 0.0
        %5146 = vmatprep.subr.mxu0 0.0
        %5147 = vmatpush1.msra.mxu0 0.0
        %5148 = vmatprep.subr.mxu0 0.0
        %5149 = vmatpush1.msra.mxu0 0.0
        %5150 = vmatprep.subr.mxu0 0.0
        %5151 = vmatpush1.msra.mxu0 0.0
        %5152 = vmatprep.subr.mxu0 0.0
        %5153 = vmatpush1.msra.mxu0 0.0
        %5154 = vmatprep.subr.mxu0 0.0
        %5155 = vmatpush1.msra.mxu0 0.0
        %5156 = vmatprep.subr.mxu0 0.0
        %5157 = vmatpush1.msra.mxu0 0.0
        %5158 = vmatprep.subr.mxu0 0.0
        %5159 = vmatpush1.msra.mxu0 0.0
        %5160 = vmatprep.subr.mxu0 0.0
        %5161 = vmatpush1.msra.mxu0 0.0
        %5162 = vmatprep.subr.mxu0 0.0
        %5163 = vmatpush1.msra.mxu0 0.0
        %5164 = vmatprep.subr.mxu0 0.0
        %5165 = vmatpush1.msra.mxu0 0.0
        %5166 = vmatprep.subr.mxu0 0.0
        %5167 = vmatpush1.msra.mxu0 0.0
        %5168 = vmatprep.mubr.f32.mxu0 0.0
        %5169 = vmatmul.mubr.f32.gmra.mrb[0].mxu0 %v5025
        %v5170 = vpop.f32.mrb[0].mxu0
        %v5171 = vadd.f32 %v5021, %v5170
        %v5172 = vpop.f32.mrb[0].mxu0
        %5173 = vdwg.mxu0
        %s5174 = scalar_lea.vmem %s4, 8
        %v5175 = vld [vmem:[%s5174] sm:$0xf]
        %5176 = vrot.lane.b32.xlu0 %v4859, 126
        %v5177 = vpop.permute.xlu0 %5176
        %5178 = vrot.lane.b32.xlu0 %v4855, 126
        %v5179 = vpop.permute.xlu0 %5178
        %5180 = vrot.lane.b32.xlu0 %v4860, 126
        %v5181 = vpop.permute.xlu0 %5180
        %v5182 = vsel %vm676, %v5177, %v5179
        %v5183 = vsel %vm676, %v5179, %v5181
        %v5185 = vsel %vm366, %v5175, 0
        %v5187 = vsel %vm370, %v5182, 0
        %v5189 = vsel %vm370, %v5183, 0
        %v5191 = vsel %vm370, %v5181, 0
        %5193 = vmatprep.subr.mxu0 %v5189
        %5194 = vmatpush1.msra.mxu0 %v5187
        %5195 = vmatprep.subr.mxu0 0.0
        %5196 = vmatpush1.msra.mxu0 0.0
        %5197 = vmatprep.subr.mxu0 0.0
        %5198 = vmatpush1.msra.mxu0 0.0
        %5199 = vmatprep.subr.mxu0 0.0
        %5200 = vmatpush1.msra.mxu0 0.0
        %5201 = vmatprep.subr.mxu0 0.0
        %5202 = vmatpush1.msra.mxu0 0.0
        %5203 = vmatprep.subr.mxu0 0.0
        %5204 = vmatpush1.msra.mxu0 0.0
        %5205 = vmatprep.subr.mxu0 0.0
        %5206 = vmatpush1.msra.mxu0 0.0
        %5207 = vmatprep.subr.mxu0 0.0
        %5208 = vmatpush1.msra.mxu0 0.0
        %5209 = vmatprep.subr.mxu0 0.0
        %5210 = vmatpush1.msra.mxu0 0.0
        %5211 = vmatprep.subr.mxu0 0.0
        %5212 = vmatpush1.msra.mxu0 0.0
        %5213 = vmatprep.subr.mxu0 0.0
        %5214 = vmatpush1.msra.mxu0 0.0
        %5215 = vmatprep.subr.mxu0 0.0
        %5216 = vmatpush1.msra.mxu0 0.0
        %5217 = vmatprep.subr.mxu0 0.0
        %5218 = vmatpush1.msra.mxu0 0.0
        %5219 = vmatprep.subr.mxu0 0.0
        %5220 = vmatpush1.msra.mxu0 0.0
        %5221 = vmatprep.subr.mxu0 0.0
        %5222 = vmatpush1.msra.mxu0 0.0
        %5223 = vmatprep.subr.mxu0 0.0
        %5224 = vmatpush1.msra.mxu0 0.0
        %5225 = vmatprep.subr.mxu0 0.0
        %5226 = vmatpush1.msra.mxu0 0.0
        %5227 = vmatprep.subr.mxu0 0.0
        %5228 = vmatpush1.msra.mxu0 0.0
        %5229 = vmatprep.subr.mxu0 0.0
        %5230 = vmatpush1.msra.mxu0 0.0
        %5231 = vmatprep.subr.mxu0 0.0
        %5232 = vmatpush1.msra.mxu0 0.0
        %5233 = vmatprep.subr.mxu0 0.0
        %5234 = vmatpush1.msra.mxu0 0.0
        %5235 = vmatprep.subr.mxu0 0.0
        %5236 = vmatpush1.msra.mxu0 0.0
        %5237 = vmatprep.subr.mxu0 0.0
        %5238 = vmatpush1.msra.mxu0 0.0
        %5239 = vmatprep.subr.mxu0 0.0
        %5240 = vmatpush1.msra.mxu0 0.0
        %5241 = vmatprep.subr.mxu0 0.0
        %5242 = vmatpush1.msra.mxu0 0.0
        %5243 = vmatprep.subr.mxu0 0.0
        %5244 = vmatpush1.msra.mxu0 0.0
        %5245 = vmatprep.subr.mxu0 0.0
        %5246 = vmatpush1.msra.mxu0 0.0
        %5247 = vmatprep.subr.mxu0 0.0
        %5248 = vmatpush1.msra.mxu0 0.0
        %5249 = vmatprep.subr.mxu0 0.0
        %5250 = vmatpush1.msra.mxu0 0.0
        %5251 = vmatprep.subr.mxu0 0.0
        %5252 = vmatpush1.msra.mxu0 0.0
        %5253 = vmatprep.subr.mxu0 0.0
        %5254 = vmatpush1.msra.mxu0 0.0
        %5255 = vmatprep.subr.mxu0 0.0
        %5256 = vmatpush1.msra.mxu0 0.0
        %5257 = vmatprep.mubr.f32.mxu0 0.0
        %5258 = vmatmul.mubr.f32.gmra.mrb[0].mxu0 %v5185
        %v5259 = vpop.f32.mrb[0].mxu0
        %v5260 = vadd.f32 0.0, %v5259
        %v5261 = vpop.f32.mrb[0].mxu0
        %v5262 = vadd.f32 0.0, %v5261
        %5263 = vdwg.mxu0
        %5264 = vmatprep.subr.mxu0 0.0
        %5265 = vmatpush1.msra.mxu0 %v5191
        %5266 = vmatprep.subr.mxu0 0.0
        %5267 = vmatpush1.msra.mxu0 0.0
        %5268 = vmatprep.subr.mxu0 0.0
        %5269 = vmatpush1.msra.mxu0 0.0
        %5270 = vmatprep.subr.mxu0 0.0
        %5271 = vmatpush1.msra.mxu0 0.0
        %5272 = vmatprep.subr.mxu0 0.0
        %5273 = vmatpush1.msra.mxu0 0.0
        %5274 = vmatprep.subr.mxu0 0.0
        %5275 = vmatpush1.msra.mxu0 0.0
        %5276 = vmatprep.subr.mxu0 0.0
        %5277 = vmatpush1.msra.mxu0 0.0
        %5278 = vmatprep.subr.mxu0 0.0
        %5279 = vmatpush1.msra.mxu0 0.0
        %5280 = vmatprep.subr.mxu0 0.0
        %5281 = vmatpush1.msra.mxu0 0.0
        %5282 = vmatprep.subr.mxu0 0.0
        %5283 = vmatpush1.msra.mxu0 0.0
        %5284 = vmatprep.subr.mxu0 0.0
        %5285 = vmatpush1.msra.mxu0 0.0
        %5286 = vmatprep.subr.mxu0 0.0
        %5287 = vmatpush1.msra.mxu0 0.0
        %5288 = vmatprep.subr.mxu0 0.0
        %5289 = vmatpush1.msra.mxu0 0.0
        %5290 = vmatprep.subr.mxu0 0.0
        %5291 = vmatpush1.msra.mxu0 0.0
        %5292 = vmatprep.subr.mxu0 0.0
        %5293 = vmatpush1.msra.mxu0 0.0
        %5294 = vmatprep.subr.mxu0 0.0
        %5295 = vmatpush1.msra.mxu0 0.0
        %5296 = vmatprep.subr.mxu0 0.0
        %5297 = vmatpush1.msra.mxu0 0.0
        %5298 = vmatprep.subr.mxu0 0.0
        %5299 = vmatpush1.msra.mxu0 0.0
        %5300 = vmatprep.subr.mxu0 0.0
        %5301 = vmatpush1.msra.mxu0 0.0
        %5302 = vmatprep.subr.mxu0 0.0
        %5303 = vmatpush1.msra.mxu0 0.0
        %5304 = vmatprep.subr.mxu0 0.0
        %5305 = vmatpush1.msra.mxu0 0.0
        %5306 = vmatprep.subr.mxu0 0.0
        %5307 = vmatpush1.msra.mxu0 0.0
        %5308 = vmatprep.subr.mxu0 0.0
        %5309 = vmatpush1.msra.mxu0 0.0
        %5310 = vmatprep.subr.mxu0 0.0
        %5311 = vmatpush1.msra.mxu0 0.0
        %5312 = vmatprep.subr.mxu0 0.0
        %5313 = vmatpush1.msra.mxu0 0.0
        %5314 = vmatprep.subr.mxu0 0.0
        %5315 = vmatpush1.msra.mxu0 0.0
        %5316 = vmatprep.subr.mxu0 0.0
        %5317 = vmatpush1.msra.mxu0 0.0
        %5318 = vmatprep.subr.mxu0 0.0
        %5319 = vmatpush1.msra.mxu0 0.0
        %5320 = vmatprep.subr.mxu0 0.0
        %5321 = vmatpush1.msra.mxu0 0.0
        %5322 = vmatprep.subr.mxu0 0.0
        %5323 = vmatpush1.msra.mxu0 0.0
        %5324 = vmatprep.subr.mxu0 0.0
        %5325 = vmatpush1.msra.mxu0 0.0
        %5326 = vmatprep.subr.mxu0 0.0
        %5327 = vmatpush1.msra.mxu0 0.0
        %5328 = vmatprep.mubr.f32.mxu0 0.0
        %5329 = vmatmul.mubr.f32.gmra.mrb[0].mxu0 %v5185
        %v5330 = vpop.f32.mrb[0].mxu0
        %v5331 = vadd.f32 0.0, %v5330
        %v5332 = vpop.f32.mrb[0].mxu0
        %5333 = vdwg.mxu0
        %v5334 = vadd.f32 %v5100, %v5260
        %v5335 = vadd.f32 %v5102, %v5262
        %v5336 = vadd.f32 %v5171, %v5331
        %s5337 = scalar_lea.vmem %s4, 12
        %v5338 = vld [vmem:[%s5337] sm:$0xf]
        %5339 = vrot.lane.b32.xlu0 %v4859, 110
        %v5340 = vpop.permute.xlu0 %5339
        %5341 = vrot.lane.b32.xlu0 %v4855, 110
        %v5342 = vpop.permute.xlu0 %5341
        %5343 = vrot.lane.b32.xlu0 %v4860, 110
        %v5344 = vpop.permute.xlu0 %5343
        %v5345 = vsel %vm840, %v5340, %v5342
        %v5346 = vsel %vm840, %v5342, %v5344
        %v5348 = vsel %vm366, %v5338, 0
        %v5350 = vsel %vm370, %v5345, 0
        %v5352 = vsel %vm370, %v5346, 0
        %v5354 = vsel %vm370, %v5344, 0
        %5356 = vmatprep.subr.mxu0 %v5352
        %5357 = vmatpush1.msra.mxu0 %v5350
        %5358 = vmatprep.subr.mxu0 0.0
        %5359 = vmatpush1.msra.mxu0 0.0
        %5360 = vmatprep.subr.mxu0 0.0
        %5361 = vmatpush1.msra.mxu0 0.0
        %5362 = vmatprep.subr.mxu0 0.0
        %5363 = vmatpush1.msra.mxu0 0.0
        %5364 = vmatprep.subr.mxu0 0.0
        %5365 = vmatpush1.msra.mxu0 0.0
        %5366 = vmatprep.subr.mxu0 0.0
        %5367 = vmatpush1.msra.mxu0 0.0
        %5368 = vmatprep.subr.mxu0 0.0
        %5369 = vmatpush1.msra.mxu0 0.0
        %5370 = vmatprep.subr.mxu0 0.0
        %5371 = vmatpush1.msra.mxu0 0.0
        %5372 = vmatprep.subr.mxu0 0.0
        %5373 = vmatpush1.msra.mxu0 0.0
        %5374 = vmatprep.subr.mxu0 0.0
        %5375 = vmatpush1.msra.mxu0 0.0
        %5376 = vmatprep.subr.mxu0 0.0
        %5377 = vmatpush1.msra.mxu0 0.0
        %5378 = vmatprep.subr.mxu0 0.0
        %5379 = vmatpush1.msra.mxu0 0.0
        %5380 = vmatprep.subr.mxu0 0.0
        %5381 = vmatpush1.msra.mxu0 0.0
        %5382 = vmatprep.subr.mxu0 0.0
        %5383 = vmatpush1.msra.mxu0 0.0
        %5384 = vmatprep.subr.mxu0 0.0
        %5385 = vmatpush1.msra.mxu0 0.0
        %5386 = vmatprep.subr.mxu0 0.0
        %5387 = vmatpush1.msra.mxu0 0.0
        %5388 = vmatprep.subr.mxu0 0.0
        %5389 = vmatpush1.msra.mxu0 0.0
        %5390 = vmatprep.subr.mxu0 0.0
        %5391 = vmatpush1.msra.mxu0 0.0
        %5392 = vmatprep.subr.mxu0 0.0
        %5393 = vmatpush1.msra.mxu0 0.0
        %5394 = vmatprep.subr.mxu0 0.0
        %5395 = vmatpush1.msra.mxu0 0.0
        %5396 = vmatprep.subr.mxu0 0.0
        %5397 = vmatpush1.msra.mxu0 0.0
        %5398 = vmatprep.subr.mxu0 0.0
        %5399 = vmatpush1.msra.mxu0 0.0
        %5400 = vmatprep.subr.mxu0 0.0
        %5401 = vmatpush1.msra.mxu0 0.0
        %5402 = vmatprep.subr.mxu0 0.0
        %5403 = vmatpush1.msra.mxu0 0.0
        %5404 = vmatprep.subr.mxu0 0.0
        %5405 = vmatpush1.msra.mxu0 0.0
        %5406 = vmatprep.subr.mxu0 0.0
        %5407 = vmatpush1.msra.mxu0 0.0
        %5408 = vmatprep.subr.mxu0 0.0
        %5409 = vmatpush1.msra.mxu0 0.0
        %5410 = vmatprep.subr.mxu0 0.0
        %5411 = vmatpush1.msra.mxu0 0.0
        %5412 = vmatprep.subr.mxu0 0.0
        %5413 = vmatpush1.msra.mxu0 0.0
        %5414 = vmatprep.subr.mxu0 0.0
        %5415 = vmatpush1.msra.mxu0 0.0
        %5416 = vmatprep.subr.mxu0 0.0
        %5417 = vmatpush1.msra.mxu0 0.0
        %5418 = vmatprep.subr.mxu0 0.0
        %5419 = vmatpush1.msra.mxu0 0.0
        %5420 = vmatprep.mubr.f32.mxu0 0.0
        %5421 = vmatmul.mubr.f32.gmra.mrb[0].mxu0 %v5348
        %v5422 = vpop.f32.mrb[0].mxu0
        %v5423 = vadd.f32 0.0, %v5422
        %v5424 = vpop.f32.mrb[0].mxu0
        %v5425 = vadd.f32 0.0, %v5424
        %5426 = vdwg.mxu0
        %5427 = vmatprep.subr.mxu0 0.0
        %5428 = vmatpush1.msra.mxu0 %v5354
        %5429 = vmatprep.subr.mxu0 0.0
        %5430 = vmatpush1.msra.mxu0 0.0
        %5431 = vmatprep.subr.mxu0 0.0
        %5432 = vmatpush1.msra.mxu0 0.0
        %5433 = vmatprep.subr.mxu0 0.0
        %5434 = vmatpush1.msra.mxu0 0.0
        %5435 = vmatprep.subr.mxu0 0.0
        %5436 = vmatpush1.msra.mxu0 0.0
        %5437 = vmatprep.subr.mxu0 0.0
        %5438 = vmatpush1.msra.mxu0 0.0
        %5439 = vmatprep.subr.mxu0 0.0
        %5440 = vmatpush1.msra.mxu0 0.0
        %5441 = vmatprep.subr.mxu0 0.0
        %5442 = vmatpush1.msra.mxu0 0.0
        %5443 = vmatprep.subr.mxu0 0.0
        %5444 = vmatpush1.msra.mxu0 0.0
        %5445 = vmatprep.subr.mxu0 0.0
        %5446 = vmatpush1.msra.mxu0 0.0
        %5447 = vmatprep.subr.mxu0 0.0
        %5448 = vmatpush1.msra.mxu0 0.0
        %5449 = vmatprep.subr.mxu0 0.0
        %5450 = vmatpush1.msra.mxu0 0.0
        %5451 = vmatprep.subr.mxu0 0.0
        %5452 = vmatpush1.msra.mxu0 0.0
        %5453 = vmatprep.subr.mxu0 0.0
        %5454 = vmatpush1.msra.mxu0 0.0
        %5455 = vmatprep.subr.mxu0 0.0
        %5456 = vmatpush1.msra.mxu0 0.0
        %5457 = vmatprep.subr.mxu0 0.0
        %5458 = vmatpush1.msra.mxu0 0.0
        %5459 = vmatprep.subr.mxu0 0.0
        %5460 = vmatpush1.msra.mxu0 0.0
        %5461 = vmatprep.subr.mxu0 0.0
        %5462 = vmatpush1.msra.mxu0 0.0
        %5463 = vmatprep.subr.mxu0 0.0
        %5464 = vmatpush1.msra.mxu0 0.0
        %5465 = vmatprep.subr.mxu0 0.0
        %5466 = vmatpush1.msra.mxu0 0.0
        %5467 = vmatprep.subr.mxu0 0.0
        %5468 = vmatpush1.msra.mxu0 0.0
        %5469 = vmatprep.subr.mxu0 0.0
        %5470 = vmatpush1.msra.mxu0 0.0
        %5471 = vmatprep.subr.mxu0 0.0
        %5472 = vmatpush1.msra.mxu0 0.0
        %5473 = vmatprep.subr.mxu0 0.0
        %5474 = vmatpush1.msra.mxu0 0.0
        %5475 = vmatprep.subr.mxu0 0.0
        %5476 = vmatpush1.msra.mxu0 0.0
        %5477 = vmatprep.subr.mxu0 0.0
        %5478 = vmatpush1.msra.mxu0 0.0
        %5479 = vmatprep.subr.mxu0 0.0
        %5480 = vmatpush1.msra.mxu0 0.0
        %5481 = vmatprep.subr.mxu0 0.0
        %5482 = vmatpush1.msra.mxu0 0.0
        %5483 = vmatprep.subr.mxu0 0.0
        %5484 = vmatpush1.msra.mxu0 0.0
        %5485 = vmatprep.subr.mxu0 0.0
        %5486 = vmatpush1.msra.mxu0 0.0
        %5487 = vmatprep.subr.mxu0 0.0
        %5488 = vmatpush1.msra.mxu0 0.0
        %5489 = vmatprep.subr.mxu0 0.0
        %5490 = vmatpush1.msra.mxu0 0.0
        %5491 = vmatprep.mubr.f32.mxu0 0.0
        %5492 = vmatmul.mubr.f32.gmra.mrb[0].mxu0 %v5348
        %v5493 = vpop.f32.mrb[0].mxu0
        %v5494 = vadd.f32 0.0, %v5493
        %v5495 = vpop.f32.mrb[0].mxu0
        %5496 = vdwg.mxu0
        %v5497 = vadd.f32 %v5334, %v5423
        %v5498 = vadd.f32 %v5335, %v5425
        %v5499 = vadd.f32 %v5336, %v5494
        %s5500 = scalar_lea.vmem %s4, 16
        %v5501 = vld [vmem:[%s5500] sm:$0xf]
        %5502 = vrot.lane.b32.xlu0 %v4859, 109
        %v5503 = vpop.permute.xlu0 %5502
        %5504 = vrot.lane.b32.xlu0 %v4855, 109
        %v5505 = vpop.permute.xlu0 %5504
        %5506 = vrot.lane.b32.xlu0 %v4860, 109
        %v5507 = vpop.permute.xlu0 %5506
        %v5508 = vsel %vm1004, %v5503, %v5505
        %v5509 = vsel %vm1004, %v5505, %v5507
        %v5511 = vsel %vm366, %v5501, 0
        %v5513 = vsel %vm370, %v5508, 0
        %v5515 = vsel %vm370, %v5509, 0
        %v5517 = vsel %vm370, %v5507, 0
        %5519 = vmatprep.subr.mxu0 %v5515
        %5520 = vmatpush1.msra.mxu0 %v5513
        %5521 = vmatprep.subr.mxu0 0.0
        %5522 = vmatpush1.msra.mxu0 0.0
        %5523 = vmatprep.subr.mxu0 0.0
        %5524 = vmatpush1.msra.mxu0 0.0
        %5525 = vmatprep.subr.mxu0 0.0
        %5526 = vmatpush1.msra.mxu0 0.0
        %5527 = vmatprep.subr.mxu0 0.0
        %5528 = vmatpush1.msra.mxu0 0.0
        %5529 = vmatprep.subr.mxu0 0.0
        %5530 = vmatpush1.msra.mxu0 0.0
        %5531 = vmatprep.subr.mxu0 0.0
        %5532 = vmatpush1.msra.mxu0 0.0
        %5533 = vmatprep.subr.mxu0 0.0
        %5534 = vmatpush1.msra.mxu0 0.0
        %5535 = vmatprep.subr.mxu0 0.0
        %5536 = vmatpush1.msra.mxu0 0.0
        %5537 = vmatprep.subr.mxu0 0.0
        %5538 = vmatpush1.msra.mxu0 0.0
        %5539 = vmatprep.subr.mxu0 0.0
        %5540 = vmatpush1.msra.mxu0 0.0
        %5541 = vmatprep.subr.mxu0 0.0
        %5542 = vmatpush1.msra.mxu0 0.0
        %5543 = vmatprep.subr.mxu0 0.0
        %5544 = vmatpush1.msra.mxu0 0.0
        %5545 = vmatprep.subr.mxu0 0.0
        %5546 = vmatpush1.msra.mxu0 0.0
        %5547 = vmatprep.subr.mxu0 0.0
        %5548 = vmatpush1.msra.mxu0 0.0
        %5549 = vmatprep.subr.mxu0 0.0
        %5550 = vmatpush1.msra.mxu0 0.0
        %5551 = vmatprep.subr.mxu0 0.0
        %5552 = vmatpush1.msra.mxu0 0.0
        %5553 = vmatprep.subr.mxu0 0.0
        %5554 = vmatpush1.msra.mxu0 0.0
        %5555 = vmatprep.subr.mxu0 0.0
        %5556 = vmatpush1.msra.mxu0 0.0
        %5557 = vmatprep.subr.mxu0 0.0
        %5558 = vmatpush1.msra.mxu0 0.0
        %5559 = vmatprep.subr.mxu0 0.0
        %5560 = vmatpush1.msra.mxu0 0.0
        %5561 = vmatprep.subr.mxu0 0.0
        %5562 = vmatpush1.msra.mxu0 0.0
        %5563 = vmatprep.subr.mxu0 0.0
        %5564 = vmatpush1.msra.mxu0 0.0
        %5565 = vmatprep.subr.mxu0 0.0
        %5566 = vmatpush1.msra.mxu0 0.0
        %5567 = vmatprep.subr.mxu0 0.0
        %5568 = vmatpush1.msra.mxu0 0.0
        %5569 = vmatprep.subr.mxu0 0.0
        %5570 = vmatpush1.msra.mxu0 0.0
        %5571 = vmatprep.subr.mxu0 0.0
        %5572 = vmatpush1.msra.mxu0 0.0
        %5573 = vmatprep.subr.mxu0 0.0
        %5574 = vmatpush1.msra.mxu0 0.0
        %5575 = vmatprep.subr.mxu0 0.0
        %5576 = vmatpush1.msra.mxu0 0.0
        %5577 = vmatprep.subr.mxu0 0.0
        %5578 = vmatpush1.msra.mxu0 0.0
        %5579 = vmatprep.subr.mxu0 0.0
        %5580 = vmatpush1.msra.mxu0 0.0
        %5581 = vmatprep.subr.mxu0 0.0
        %5582 = vmatpush1.msra.mxu0 0.0
        %5583 = vmatprep.mubr.f32.mxu0 0.0
        %5584 = vmatmul.mubr.f32.gmra.mrb[0].mxu0 %v5511
        %v5585 = vpop.f32.mrb[0].mxu0
        %v5586 = vadd.f32 0.0, %v5585
        %v5587 = vpop.f32.mrb[0].mxu0
        %v5588 = vadd.f32 0.0, %v5587
        %5589 = vdwg.mxu0
        %5590 = vmatprep.subr.mxu0 0.0
        %5591 = vmatpush1.msra.mxu0 %v5517
        %5592 = vmatprep.subr.mxu0 0.0
        %5593 = vmatpush1.msra.mxu0 0.0
        %5594 = vmatprep.subr.mxu0 0.0
        %5595 = vmatpush1.msra.mxu0 0.0
        %5596 = vmatprep.subr.mxu0 0.0
        %5597 = vmatpush1.msra.mxu0 0.0
        %5598 = vmatprep.subr.mxu0 0.0
        %5599 = vmatpush1.msra.mxu0 0.0
        %5600 = vmatprep.subr.mxu0 0.0
        %5601 = vmatpush1.msra.mxu0 0.0
        %5602 = vmatprep.subr.mxu0 0.0
        %5603 = vmatpush1.msra.mxu0 0.0
        %5604 = vmatprep.subr.mxu0 0.0
        %5605 = vmatpush1.msra.mxu0 0.0
        %5606 = vmatprep.subr.mxu0 0.0
        %5607 = vmatpush1.msra.mxu0 0.0
        %5608 = vmatprep.subr.mxu0 0.0
        %5609 = vmatpush1.msra.mxu0 0.0
        %5610 = vmatprep.subr.mxu0 0.0
        %5611 = vmatpush1.msra.mxu0 0.0
        %5612 = vmatprep.subr.mxu0 0.0
        %5613 = vmatpush1.msra.mxu0 0.0
        %5614 = vmatprep.subr.mxu0 0.0
        %5615 = vmatpush1.msra.mxu0 0.0
        %5616 = vmatprep.subr.mxu0 0.0
        %5617 = vmatpush1.msra.mxu0 0.0
        %5618 = vmatprep.subr.mxu0 0.0
        %5619 = vmatpush1.msra.mxu0 0.0
        %5620 = vmatprep.subr.mxu0 0.0
        %5621 = vmatpush1.msra.mxu0 0.0
        %5622 = vmatprep.subr.mxu0 0.0
        %5623 = vmatpush1.msra.mxu0 0.0
        %5624 = vmatprep.subr.mxu0 0.0
        %5625 = vmatpush1.msra.mxu0 0.0
        %5626 = vmatprep.subr.mxu0 0.0
        %5627 = vmatpush1.msra.mxu0 0.0
        %5628 = vmatprep.subr.mxu0 0.0
        %5629 = vmatpush1.msra.mxu0 0.0
        %5630 = vmatprep.subr.mxu0 0.0
        %5631 = vmatpush1.msra.mxu0 0.0
        %5632 = vmatprep.subr.mxu0 0.0
        %5633 = vmatpush1.msra.mxu0 0.0
        %5634 = vmatprep.subr.mxu0 0.0
        %5635 = vmatpush1.msra.mxu0 0.0
        %5636 = vmatprep.subr.mxu0 0.0
        %5637 = vmatpush1.msra.mxu0 0.0
        %5638 = vmatprep.subr.mxu0 0.0
        %5639 = vmatpush1.msra.mxu0 0.0
        %5640 = vmatprep.subr.mxu0 0.0
        %5641 = vmatpush1.msra.mxu0 0.0
        %5642 = vmatprep.subr.mxu0 0.0
        %5643 = vmatpush1.msra.mxu0 0.0
        %5644 = vmatprep.subr.mxu0 0.0
        %5645 = vmatpush1.msra.mxu0 0.0
        %5646 = vmatprep.subr.mxu0 0.0
        %5647 = vmatpush1.msra.mxu0 0.0
        %5648 = vmatprep.subr.mxu0 0.0
        %5649 = vmatpush1.msra.mxu0 0.0
        %5650 = vmatprep.subr.mxu0 0.0
        %5651 = vmatpush1.msra.mxu0 0.0
        %5652 = vmatprep.subr.mxu0 0.0
        %5653 = vmatpush1.msra.mxu0 0.0
        %5654 = vmatprep.mubr.f32.mxu0 0.0
        %5655 = vmatmul.mubr.f32.gmra.mrb[0].mxu0 %v5511
        %v5656 = vpop.f32.mrb[0].mxu0
        %v5657 = vadd.f32 0.0, %v5656
        %v5658 = vpop.f32.mrb[0].mxu0
        %5659 = vdwg.mxu0
        %v5660 = vadd.f32 %v5497, %v5586
        %v5661 = vadd.f32 %v5498, %v5588
        %v5662 = vadd.f32 %v5499, %v5657
        %s5663 = scalar_lea.vmem %s4, 20
        %v5664 = vld [vmem:[%s5663] sm:$0xf]
        %5665 = vrot.lane.b32.xlu0 %v4859, 108
        %v5666 = vpop.permute.xlu0 %5665
        %5667 = vrot.lane.b32.xlu0 %v4855, 108
        %v5668 = vpop.permute.xlu0 %5667
        %5669 = vrot.lane.b32.xlu0 %v4860, 108
        %v5670 = vpop.permute.xlu0 %5669
        %v5671 = vsel %vm1168, %v5666, %v5668
        %v5672 = vsel %vm1168, %v5668, %v5670
        %v5674 = vsel %vm366, %v5664, 0
        %v5676 = vsel %vm370, %v5671, 0
        %v5678 = vsel %vm370, %v5672, 0
        %v5680 = vsel %vm370, %v5670, 0
        %5682 = vmatprep.subr.mxu0 %v5678
        %5683 = vmatpush1.msra.mxu0 %v5676
        %5684 = vmatprep.subr.mxu0 0.0
        %5685 = vmatpush1.msra.mxu0 0.0
        %5686 = vmatprep.subr.mxu0 0.0
        %5687 = vmatpush1.msra.mxu0 0.0
        %5688 = vmatprep.subr.mxu0 0.0
        %5689 = vmatpush1.msra.mxu0 0.0
        %5690 = vmatprep.subr.mxu0 0.0
        %5691 = vmatpush1.msra.mxu0 0.0
        %5692 = vmatprep.subr.mxu0 0.0
        %5693 = vmatpush1.msra.mxu0 0.0
        %5694 = vmatprep.subr.mxu0 0.0
        %5695 = vmatpush1.msra.mxu0 0.0
        %5696 = vmatprep.subr.mxu0 0.0
        %5697 = vmatpush1.msra.mxu0 0.0
        %5698 = vmatprep.subr.mxu0 0.0
        %5699 = vmatpush1.msra.mxu0 0.0
        %5700 = vmatprep.subr.mxu0 0.0
        %5701 = vmatpush1.msra.mxu0 0.0
        %5702 = vmatprep.subr.mxu0 0.0
        %5703 = vmatpush1.msra.mxu0 0.0
        %5704 = vmatprep.subr.mxu0 0.0
        %5705 = vmatpush1.msra.mxu0 0.0
        %5706 = vmatprep.subr.mxu0 0.0
        %5707 = vmatpush1.msra.mxu0 0.0
        %5708 = vmatprep.subr.mxu0 0.0
        %5709 = vmatpush1.msra.mxu0 0.0
        %5710 = vmatprep.subr.mxu0 0.0
        %5711 = vmatpush1.msra.mxu0 0.0
        %5712 = vmatprep.subr.mxu0 0.0
        %5713 = vmatpush1.msra.mxu0 0.0
        %5714 = vmatprep.subr.mxu0 0.0
        %5715 = vmatpush1.msra.mxu0 0.0
        %5716 = vmatprep.subr.mxu0 0.0
        %5717 = vmatpush1.msra.mxu0 0.0
        %5718 = vmatprep.subr.mxu0 0.0
        %5719 = vmatpush1.msra.mxu0 0.0
        %5720 = vmatprep.subr.mxu0 0.0
        %5721 = vmatpush1.msra.mxu0 0.0
        %5722 = vmatprep.subr.mxu0 0.0
        %5723 = vmatpush1.msra.mxu0 0.0
        %5724 = vmatprep.subr.mxu0 0.0
        %5725 = vmatpush1.msra.mxu0 0.0
        %5726 = vmatprep.subr.mxu0 0.0
        %5727 = vmatpush1.msra.mxu0 0.0
        %5728 = vmatprep.subr.mxu0 0.0
        %5729 = vmatpush1.msra.mxu0 0.0
        %5730 = vmatprep.subr.mxu0 0.0
        %5731 = vmatpush1.msra.mxu0 0.0
        %5732 = vmatprep.subr.mxu0 0.0
        %5733 = vmatpush1.msra.mxu0 0.0
        %5734 = vmatprep.subr.mxu0 0.0
        %5735 = vmatpush1.msra.mxu0 0.0
        %5736 = vmatprep.subr.mxu0 0.0
        %5737 = vmatpush1.msra.mxu0 0.0
        %5738 = vmatprep.subr.mxu0 0.0
        %5739 = vmatpush1.msra.mxu0 0.0
        %5740 = vmatprep.subr.mxu0 0.0
        %5741 = vmatpush1.msra.mxu0 0.0
        %5742 = vmatprep.subr.mxu0 0.0
        %5743 = vmatpush1.msra.mxu0 0.0
        %5744 = vmatprep.subr.mxu0 0.0
        %5745 = vmatpush1.msra.mxu0 0.0
        %5746 = vmatprep.mubr.f32.mxu0 0.0
        %5747 = vmatmul.mubr.f32.gmra.mrb[0].mxu0 %v5674
        %v5748 = vpop.f32.mrb[0].mxu0
        %v5749 = vadd.f32 0.0, %v5748
        %v5750 = vpop.f32.mrb[0].mxu0
        %v5751 = vadd.f32 0.0, %v5750
        %5752 = vdwg.mxu0
        %5753 = vmatprep.subr.mxu0 0.0
        %5754 = vmatpush1.msra.mxu0 %v5680
        %5755 = vmatprep.subr.mxu0 0.0
        %5756 = vmatpush1.msra.mxu0 0.0
        %5757 = vmatprep.subr.mxu0 0.0
        %5758 = vmatpush1.msra.mxu0 0.0
        %5759 = vmatprep.subr.mxu0 0.0
        %5760 = vmatpush1.msra.mxu0 0.0
        %5761 = vmatprep.subr.mxu0 0.0
        %5762 = vmatpush1.msra.mxu0 0.0
        %5763 = vmatprep.subr.mxu0 0.0
        %5764 = vmatpush1.msra.mxu0 0.0
        %5765 = vmatprep.subr.mxu0 0.0
        %5766 = vmatpush1.msra.mxu0 0.0
        %5767 = vmatprep.subr.mxu0 0.0
        %5768 = vmatpush1.msra.mxu0 0.0
        %5769 = vmatprep.subr.mxu0 0.0
        %5770 = vmatpush1.msra.mxu0 0.0
        %5771 = vmatprep.subr.mxu0 0.0
        %5772 = vmatpush1.msra.mxu0 0.0
        %5773 = vmatprep.subr.mxu0 0.0
        %5774 = vmatpush1.msra.mxu0 0.0
        %5775 = vmatprep.subr.mxu0 0.0
        %5776 = vmatpush1.msra.mxu0 0.0
        %5777 = vmatprep.subr.mxu0 0.0
        %5778 = vmatpush1.msra.mxu0 0.0
        %5779 = vmatprep.subr.mxu0 0.0
        %5780 = vmatpush1.msra.mxu0 0.0
        %5781 = vmatprep.subr.mxu0 0.0
        %5782 = vmatpush1.msra.mxu0 0.0
        %5783 = vmatprep.subr.mxu0 0.0
        %5784 = vmatpush1.msra.mxu0 0.0
        %5785 = vmatprep.subr.mxu0 0.0
        %5786 = vmatpush1.msra.mxu0 0.0
        %5787 = vmatprep.subr.mxu0 0.0
        %5788 = vmatpush1.msra.mxu0 0.0
        %5789 = vmatprep.subr.mxu0 0.0
        %5790 = vmatpush1.msra.mxu0 0.0
        %5791 = vmatprep.subr.mxu0 0.0
        %5792 = vmatpush1.msra.mxu0 0.0
        %5793 = vmatprep.subr.mxu0 0.0
        %5794 = vmatpush1.msra.mxu0 0.0
        %5795 = vmatprep.subr.mxu0 0.0
        %5796 = vmatpush1.msra.mxu0 0.0
        %5797 = vmatprep.subr.mxu0 0.0
        %5798 = vmatpush1.msra.mxu0 0.0
        %5799 = vmatprep.subr.mxu0 0.0
        %5800 = vmatpush1.msra.mxu0 0.0
        %5801 = vmatprep.subr.mxu0 0.0
        %5802 = vmatpush1.msra.mxu0 0.0
        %5803 = vmatprep.subr.mxu0 0.0
        %5804 = vmatpush1.msra.mxu0 0.0
        %5805 = vmatprep.subr.mxu0 0.0
        %5806 = vmatpush1.msra.mxu0 0.0
        %5807 = vmatprep.subr.mxu0 0.0
        %5808 = vmatpush1.msra.mxu0 0.0
        %5809 = vmatprep.subr.mxu0 0.0
        %5810 = vmatpush1.msra.mxu0 0.0
        %5811 = vmatprep.subr.mxu0 0.0
        %5812 = vmatpush1.msra.mxu0 0.0
        %5813 = vmatprep.subr.mxu0 0.0
        %5814 = vmatpush1.msra.mxu0 0.0
        %5815 = vmatprep.subr.mxu0 0.0
        %5816 = vmatpush1.msra.mxu0 0.0
        %5817 = vmatprep.mubr.f32.mxu0 0.0
        %5818 = vmatmul.mubr.f32.gmra.mrb[0].mxu0 %v5674
        %v5819 = vpop.f32.mrb[0].mxu0
        %v5820 = vadd.f32 0.0, %v5819
        %v5821 = vpop.f32.mrb[0].mxu0
        %5822 = vdwg.mxu0
        %v5823 = vadd.f32 %v5660, %v5749
        %v5824 = vadd.f32 %v5661, %v5751
        %v5825 = vadd.f32 %v5662, %v5820
        %s5826 = scalar_lea.vmem %s4, 24
        %v5827 = vld [vmem:[%s5826] sm:$0xf]
        %5828 = vrot.lane.b32.xlu0 %v4859, 92
        %v5829 = vpop.permute.xlu0 %5828
        %5830 = vrot.lane.b32.xlu0 %v4855, 92
        %v5831 = vpop.permute.xlu0 %5830
        %5832 = vrot.lane.b32.xlu0 %v4860, 92
        %v5833 = vpop.permute.xlu0 %5832
        %v5834 = vsel %vm1332, %v5829, %v5831
        %v5835 = vsel %vm1332, %v5831, %v5833
        %v5837 = vsel %vm366, %v5827, 0
        %v5839 = vsel %vm370, %v5834, 0
        %v5841 = vsel %vm370, %v5835, 0
        %v5843 = vsel %vm370, %v5833, 0
        %5845 = vmatprep.subr.mxu0 %v5841
        %5846 = vmatpush1.msra.mxu0 %v5839
        %5847 = vmatprep.subr.mxu0 0.0
        %5848 = vmatpush1.msra.mxu0 0.0
        %5849 = vmatprep.subr.mxu0 0.0
        %5850 = vmatpush1.msra.mxu0 0.0
        %5851 = vmatprep.subr.mxu0 0.0
        %5852 = vmatpush1.msra.mxu0 0.0
        %5853 = vmatprep.subr.mxu0 0.0
        %5854 = vmatpush1.msra.mxu0 0.0
        %5855 = vmatprep.subr.mxu0 0.0
        %5856 = vmatpush1.msra.mxu0 0.0
        %5857 = vmatprep.subr.mxu0 0.0
        %5858 = vmatpush1.msra.mxu0 0.0
        %5859 = vmatprep.subr.mxu0 0.0
        %5860 = vmatpush1.msra.mxu0 0.0
        %5861 = vmatprep.subr.mxu0 0.0
        %5862 = vmatpush1.msra.mxu0 0.0
        %5863 = vmatprep.subr.mxu0 0.0
        %5864 = vmatpush1.msra.mxu0 0.0
        %5865 = vmatprep.subr.mxu0 0.0
        %5866 = vmatpush1.msra.mxu0 0.0
        %5867 = vmatprep.subr.mxu0 0.0
        %5868 = vmatpush1.msra.mxu0 0.0
        %5869 = vmatprep.subr.mxu0 0.0
        %5870 = vmatpush1.msra.mxu0 0.0
        %5871 = vmatprep.subr.mxu0 0.0
        %5872 = vmatpush1.msra.mxu0 0.0
        %5873 = vmatprep.subr.mxu0 0.0
        %5874 = vmatpush1.msra.mxu0 0.0
        %5875 = vmatprep.subr.mxu0 0.0
        %5876 = vmatpush1.msra.mxu0 0.0
        %5877 = vmatprep.subr.mxu0 0.0
        %5878 = vmatpush1.msra.mxu0 0.0
        %5879 = vmatprep.subr.mxu0 0.0
        %5880 = vmatpush1.msra.mxu0 0.0
        %5881 = vmatprep.subr.mxu0 0.0
        %5882 = vmatpush1.msra.mxu0 0.0
        %5883 = vmatprep.subr.mxu0 0.0
        %5884 = vmatpush1.msra.mxu0 0.0
        %5885 = vmatprep.subr.mxu0 0.0
        %5886 = vmatpush1.msra.mxu0 0.0
        %5887 = vmatprep.subr.mxu0 0.0
        %5888 = vmatpush1.msra.mxu0 0.0
        %5889 = vmatprep.subr.mxu0 0.0
        %5890 = vmatpush1.msra.mxu0 0.0
        %5891 = vmatprep.subr.mxu0 0.0
        %5892 = vmatpush1.msra.mxu0 0.0
        %5893 = vmatprep.subr.mxu0 0.0
        %5894 = vmatpush1.msra.mxu0 0.0
        %5895 = vmatprep.subr.mxu0 0.0
        %5896 = vmatpush1.msra.mxu0 0.0
        %5897 = vmatprep.subr.mxu0 0.0
        %5898 = vmatpush1.msra.mxu0 0.0
        %5899 = vmatprep.subr.mxu0 0.0
        %5900 = vmatpush1.msra.mxu0 0.0
        %5901 = vmatprep.subr.mxu0 0.0
        %5902 = vmatpush1.msra.mxu0 0.0
        %5903 = vmatprep.subr.mxu0 0.0
        %5904 = vmatpush1.msra.mxu0 0.0
        %5905 = vmatprep.subr.mxu0 0.0
        %5906 = vmatpush1.msra.mxu0 0.0
        %5907 = vmatprep.subr.mxu0 0.0
        %5908 = vmatpush1.msra.mxu0 0.0
        %5909 = vmatprep.mubr.f32.mxu0 0.0
        %5910 = vmatmul.mubr.f32.gmra.mrb[0].mxu0 %v5837
        %v5911 = vpop.f32.mrb[0].mxu0
        %v5912 = vadd.f32 0.0, %v5911
        %v5913 = vpop.f32.mrb[0].mxu0
        %v5914 = vadd.f32 0.0, %v5913
        %5915 = vdwg.mxu0
        %5916 = vmatprep.subr.mxu0 0.0
        %5917 = vmatpush1.msra.mxu0 %v5843
        %5918 = vmatprep.subr.mxu0 0.0
        %5919 = vmatpush1.msra.mxu0 0.0
        %5920 = vmatprep.subr.mxu0 0.0
        %5921 = vmatpush1.msra.mxu0 0.0
        %5922 = vmatprep.subr.mxu0 0.0
        %5923 = vmatpush1.msra.mxu0 0.0
        %5924 = vmatprep.subr.mxu0 0.0
        %5925 = vmatpush1.msra.mxu0 0.0
        %5926 = vmatprep.subr.mxu0 0.0
        %5927 = vmatpush1.msra.mxu0 0.0
        %5928 = vmatprep.subr.mxu0 0.0
        %5929 = vmatpush1.msra.mxu0 0.0
        %5930 = vmatprep.subr.mxu0 0.0
        %5931 = vmatpush1.msra.mxu0 0.0
        %5932 = vmatprep.subr.mxu0 0.0
        %5933 = vmatpush1.msra.mxu0 0.0
        %5934 = vmatprep.subr.mxu0 0.0
        %5935 = vmatpush1.msra.mxu0 0.0
        %5936 = vmatprep.subr.mxu0 0.0
        %5937 = vmatpush1.msra.mxu0 0.0
        %5938 = vmatprep.subr.mxu0 0.0
        %5939 = vmatpush1.msra.mxu0 0.0
        %5940 = vmatprep.subr.mxu0 0.0
        %5941 = vmatpush1.msra.mxu0 0.0
        %5942 = vmatprep.subr.mxu0 0.0
        %5943 = vmatpush1.msra.mxu0 0.0
        %5944 = vmatprep.subr.mxu0 0.0
        %5945 = vmatpush1.msra.mxu0 0.0
        %5946 = vmatprep.subr.mxu0 0.0
        %5947 = vmatpush1.msra.mxu0 0.0
        %5948 = vmatprep.subr.mxu0 0.0
        %5949 = vmatpush1.msra.mxu0 0.0
        %5950 = vmatprep.subr.mxu0 0.0
        %5951 = vmatpush1.msra.mxu0 0.0
        %5952 = vmatprep.subr.mxu0 0.0
        %5953 = vmatpush1.msra.mxu0 0.0
        %5954 = vmatprep.subr.mxu0 0.0
        %5955 = vmatpush1.msra.mxu0 0.0
        %5956 = vmatprep.subr.mxu0 0.0
        %5957 = vmatpush1.msra.mxu0 0.0
        %5958 = vmatprep.subr.mxu0 0.0
        %5959 = vmatpush1.msra.mxu0 0.0
        %5960 = vmatprep.subr.mxu0 0.0
        %5961 = vmatpush1.msra.mxu0 0.0
        %5962 = vmatprep.subr.mxu0 0.0
        %5963 = vmatpush1.msra.mxu0 0.0
        %5964 = vmatprep.subr.mxu0 0.0
        %5965 = vmatpush1.msra.mxu0 0.0
        %5966 = vmatprep.subr.mxu0 0.0
        %5967 = vmatpush1.msra.mxu0 0.0
        %5968 = vmatprep.subr.mxu0 0.0
        %5969 = vmatpush1.msra.mxu0 0.0
        %5970 = vmatprep.subr.mxu0 0.0
        %5971 = vmatpush1.msra.mxu0 0.0
        %5972 = vmatprep.subr.mxu0 0.0
        %5973 = vmatpush1.msra.mxu0 0.0
        %5974 = vmatprep.subr.mxu0 0.0
        %5975 = vmatpush1.msra.mxu0 0.0
        %5976 = vmatprep.subr.mxu0 0.0
        %5977 = vmatpush1.msra.mxu0 0.0
        %5978 = vmatprep.subr.mxu0 0.0
        %5979 = vmatpush1.msra.mxu0 0.0
        %5980 = vmatprep.mubr.f32.mxu0 0.0
        %5981 = vmatmul.mubr.f32.gmra.mrb[0].mxu0 %v5837
        %v5982 = vpop.f32.mrb[0].mxu0
        %v5983 = vadd.f32 0.0, %v5982
        %v5984 = vpop.f32.mrb[0].mxu0
        %5985 = vdwg.mxu0
        %v5986 = vadd.f32 %v5823, %v5912
        %v5987 = vadd.f32 %v5824, %v5914
        %v5988 = vadd.f32 %v5825, %v5983
        %s5989 = scalar_lea.vmem %s4, 28
        %v5990 = vld [vmem:[%s5989] sm:$0xf]
        %5991 = vrot.lane.b32.xlu0 %v4859, 91
        %v5992 = vpop.permute.xlu0 %5991
        %5993 = vrot.lane.b32.xlu0 %v4855, 91
        %v5994 = vpop.permute.xlu0 %5993
        %5995 = vrot.lane.b32.xlu0 %v4860, 91
        %v5996 = vpop.permute.xlu0 %5995
        %v5997 = vsel %vm1496, %v5992, %v5994
        %v5998 = vsel %vm1496, %v5994, %v5996
        %v6000 = vsel %vm366, %v5990, 0
        %v6002 = vsel %vm370, %v5997, 0
        %v6004 = vsel %vm370, %v5998, 0
        %v6006 = vsel %vm370, %v5996, 0
        %6008 = vmatprep.subr.mxu0 %v6004
        %6009 = vmatpush1.msra.mxu0 %v6002
        %6010 = vmatprep.subr.mxu0 0.0
        %6011 = vmatpush1.msra.mxu0 0.0
        %6012 = vmatprep.subr.mxu0 0.0
        %6013 = vmatpush1.msra.mxu0 0.0
        %6014 = vmatprep.subr.mxu0 0.0
        %6015 = vmatpush1.msra.mxu0 0.0
        %6016 = vmatprep.subr.mxu0 0.0
        %6017 = vmatpush1.msra.mxu0 0.0
        %6018 = vmatprep.subr.mxu0 0.0
        %6019 = vmatpush1.msra.mxu0 0.0
        %6020 = vmatprep.subr.mxu0 0.0
        %6021 = vmatpush1.msra.mxu0 0.0
        %6022 = vmatprep.subr.mxu0 0.0
        %6023 = vmatpush1.msra.mxu0 0.0
        %6024 = vmatprep.subr.mxu0 0.0
        %6025 = vmatpush1.msra.mxu0 0.0
        %6026 = vmatprep.subr.mxu0 0.0
        %6027 = vmatpush1.msra.mxu0 0.0
        %6028 = vmatprep.subr.mxu0 0.0
        %6029 = vmatpush1.msra.mxu0 0.0
        %6030 = vmatprep.subr.mxu0 0.0
        %6031 = vmatpush1.msra.mxu0 0.0
        %6032 = vmatprep.subr.mxu0 0.0
        %6033 = vmatpush1.msra.mxu0 0.0
        %6034 = vmatprep.subr.mxu0 0.0
        %6035 = vmatpush1.msra.mxu0 0.0
        %6036 = vmatprep.subr.mxu0 0.0
        %6037 = vmatpush1.msra.mxu0 0.0
        %6038 = vmatprep.subr.mxu0 0.0
        %6039 = vmatpush1.msra.mxu0 0.0
        %6040 = vmatprep.subr.mxu0 0.0
        %6041 = vmatpush1.msra.mxu0 0.0
        %6042 = vmatprep.subr.mxu0 0.0
        %6043 = vmatpush1.msra.mxu0 0.0
        %6044 = vmatprep.subr.mxu0 0.0
        %6045 = vmatpush1.msra.mxu0 0.0
        %6046 = vmatprep.subr.mxu0 0.0
        %6047 = vmatpush1.msra.mxu0 0.0
        %6048 = vmatprep.subr.mxu0 0.0
        %6049 = vmatpush1.msra.mxu0 0.0
        %6050 = vmatprep.subr.mxu0 0.0
        %6051 = vmatpush1.msra.mxu0 0.0
        %6052 = vmatprep.subr.mxu0 0.0
        %6053 = vmatpush1.msra.mxu0 0.0
        %6054 = vmatprep.subr.mxu0 0.0
        %6055 = vmatpush1.msra.mxu0 0.0
        %6056 = vmatprep.subr.mxu0 0.0
        %6057 = vmatpush1.msra.mxu0 0.0
        %6058 = vmatprep.subr.mxu0 0.0
        %6059 = vmatpush1.msra.mxu0 0.0
        %6060 = vmatprep.subr.mxu0 0.0
        %6061 = vmatpush1.msra.mxu0 0.0
        %6062 = vmatprep.subr.mxu0 0.0
        %6063 = vmatpush1.msra.mxu0 0.0
        %6064 = vmatprep.subr.mxu0 0.0
        %6065 = vmatpush1.msra.mxu0 0.0
        %6066 = vmatprep.subr.mxu0 0.0
        %6067 = vmatpush1.msra.mxu0 0.0
        %6068 = vmatprep.subr.mxu0 0.0
        %6069 = vmatpush1.msra.mxu0 0.0
        %6070 = vmatprep.subr.mxu0 0.0
        %6071 = vmatpush1.msra.mxu0 0.0
        %6072 = vmatprep.mubr.f32.mxu0 0.0
        %6073 = vmatmul.mubr.f32.gmra.mrb[0].mxu0 %v6000
        %v6074 = vpop.f32.mrb[0].mxu0
        %v6075 = vadd.f32 0.0, %v6074
        %v6076 = vpop.f32.mrb[0].mxu0
        %v6077 = vadd.f32 0.0, %v6076
        %6078 = vdwg.mxu0
        %6079 = vmatprep.subr.mxu0 0.0
        %6080 = vmatpush1.msra.mxu0 %v6006
        %6081 = vmatprep.subr.mxu0 0.0
        %6082 = vmatpush1.msra.mxu0 0.0
        %6083 = vmatprep.subr.mxu0 0.0
        %6084 = vmatpush1.msra.mxu0 0.0
        %6085 = vmatprep.subr.mxu0 0.0
        %6086 = vmatpush1.msra.mxu0 0.0
        %6087 = vmatprep.subr.mxu0 0.0
        %6088 = vmatpush1.msra.mxu0 0.0
        %6089 = vmatprep.subr.mxu0 0.0
        %6090 = vmatpush1.msra.mxu0 0.0
        %6091 = vmatprep.subr.mxu0 0.0
        %6092 = vmatpush1.msra.mxu0 0.0
        %6093 = vmatprep.subr.mxu0 0.0
        %6094 = vmatpush1.msra.mxu0 0.0
        %6095 = vmatprep.subr.mxu0 0.0
        %6096 = vmatpush1.msra.mxu0 0.0
        %6097 = vmatprep.subr.mxu0 0.0
        %6098 = vmatpush1.msra.mxu0 0.0
        %6099 = vmatprep.subr.mxu0 0.0
        %6100 = vmatpush1.msra.mxu0 0.0
        %6101 = vmatprep.subr.mxu0 0.0
        %6102 = vmatpush1.msra.mxu0 0.0
        %6103 = vmatprep.subr.mxu0 0.0
        %6104 = vmatpush1.msra.mxu0 0.0
        %6105 = vmatprep.subr.mxu0 0.0
        %6106 = vmatpush1.msra.mxu0 0.0
        %6107 = vmatprep.subr.mxu0 0.0
        %6108 = vmatpush1.msra.mxu0 0.0
        %6109 = vmatprep.subr.mxu0 0.0
        %6110 = vmatpush1.msra.mxu0 0.0
        %6111 = vmatprep.subr.mxu0 0.0
        %6112 = vmatpush1.msra.mxu0 0.0
        %6113 = vmatprep.subr.mxu0 0.0
        %6114 = vmatpush1.msra.mxu0 0.0
        %6115 = vmatprep.subr.mxu0 0.0
        %6116 = vmatpush1.msra.mxu0 0.0
        %6117 = vmatprep.subr.mxu0 0.0
        %6118 = vmatpush1.msra.mxu0 0.0
        %6119 = vmatprep.subr.mxu0 0.0
        %6120 = vmatpush1.msra.mxu0 0.0
        %6121 = vmatprep.subr.mxu0 0.0
        %6122 = vmatpush1.msra.mxu0 0.0
        %6123 = vmatprep.subr.mxu0 0.0
        %6124 = vmatpush1.msra.mxu0 0.0
        %6125 = vmatprep.subr.mxu0 0.0
        %6126 = vmatpush1.msra.mxu0 0.0
        %6127 = vmatprep.subr.mxu0 0.0
        %6128 = vmatpush1.msra.mxu0 0.0
        %6129 = vmatprep.subr.mxu0 0.0
        %6130 = vmatpush1.msra.mxu0 0.0
        %6131 = vmatprep.subr.mxu0 0.0
        %6132 = vmatpush1.msra.mxu0 0.0
        %6133 = vmatprep.subr.mxu0 0.0
        %6134 = vmatpush1.msra.mxu0 0.0
        %6135 = vmatprep.subr.mxu0 0.0
        %6136 = vmatpush1.msra.mxu0 0.0
        %6137 = vmatprep.subr.mxu0 0.0
        %6138 = vmatpush1.msra.mxu0 0.0
        %6139 = vmatprep.subr.mxu0 0.0
        %6140 = vmatpush1.msra.mxu0 0.0
        %6141 = vmatprep.subr.mxu0 0.0
        %6142 = vmatpush1.msra.mxu0 0.0
        %6143 = vmatprep.mubr.f32.mxu0 0.0
        %6144 = vmatmul.mubr.f32.gmra.mrb[0].mxu0 %v6000
        %v6145 = vpop.f32.mrb[0].mxu0
        %v6146 = vadd.f32 0.0, %v6145
        %v6147 = vpop.f32.mrb[0].mxu0
        %6148 = vdwg.mxu0
        %v6149 = vadd.f32 %v5986, %v6075
        %v6150 = vadd.f32 %v5987, %v6077
        %v6151 = vadd.f32 %v5988, %v6146
        %s6152 = scalar_lea.vmem %s4, 32
        %v6153 = vld [vmem:[%s6152] sm:$0xf]
        %6154 = vrot.lane.b32.xlu0 %v4859, 90
        %v6155 = vpop.permute.xlu0 %6154
        %6156 = vrot.lane.b32.xlu0 %v4855, 90
        %v6157 = vpop.permute.xlu0 %6156
        %6158 = vrot.lane.b32.xlu0 %v4860, 90
        %v6159 = vpop.permute.xlu0 %6158
        %v6160 = vsel %vm1660, %v6155, %v6157
        %v6161 = vsel %vm1660, %v6157, %v6159
        %v6163 = vsel %vm366, %v6153, 0
        %v6165 = vsel %vm370, %v6160, 0
        %v6167 = vsel %vm370, %v6161, 0
        %v6169 = vsel %vm370, %v6159, 0
        %6171 = vmatprep.subr.mxu0 %v6167
        %6172 = vmatpush1.msra.mxu0 %v6165
        %6173 = vmatprep.subr.mxu0 0.0
        %6174 = vmatpush1.msra.mxu0 0.0
        %6175 = vmatprep.subr.mxu0 0.0
        %6176 = vmatpush1.msra.mxu0 0.0
        %6177 = vmatprep.subr.mxu0 0.0
        %6178 = vmatpush1.msra.mxu0 0.0
        %6179 = vmatprep.subr.mxu0 0.0
        %6180 = vmatpush1.msra.mxu0 0.0
        %6181 = vmatprep.subr.mxu0 0.0
        %6182 = vmatpush1.msra.mxu0 0.0
        %6183 = vmatprep.subr.mxu0 0.0
        %6184 = vmatpush1.msra.mxu0 0.0
        %6185 = vmatprep.subr.mxu0 0.0
        %6186 = vmatpush1.msra.mxu0 0.0
        %6187 = vmatprep.subr.mxu0 0.0
        %6188 = vmatpush1.msra.mxu0 0.0
        %6189 = vmatprep.subr.mxu0 0.0
        %6190 = vmatpush1.msra.mxu0 0.0
        %6191 = vmatprep.subr.mxu0 0.0
        %6192 = vmatpush1.msra.mxu0 0.0
        %6193 = vmatprep.subr.mxu0 0.0
        %6194 = vmatpush1.msra.mxu0 0.0
        %6195 = vmatprep.subr.mxu0 0.0
        %6196 = vmatpush1.msra.mxu0 0.0
        %6197 = vmatprep.subr.mxu0 0.0
        %6198 = vmatpush1.msra.mxu0 0.0
        %6199 = vmatprep.subr.mxu0 0.0
        %6200 = vmatpush1.msra.mxu0 0.0
        %6201 = vmatprep.subr.mxu0 0.0
        %6202 = vmatpush1.msra.mxu0 0.0
        %6203 = vmatprep.subr.mxu0 0.0
        %6204 = vmatpush1.msra.mxu0 0.0
        %6205 = vmatprep.subr.mxu0 0.0
        %6206 = vmatpush1.msra.mxu0 0.0
        %6207 = vmatprep.subr.mxu0 0.0
        %6208 = vmatpush1.msra.mxu0 0.0
        %6209 = vmatprep.subr.mxu0 0.0
        %6210 = vmatpush1.msra.mxu0 0.0
        %6211 = vmatprep.subr.mxu0 0.0
        %6212 = vmatpush1.msra.mxu0 0.0
        %6213 = vmatprep.subr.mxu0 0.0
        %6214 = vmatpush1.msra.mxu0 0.0
        %6215 = vmatprep.subr.mxu0 0.0
        %6216 = vmatpush1.msra.mxu0 0.0
        %6217 = vmatprep.subr.mxu0 0.0
        %6218 = vmatpush1.msra.mxu0 0.0
        %6219 = vmatprep.subr.mxu0 0.0
        %6220 = vmatpush1.msra.mxu0 0.0
        %6221 = vmatprep.subr.mxu0 0.0
        %6222 = vmatpush1.msra.mxu0 0.0
        %6223 = vmatprep.subr.mxu0 0.0
        %6224 = vmatpush1.msra.mxu0 0.0
        %6225 = vmatprep.subr.mxu0 0.0
        %6226 = vmatpush1.msra.mxu0 0.0
        %6227 = vmatprep.subr.mxu0 0.0
        %6228 = vmatpush1.msra.mxu0 0.0
        %6229 = vmatprep.subr.mxu0 0.0
        %6230 = vmatpush1.msra.mxu0 0.0
        %6231 = vmatprep.subr.mxu0 0.0
        %6232 = vmatpush1.msra.mxu0 0.0
        %6233 = vmatprep.subr.mxu0 0.0
        %6234 = vmatpush1.msra.mxu0 0.0
        %6235 = vmatprep.mubr.f32.mxu0 0.0
        %6236 = vmatmul.mubr.f32.gmra.mrb[0].mxu0 %v6163
        %v6237 = vpop.f32.mrb[0].mxu0
        %v6238 = vadd.f32 0.0, %v6237
        %v6239 = vpop.f32.mrb[0].mxu0
        %v6240 = vadd.f32 0.0, %v6239
        %6241 = vdwg.mxu0
        %6242 = vmatprep.subr.mxu0 0.0
        %6243 = vmatpush1.msra.mxu0 %v6169
        %6244 = vmatprep.subr.mxu0 0.0
        %6245 = vmatpush1.msra.mxu0 0.0
        %6246 = vmatprep.subr.mxu0 0.0
        %6247 = vmatpush1.msra.mxu0 0.0
        %6248 = vmatprep.subr.mxu0 0.0
        %6249 = vmatpush1.msra.mxu0 0.0
        %6250 = vmatprep.subr.mxu0 0.0
        %6251 = vmatpush1.msra.mxu0 0.0
        %6252 = vmatprep.subr.mxu0 0.0
        %6253 = vmatpush1.msra.mxu0 0.0
        %6254 = vmatprep.subr.mxu0 0.0
        %6255 = vmatpush1.msra.mxu0 0.0
        %6256 = vmatprep.subr.mxu0 0.0
        %6257 = vmatpush1.msra.mxu0 0.0
        %6258 = vmatprep.subr.mxu0 0.0
        %6259 = vmatpush1.msra.mxu0 0.0
        %6260 = vmatprep.subr.mxu0 0.0
        %6261 = vmatpush1.msra.mxu0 0.0
        %6262 = vmatprep.subr.mxu0 0.0
        %6263 = vmatpush1.msra.mxu0 0.0
        %6264 = vmatprep.subr.mxu0 0.0
        %6265 = vmatpush1.msra.mxu0 0.0
        %6266 = vmatprep.subr.mxu0 0.0
        %6267 = vmatpush1.msra.mxu0 0.0
        %6268 = vmatprep.subr.mxu0 0.0
        %6269 = vmatpush1.msra.mxu0 0.0
        %6270 = vmatprep.subr.mxu0 0.0
        %6271 = vmatpush1.msra.mxu0 0.0
        %6272 = vmatprep.subr.mxu0 0.0
        %6273 = vmatpush1.msra.mxu0 0.0
        %6274 = vmatprep.subr.mxu0 0.0
        %6275 = vmatpush1.msra.mxu0 0.0
        %6276 = vmatprep.subr.mxu0 0.0
        %6277 = vmatpush1.msra.mxu0 0.0
        %6278 = vmatprep.subr.mxu0 0.0
        %6279 = vmatpush1.msra.mxu0 0.0
        %6280 = vmatprep.subr.mxu0 0.0
        %6281 = vmatpush1.msra.mxu0 0.0
        %6282 = vmatprep.subr.mxu0 0.0
        %6283 = vmatpush1.msra.mxu0 0.0
        %6284 = vmatprep.subr.mxu0 0.0
        %6285 = vmatpush1.msra.mxu0 0.0
        %6286 = vmatprep.subr.mxu0 0.0
        %6287 = vmatpush1.msra.mxu0 0.0
        %6288 = vmatprep.subr.mxu0 0.0
        %6289 = vmatpush1.msra.mxu0 0.0
        %6290 = vmatprep.subr.mxu0 0.0
        %6291 = vmatpush1.msra.mxu0 0.0
        %6292 = vmatprep.subr.mxu0 0.0
        %6293 = vmatpush1.msra.mxu0 0.0
        %6294 = vmatprep.subr.mxu0 0.0
        %6295 = vmatpush1.msra.mxu0 0.0
        %6296 = vmatprep.subr.mxu0 0.0
        %6297 = vmatpush1.msra.mxu0 0.0
        %6298 = vmatprep.subr.mxu0 0.0
        %6299 = vmatpush1.msra.mxu0 0.0
        %6300 = vmatprep.subr.mxu0 0.0
        %6301 = vmatpush1.msra.mxu0 0.0
        %6302 = vmatprep.subr.mxu0 0.0
        %6303 = vmatpush1.msra.mxu0 0.0
        %6304 = vmatprep.subr.mxu0 0.0
        %6305 = vmatpush1.msra.mxu0 0.0
        %6306 = vmatprep.mubr.f32.mxu0 0.0
        %6307 = vmatmul.mubr.f32.gmra.mrb[0].mxu0 %v6163
        %v6308 = vpop.f32.mrb[0].mxu0
        %v6309 = vadd.f32 0.0, %v6308
        %v6310 = vpop.f32.mrb[0].mxu0
        %6311 = vdwg.mxu0
        %v6312 = vadd.f32 %v6149, %v6238
        %v6313 = vadd.f32 %v6150, %v6240
        %v6314 = vadd.f32 %v6151, %v6309
        %v6315 = vmul.f32 %v3308, 0.25
        %v6316 = vmul.f32 %v3309, 0.25
        %v6317 = vmul.f32 %v3310, 0.25
        %v6318 = vmul.f32 %v6312, 0.75
        %v6319 = vmul.f32 %v6313, 0.75
        %v6320 = vmul.f32 %v6314, 0.75
        %v6321 = vadd.f32 %v6315, %v6318
        %v6322 = vadd.f32 %v6316, %v6319
        %v6323 = vadd.f32 %v6317, %v6320
        %v6325 = vcombine.high %v278, %v278
        %v6327 = vadd.f32 %v6321, %v278
        %v6328 = vadd.f32 %v6322, %v6325
        %v6329 = vadd.f32 %v6323, %v279
        %v6330 = vmax.f32 %v6327, 0.0
        %v6331 = vmax.f32 %v6328, 0.0
        %v6332 = vmax.f32 %v6329, 0.0
        %v6335 = vunpack.c.l.s4 1966171168
        %v6336 = vunpack.c.0.s8 %v6335
        %v6337 = vlaneseq
        %v6338 = vshrl.u32 %v6337, 7
        %v6339 = vsub.s32 %v6336, %v6338
        %v6340 = vrot.slane %v6330, %v6339
        %v6341 = vcombine.high %v6340, %v6340
        %v6343 = vunpack.c.l.s4 1966171168
        %v6344 = vunpack.c.0.s8 %v6343
        %v6345 = vlaneseq
        %v6346 = vshrl.u32 %v6345, 7
        %v6347 = vsub.s32 %v6344, %v6346
        %v6348 = vrot.slane %v6340, %v6347
        %v6350 = vunpack.c.l.s4 1966171168
        %v6351 = vunpack.c.0.s8 %v6350
        %v6352 = vlaneseq
        %v6353 = vshrl.u32 %v6352, 7
        %v6354 = vsub.s32 %v6351, %v6353
        %v6355 = vrot.slane %v6341, %v6354
        %v6356 = vcombine.high %v6348, %v6348
        %v6357 = vcombine.high %v6355, %v6355
        %v6358 = vlaneseq
        %v6359 = vshrl.u32 %v6358, 7
        %v6360 = vsub.s32 0, %v6359
        %v6361 = vrot.slane %v6348, %v6360
        %v6362 = vlaneseq
        %v6363 = vshrl.u32 %v6362, 7
        %v6364 = vsub.s32 0, %v6363
        %v6365 = vrot.slane %v6355, %v6364
        %v6366 = vlaneseq
        %v6367 = vshrl.u32 %v6366, 7
        %v6368 = vsub.s32 0, %v6367
        %v6369 = vrot.slane %v6356, %v6368
        %v6370 = vlaneseq
        %v6371 = vshrl.u32 %v6370, 7
        %v6372 = vsub.s32 0, %v6371
        %v6373 = vrot.slane %v6357, %v6372
        %6374 = vrot.lane.b32.xlu0 %v6361, 109
        %v6375 = vpop.permute.xlu0 %6374
        %6376 = vrot.lane.b32.xlu0 %v6365, 109
        %v6377 = vpop.permute.xlu0 %6376
        %6378 = vrot.lane.b32.xlu0 %v6369, 109
        %v6379 = vpop.permute.xlu0 %6378
        %6380 = vrot.lane.b32.xlu0 %v6373, 109
        %v6381 = vpop.permute.xlu0 %6380
        %vm6386 = vcmask 122880
        %6387 = vst.msk [vmem:[%s271] sm:$0x1] %vm6386, %v6375
        %6388 = vst.msk [vmem:[%s271 + $0x10] sm:$0x1] %vm6386, %v6377
        %6389 = vst.msk [vmem:[%s271 + $0x20] sm:$0x1] %vm6386, %v6379
        %6390 = vst.msk [vmem:[%s271 + $0x30] sm:$0x1] %vm6386, %v6381
        %6391 = vrot.lane.b32.xlu0 %v6361, 91
        %v6392 = vpop.permute.xlu0 %6391
        %6393 = vrot.lane.b32.xlu0 %v6365, 91
        %v6394 = vpop.permute.xlu0 %6393
        %6395 = vrot.lane.b32.xlu0 %v6369, 91
        %v6396 = vpop.permute.xlu0 %6395
        %6397 = vrot.lane.b32.xlu0 %v6373, 91
        %v6398 = vpop.permute.xlu0 %6397
        %6403 = vst.msk [vmem:[%s271 + $0x1] sm:$0x1] %vm6386, %v6392
        %6404 = vst.msk [vmem:[%s271 + $0x11] sm:$0x1] %vm6386, %v6394
        %6405 = vst.msk [vmem:[%s271 + $0x21] sm:$0x1] %vm6386, %v6396
        %6406 = vst.msk [vmem:[%s271 + $0x31] sm:$0x1] %vm6386, %v6398
        %6407 = vrot.lane.b32.xlu0 %v6361, 73
        %v6408 = vpop.permute.xlu0 %6407
        %6409 = vrot.lane.b32.xlu0 %v6365, 73
        %v6410 = vpop.permute.xlu0 %6409
        %6411 = vrot.lane.b32.xlu0 %v6369, 73
        %v6412 = vpop.permute.xlu0 %6411
        %6413 = vrot.lane.b32.xlu0 %v6373, 73
        %v6414 = vpop.permute.xlu0 %6413
        %6419 = vst.msk [vmem:[%s271 + $0x2] sm:$0x1] %vm6386, %v6408
        %6420 = vst.msk [vmem:[%s271 + $0x12] sm:$0x1] %vm6386, %v6410
        %6421 = vst.msk [vmem:[%s271 + $0x22] sm:$0x1] %vm6386, %v6412
        %6422 = vst.msk [vmem:[%s271 + $0x32] sm:$0x1] %vm6386, %v6414
        %6423 = vrot.lane.b32.xlu0 %v6361, 55
        %v6424 = vpop.permute.xlu0 %6423
        %6425 = vrot.lane.b32.xlu0 %v6365, 55
        %v6426 = vpop.permute.xlu0 %6425
        %6427 = vrot.lane.b32.xlu0 %v6369, 55
        %v6428 = vpop.permute.xlu0 %6427
        %6429 = vrot.lane.b32.xlu0 %v6373, 55
        %v6430 = vpop.permute.xlu0 %6429
        %6435 = vst.msk [vmem:[%s271 + $0x3] sm:$0x1] %vm6386, %v6424
        %6436 = vst.msk [vmem:[%s271 + $0x13] sm:$0x1] %vm6386, %v6426
        %6437 = vst.msk [vmem:[%s271 + $0x23] sm:$0x1] %vm6386, %v6428
        %6438 = vst.msk [vmem:[%s271 + $0x33] sm:$0x1] %vm6386, %v6430
        %6439 = vrot.lane.b32.xlu0 %v6361, 37
        %v6440 = vpop.permute.xlu0 %6439
        %6441 = vrot.lane.b32.xlu0 %v6365, 37
        %v6442 = vpop.permute.xlu0 %6441
        %6443 = vrot.lane.b32.xlu0 %v6369, 37
        %v6444 = vpop.permute.xlu0 %6443
        %6445 = vrot.lane.b32.xlu0 %v6373, 37
        %v6446 = vpop.permute.xlu0 %6445
        %6451 = vst.msk [vmem:[%s271 + $0x4] sm:$0x1] %vm6386, %v6440
        %6452 = vst.msk [vmem:[%s271 + $0x14] sm:$0x1] %vm6386, %v6442
        %6453 = vst.msk [vmem:[%s271 + $0x24] sm:$0x1] %vm6386, %v6444
        %6454 = vst.msk [vmem:[%s271 + $0x34] sm:$0x1] %vm6386, %v6446
        %6455 = vrot.lane.b32.xlu0 %v6361, 19
        %v6456 = vpop.permute.xlu0 %6455
        %6457 = vrot.lane.b32.xlu0 %v6365, 19
        %v6458 = vpop.permute.xlu0 %6457
        %6459 = vrot.lane.b32.xlu0 %v6369, 19
        %v6460 = vpop.permute.xlu0 %6459
        %6461 = vrot.lane.b32.xlu0 %v6373, 19
        %v6462 = vpop.permute.xlu0 %6461
        %6467 = vst.msk [vmem:[%s271 + $0x5] sm:$0x1] %vm6386, %v6456
        %6468 = vst.msk [vmem:[%s271 + $0x15] sm:$0x1] %vm6386, %v6458
        %6469 = vst.msk [vmem:[%s271 + $0x25] sm:$0x1] %vm6386, %v6460
        %6470 = vst.msk [vmem:[%s271 + $0x35] sm:$0x1] %vm6386, %v6462
        %v6472 = vcombine.low %v6330, %v6331
        %v6474 = vunpack.c.l.s4 1966171168
        %v6475 = vunpack.c.0.s8 %v6474
        %v6476 = vlaneseq
        %v6477 = vshrl.u32 %v6476, 7
        %v6478 = vsub.s32 %v6475, %v6477
        %v6479 = vrot.slane %v6472, %v6478
        %v6480 = vcombine.high %v6479, %v6479
        %v6482 = vunpack.c.l.s4 1966171168
        %v6483 = vunpack.c.0.s8 %v6482
        %v6484 = vlaneseq
        %v6485 = vshrl.u32 %v6484, 7
        %v6486 = vsub.s32 %v6483, %v6485
        %v6487 = vrot.slane %v6479, %v6486
        %v6489 = vunpack.c.l.s4 1966171168
        %v6490 = vunpack.c.0.s8 %v6489
        %v6491 = vlaneseq
        %v6492 = vshrl.u32 %v6491, 7
        %v6493 = vsub.s32 %v6490, %v6492
        %v6494 = vrot.slane %v6480, %v6493
        %v6495 = vcombine.high %v6487, %v6487
        %v6496 = vcombine.high %v6494, %v6494
        %v6497 = vlaneseq
        %v6498 = vshrl.u32 %v6497, 7
        %v6499 = vsub.s32 0, %v6498
        %v6500 = vrot.slane %v6487, %v6499
        %v6501 = vlaneseq
        %v6502 = vshrl.u32 %v6501, 7
        %v6503 = vsub.s32 1, %v6502
        %v6504 = vrot.slane %v6487, %v6503
        %v6505 = vlaneseq
        %v6506 = vshrl.u32 %v6505, 7
        %v6507 = vsub.s32 0, %v6506
        %v6508 = vrot.slane %v6494, %v6507
        %v6509 = vlaneseq
        %v6510 = vshrl.u32 %v6509, 7
        %v6511 = vsub.s32 1, %v6510
        %v6512 = vrot.slane %v6494, %v6511
        %v6513 = vlaneseq
        %v6514 = vshrl.u32 %v6513, 7
        %v6515 = vsub.s32 0, %v6514
        %v6516 = vrot.slane %v6495, %v6515
        %v6517 = vlaneseq
        %v6518 = vshrl.u32 %v6517, 7
        %v6519 = vsub.s32 1, %v6518
        %v6520 = vrot.slane %v6495, %v6519
        %v6521 = vlaneseq
        %v6522 = vshrl.u32 %v6521, 7
        %v6523 = vsub.s32 0, %v6522
        %v6524 = vrot.slane %v6496, %v6523
        %v6525 = vlaneseq
        %v6526 = vshrl.u32 %v6525, 7
        %v6527 = vsub.s32 1, %v6526
        %v6528 = vrot.slane %v6496, %v6527
        %6529 = vrot.lane.b32.xlu0 %v6500, 1
        %v6530 = vpop.permute.xlu0 %6529
        %6531 = vrot.lane.b32.xlu0 %v6504, 1
        %v6532 = vpop.permute.xlu0 %6531
        %6533 = vrot.lane.b32.xlu0 %v6508, 1
        %v6534 = vpop.permute.xlu0 %6533
        %6535 = vrot.lane.b32.xlu0 %v6512, 1
        %v6536 = vpop.permute.xlu0 %6535
        %6537 = vrot.lane.b32.xlu0 %v6516, 1
        %v6538 = vpop.permute.xlu0 %6537
        %6539 = vrot.lane.b32.xlu0 %v6520, 1
        %v6540 = vpop.permute.xlu0 %6539
        %6541 = vrot.lane.b32.xlu0 %v6524, 1
        %v6542 = vpop.permute.xlu0 %6541
        %6543 = vrot.lane.b32.xlu0 %v6528, 1
        %v6544 = vpop.permute.xlu0 %6543
        %vm6545 = vcmask 7168
        %v6546 = vsel %vm6545, %v6530, %v6532
        %v6547 = vsel %vm6545, %v6534, %v6536
        %v6548 = vsel %vm6545, %v6538, %v6540
        %v6549 = vsel %vm6545, %v6542, %v6544
        %6554 = vst.msk [vmem:[%s271 + $0x6] sm:$0x1] %vm6386, %v6546
        %6555 = vst.msk [vmem:[%s271 + $0x16] sm:$0x1] %vm6386, %v6547
        %6556 = vst.msk [vmem:[%s271 + $0x26] sm:$0x1] %vm6386, %v6548
        %6557 = vst.msk [vmem:[%s271 + $0x36] sm:$0x1] %vm6386, %v6549
        %v6559 = vunpack.c.l.s4 1966171168
        %v6560 = vunpack.c.0.s8 %v6559
        %v6561 = vlaneseq
        %v6562 = vshrl.u32 %v6561, 7
        %v6563 = vsub.s32 %v6560, %v6562
        %v6564 = vrot.slane %v6331, %v6563
        %v6565 = vcombine.high %v6564, %v6564
        %v6567 = vunpack.c.l.s4 1966171168
        %v6568 = vunpack.c.0.s8 %v6567
        %v6569 = vlaneseq
        %v6570 = vshrl.u32 %v6569, 7
        %v6571 = vsub.s32 %v6568, %v6570
        %v6572 = vrot.slane %v6564, %v6571
        %v6574 = vunpack.c.l.s4 1966171168
        %v6575 = vunpack.c.0.s8 %v6574
        %v6576 = vlaneseq
        %v6577 = vshrl.u32 %v6576, 7
        %v6578 = vsub.s32 %v6575, %v6577
        %v6579 = vrot.slane %v6565, %v6578
        %v6580 = vcombine.high %v6572, %v6572
        %v6581 = vcombine.high %v6579, %v6579
        %v6582 = vlaneseq
        %v6583 = vshrl.u32 %v6582, 7
        %v6584 = vsub.s32 0, %v6583
        %v6585 = vrot.slane %v6572, %v6584
        %v6586 = vlaneseq
        %v6587 = vshrl.u32 %v6586, 7
        %v6588 = vsub.s32 0, %v6587
        %v6589 = vrot.slane %v6579, %v6588
        %v6590 = vlaneseq
        %v6591 = vshrl.u32 %v6590, 7
        %v6592 = vsub.s32 0, %v6591
        %v6593 = vrot.slane %v6580, %v6592
        %v6594 = vlaneseq
        %v6595 = vshrl.u32 %v6594, 7
        %v6596 = vsub.s32 0, %v6595
        %v6597 = vrot.slane %v6581, %v6596
        %6598 = vrot.lane.b32.xlu0 %v6585, 111
        %v6599 = vpop.permute.xlu0 %6598
        %6600 = vrot.lane.b32.xlu0 %v6589, 111
        %v6601 = vpop.permute.xlu0 %6600
        %6602 = vrot.lane.b32.xlu0 %v6593, 111
        %v6603 = vpop.permute.xlu0 %6602
        %6604 = vrot.lane.b32.xlu0 %v6597, 111
        %v6605 = vpop.permute.xlu0 %6604
        %6610 = vst.msk [vmem:[%s271 + $0x7] sm:$0x1] %vm6386, %v6599
        %6611 = vst.msk [vmem:[%s271 + $0x17] sm:$0x1] %vm6386, %v6601
        %6612 = vst.msk [vmem:[%s271 + $0x27] sm:$0x1] %vm6386, %v6603
        %6613 = vst.msk [vmem:[%s271 + $0x37] sm:$0x1] %vm6386, %v6605
        %6614 = vrot.lane.b32.xlu0 %v6585, 93
        %v6615 = vpop.permute.xlu0 %6614
        %6616 = vrot.lane.b32.xlu0 %v6589, 93
        %v6617 = vpop.permute.xlu0 %6616
        %6618 = vrot.lane.b32.xlu0 %v6593, 93
        %v6619 = vpop.permute.xlu0 %6618
        %6620 = vrot.lane.b32.xlu0 %v6597, 93
        %v6621 = vpop.permute.xlu0 %6620
        %6626 = vst.msk [vmem:[%s271 + $0x8] sm:$0x1] %vm6386, %v6615
        %6627 = vst.msk [vmem:[%s271 + $0x18] sm:$0x1] %vm6386, %v6617
        %6628 = vst.msk [vmem:[%s271 + $0x28] sm:$0x1] %vm6386, %v6619
        %6629 = vst.msk [vmem:[%s271 + $0x38] sm:$0x1] %vm6386, %v6621
        %6630 = vrot.lane.b32.xlu0 %v6585, 75
        %v6631 = vpop.permute.xlu0 %6630
        %6632 = vrot.lane.b32.xlu0 %v6589, 75
        %v6633 = vpop.permute.xlu0 %6632
        %6634 = vrot.lane.b32.xlu0 %v6593, 75
        %v6635 = vpop.permute.xlu0 %6634
        %6636 = vrot.lane.b32.xlu0 %v6597, 75
        %v6637 = vpop.permute.xlu0 %6636
        %6642 = vst.msk [vmem:[%s271 + $0x9] sm:$0x1] %vm6386, %v6631
        %6643 = vst.msk [vmem:[%s271 + $0x19] sm:$0x1] %vm6386, %v6633
        %6644 = vst.msk [vmem:[%s271 + $0x29] sm:$0x1] %vm6386, %v6635
        %6645 = vst.msk [vmem:[%s271 + $0x39] sm:$0x1] %vm6386, %v6637
        %6646 = vrot.lane.b32.xlu0 %v6585, 57
        %v6647 = vpop.permute.xlu0 %6646
        %6648 = vrot.lane.b32.xlu0 %v6589, 57
        %v6649 = vpop.permute.xlu0 %6648
        %6650 = vrot.lane.b32.xlu0 %v6593, 57
        %v6651 = vpop.permute.xlu0 %6650
        %6652 = vrot.lane.b32.xlu0 %v6597, 57
        %v6653 = vpop.permute.xlu0 %6652
        %6658 = vst.msk [vmem:[%s271 + $0xa] sm:$0x1] %vm6386, %v6647
        %6659 = vst.msk [vmem:[%s271 + $0x1a] sm:$0x1] %vm6386, %v6649
        %6660 = vst.msk [vmem:[%s271 + $0x2a] sm:$0x1] %vm6386, %v6651
        %6661 = vst.msk [vmem:[%s271 + $0x3a] sm:$0x1] %vm6386, %v6653
        %6662 = vrot.lane.b32.xlu0 %v6585, 39
        %v6663 = vpop.permute.xlu0 %6662
        %6664 = vrot.lane.b32.xlu0 %v6589, 39
        %v6665 = vpop.permute.xlu0 %6664
        %6666 = vrot.lane.b32.xlu0 %v6593, 39
        %v6667 = vpop.permute.xlu0 %6666
        %6668 = vrot.lane.b32.xlu0 %v6597, 39
        %v6669 = vpop.permute.xlu0 %6668
        %6674 = vst.msk [vmem:[%s271 + $0xb] sm:$0x1] %vm6386, %v6663
        %6675 = vst.msk [vmem:[%s271 + $0x1b] sm:$0x1] %vm6386, %v6665
        %6676 = vst.msk [vmem:[%s271 + $0x2b] sm:$0x1] %vm6386, %v6667
        %6677 = vst.msk [vmem:[%s271 + $0x3b] sm:$0x1] %vm6386, %v6669
        %6678 = vrot.lane.b32.xlu0 %v6585, 21
        %v6679 = vpop.permute.xlu0 %6678
        %6680 = vrot.lane.b32.xlu0 %v6589, 21
        %v6681 = vpop.permute.xlu0 %6680
        %6682 = vrot.lane.b32.xlu0 %v6593, 21
        %v6683 = vpop.permute.xlu0 %6682
        %6684 = vrot.lane.b32.xlu0 %v6597, 21
        %v6685 = vpop.permute.xlu0 %6684
        %6690 = vst.msk [vmem:[%s271 + $0xc] sm:$0x1] %vm6386, %v6679
        %6691 = vst.msk [vmem:[%s271 + $0x1c] sm:$0x1] %vm6386, %v6681
        %6692 = vst.msk [vmem:[%s271 + $0x2c] sm:$0x1] %vm6386, %v6683
        %6693 = vst.msk [vmem:[%s271 + $0x3c] sm:$0x1] %vm6386, %v6685
        %v6695 = vcombine.low %v6331, %v6332
        %v6697 = vunpack.c.l.s4 1966171168
        %v6698 = vunpack.c.0.s8 %v6697
        %v6699 = vlaneseq
        %v6700 = vshrl.u32 %v6699, 7
        %v6701 = vsub.s32 %v6698, %v6700
        %v6702 = vrot.slane %v6695, %v6701
        %v6703 = vcombine.high %v6702, %v6702
        %v6705 = vunpack.c.l.s4 1966171168
        %v6706 = vunpack.c.0.s8 %v6705
        %v6707 = vlaneseq
        %v6708 = vshrl.u32 %v6707, 7
        %v6709 = vsub.s32 %v6706, %v6708
        %v6710 = vrot.slane %v6702, %v6709
        %v6712 = vunpack.c.l.s4 1966171168
        %v6713 = vunpack.c.0.s8 %v6712
        %v6714 = vlaneseq
        %v6715 = vshrl.u32 %v6714, 7
        %v6716 = vsub.s32 %v6713, %v6715
        %v6717 = vrot.slane %v6703, %v6716
        %v6718 = vcombine.high %v6710, %v6710
        %v6719 = vcombine.high %v6717, %v6717
        %v6720 = vlaneseq
        %v6721 = vshrl.u32 %v6720, 7
        %v6722 = vsub.s32 0, %v6721
        %v6723 = vrot.slane %v6710, %v6722
        %v6724 = vlaneseq
        %v6725 = vshrl.u32 %v6724, 7
        %v6726 = vsub.s32 1, %v6725
        %v6727 = vrot.slane %v6710, %v6726
        %v6728 = vlaneseq
        %v6729 = vshrl.u32 %v6728, 7
        %v6730 = vsub.s32 0, %v6729
        %v6731 = vrot.slane %v6717, %v6730
        %v6732 = vlaneseq
        %v6733 = vshrl.u32 %v6732, 7
        %v6734 = vsub.s32 1, %v6733
        %v6735 = vrot.slane %v6717, %v6734
        %v6736 = vlaneseq
        %v6737 = vshrl.u32 %v6736, 7
        %v6738 = vsub.s32 0, %v6737
        %v6739 = vrot.slane %v6718, %v6738
        %v6740 = vlaneseq
        %v6741 = vshrl.u32 %v6740, 7
        %v6742 = vsub.s32 1, %v6741
        %v6743 = vrot.slane %v6718, %v6742
        %v6744 = vlaneseq
        %v6745 = vshrl.u32 %v6744, 7
        %v6746 = vsub.s32 0, %v6745
        %v6747 = vrot.slane %v6719, %v6746
        %v6748 = vlaneseq
        %v6749 = vshrl.u32 %v6748, 7
        %v6750 = vsub.s32 1, %v6749
        %v6751 = vrot.slane %v6719, %v6750
        %6752 = vrot.lane.b32.xlu0 %v6723, 3
        %v6753 = vpop.permute.xlu0 %6752
        %6754 = vrot.lane.b32.xlu0 %v6727, 3
        %v6755 = vpop.permute.xlu0 %6754
        %6756 = vrot.lane.b32.xlu0 %v6731, 3
        %v6757 = vpop.permute.xlu0 %6756
        %6758 = vrot.lane.b32.xlu0 %v6735, 3
        %v6759 = vpop.permute.xlu0 %6758
        %6760 = vrot.lane.b32.xlu0 %v6739, 3
        %v6761 = vpop.permute.xlu0 %6760
        %6762 = vrot.lane.b32.xlu0 %v6743, 3
        %v6763 = vpop.permute.xlu0 %6762
        %6764 = vrot.lane.b32.xlu0 %v6747, 3
        %v6765 = vpop.permute.xlu0 %6764
        %6766 = vrot.lane.b32.xlu0 %v6751, 3
        %v6767 = vpop.permute.xlu0 %6766
        %vm6768 = vcmask 23552
        %v6769 = vsel %vm6768, %v6753, %v6755
        %v6770 = vsel %vm6768, %v6757, %v6759
        %v6771 = vsel %vm6768, %v6761, %v6763
        %v6772 = vsel %vm6768, %v6765, %v6767
        %6777 = vst.msk [vmem:[%s271 + $0xd] sm:$0x1] %vm6386, %v6769
        %6778 = vst.msk [vmem:[%s271 + $0x1d] sm:$0x1] %vm6386, %v6770
        %6779 = vst.msk [vmem:[%s271 + $0x2d] sm:$0x1] %vm6386, %v6771
        %6780 = vst.msk [vmem:[%s271 + $0x3d] sm:$0x1] %vm6386, %v6772
        %v6782 = vunpack.c.l.s4 1966171168
        %v6783 = vunpack.c.0.s8 %v6782
        %v6784 = vlaneseq
        %v6785 = vshrl.u32 %v6784, 7
        %v6786 = vsub.s32 %v6783, %v6785
        %v6787 = vrot.slane %v6332, %v6786
        %v6788 = vcombine.high %v6787, %v6787
        %v6790 = vunpack.c.l.s4 1966171168
        %v6791 = vunpack.c.0.s8 %v6790
        %v6792 = vlaneseq
        %v6793 = vshrl.u32 %v6792, 7
        %v6794 = vsub.s32 %v6791, %v6793
        %v6795 = vrot.slane %v6787, %v6794
        %v6797 = vunpack.c.l.s4 1966171168
        %v6798 = vunpack.c.0.s8 %v6797
        %v6799 = vlaneseq
        %v6800 = vshrl.u32 %v6799, 7
        %v6801 = vsub.s32 %v6798, %v6800
        %v6802 = vrot.slane %v6788, %v6801
        %v6803 = vcombine.high %v6795, %v6795
        %v6804 = vcombine.high %v6802, %v6802
        %v6805 = vlaneseq
        %v6806 = vshrl.u32 %v6805, 7
        %v6807 = vsub.s32 0, %v6806
        %v6808 = vrot.slane %v6795, %v6807
        %v6809 = vlaneseq
        %v6810 = vshrl.u32 %v6809, 7
        %v6811 = vsub.s32 0, %v6810
        %v6812 = vrot.slane %v6802, %v6811
        %v6813 = vlaneseq
        %v6814 = vshrl.u32 %v6813, 7
        %v6815 = vsub.s32 0, %v6814
        %v6816 = vrot.slane %v6803, %v6815
        %v6817 = vlaneseq
        %v6818 = vshrl.u32 %v6817, 7
        %v6819 = vsub.s32 0, %v6818
        %v6820 = vrot.slane %v6804, %v6819
        %6821 = vrot.lane.b32.xlu0 %v6808, 113
        %v6822 = vpop.permute.xlu0 %6821
        %6823 = vrot.lane.b32.xlu0 %v6812, 113
        %v6824 = vpop.permute.xlu0 %6823
        %6825 = vrot.lane.b32.xlu0 %v6816, 113
        %v6826 = vpop.permute.xlu0 %6825
        %6827 = vrot.lane.b32.xlu0 %v6820, 113
        %v6828 = vpop.permute.xlu0 %6827
        %6833 = vst.msk [vmem:[%s271 + $0xe] sm:$0x1] %vm6386, %v6822
        %6834 = vst.msk [vmem:[%s271 + $0x1e] sm:$0x1] %vm6386, %v6824
        %6835 = vst.msk [vmem:[%s271 + $0x2e] sm:$0x1] %vm6386, %v6826
        %6836 = vst.msk [vmem:[%s271 + $0x3e] sm:$0x1] %vm6386, %v6828
        %6837 = vrot.lane.b32.xlu0 %v6808, 95
        %v6838 = vpop.permute.xlu0 %6837
        %6839 = vrot.lane.b32.xlu0 %v6812, 95
        %v6840 = vpop.permute.xlu0 %6839
        %6841 = vrot.lane.b32.xlu0 %v6816, 95
        %v6842 = vpop.permute.xlu0 %6841
        %6843 = vrot.lane.b32.xlu0 %v6820, 95
        %v6844 = vpop.permute.xlu0 %6843
        %6849 = vst.msk [vmem:[%s271 + $0xf] sm:$0x1] %vm6386, %v6838
        %6850 = vst.msk [vmem:[%s271 + $0x1f] sm:$0x1] %vm6386, %v6840
        %6851 = vst.msk [vmem:[%s271 + $0x2f] sm:$0x1] %vm6386, %v6842
        %6852 = vst.msk [vmem:[%s271 + $0x3f] sm:$0x1] %vm6386, %v6844
        %s6853 = sand.u32 %s181, 1
        %s6854 = scalar_lea.sflag [#allocation3], %s6853
        %s6855 = sand.u32 %s181, 1
        %s6856 = smul.addr %s6855, 64
        %s6857 = scalar_lea.vmem [#allocation2], %s6856
        // Predicated region
        $region49: #{rk2_forward.1} parent=47 // pred_check
          %p6858 = pneg %p191
        $region50: #{rk2_forward.1} parent=47 // pred_check_branch
          %6860 = sbr.rel (%p6858) target = $region52
        $region51: #{rk2_forward.1} parent=47 // pred_region
          %s6862 = ssub.s32 1024, 1024
          %6863 = vsyncadd %s6854, %s6862
          %s6864 = smul.addr %s21, 8
          %s6865 = smul.addr %s6864, 128
          %s6866 = scalar_lea.hbm %s7, %s6865
          %s6867 = sshll.u32 %s6857, 4
          %s6868 = int_to_ptr.vmem [resolvable:$true] %s6867
          %6873 = dma.vmem_to_hbm [thread:$0]  %s6868, 1024, %s6866, %s6854, 128, 128, 8
        $region52: #{rk2_forward.1} parent=47 // pred_fallthru
          _
      $region48: #{rk2_forward.1} parent=5 // pred_fallthru
        _
      %p6874 = scmp.le.s32.totalorder 2, %s16
      // Predicated region
      $region53: #{rk2_forward.1} parent=5 // pred_check
        %p6875 = pneg %p6874
      $region54: #{rk2_forward.1} parent=5 // pred_check_branch
        %6877 = sbr.rel (%p6875) target = $region56
      $region55: #{rk2_forward.1} parent=5 // pred_region
        %s6878 = ssub.s32 %s16, 2
        // Predicated region
        $region57: #{rk2_forward.1} parent=55 // pred_check
          %p6879 = pneg %p197
        $region58: #{rk2_forward.1} parent=55 // pred_check_branch
          %6881 = sbr.rel (%p6879) target = $region60
        $region59: #{rk2_forward.1} parent=55 // pred_region
          %s6882 = sand.u32 %s182, 1
          %s6883 = scalar_lea.sflag [#allocation3], %s6882
          %s6884 = sand.u32 %s182, 1
          %s6885 = smul.addr %s6884, 64
          %s6886 = scalar_lea.vmem [#allocation2], %s6885
          %6887 = dma.done %s6883, 1024
        $region60: #{rk2_forward.1} parent=55 // pred_fallthru
          _
      $region56: #{rk2_forward.1} parent=5 // pred_fallthru
        _
    $region6: #{rk2_forward.1} parent=1 // loop_footer
      %s20 = sadd.s32 1, %s16
    $region7: #{rk2_forward.1} parent=1 // loop_footer_branch
      %15 = sbr.rel target = $region3
    $region8: #{rk2_forward.1} parent=1 // loop_exit
      _
    %6888 = vsyncpa [#allocation3], 1
    %s6889 = scalar_lea.sflag [#allocation3], 1
    %6890 = vsyncpa %s6889, 1

</llo_original>
